<compile_context>
chip_gen: v6e
topology: v6e:2x2x1
jax: 0.10.0
libtpu: 0.0.40
codegen_flags: <defaults>
</compile_context>

<pallas_src>
import functools

import jax
import jax.numpy as jnp
from jax.experimental import pallas as pl
from jax.experimental.pallas import tpu as pltpu


# ----------------------------- host-side helpers -----------------------------

def _interp_matrix(out_size, in_size):
    """PyTorch F.interpolate(mode='bilinear', align_corners=False) row weights."""
    dst = jnp.arange(out_size, dtype=jnp.float32)
    src = jnp.maximum((dst + 0.5) * (in_size / out_size) - 0.5, 0.0)
    i0 = jnp.minimum(jnp.floor(src).astype(jnp.int32), in_size - 1)
    i1 = jnp.minimum(i0 + 1, in_size - 1)
    lam = jnp.clip(src - i0.astype(jnp.float32), 0.0, 1.0)
    m = jnp.zeros((out_size, in_size), jnp.float32)
    rows = jnp.arange(out_size)
    m = m.at[rows, i0].add(1.0 - lam)
    m = m.at[rows, i1].add(lam)
    return m


def _shift_masks(H, W, ks):
    """(ks*ks, 1, H*W) validity masks for the roll-based shifted-tap convolution."""
    r = (ks - 1) // 2
    hh = jnp.arange(H)
    ww = jnp.arange(W)
    masks = []
    for ki in range(ks):
        for kj in range(ks):
            okh = (hh + (ki - r) >= 0) & (hh + (ki - r) < H)
            okw = (ww + (kj - r) >= 0) & (ww + (kj - r) < W)
            masks.append((okh[:, None] & okw[None, :]).reshape(1, H * W))
    return jnp.stack(masks, axis=0).astype(jnp.float32)


def _group_size(n, cap=16):
    """Largest divisor of n that is <= cap and leaves >= 2 grid steps when possible."""
    cap = max(1, min(cap, n // 2 if n > 1 else 1))
    best = 1
    for d in range(1, cap + 1):
        if n % d == 0:
            best = d
    return best


def _hw_tile(hw):
    """Lane tile for the HW axis of the conv matmuls (128-multiple divisor)."""
    for t in (512, 256, 128):
        if hw % t == 0 and hw > t:
            return t
    return hw  # full-extent block (always legal)


# ----------------------------- bilinear resize --------------------------------

def _bilinear_kernel(x_ref, lxt_ref, ly_ref, o_ref):
    # separable bilinear interpolation for G images at once:
    #   t = X (G*h, w) @ LxT (w, W);  out = kron(I_G, Ly) (G*H, G*h) @ t
    t = jnp.dot(x_ref[...], lxt_ref[...], preferred_element_type=jnp.float32)
    o_ref[...] = jnp.dot(ly_ref[...], t, preferred_element_type=jnp.float32)


def bilinear_resize(x, out_h, out_w):
    """F.interpolate(..., mode='bilinear', align_corners=False)."""
    B, C, H, W = x.shape
    if (H, W) == (out_h, out_w):
        return x
    BC = B * C
    G = _group_size(BC)
    if (G * H) % 8 != 0 or (G * out_h) % 8 != 0:
        G = BC  # full-extent blocks are always legal
    lxt = _interp_matrix(out_w, W).T                                   # (W, out_w)
    ly = jnp.kron(jnp.eye(G, dtype=jnp.float32), _interp_matrix(out_h, H))
    xf = x.reshape(BC * H, W).astype(jnp.float32)
    out = pl.pallas_call(
        _bilinear_kernel,
        out_shape=jax.ShapeDtypeStruct((BC * out_h, out_w), jnp.float32),
        grid=(BC // G,),
        in_specs=[
            pl.BlockSpec((G * H, W), lambda i: (i, 0)),
            pl.BlockSpec((W, out_w), lambda i: (0, 0)),
            pl.BlockSpec((G * out_h, G * H), lambda i: (0, 0)),
        ],
        out_specs=pl.BlockSpec((G * out_h, out_w), lambda i: (i, 0)),
        compiler_params=pltpu.CompilerParams(dimension_semantics=("parallel",)),
    )(xf, lxt, ly)
    return out.reshape(B, C, out_h, out_w)


# ------------------- fused 3x3 conv (offset-predicting conv) ------------------

def _conv3x3_kernel(x_ref, w_ref, mask_ref, b_ref, o_ref, *, W):
    """Fused-im2col 3x3/pad1 conv: taps are lane-rolls of the flat (C, HW) block."""
    x = x_ref[0]                                       # (C, HW) f32
    HW = x.shape[1]
    O = w_ref.shape[1]
    acc = jnp.zeros((O, HW), jnp.float32)
    for t in range(9):
        ki, kj = divmod(t, 3)
        sh = ((1 - ki) * W + (1 - kj)) % HW
        xt = pltpu.roll(x, sh, 1) if sh else x         # XLU, free slot
        xt = (xt * mask_ref[t]).astype(jnp.bfloat16)   # zero the out-of-bounds taps
        acc = acc + jnp.dot(w_ref[t], xt, preferred_element_type=jnp.float32)
    o_ref[0] = acc + b_ref[...]


def conv3x3(x, w, b):
    """3x3 / stride-1 / pad-1 conv.  x:(B,C,H,W), w:(O,C,3,3), b:(O,) -> (B,O,H*W) f32."""
    # TODO(synk): roll+mask taps need the full HW row per block; huge H*W would need an
    # explicit halo-tiled variant.
    B, C, H, W = x.shape
    O = w.shape[0]
    HW = H * W
    w9 = jnp.transpose(w, (2, 3, 0, 1)).reshape(9, O, C).astype(jnp.bfloat16)
    masks = _shift_masks(H, W, 3)                      # (9, 1, HW)
    xf = x.reshape(B, C, HW).astype(jnp.float32)
    return pl.pallas_call(
        functools.partial(_conv3x3_kernel, W=W),
        out_shape=jax.ShapeDtypeStruct((B, O, HW), jnp.float32),
        grid=(B,),
        in_specs=[
            pl.BlockSpec((1, C, HW), lambda b_: (b_, 0, 0)),
            pl.BlockSpec((9, O, C), lambda b_: (0, 0, 0)),
            pl.BlockSpec((9, 1, HW), lambda b_: (0, 0, 0)),
            pl.BlockSpec((O, 1), lambda b_: (0, 0)),
        ],
        out_specs=pl.BlockSpec((1, O, HW), lambda b_: (b_, 0, 0)),
        compiler_params=pltpu.CompilerParams(dimension_semantics=("parallel",)),
    )(xf, w9, masks, b.reshape(O, 1).astype(jnp.float32))


# --------------------- main deform-conv matmul (+BN+ReLU) ---------------------

def _matmul_bias_relu_kernel(w_ref, x_ref, b_ref, o_ref):
    # Single-K fast path: no accumulator scratch, no pl.when phases.
    y = jnp.dot(w_ref[...], x_ref[0], preferred_element_type=jnp.float32) + b_ref[...]
    o_ref[0] = jnp.maximum(y, 0.0)


def matmul_bias_relu(w, cols, bias):
    """y[b] = relu(w @ cols[b] + bias).  w:(O,K), cols:(B,K,HW) bf16 -> (B,O,HW) f32."""
    O, K = w.shape
    B, _, HW = cols.shape
    tn = _hw_tile(HW)
    return pl.pallas_call(
        _matmul_bias_relu_kernel,
        out_shape=jax.ShapeDtypeStruct((B, O, HW), jnp.float32),
        grid=(B, HW // tn),
        in_specs=[
            pl.BlockSpec((O, K), lambda b_, j: (0, 0)),
            pl.BlockSpec((1, K, tn), lambda b_, j: (b_, 0, j)),
            pl.BlockSpec((O, 1), lambda b_, j: (0, 0)),
        ],
        out_specs=pl.BlockSpec((1, O, tn), lambda b_, j: (b_, 0, j)),
        compiler_params=pltpu.CompilerParams(
            dimension_semantics=("parallel", "parallel")),
    )(w.astype(jnp.bfloat16), cols, bias.reshape(O, 1).astype(jnp.float32))


# ---------------------------- deformable sampling -----------------------------

def _deform_sample(x, offsets, ks, pad):
    """Bilinear-sample x at deformed kernel positions -> (B, C*ks*ks, H*W) bf16 columns."""
    # TODO(synk): the data-dependent gather stays in plain JAX (XLA gather); a Pallas
    # DMA/one-hot gather feeding the matmul accumulator directly is the next step.
    B, C, H, W = x.shape
    N = ks * ks
    xp = jnp.pad(x, ((0, 0), (0, 0), (pad, pad), (pad, pad)))
    Hp, Wp = H + 2 * pad, W + 2 * pad
    base_y = jnp.arange(H, dtype=jnp.float32) + pad
    base_x = jnp.arange(W, dtype=jnp.float32) + pad
    kr = jnp.arange(ks, dtype=jnp.float32) - (ks - 1) // 2
    dy_k, dx_k = jnp.meshgrid(kr, kr, indexing="ij")
    dy_k = dy_k.reshape(-1)
    dx_k = dx_k.reshape(-1)
    off_y = offsets[:, :N]                               # (B, N, H, W)
    off_x = offsets[:, N:]
    py = base_y[None, None, :, None] + dy_k[None, :, None, None] + off_y
    px = base_x[None, None, None, :] + dx_k[None, :, None, None] + off_x
    py = jnp.clip(py, 0.0, Hp - 1.0)
    px = jnp.clip(px, 0.0, Wp - 1.0)
    y0 = jnp.floor(py)
    x0 = jnp.floor(px)
    ly, lx = py - y0, px - x0
    y0i = y0.astype(jnp.int32)
    x0i = x0.astype(jnp.int32)
    y1i = jnp.minimum(y0i + 1, Hp - 1)
    x1i = jnp.minimum(x0i + 1, Wp - 1)

    NHW = N * H * W
    xpf = xp.reshape(B, C, Hp * Wp)

    def flat(yi, xi):
        return (yi * Wp + xi).reshape(B, NHW)

    i00, i01 = flat(y0i, x0i), flat(y0i, x1i)
    i10, i11 = flat(y1i, x0i), flat(y1i, x1i)
    w00 = ((1 - ly) * (1 - lx)).reshape(B, 1, NHW)
    w01 = ((1 - ly) * lx).reshape(B, 1, NHW)
    w10 = (ly * (1 - lx)).reshape(B, 1, NHW)
    w11 = (ly * lx).reshape(B, 1, NHW)

    def per_batch(img, a, b_, c, d, wa, wb, wc, wd):
        g = lambda idx: jnp.take(img, idx, axis=1)        # (C, NHW) vectorized gather
        return (g(a) * wa + g(b_) * wb + g(c) * wc + g(d) * wd).astype(jnp.bfloat16)

    cols = jax.vmap(per_batch)(xpf, i00, i01, i10, i11, w00, w01, w10, w11)  # (B,C,NHW)
    # (B, C, N*HW) -> (B, C*N, HW) is contiguous and matches the (O, C, kh, kw) weights.
    return cols.reshape(B, C * N, H * W)


def deform_conv_bn_relu(x, p, ks, pad):
    """DeformConv2d(ks, pad) -> BatchNorm2d (eval) -> ReLU.  Returns (B, O, H*W) f32."""
    B, C, H, W = x.shape
    O = p["w"].shape[0]
    N = ks * ks
    offsets = conv3x3(x, p["p_w"], p["p_b"])             # offset-predicting conv (fused)
    offsets = offsets.reshape(B, 2 * N, H, W)
    cols = _deform_sample(x, offsets, ks, pad)           # (B, C*N, HW) bf16
    scale = p["bn_g"] / jnp.sqrt(p["bn_v"] + 1e-5)       # fold BN scale into the weights
    w_main = p["w"].reshape(O, C * N) * scale[:, None]
    shift = p["bn_b"] - p["bn_m"] * scale
    return matmul_bias_relu(w_main, cols, shift)         # (B, O, HW)


# ------------------------------- fused CBAM -----------------------------------

def _cbam_kernel(x_ref, w1_ref, w2_ref, mask_ref, saw_ref, o_ref, *, W):
    """Channel attention (shared MLP on avg/max pools) + 7x7 spatial attention, fused."""
    x = x_ref[0]                                          # (C, HW) f32
    C = x.shape[0]
    HW = x.shape[1]

    # --- channel attention ---
    pool = jnp.concatenate(
        [jnp.mean(x, axis=1, keepdims=True), jnp.max(x, axis=1, keepdims=True)],
        axis=1)                                           # (C, 2): [avg, max]
    h = jnp.maximum(jnp.dot(w1_ref[...], pool, preferred_element_type=jnp.float32), 0.0)
    s = jnp.dot(w2_ref[...], h, preferred_element_type=jnp.float32)      # (C, 2)
    att_c = jax.nn.sigmoid(s[:, 0:1] + s[:, 1:2])         # (C, 1)
    y = x * att_c                                         # (C, HW) lane-dense

    # --- spatial attention: 7x7 conv on (avg_c, max_c) maps via lane-rolls ---
    pool2 = jnp.concatenate(
        [jnp.mean(y, axis=0, keepdims=True), jnp.max(y, axis=0, keepdims=True)],
        axis=0)                                           # (2, HW)
    parts = [jnp.zeros((1, HW), jnp.float32) for _ in range(4)]  # independent chains
    for t in range(49):
        ki, kj = divmod(t, 7)
        sh = ((3 - ki) * W + (3 - kj)) % HW
        pr = pltpu.roll(pool2, sh, 1) if sh else pool2
        parts[t % 4] = parts[t % 4] + (
            saw_ref[t] * pr[0:1, :] + saw_ref[49 + t] * pr[1:2, :]) * mask_ref[t]
    att_s = jax.nn.sigmoid(parts[0] + parts[1] + parts[2] + parts[3])     # (1, HW)
    o_ref[0] = y * att_s                                  # lane-dense store


def cbam(y, p, H, W):
    """CBAM on (B, C, H*W) activations; one fused Pallas kernel per batch element."""
    B, C, HW = y.shape
    cr = p["ca_w1"].shape[0]
    masks = _shift_masks(H, W, 7)                         # (49, 1, HW)
    saw = p["sa_w"].reshape(-1).astype(jnp.float32)       # (98,): [avg taps..., max taps...]
    return pl.pallas_call(
        functools.partial(_cbam_kernel, W=W),
        out_shape=jax.ShapeDtypeStruct((B, C, HW), jnp.float32),
        grid=(B,),
        in_specs=[
            pl.BlockSpec((1, C, HW), lambda b_: (b_, 0, 0)),
            pl.BlockSpec((cr, C), lambda b_: (0, 0)),
            pl.BlockSpec((C, cr), lambda b_: (0, 0)),
            pl.BlockSpec((49, 1, HW), lambda b_: (0, 0, 0)),
            pl.BlockSpec(memory_space=pltpu.MemorySpace.SMEM),
        ],
        out_specs=pl.BlockSpec((1, C, HW), lambda b_: (b_, 0, 0)),
        compiler_params=pltpu.CompilerParams(dimension_semantics=("parallel",)),
    )(y, p["ca_w1"].astype(jnp.float32), p["ca_w2"].astype(jnp.float32), masks, saw)


# ------------------------------ full module -----------------------------------

def combination_module_dcn(params, x_low, x_up):
    B, c_up_ch, H, W = x_up.shape
    x_low_r = bilinear_resize(x_low, H, W)                        # F.interpolate(bilinear)
    up = deform_conv_bn_relu(x_low_r, params["up"], ks=3, pad=1)  # self.up   -> (B,C,HW)
    low = cbam(up, params["cbam"], H, W)                          # self.cbam -> (B,C,HW)
    x_cat = jnp.concatenate([x_up.reshape(B, c_up_ch, H * W), low], axis=1)
    x_cat = x_cat.reshape(B, 2 * c_up_ch, H, W)                   # torch.cat(dim=1)
    out = deform_conv_bn_relu(x_cat, params["cat"], ks=1, pad=1)  # self.cat_conv
    return out.reshape(B, c_up_ch, H, W)


# ------------------------------ init / main ------------------------------------

def init_params(key, c_low, c_up, ratio=4):
    ks = jax.random.split(key, 16)

    def rnd(k, shape, scale=0.1):
        return scale * jax.random.normal(k, shape, dtype=jnp.float32)

    return {
        "up": {
            "p_w": rnd(ks[0], (2 * 9, c_low, 3, 3), 0.02),
            "p_b": rnd(ks[1], (2 * 9,), 0.02),
            "w": rnd(ks[2], (c_up, c_low, 3, 3), 0.1),
            "bn_g": 1.0 + rnd(ks[3], (c_up,), 0.1),
            "bn_b": rnd(ks[4], (c_up,), 0.1),
            "bn_m": rnd(ks[5], (c_up,), 0.1),
            "bn_v": 1.0 + jnp.abs(rnd(ks[6], (c_up,), 0.1)),
        },
        "cbam": {
            "ca_w1": rnd(ks[7], (c_up // ratio, c_up), 0.2),
            "ca_w2": rnd(ks[8], (c_up, c_up // ratio), 0.2),
            "sa_w": rnd(ks[9], (1, 2, 7, 7), 0.2),
        },
        "cat": {
            "p_w": rnd(ks[10], (2 * 1, 2 * c_up, 3, 3), 0.02),
            "p_b": rnd(ks[11], (2 * 1,), 0.02),
            "w": rnd(ks[12], (c_up, 2 * c_up, 1, 1), 0.1),
            "bn_g": 1.0 + rnd(ks[13], (c_up,), 0.1),
            "bn_b": rnd(ks[14], (c_up,), 0.1),
            "bn_m": rnd(ks[15], (c_up,), 0.1),
            "bn_v": jnp.ones((c_up,), jnp.float32),
        },
    }


if __name__ == "__main__":
    key = jax.random.PRNGKey(0)
    k1, k2, k3 = jax.random.split(key, 3)
    c_low, c_up = 8, 16
    x_low = jax.random.normal(k1, (2, c_low, 8, 8), jnp.float32)     # low-res feature
    x_up = jax.random.normal(k2, (2, c_up, 16, 16), jnp.float32)     # high-res feature
    params = init_params(k3, c_low, c_up)

    fwd = jax.jit(combination_module_dcn)
    out = fwd(params, x_low, x_up)
    jax.block_until_ready(out)
    assert out.shape == (2, c_up, 16, 16) and out.dtype == jnp.float32
    print("KERNEL_OK")
</pallas_src>

<mosaic_0001>
module attributes {stable_mosaic.version = 11 : i64} {
  func.func private @main(%arg0: i32) attributes {dimension_semantics = [#tpu.dimension_semantics<core_parallel>], iteration_bounds = array<i64: 2>, tpu.core_type = #tpu.core_type<sc_scalar_subcore>, window_params = []} {
    return
  }
}

module attributes {stable_mosaic.version = 11 : i64} {
  func.func private @main(%arg0: i32) attributes {dimension_semantics = [#tpu.dimension_semantics<core_parallel>], iteration_bounds = array<i64: 2>, tpu.core_type = #tpu.core_type<sc_scalar_subcore>, window_params = []} {
    return
  }
}

module attributes {stable_mosaic.version = 11 : i64} {
  func.func @_conv3x3_kernel(%arg0: i32, %arg1: memref<1x8x256xf32, #tpu.memory_space<vmem>>, %arg2: memref<9x18x8xbf16, #tpu.memory_space<vmem>>, %arg3: memref<9x1x256xf32, #tpu.memory_space<vmem>>, %arg4: memref<18x1xf32, #tpu.memory_space<vmem>>, %arg5: memref<1x18x256xf32, #tpu.memory_space<vmem>>) attributes {dimension_semantics = [#tpu.dimension_semantics<parallel>], iteration_bounds = array<i64: 2>, scalar_prefetch = 0 : i64, scratch_operands = 0 : i64, tpu.core_type = #tpu.core_type<tc>, window_params = [{transform_indices = @transform_0, window_bounds = array<i64: 1, 8, 256>}, {pipeline_mode = #tpu.pipeline_mode<synchronous>, transform_indices = @transform_1, window_bounds = array<i64: 9, 18, 8>}, {pipeline_mode = #tpu.pipeline_mode<synchronous>, transform_indices = @transform_2, window_bounds = array<i64: 9, 1, 256>}, {pipeline_mode = #tpu.pipeline_mode<synchronous>, transform_indices = @transform_3, window_bounds = array<i64: 18, 1>}, {transform_indices = @transform_4, window_bounds = array<i64: 1, 18, 256>}]} {
    %c0 = arith.constant 0 : index
    %c0_0 = arith.constant 0 : index
    %c0_1 = arith.constant 0 : index
    %0 = vector.load %arg1[%c0, %c0_0, %c0_1] : memref<1x8x256xf32, #tpu.memory_space<vmem>>, vector<1x8x256xf32>
    %1 = vector.shape_cast %0 : vector<1x8x256xf32> to vector<8x256xf32>
    %cst = arith.constant 0.000000e+00 : f32
    %2 = vector.broadcast %cst : f32 to vector<18x256xf32>
    %c17_i32 = arith.constant 17 : i32
    %3 = tpu.dynamic_rotate %1 by %c17_i32 dim 1 : vector<8x256xf32>, i32 -> vector<8x256xf32>
    %c0_2 = arith.constant 0 : index
    %c0_3 = arith.constant 0 : index
    %c0_4 = arith.constant 0 : index
    %4 = vector.load %arg3[%c0_2, %c0_3, %c0_4] : memref<9x1x256xf32, #tpu.memory_space<vmem>>, vector<1x1x256xf32>
    %5 = vector.shape_cast %4 : vector<1x1x256xf32> to vector<1x256xf32>
    %6 = vector.broadcast %5 : vector<1x256xf32> to vector<8x256xf32>
    %7 = arith.mulf %3, %6 : vector<8x256xf32>
    %8 = arith.truncf %7 : vector<8x256xf32> to vector<8x256xbf16>
    %c0_5 = arith.constant 0 : index
    %c0_6 = arith.constant 0 : index
    %c0_7 = arith.constant 0 : index
    %9 = vector.load %arg2[%c0_5, %c0_6, %c0_7] : memref<9x18x8xbf16, #tpu.memory_space<vmem>>, vector<1x18x8xbf16>
    %10 = vector.shape_cast %9 : vector<1x18x8xbf16> to vector<18x8xbf16>
    %cst_8 = arith.constant dense<0.000000e+00> : vector<18x256xf32>
    %11 = tpu.matmul %10, %8, %cst_8 {dimension_numbers = #tpu.dot_dimension_numbers<[1], [0], [0], [1], [0, 0, 1, 1], [], []>} : vector<18x8xbf16>, vector<8x256xbf16>, vector<18x256xf32> -> vector<18x256xf32>
    %12 = arith.addf %2, %11 : vector<18x256xf32>
    %c16_i32 = arith.constant 16 : i32
    %13 = tpu.dynamic_rotate %1 by %c16_i32 dim 1 : vector<8x256xf32>, i32 -> vector<8x256xf32>
    %c1 = arith.constant 1 : index
    %c0_9 = arith.constant 0 : index
    %c0_10 = arith.constant 0 : index
    %14 = vector.load %arg3[%c1, %c0_9, %c0_10] : memref<9x1x256xf32, #tpu.memory_space<vmem>>, vector<1x1x256xf32>
    %15 = vector.shape_cast %14 : vector<1x1x256xf32> to vector<1x256xf32>
    %16 = vector.broadcast %15 : vector<1x256xf32> to vector<8x256xf32>
    %17 = arith.mulf %13, %16 : vector<8x256xf32>
    %18 = arith.truncf %17 : vector<8x256xf32> to vector<8x256xbf16>
    %c1_11 = arith.constant 1 : index
    %c0_12 = arith.constant 0 : index
    %c0_13 = arith.constant 0 : index
    %19 = vector.load %arg2[%c1_11, %c0_12, %c0_13] : memref<9x18x8xbf16, #tpu.memory_space<vmem>>, vector<1x18x8xbf16>
    %20 = vector.shape_cast %19 : vector<1x18x8xbf16> to vector<18x8xbf16>
    %cst_14 = arith.constant dense<0.000000e+00> : vector<18x256xf32>
    %21 = tpu.matmul %20, %18, %cst_14 {dimension_numbers = #tpu.dot_dimension_numbers<[1], [0], [0], [1], [0, 0, 1, 1], [], []>} : vector<18x8xbf16>, vector<8x256xbf16>, vector<18x256xf32> -> vector<18x256xf32>
    %22 = arith.addf %12, %21 : vector<18x256xf32>
    %c15_i32 = arith.constant 15 : i32
    %23 = tpu.dynamic_rotate %1 by %c15_i32 dim 1 : vector<8x256xf32>, i32 -> vector<8x256xf32>
    %c2 = arith.constant 2 : index
    %c0_15 = arith.constant 0 : index
    %c0_16 = arith.constant 0 : index
    %24 = vector.load %arg3[%c2, %c0_15, %c0_16] : memref<9x1x256xf32, #tpu.memory_space<vmem>>, vector<1x1x256xf32>
    %25 = vector.shape_cast %24 : vector<1x1x256xf32> to vector<1x256xf32>
    %26 = vector.broadcast %25 : vector<1x256xf32> to vector<8x256xf32>
    %27 = arith.mulf %23, %26 : vector<8x256xf32>
    %28 = arith.truncf %27 : vector<8x256xf32> to vector<8x256xbf16>
    %c2_17 = arith.constant 2 : index
    %c0_18 = arith.constant 0 : index
    %c0_19 = arith.constant 0 : index
    %29 = vector.load %arg2[%c2_17, %c0_18, %c0_19] : memref<9x18x8xbf16, #tpu.memory_space<vmem>>, vector<1x18x8xbf16>
    %30 = vector.shape_cast %29 : vector<1x18x8xbf16> to vector<18x8xbf16>
    %cst_20 = arith.constant dense<0.000000e+00> : vector<18x256xf32>
    %31 = tpu.matmul %30, %28, %cst_20 {dimension_numbers = #tpu.dot_dimension_numbers<[1], [0], [0], [1], [0, 0, 1, 1], [], []>} : vector<18x8xbf16>, vector<8x256xbf16>, vector<18x256xf32> -> vector<18x256xf32>
    %32 = arith.addf %22, %31 : vector<18x256xf32>
    %c1_i32 = arith.constant 1 : i32
    %33 = tpu.dynamic_rotate %1 by %c1_i32 dim 1 : vector<8x256xf32>, i32 -> vector<8x256xf32>
    %c3 = arith.constant 3 : index
    %c0_21 = arith.constant 0 : index
    %c0_22 = arith.constant 0 : index
    %34 = vector.load %arg3[%c3, %c0_21, %c0_22] : memref<9x1x256xf32, #tpu.memory_space<vmem>>, vector<1x1x256xf32>
    %35 = vector.shape_cast %34 : vector<1x1x256xf32> to vector<1x256xf32>
    %36 = vector.broadcast %35 : vector<1x256xf32> to vector<8x256xf32>
    %37 = arith.mulf %33, %36 : vector<8x256xf32>
    %38 = arith.truncf %37 : vector<8x256xf32> to vector<8x256xbf16>
    %c3_23 = arith.constant 3 : index
    %c0_24 = arith.constant 0 : index
    %c0_25 = arith.constant 0 : index
    %39 = vector.load %arg2[%c3_23, %c0_24, %c0_25] : memref<9x18x8xbf16, #tpu.memory_space<vmem>>, vector<1x18x8xbf16>
    %40 = vector.shape_cast %39 : vector<1x18x8xbf16> to vector<18x8xbf16>
    %cst_26 = arith.constant dense<0.000000e+00> : vector<18x256xf32>
    %41 = tpu.matmul %40, %38, %cst_26 {dimension_numbers = #tpu.dot_dimension_numbers<[1], [0], [0], [1], [0, 0, 1, 1], [], []>} : vector<18x8xbf16>, vector<8x256xbf16>, vector<18x256xf32> -> vector<18x256xf32>
    %42 = arith.addf %32, %41 : vector<18x256xf32>
    %c4 = arith.constant 4 : index
    %c0_27 = arith.constant 0 : index
    %c0_28 = arith.constant 0 : index
    %43 = vector.load %arg3[%c4, %c0_27, %c0_28] : memref<9x1x256xf32, #tpu.memory_space<vmem>>, vector<1x1x256xf32>
    %44 = vector.shape_cast %43 : vector<1x1x256xf32> to vector<1x256xf32>
    %45 = vector.broadcast %44 : vector<1x256xf32> to vector<8x256xf32>
    %46 = arith.mulf %1, %45 : vector<8x256xf32>
    %47 = arith.truncf %46 : vector<8x256xf32> to vector<8x256xbf16>
    %c4_29 = arith.constant 4 : index
    %c0_30 = arith.constant 0 : index
    %c0_31 = arith.constant 0 : index
    %48 = vector.load %arg2[%c4_29, %c0_30, %c0_31] : memref<9x18x8xbf16, #tpu.memory_space<vmem>>, vector<1x18x8xbf16>
    %49 = vector.shape_cast %48 : vector<1x18x8xbf16> to vector<18x8xbf16>
    %cst_32 = arith.constant dense<0.000000e+00> : vector<18x256xf32>
    %50 = tpu.matmul %49, %47, %cst_32 {dimension_numbers = #tpu.dot_dimension_numbers<[1], [0], [0], [1], [0, 0, 1, 1], [], []>} : vector<18x8xbf16>, vector<8x256xbf16>, vector<18x256xf32> -> vector<18x256xf32>
    %51 = arith.addf %42, %50 : vector<18x256xf32>
    %c255_i32 = arith.constant 255 : i32
    %52 = tpu.dynamic_rotate %1 by %c255_i32 dim 1 : vector<8x256xf32>, i32 -> vector<8x256xf32>
    %c5 = arith.constant 5 : index
    %c0_33 = arith.constant 0 : index
    %c0_34 = arith.constant 0 : index
    %53 = vector.load %arg3[%c5, %c0_33, %c0_34] : memref<9x1x256xf32, #tpu.memory_space<vmem>>, vector<1x1x256xf32>
    %54 = vector.shape_cast %53 : vector<1x1x256xf32> to vector<1x256xf32>
    %55 = vector.broadcast %54 : vector<1x256xf32> to vector<8x256xf32>
    %56 = arith.mulf %52, %55 : vector<8x256xf32>
    %57 = arith.truncf %56 : vector<8x256xf32> to vector<8x256xbf16>
    %c5_35 = arith.constant 5 : index
    %c0_36 = arith.constant 0 : index
    %c0_37 = arith.constant 0 : index
    %58 = vector.load %arg2[%c5_35, %c0_36, %c0_37] : memref<9x18x8xbf16, #tpu.memory_space<vmem>>, vector<1x18x8xbf16>
    %59 = vector.shape_cast %58 : vector<1x18x8xbf16> to vector<18x8xbf16>
    %cst_38 = arith.constant dense<0.000000e+00> : vector<18x256xf32>
    %60 = tpu.matmul %59, %57, %cst_38 {dimension_numbers = #tpu.dot_dimension_numbers<[1], [0], [0], [1], [0, 0, 1, 1], [], []>} : vector<18x8xbf16>, vector<8x256xbf16>, vector<18x256xf32> -> vector<18x256xf32>
    %61 = arith.addf %51, %60 : vector<18x256xf32>
    %c241_i32 = arith.constant 241 : i32
    %62 = tpu.dynamic_rotate %1 by %c241_i32 dim 1 : vector<8x256xf32>, i32 -> vector<8x256xf32>
    %c6 = arith.constant 6 : index
    %c0_39 = arith.constant 0 : index
    %c0_40 = arith.constant 0 : index
    %63 = vector.load %arg3[%c6, %c0_39, %c0_40] : memref<9x1x256xf32, #tpu.memory_space<vmem>>, vector<1x1x256xf32>
    %64 = vector.shape_cast %63 : vector<1x1x256xf32> to vector<1x256xf32>
    %65 = vector.broadcast %64 : vector<1x256xf32> to vector<8x256xf32>
    %66 = arith.mulf %62, %65 : vector<8x256xf32>
    %67 = arith.truncf %66 : vector<8x256xf32> to vector<8x256xbf16>
    %c6_41 = arith.constant 6 : index
    %c0_42 = arith.constant 0 : index
    %c0_43 = arith.constant 0 : index
    %68 = vector.load %arg2[%c6_41, %c0_42, %c0_43] : memref<9x18x8xbf16, #tpu.memory_space<vmem>>, vector<1x18x8xbf16>
    %69 = vector.shape_cast %68 : vector<1x18x8xbf16> to vector<18x8xbf16>
    %cst_44 = arith.constant dense<0.000000e+00> : vector<18x256xf32>
    %70 = tpu.matmul %69, %67, %cst_44 {dimension_numbers = #tpu.dot_dimension_numbers<[1], [0], [0], [1], [0, 0, 1, 1], [], []>} : vector<18x8xbf16>, vector<8x256xbf16>, vector<18x256xf32> -> vector<18x256xf32>
    %71 = arith.addf %61, %70 : vector<18x256xf32>
    %c240_i32 = arith.constant 240 : i32
    %72 = tpu.dynamic_rotate %1 by %c240_i32 dim 1 : vector<8x256xf32>, i32 -> vector<8x256xf32>
    %c7 = arith.constant 7 : index
    %c0_45 = arith.constant 0 : index
    %c0_46 = arith.constant 0 : index
    %73 = vector.load %arg3[%c7, %c0_45, %c0_46] : memref<9x1x256xf32, #tpu.memory_space<vmem>>, vector<1x1x256xf32>
    %74 = vector.shape_cast %73 : vector<1x1x256xf32> to vector<1x256xf32>
    %75 = vector.broadcast %74 : vector<1x256xf32> to vector<8x256xf32>
    %76 = arith.mulf %72, %75 : vector<8x256xf32>
    %77 = arith.truncf %76 : vector<8x256xf32> to vector<8x256xbf16>
    %c7_47 = arith.constant 7 : index
    %c0_48 = arith.constant 0 : index
    %c0_49 = arith.constant 0 : index
    %78 = vector.load %arg2[%c7_47, %c0_48, %c0_49] : memref<9x18x8xbf16, #tpu.memory_space<vmem>>, vector<1x18x8xbf16>
    %79 = vector.shape_cast %78 : vector<1x18x8xbf16> to vector<18x8xbf16>
    %cst_50 = arith.constant dense<0.000000e+00> : vector<18x256xf32>
    %80 = tpu.matmul %79, %77, %cst_50 {dimension_numbers = #tpu.dot_dimension_numbers<[1], [0], [0], [1], [0, 0, 1, 1], [], []>} : vector<18x8xbf16>, vector<8x256xbf16>, vector<18x256xf32> -> vector<18x256xf32>
    %81 = arith.addf %71, %80 : vector<18x256xf32>
    %c239_i32 = arith.constant 239 : i32
    %82 = tpu.dynamic_rotate %1 by %c239_i32 dim 1 : vector<8x256xf32>, i32 -> vector<8x256xf32>
    %c8 = arith.constant 8 : index
    %c0_51 = arith.constant 0 : index
    %c0_52 = arith.constant 0 : index
    %83 = vector.load %arg3[%c8, %c0_51, %c0_52] : memref<9x1x256xf32, #tpu.memory_space<vmem>>, vector<1x1x256xf32>
    %84 = vector.shape_cast %83 : vector<1x1x256xf32> to vector<1x256xf32>
    %85 = vector.broadcast %84 : vector<1x256xf32> to vector<8x256xf32>
    %86 = arith.mulf %82, %85 : vector<8x256xf32>
    %87 = arith.truncf %86 : vector<8x256xf32> to vector<8x256xbf16>
    %c8_53 = arith.constant 8 : index
    %c0_54 = arith.constant 0 : index
    %c0_55 = arith.constant 0 : index
    %88 = vector.load %arg2[%c8_53, %c0_54, %c0_55] : memref<9x18x8xbf16, #tpu.memory_space<vmem>>, vector<1x18x8xbf16>
    %89 = vector.shape_cast %88 : vector<1x18x8xbf16> to vector<18x8xbf16>
    %cst_56 = arith.constant dense<0.000000e+00> : vector<18x256xf32>
    %90 = tpu.matmul %89, %87, %cst_56 {dimension_numbers = #tpu.dot_dimension_numbers<[1], [0], [0], [1], [0, 0, 1, 1], [], []>} : vector<18x8xbf16>, vector<8x256xbf16>, vector<18x256xf32> -> vector<18x256xf32>
    %91 = arith.addf %81, %90 : vector<18x256xf32>
    %c0_57 = arith.constant 0 : index
    %c0_58 = arith.constant 0 : index
    %92 = vector.load %arg4[%c0_57, %c0_58] : memref<18x1xf32, #tpu.memory_space<vmem>>, vector<18x1xf32>
    %93 = vector.broadcast %92 : vector<18x1xf32> to vector<18x256xf32>
    %94 = arith.addf %91, %93 : vector<18x256xf32>
    %c0_59 = arith.constant 0 : index
    %c0_60 = arith.constant 0 : index
    %c0_61 = arith.constant 0 : index
    %95 = vector.load %arg5[%c0_59, %c0_60, %c0_61] : memref<1x18x256xf32, #tpu.memory_space<vmem>>, vector<1x18x256xf32>
    %96 = vector.shape_cast %95 : vector<1x18x256xf32> to vector<18x256xf32>
    %97 = vector.shape_cast %94 : vector<18x256xf32> to vector<1x18x256xf32>
    tpu.vector_store %arg5[%c0_59, %c0_60, %c0_61], %97 {strides = array<i32>} : memref<1x18x256xf32, #tpu.memory_space<vmem>>, vector<1x18x256xf32>,
    return
  }
  func.func @transform_0(%arg0: i32) -> (i32, i32, i32) {
    %c0_i32 = arith.constant 0 : i32
    %c0_i32_0 = arith.constant 0 : i32
    %c0_i32_1 = arith.constant 0 : i32
    return %arg0, %c0_i32, %c0_i32_0 : i32, i32, i32
  }
  func.func @transform_1(%arg0: i32) -> (i32, i32, i32) {
    %c0_i32 = arith.constant 0 : i32
    %c0_i32_0 = arith.constant 0 : i32
    %c0_i32_1 = arith.constant 0 : i32
    %c0_i32_2 = arith.constant 0 : i32
    return %c0_i32, %c0_i32_0, %c0_i32_1 : i32, i32, i32
  }
  func.func @transform_2(%arg0: i32) -> (i32, i32, i32) {
    %c0_i32 = arith.constant 0 : i32
    %c0_i32_0 = arith.constant 0 : i32
    %c0_i32_1 = arith.constant 0 : i32
    %c0_i32_2 = arith.constant 0 : i32
    return %c0_i32, %c0_i32_0, %c0_i32_1 : i32, i32, i32
  }
  func.func @transform_3(%arg0: i32) -> (i32, i32) {
    %c0_i32 = arith.constant 0 : i32
    %c0_i32_0 = arith.constant 0 : i32
    %c0_i32_1 = arith.constant 0 : i32
    return %c0_i32, %c0_i32_0 : i32, i32
  }
  func.func @transform_4(%arg0: i32) -> (i32, i32, i32) {
    %c0_i32 = arith.constant 0 : i32
    %c0_i32_0 = arith.constant 0 : i32
    %c0_i32_1 = arith.constant 0 : i32
    return %arg0, %c0_i32, %c0_i32_0 : i32, i32, i32
  }
}

module attributes {stable_mosaic.version = 11 : i64} {
  func.func @_bilinear_kernel(%arg0: i32, %arg1: memref<64x8xf32, #tpu.memory_space<vmem>>, %arg2: memref<8x16xf32, #tpu.memory_space<vmem>>, %arg3: memref<128x64xf32, #tpu.memory_space<vmem>>, %arg4: memref<128x16xf32, #tpu.memory_space<vmem>>) attributes {dimension_semantics = [#tpu.dimension_semantics<parallel>], iteration_bounds = array<i64: 2>, scalar_prefetch = 0 : i64, scratch_operands = 0 : i64, tpu.core_type = #tpu.core_type<tc>, window_params = [{transform_indices = @transform_0, window_bounds = array<i64: 64, 8>}, {pipeline_mode = #tpu.pipeline_mode<synchronous>, transform_indices = @transform_1, window_bounds = array<i64: 8, 16>}, {pipeline_mode = #tpu.pipeline_mode<synchronous>, transform_indices = @transform_2, window_bounds = array<i64: 128, 64>}, {transform_indices = @transform_3, window_bounds = array<i64: 128, 16>}]} {
    %c0 = arith.constant 0 : index
    %c0_0 = arith.constant 0 : index
    %0 = vector.load %arg1[%c0, %c0_0] : memref<64x8xf32, #tpu.memory_space<vmem>>, vector<64x8xf32>
    %c0_1 = arith.constant 0 : index
    %c0_2 = arith.constant 0 : index
    %1 = vector.load %arg2[%c0_1, %c0_2] : memref<8x16xf32, #tpu.memory_space<vmem>>, vector<8x16xf32>
    %cst = arith.constant dense<0.000000e+00> : vector<64x16xf32>
    %2 = tpu.matmul %0, %1, %cst {dimension_numbers = #tpu.dot_dimension_numbers<[1], [0], [0], [1], [0, 0, 1, 1], [], []>} : vector<64x8xf32>, vector<8x16xf32>, vector<64x16xf32> -> vector<64x16xf32>
    %c0_3 = arith.constant 0 : index
    %c0_4 = arith.constant 0 : index
    %3 = vector.load %arg3[%c0_3, %c0_4] : memref<128x64xf32, #tpu.memory_space<vmem>>, vector<128x64xf32>
    %cst_5 = arith.constant dense<0.000000e+00> : vector<128x16xf32>
    %4 = tpu.matmul %3, %2, %cst_5 {dimension_numbers = #tpu.dot_dimension_numbers<[1], [0], [0], [1], [0, 0, 1, 1], [], []>} : vector<128x64xf32>, vector<64x16xf32>, vector<128x16xf32> -> vector<128x16xf32>
    %c0_6 = arith.constant 0 : index
    %c0_7 = arith.constant 0 : index
    %5 = vector.load %arg4[%c0_6, %c0_7] : memref<128x16xf32, #tpu.memory_space<vmem>>, vector<128x16xf32>
    tpu.vector_store %arg4[%c0_6, %c0_7], %4 {strides = array<i32>} : memref<128x16xf32, #tpu.memory_space<vmem>>, vector<128x16xf32>,
    return
  }
  func.func @transform_0(%arg0: i32) -> (i32, i32) {
    %c0_i32 = arith.constant 0 : i32
    %c0_i32_0 = arith.constant 0 : i32
    return %arg0, %c0_i32 : i32, i32
  }
  func.func @transform_1(%arg0: i32) -> (i32, i32) {
    %c0_i32 = arith.constant 0 : i32
    %c0_i32_0 = arith.constant 0 : i32
    %c0_i32_1 = arith.constant 0 : i32
    return %c0_i32, %c0_i32_0 : i32, i32
  }
  func.func @transform_2(%arg0: i32) -> (i32, i32) {
    %c0_i32 = arith.constant 0 : i32
    %c0_i32_0 = arith.constant 0 : i32
    %c0_i32_1 = arith.constant 0 : i32
    return %c0_i32, %c0_i32_0 : i32, i32
  }
  func.func @transform_3(%arg0: i32) -> (i32, i32) {
    %c0_i32 = arith.constant 0 : i32
    %c0_i32_0 = arith.constant 0 : i32
    return %arg0, %c0_i32 : i32, i32
  }
}

module attributes {stable_mosaic.version = 11 : i64} {
  func.func @_matmul_bias_relu_kernel(%arg0: i32, %arg1: i32, %arg2: memref<16x72xbf16, #tpu.memory_space<vmem>>, %arg3: memref<1x72x128xbf16, #tpu.memory_space<vmem>>, %arg4: memref<16x1xf32, #tpu.memory_space<vmem>>, %arg5: memref<1x16x128xf32, #tpu.memory_space<vmem>>) attributes {dimension_semantics = [#tpu.dimension_semantics<parallel>, #tpu.dimension_semantics<parallel>], iteration_bounds = array<i64: 2, 2>, scalar_prefetch = 0 : i64, scratch_operands = 0 : i64, tpu.core_type = #tpu.core_type<tc>, window_params = [{pipeline_mode = #tpu.pipeline_mode<synchronous>, transform_indices = @transform_0, window_bounds = array<i64: 16, 72>}, {transform_indices = @transform_1, window_bounds = array<i64: 1, 72, 128>}, {pipeline_mode = #tpu.pipeline_mode<synchronous>, transform_indices = @transform_2, window_bounds = array<i64: 16, 1>}, {transform_indices = @transform_3, window_bounds = array<i64: 1, 16, 128>}]} {
    %c0 = arith.constant 0 : index
    %c0_0 = arith.constant 0 : index
    %0 = vector.load %arg2[%c0, %c0_0] : memref<16x72xbf16, #tpu.memory_space<vmem>>, vector<16x72xbf16>
    %c0_1 = arith.constant 0 : index
    %c0_2 = arith.constant 0 : index
    %c0_3 = arith.constant 0 : index
    %1 = vector.load %arg3[%c0_1, %c0_2, %c0_3] : memref<1x72x128xbf16, #tpu.memory_space<vmem>>, vector<1x72x128xbf16>
    %2 = vector.shape_cast %1 : vector<1x72x128xbf16> to vector<72x128xbf16>
    %cst = arith.constant dense<0.000000e+00> : vector<16x128xf32>
    %3 = tpu.matmul %0, %2, %cst {dimension_numbers = #tpu.dot_dimension_numbers<[1], [0], [0], [1], [0, 0, 1, 1], [], []>} : vector<16x72xbf16>, vector<72x128xbf16>, vector<16x128xf32> -> vector<16x128xf32>
    %c0_4 = arith.constant 0 : index
    %c0_5 = arith.constant 0 : index
    %4 = vector.load %arg4[%c0_4, %c0_5] : memref<16x1xf32, #tpu.memory_space<vmem>>, vector<16x1xf32>
    %5 = vector.broadcast %4 : vector<16x1xf32> to vector<16x128xf32>
    %6 = arith.addf %3, %5 : vector<16x128xf32>
    %cst_6 = arith.constant 0.000000e+00 : f32
    %7 = vector.broadcast %cst_6 : f32 to vector<16x128xf32>
    %8 = arith.maximumf %6, %7 : vector<16x128xf32>
    %c0_7 = arith.constant 0 : index
    %c0_8 = arith.constant 0 : index
    %c0_9 = arith.constant 0 : index
    %9 = vector.load %arg5[%c0_7, %c0_8, %c0_9] : memref<1x16x128xf32, #tpu.memory_space<vmem>>, vector<1x16x128xf32>
    %10 = vector.shape_cast %9 : vector<1x16x128xf32> to vector<16x128xf32>
    %11 = vector.shape_cast %8 : vector<16x128xf32> to vector<1x16x128xf32>
    tpu.vector_store %arg5[%c0_7, %c0_8, %c0_9], %11 {strides = array<i32>} : memref<1x16x128xf32, #tpu.memory_space<vmem>>, vector<1x16x128xf32>,
    return
  }
  func.func @transform_0(%arg0: i32, %arg1: i32) -> (i32, i32) {
    %c0_i32 = arith.constant 0 : i32
    %c0_i32_0 = arith.constant 0 : i32
    %c0_i32_1 = arith.constant 0 : i32
    return %c0_i32, %c0_i32_0 : i32, i32
  }
  func.func @transform_1(%arg0: i32, %arg1: i32) -> (i32, i32, i32) {
    %c0_i32 = arith.constant 0 : i32
    %c0_i32_0 = arith.constant 0 : i32
    return %arg0, %c0_i32, %arg1 : i32, i32, i32
  }
  func.func @transform_2(%arg0: i32, %arg1: i32) -> (i32, i32) {
    %c0_i32 = arith.constant 0 : i32
    %c0_i32_0 = arith.constant 0 : i32
    %c0_i32_1 = arith.constant 0 : i32
    return %c0_i32, %c0_i32_0 : i32, i32
  }
  func.func @transform_3(%arg0: i32, %arg1: i32) -> (i32, i32, i32) {
    %c0_i32 = arith.constant 0 : i32
    %c0_i32_0 = arith.constant 0 : i32
    return %arg0, %c0_i32, %arg1 : i32, i32, i32
  }
}

module attributes {stable_mosaic.version = 11 : i64} {
  func.func @_cbam_kernel(%arg0: i32, %arg1: memref<1x16x256xf32, #tpu.memory_space<vmem>>, %arg2: memref<4x16xf32, #tpu.memory_space<vmem>>, %arg3: memref<16x4xf32, #tpu.memory_space<vmem>>, %arg4: memref<49x1x256xf32, #tpu.memory_space<vmem>>, %arg5: memref<98xf32, #tpu.memory_space<smem>>, %arg6: memref<1x16x256xf32, #tpu.memory_space<vmem>>) attributes {dimension_semantics = [#tpu.dimension_semantics<parallel>], iteration_bounds = array<i64: 2>, scalar_prefetch = 0 : i64, scratch_operands = 0 : i64, tpu.core_type = #tpu.core_type<tc>, window_params = [{transform_indices = @transform_0, window_bounds = array<i64: 1, 16, 256>}, {pipeline_mode = #tpu.pipeline_mode<synchronous>, transform_indices = @transform_1, window_bounds = array<i64: 4, 16>}, {pipeline_mode = #tpu.pipeline_mode<synchronous>, transform_indices = @transform_2, window_bounds = array<i64: 16, 4>}, {pipeline_mode = #tpu.pipeline_mode<synchronous>, transform_indices = @transform_3, window_bounds = array<i64: 49, 1, 256>}, {transform_indices = @transform_4, window_bounds = array<i64: 98>}, {transform_indices = @transform_5, window_bounds = array<i64: 1, 16, 256>}]} {
    %c0 = arith.constant 0 : index
    %c0_0 = arith.constant 0 : index
    %c0_1 = arith.constant 0 : index
    %0 = vector.load %arg1[%c0, %c0_0, %c0_1] : memref<1x16x256xf32, #tpu.memory_space<vmem>>, vector<1x16x256xf32>
    %1 = vector.shape_cast %0 : vector<1x16x256xf32> to vector<16x256xf32>
    %cst = arith.constant dense<0.000000e+00> : vector<16xf32>
    %2 = vector.multi_reduction <add>, %1, %cst [1] : vector<16x256xf32> to vector<16xf32>
    %3 = vector.shape_cast %2 : vector<16xf32> to vector<16x1xf32>
    %cst_2 = arith.constant 2.560000e+02 : f32
    %4 = vector.broadcast %cst_2 : f32 to vector<16x1xf32>
    %5 = arith.divf %3, %4 : vector<16x1xf32>
    %cst_3 = arith.constant dense<0xFF800000> : vector<16xf32>
    %6 = vector.multi_reduction <maximumf>, %1, %cst_3 [1] : vector<16x256xf32> to vector<16xf32>
    %7 = vector.shape_cast %6 : vector<16xf32> to vector<16x1xf32>
    %8 = tpu.concatenate %5, %7 in 1 : vector<16x1xf32>, vector<16x1xf32> -> vector<16x2xf32>
    %c0_4 = arith.constant 0 : index
    %c0_5 = arith.constant 0 : index
    %9 = vector.load %arg2[%c0_4, %c0_5] : memref<4x16xf32, #tpu.memory_space<vmem>>, vector<4x16xf32>
    %cst_6 = arith.constant dense<0.000000e+00> : vector<4x2xf32>
    %10 = tpu.matmul %9, %8, %cst_6 {dimension_numbers = #tpu.dot_dimension_numbers<[1], [0], [0], [1], [0, 0, 1, 1], [], []>} : vector<4x16xf32>, vector<16x2xf32>, vector<4x2xf32> -> vector<4x2xf32>
    %cst_7 = arith.constant 0.000000e+00 : f32
    %11 = vector.broadcast %cst_7 : f32 to vector<4x2xf32>
    %12 = arith.maximumf %10, %11 : vector<4x2xf32>
    %c0_8 = arith.constant 0 : index
    %c0_9 = arith.constant 0 : index
    %13 = vector.load %arg3[%c0_8, %c0_9] : memref<16x4xf32, #tpu.memory_space<vmem>>, vector<16x4xf32>
    %cst_10 = arith.constant dense<0.000000e+00> : vector<16x2xf32>
    %14 = tpu.matmul %13, %12, %cst_10 {dimension_numbers = #tpu.dot_dimension_numbers<[1], [0], [0], [1], [0, 0, 1, 1], [], []>} : vector<16x4xf32>, vector<4x2xf32>, vector<16x2xf32> -> vector<16x2xf32>
    %15 = vector.extract_strided_slice %14 {offsets = [0, 0], sizes = [16, 1], strides = [1, 1]} : vector<16x2xf32> to vector<16x1xf32>
    %16 = vector.extract_strided_slice %14 {offsets = [0, 1], sizes = [16, 1], strides = [1, 1]} : vector<16x2xf32> to vector<16x1xf32>
    %17 = arith.addf %15, %16 : vector<16x1xf32>
    %18 = arith.negf %17 : vector<16x1xf32>
    %19 = math.exp %18 : vector<16x1xf32>
    %cst_11 = arith.constant 1.000000e+00 : f32
    %20 = vector.broadcast %cst_11 : f32 to vector<16x1xf32>
    %21 = arith.addf %20, %19 : vector<16x1xf32>
    %22 = arith.divf %20, %21 : vector<16x1xf32>
    %23 = vector.broadcast %22 : vector<16x1xf32> to vector<16x256xf32>
    %24 = arith.mulf %1, %23 : vector<16x256xf32>
    %cst_12 = arith.constant dense<0.000000e+00> : vector<256xf32>
    %25 = vector.multi_reduction <add>, %24, %cst_12 [0] : vector<16x256xf32> to vector<256xf32>
    %26 = vector.shape_cast %25 : vector<256xf32> to vector<1x256xf32>
    %cst_13 = arith.constant 1.600000e+01 : f32
    %27 = vector.broadcast %cst_13 : f32 to vector<1x256xf32>
    %28 = arith.divf %26, %27 : vector<1x256xf32>
    %cst_14 = arith.constant dense<0xFF800000> : vector<256xf32>
    %29 = vector.multi_reduction <maximumf>, %24, %cst_14 [0] : vector<16x256xf32> to vector<256xf32>
    %30 = vector.shape_cast %29 : vector<256xf32> to vector<1x256xf32>
    %31 = tpu.concatenate %28, %30 in 0 : vector<1x256xf32>, vector<1x256xf32> -> vector<2x256xf32>
    %cst_15 = arith.constant 0.000000e+00 : f32
    %32 = vector.broadcast %cst_15 : f32 to vector<1x256xf32>
    %cst_16 = arith.constant 0.000000e+00 : f32
    %33 = vector.broadcast %cst_16 : f32 to vector<1x256xf32>
    %cst_17 = arith.constant 0.000000e+00 : f32
    %34 = vector.broadcast %cst_17 : f32 to vector<1x256xf32>
    %cst_18 = arith.constant 0.000000e+00 : f32
    %35 = vector.broadcast %cst_18 : f32 to vector<1x256xf32>
    %c51_i32 = arith.constant 51 : i32
    %36 = tpu.dynamic_rotate %31 by %c51_i32 dim 1 : vector<2x256xf32>, i32 -> vector<2x256xf32>
    %c0_19 = arith.constant 0 : index
    %37 = memref.load %arg5[%c0_19] : memref<98xf32, #tpu.memory_space<smem>>
    %38 = vector.extract_strided_slice %36 {offsets = [0, 0], sizes = [1, 256], strides = [1, 1]} : vector<2x256xf32> to vector<1x256xf32>
    %39 = vector.broadcast %37 : f32 to vector<1x256xf32>
    %40 = arith.mulf %39, %38 : vector<1x256xf32>
    %c49 = arith.constant 49 : index
    %41 = memref.load %arg5[%c49] : memref<98xf32, #tpu.memory_space<smem>>
    %42 = vector.extract_strided_slice %36 {offsets = [1, 0], sizes = [1, 256], strides = [1, 1]} : vector<2x256xf32> to vector<1x256xf32>
    %43 = vector.broadcast %41 : f32 to vector<1x256xf32>
    %44 = arith.mulf %43, %42 : vector<1x256xf32>
    %45 = arith.addf %40, %44 : vector<1x256xf32>
    %c0_20 = arith.constant 0 : index
    %c0_21 = arith.constant 0 : index
    %c0_22 = arith.constant 0 : index
    %46 = vector.load %arg4[%c0_20, %c0_21, %c0_22] : memref<49x1x256xf32, #tpu.memory_space<vmem>>, vector<1x1x256xf32>
    %47 = vector.shape_cast %46 : vector<1x1x256xf32> to vector<1x256xf32>
    %48 = arith.mulf %45, %47 : vector<1x256xf32>
    %49 = arith.addf %32, %48 : vector<1x256xf32>
    %c50_i32 = arith.constant 50 : i32
    %50 = tpu.dynamic_rotate %31 by %c50_i32 dim 1 : vector<2x256xf32>, i32 -> vector<2x256xf32>
    %c1 = arith.constant 1 : index
    %51 = memref.load %arg5[%c1] : memref<98xf32, #tpu.memory_space<smem>>
    %52 = vector.extract_strided_slice %50 {offsets = [0, 0], sizes = [1, 256], strides = [1, 1]} : vector<2x256xf32> to vector<1x256xf32>
    %53 = vector.broadcast %51 : f32 to vector<1x256xf32>
    %54 = arith.mulf %53, %52 : vector<1x256xf32>
    %c50 = arith.constant 50 : index
    %55 = memref.load %arg5[%c50] : memref<98xf32, #tpu.memory_space<smem>>
    %56 = vector.extract_strided_slice %50 {offsets = [1, 0], sizes = [1, 256], strides = [1, 1]} : vector<2x256xf32> to vector<1x256xf32>
    %57 = vector.broadcast %55 : f32 to vector<1x256xf32>
    %58 = arith.mulf %57, %56 : vector<1x256xf32>
    %59 = arith.addf %54, %58 : vector<1x256xf32>
    %c1_23 = arith.constant 1 : index
    %c0_24 = arith.constant 0 : index
    %c0_25 = arith.constant 0 : index
    %60 = vector.load %arg4[%c1_23, %c0_24, %c0_25] : memref<49x1x256xf32, #tpu.memory_space<vmem>>, vector<1x1x256xf32>
    %61 = vector.shape_cast %60 : vector<1x1x256xf32> to vector<1x256xf32>
    %62 = arith.mulf %59, %61 : vector<1x256xf32>
    %63 = arith.addf %33, %62 : vector<1x256xf32>
    %c49_i32 = arith.constant 49 : i32
    %64 = tpu.dynamic_rotate %31 by %c49_i32 dim 1 : vector<2x256xf32>, i32 -> vector<2x256xf32>
    %c2 = arith.constant 2 : index
    %65 = memref.load %arg5[%c2] : memref<98xf32, #tpu.memory_space<smem>>
    %66 = vector.extract_strided_slice %64 {offsets = [0, 0], sizes = [1, 256], strides = [1, 1]} : vector<2x256xf32> to vector<1x256xf32>
    %67 = vector.broadcast %65 : f32 to vector<1x256xf32>
    %68 = arith.mulf %67, %66 : vector<1x256xf32>
    %c51 = arith.constant 51 : index
    %69 = memref.load %arg5[%c51] : memref<98xf32, #tpu.memory_space<smem>>
    %70 = vector.extract_strided_slice %64 {offsets = [1, 0], sizes = [1, 256], strides = [1, 1]} : vector<2x256xf32> to vector<1x256xf32>
    %71 = vector.broadcast %69 : f32 to vector<1x256xf32>
    %72 = arith.mulf %71, %70 : vector<1x256xf32>
    %73 = arith.addf %68, %72 : vector<1x256xf32>
    %c2_26 = arith.constant 2 : index
    %c0_27 = arith.constant 0 : index
    %c0_28 = arith.constant 0 : index
    %74 = vector.load %arg4[%c2_26, %c0_27, %c0_28] : memref<49x1x256xf32, #tpu.memory_space<vmem>>, vector<1x1x256xf32>
    %75 = vector.shape_cast %74 : vector<1x1x256xf32> to vector<1x256xf32>
    %76 = arith.mulf %73, %75 : vector<1x256xf32>
    %77 = arith.addf %34, %76 : vector<1x256xf32>
    %c48_i32 = arith.constant 48 : i32
    %78 = tpu.dynamic_rotate %31 by %c48_i32 dim 1 : vector<2x256xf32>, i32 -> vector<2x256xf32>
    %c3 = arith.constant 3 : index
    %79 = memref.load %arg5[%c3] : memref<98xf32, #tpu.memory_space<smem>>
    %80 = vector.extract_strided_slice %78 {offsets = [0, 0], sizes = [1, 256], strides = [1, 1]} : vector<2x256xf32> to vector<1x256xf32>
    %81 = vector.broadcast %79 : f32 to vector<1x256xf32>
    %82 = arith.mulf %81, %80 : vector<1x256xf32>
    %c52 = arith.constant 52 : index
    %83 = memref.load %arg5[%c52] : memref<98xf32, #tpu.memory_space<smem>>
    %84 = vector.extract_strided_slice %78 {offsets = [1, 0], sizes = [1, 256], strides = [1, 1]} : vector<2x256xf32> to vector<1x256xf32>
    %85 = vector.broadcast %83 : f32 to vector<1x256xf32>
    %86 = arith.mulf %85, %84 : vector<1x256xf32>
    %87 = arith.addf %82, %86 : vector<1x256xf32>
    %c3_29 = arith.constant 3 : index
    %c0_30 = arith.constant 0 : index
    %c0_31 = arith.constant 0 : index
    %88 = vector.load %arg4[%c3_29, %c0_30, %c0_31] : memref<49x1x256xf32, #tpu.memory_space<vmem>>, vector<1x1x256xf32>
    %89 = vector.shape_cast %88 : vector<1x1x256xf32> to vector<1x256xf32>
    %90 = arith.mulf %87, %89 : vector<1x256xf32>
    %91 = arith.addf %35, %90 : vector<1x256xf32>
    %c47_i32 = arith.constant 47 : i32
    %92 = tpu.dynamic_rotate %31 by %c47_i32 dim 1 : vector<2x256xf32>, i32 -> vector<2x256xf32>
    %c4 = arith.constant 4 : index
    %93 = memref.load %arg5[%c4] : memref<98xf32, #tpu.memory_space<smem>>
    %94 = vector.extract_strided_slice %92 {offsets = [0, 0], sizes = [1, 256], strides = [1, 1]} : vector<2x256xf32> to vector<1x256xf32>
    %95 = vector.broadcast %93 : f32 to vector<1x256xf32>
    %96 = arith.mulf %95, %94 : vector<1x256xf32>
    %c53 = arith.constant 53 : index
    %97 = memref.load %arg5[%c53] : memref<98xf32, #tpu.memory_space<smem>>
    %98 = vector.extract_strided_slice %92 {offsets = [1, 0], sizes = [1, 256], strides = [1, 1]} : vector<2x256xf32> to vector<1x256xf32>
    %99 = vector.broadcast %97 : f32 to vector<1x256xf32>
    %100 = arith.mulf %99, %98 : vector<1x256xf32>
    %101 = arith.addf %96, %100 : vector<1x256xf32>
    %c4_32 = arith.constant 4 : index
    %c0_33 = arith.constant 0 : index
    %c0_34 = arith.constant 0 : index
    %102 = vector.load %arg4[%c4_32, %c0_33, %c0_34] : memref<49x1x256xf32, #tpu.memory_space<vmem>>, vector<1x1x256xf32>
    %103 = vector.shape_cast %102 : vector<1x1x256xf32> to vector<1x256xf32>
    %104 = arith.mulf %101, %103 : vector<1x256xf32>
    %105 = arith.addf %49, %104 : vector<1x256xf32>
    %c46_i32 = arith.constant 46 : i32
    %106 = tpu.dynamic_rotate %31 by %c46_i32 dim 1 : vector<2x256xf32>, i32 -> vector<2x256xf32>
    %c5 = arith.constant 5 : index
    %107 = memref.load %arg5[%c5] : memref<98xf32, #tpu.memory_space<smem>>
    %108 = vector.extract_strided_slice %106 {offsets = [0, 0], sizes = [1, 256], strides = [1, 1]} : vector<2x256xf32> to vector<1x256xf32>
    %109 = vector.broadcast %107 : f32 to vector<1x256xf32>
    %110 = arith.mulf %109, %108 : vector<1x256xf32>
    %c54 = arith.constant 54 : index
    %111 = memref.load %arg5[%c54] : memref<98xf32, #tpu.memory_space<smem>>
    %112 = vector.extract_strided_slice %106 {offsets = [1, 0], sizes = [1, 256], strides = [1, 1]} : vector<2x256xf32> to vector<1x256xf32>
    %113 = vector.broadcast %111 : f32 to vector<1x256xf32>
    %114 = arith.mulf %113, %112 : vector<1x256xf32>
    %115 = arith.addf %110, %114 : vector<1x256xf32>
    %c5_35 = arith.constant 5 : index
    %c0_36 = arith.constant 0 : index
    %c0_37 = arith.constant 0 : index
    %116 = vector.load %arg4[%c5_35, %c0_36, %c0_37] : memref<49x1x256xf32, #tpu.memory_space<vmem>>, vector<1x1x256xf32>
    %117 = vector.shape_cast %116 : vector<1x1x256xf32> to vector<1x256xf32>
    %118 = arith.mulf %115, %117 : vector<1x256xf32>
    %119 = arith.addf %63, %118 : vector<1x256xf32>
    %c45_i32 = arith.constant 45 : i32
    %120 = tpu.dynamic_rotate %31 by %c45_i32 dim 1 : vector<2x256xf32>, i32 -> vector<2x256xf32>
    %c6 = arith.constant 6 : index
    %121 = memref.load %arg5[%c6] : memref<98xf32, #tpu.memory_space<smem>>
    %122 = vector.extract_strided_slice %120 {offsets = [0, 0], sizes = [1, 256], strides = [1, 1]} : vector<2x256xf32> to vector<1x256xf32>
    %123 = vector.broadcast %121 : f32 to vector<1x256xf32>
    %124 = arith.mulf %123, %122 : vector<1x256xf32>
    %c55 = arith.constant 55 : index
    %125 = memref.load %arg5[%c55] : memref<98xf32, #tpu.memory_space<smem>>
    %126 = vector.extract_strided_slice %120 {offsets = [1, 0], sizes = [1, 256], strides = [1, 1]} : vector<2x256xf32> to vector<1x256xf32>
    %127 = vector.broadcast %125 : f32 to vector<1x256xf32>
    %128 = arith.mulf %127, %126 : vector<1x256xf32>
    %129 = arith.addf %124, %128 : vector<1x256xf32>
    %c6_38 = arith.constant 6 : index
    %c0_39 = arith.constant 0 : index
    %c0_40 = arith.constant 0 : index
    %130 = vector.load %arg4[%c6_38, %c0_39, %c0_40] : memref<49x1x256xf32, #tpu.memory_space<vmem>>, vector<1x1x256xf32>
    %131 = vector.shape_cast %130 : vector<1x1x256xf32> to vector<1x256xf32>
    %132 = arith.mulf %129, %131 : vector<1x256xf32>
    %133 = arith.addf %77, %132 : vector<1x256xf32>
    %c35_i32 = arith.constant 35 : i32
    %134 = tpu.dynamic_rotate %31 by %c35_i32 dim 1 : vector<2x256xf32>, i32 -> vector<2x256xf32>
    %c7 = arith.constant 7 : index
    %135 = memref.load %arg5[%c7] : memref<98xf32, #tpu.memory_space<smem>>
    %136 = vector.extract_strided_slice %134 {offsets = [0, 0], sizes = [1, 256], strides = [1, 1]} : vector<2x256xf32> to vector<1x256xf32>
    %137 = vector.broadcast %135 : f32 to vector<1x256xf32>
    %138 = arith.mulf %137, %136 : vector<1x256xf32>
    %c56 = arith.constant 56 : index
    %139 = memref.load %arg5[%c56] : memref<98xf32, #tpu.memory_space<smem>>
    %140 = vector.extract_strided_slice %134 {offsets = [1, 0], sizes = [1, 256], strides = [1, 1]} : vector<2x256xf32> to vector<1x256xf32>
    %141 = vector.broadcast %139 : f32 to vector<1x256xf32>
    %142 = arith.mulf %141, %140 : vector<1x256xf32>
    %143 = arith.addf %138, %142 : vector<1x256xf32>
    %c7_41 = arith.constant 7 : index
    %c0_42 = arith.constant 0 : index
    %c0_43 = arith.constant 0 : index
    %144 = vector.load %arg4[%c7_41, %c0_42, %c0_43] : memref<49x1x256xf32, #tpu.memory_space<vmem>>, vector<1x1x256xf32>
    %145 = vector.shape_cast %144 : vector<1x1x256xf32> to vector<1x256xf32>
    %146 = arith.mulf %143, %145 : vector<1x256xf32>
    %147 = arith.addf %91, %146 : vector<1x256xf32>
    %c34_i32 = arith.constant 34 : i32
    %148 = tpu.dynamic_rotate %31 by %c34_i32 dim 1 : vector<2x256xf32>, i32 -> vector<2x256xf32>
    %c8 = arith.constant 8 : index
    %149 = memref.load %arg5[%c8] : memref<98xf32, #tpu.memory_space<smem>>
    %150 = vector.extract_strided_slice %148 {offsets = [0, 0], sizes = [1, 256], strides = [1, 1]} : vector<2x256xf32> to vector<1x256xf32>
    %151 = vector.broadcast %149 : f32 to vector<1x256xf32>
    %152 = arith.mulf %151, %150 : vector<1x256xf32>
    %c57 = arith.constant 57 : index
    %153 = memref.load %arg5[%c57] : memref<98xf32, #tpu.memory_space<smem>>
    %154 = vector.extract_strided_slice %148 {offsets = [1, 0], sizes = [1, 256], strides = [1, 1]} : vector<2x256xf32> to vector<1x256xf32>
    %155 = vector.broadcast %153 : f32 to vector<1x256xf32>
    %156 = arith.mulf %155, %154 : vector<1x256xf32>
    %157 = arith.addf %152, %156 : vector<1x256xf32>
    %c8_44 = arith.constant 8 : index
    %c0_45 = arith.constant 0 : index
    %c0_46 = arith.constant 0 : index
    %158 = vector.load %arg4[%c8_44, %c0_45, %c0_46] : memref<49x1x256xf32, #tpu.memory_space<vmem>>, vector<1x1x256xf32>
    %159 = vector.shape_cast %158 : vector<1x1x256xf32> to vector<1x256xf32>
    %160 = arith.mulf %157, %159 : vector<1x256xf32>
    %161 = arith.addf %105, %160 : vector<1x256xf32>
    %c33_i32 = arith.constant 33 : i32
    %162 = tpu.dynamic_rotate %31 by %c33_i32 dim 1 : vector<2x256xf32>, i32 -> vector<2x256xf32>
    %c9 = arith.constant 9 : index
    %163 = memref.load %arg5[%c9] : memref<98xf32, #tpu.memory_space<smem>>
    %164 = vector.extract_strided_slice %162 {offsets = [0, 0], sizes = [1, 256], strides = [1, 1]} : vector<2x256xf32> to vector<1x256xf32>
    %165 = vector.broadcast %163 : f32 to vector<1x256xf32>
    %166 = arith.mulf %165, %164 : vector<1x256xf32>
    %c58 = arith.constant 58 : index
    %167 = memref.load %arg5[%c58] : memref<98xf32, #tpu.memory_space<smem>>
    %168 = vector.extract_strided_slice %162 {offsets = [1, 0], sizes = [1, 256], strides = [1, 1]} : vector<2x256xf32> to vector<1x256xf32>
    %169 = vector.broadcast %167 : f32 to vector<1x256xf32>
    %170 = arith.mulf %169, %168 : vector<1x256xf32>
    %171 = arith.addf %166, %170 : vector<1x256xf32>
    %c9_47 = arith.constant 9 : index
    %c0_48 = arith.constant 0 : index
    %c0_49 = arith.constant 0 : index
    %172 = vector.load %arg4[%c9_47, %c0_48, %c0_49] : memref<49x1x256xf32, #tpu.memory_space<vmem>>, vector<1x1x256xf32>
    %173 = vector.shape_cast %172 : vector<1x1x256xf32> to vector<1x256xf32>
    %174 = arith.mulf %171, %173 : vector<1x256xf32>
    %175 = arith.addf %119, %174 : vector<1x256xf32>
    %c32_i32 = arith.constant 32 : i32
    %176 = tpu.dynamic_rotate %31 by %c32_i32 dim 1 : vector<2x256xf32>, i32 -> vector<2x256xf32>
    %c10 = arith.constant 10 : index
    %177 = memref.load %arg5[%c10] : memref<98xf32, #tpu.memory_space<smem>>
    %178 = vector.extract_strided_slice %176 {offsets = [0, 0], sizes = [1, 256], strides = [1, 1]} : vector<2x256xf32> to vector<1x256xf32>
    %179 = vector.broadcast %177 : f32 to vector<1x256xf32>
    %180 = arith.mulf %179, %178 : vector<1x256xf32>
    %c59 = arith.constant 59 : index
    %181 = memref.load %arg5[%c59] : memref<98xf32, #tpu.memory_space<smem>>
    %182 = vector.extract_strided_slice %176 {offsets = [1, 0], sizes = [1, 256], strides = [1, 1]} : vector<2x256xf32> to vector<1x256xf32>
    %183 = vector.broadcast %181 : f32 to vector<1x256xf32>
    %184 = arith.mulf %183, %182 : vector<1x256xf32>
    %185 = arith.addf %180, %184 : vector<1x256xf32>
    %c10_50 = arith.constant 10 : index
    %c0_51 = arith.constant 0 : index
    %c0_52 = arith.constant 0 : index
    %186 = vector.load %arg4[%c10_50, %c0_51, %c0_52] : memref<49x1x256xf32, #tpu.memory_space<vmem>>, vector<1x1x256xf32>
    %187 = vector.shape_cast %186 : vector<1x1x256xf32> to vector<1x256xf32>
    %188 = arith.mulf %185, %187 : vector<1x256xf32>
    %189 = arith.addf %133, %188 : vector<1x256xf32>
    %c31_i32 = arith.constant 31 : i32
    %190 = tpu.dynamic_rotate %31 by %c31_i32 dim 1 : vector<2x256xf32>, i32 -> vector<2x256xf32>
    %c11 = arith.constant 11 : index
    %191 = memref.load %arg5[%c11] : memref<98xf32, #tpu.memory_space<smem>>
    %192 = vector.extract_strided_slice %190 {offsets = [0, 0], sizes = [1, 256], strides = [1, 1]} : vector<2x256xf32> to vector<1x256xf32>
    %193 = vector.broadcast %191 : f32 to vector<1x256xf32>
    %194 = arith.mulf %193, %192 : vector<1x256xf32>
    %c60 = arith.constant 60 : index
    %195 = memref.load %arg5[%c60] : memref<98xf32, #tpu.memory_space<smem>>
    %196 = vector.extract_strided_slice %190 {offsets = [1, 0], sizes = [1, 256], strides = [1, 1]} : vector<2x256xf32> to vector<1x256xf32>
    %197 = vector.broadcast %195 : f32 to vector<1x256xf32>
    %198 = arith.mulf %197, %196 : vector<1x256xf32>
    %199 = arith.addf %194, %198 : vector<1x256xf32>
    %c11_53 = arith.constant 11 : index
    %c0_54 = arith.constant 0 : index
    %c0_55 = arith.constant 0 : index
    %200 = vector.load %arg4[%c11_53, %c0_54, %c0_55] : memref<49x1x256xf32, #tpu.memory_space<vmem>>, vector<1x1x256xf32>
    %201 = vector.shape_cast %200 : vector<1x1x256xf32> to vector<1x256xf32>
    %202 = arith.mulf %199, %201 : vector<1x256xf32>
    %203 = arith.addf %147, %202 : vector<1x256xf32>
    %c30_i32 = arith.constant 30 : i32
    %204 = tpu.dynamic_rotate %31 by %c30_i32 dim 1 : vector<2x256xf32>, i32 -> vector<2x256xf32>
    %c12 = arith.constant 12 : index
    %205 = memref.load %arg5[%c12] : memref<98xf32, #tpu.memory_space<smem>>
    %206 = vector.extract_strided_slice %204 {offsets = [0, 0], sizes = [1, 256], strides = [1, 1]} : vector<2x256xf32> to vector<1x256xf32>
    %207 = vector.broadcast %205 : f32 to vector<1x256xf32>
    %208 = arith.mulf %207, %206 : vector<1x256xf32>
    %c61 = arith.constant 61 : index
    %209 = memref.load %arg5[%c61] : memref<98xf32, #tpu.memory_space<smem>>
    %210 = vector.extract_strided_slice %204 {offsets = [1, 0], sizes = [1, 256], strides = [1, 1]} : vector<2x256xf32> to vector<1x256xf32>
    %211 = vector.broadcast %209 : f32 to vector<1x256xf32>
    %212 = arith.mulf %211, %210 : vector<1x256xf32>
    %213 = arith.addf %208, %212 : vector<1x256xf32>
    %c12_56 = arith.constant 12 : index
    %c0_57 = arith.constant 0 : index
    %c0_58 = arith.constant 0 : index
    %214 = vector.load %arg4[%c12_56, %c0_57, %c0_58] : memref<49x1x256xf32, #tpu.memory_space<vmem>>, vector<1x1x256xf32>
    %215 = vector.shape_cast %214 : vector<1x1x256xf32> to vector<1x256xf32>
    %216 = arith.mulf %213, %215 : vector<1x256xf32>
    %217 = arith.addf %161, %216 : vector<1x256xf32>
    %c29_i32 = arith.constant 29 : i32
    %218 = tpu.dynamic_rotate %31 by %c29_i32 dim 1 : vector<2x256xf32>, i32 -> vector<2x256xf32>
    %c13 = arith.constant 13 : index
    %219 = memref.load %arg5[%c13] : memref<98xf32, #tpu.memory_space<smem>>
    %220 = vector.extract_strided_slice %218 {offsets = [0, 0], sizes = [1, 256], strides = [1, 1]} : vector<2x256xf32> to vector<1x256xf32>
    %221 = vector.broadcast %219 : f32 to vector<1x256xf32>
    %222 = arith.mulf %221, %220 : vector<1x256xf32>
    %c62 = arith.constant 62 : index
    %223 = memref.load %arg5[%c62] : memref<98xf32, #tpu.memory_space<smem>>
    %224 = vector.extract_strided_slice %218 {offsets = [1, 0], sizes = [1, 256], strides = [1, 1]} : vector<2x256xf32> to vector<1x256xf32>
    %225 = vector.broadcast %223 : f32 to vector<1x256xf32>
    %226 = arith.mulf %225, %224 : vector<1x256xf32>
    %227 = arith.addf %222, %226 : vector<1x256xf32>
    %c13_59 = arith.constant 13 : index
    %c0_60 = arith.constant 0 : index
    %c0_61 = arith.constant 0 : index
    %228 = vector.load %arg4[%c13_59, %c0_60, %c0_61] : memref<49x1x256xf32, #tpu.memory_space<vmem>>, vector<1x1x256xf32>
    %229 = vector.shape_cast %228 : vector<1x1x256xf32> to vector<1x256xf32>
    %230 = arith.mulf %227, %229 : vector<1x256xf32>
    %231 = arith.addf %175, %230 : vector<1x256xf32>
    %c19_i32 = arith.constant 19 : i32
    %232 = tpu.dynamic_rotate %31 by %c19_i32 dim 1 : vector<2x256xf32>, i32 -> vector<2x256xf32>
    %c14 = arith.constant 14 : index
    %233 = memref.load %arg5[%c14] : memref<98xf32, #tpu.memory_space<smem>>
    %234 = vector.extract_strided_slice %232 {offsets = [0, 0], sizes = [1, 256], strides = [1, 1]} : vector<2x256xf32> to vector<1x256xf32>
    %235 = vector.broadcast %233 : f32 to vector<1x256xf32>
    %236 = arith.mulf %235, %234 : vector<1x256xf32>
    %c63 = arith.constant 63 : index
    %237 = memref.load %arg5[%c63] : memref<98xf32, #tpu.memory_space<smem>>
    %238 = vector.extract_strided_slice %232 {offsets = [1, 0], sizes = [1, 256], strides = [1, 1]} : vector<2x256xf32> to vector<1x256xf32>
    %239 = vector.broadcast %237 : f32 to vector<1x256xf32>
    %240 = arith.mulf %239, %238 : vector<1x256xf32>
    %241 = arith.addf %236, %240 : vector<1x256xf32>
    %c14_62 = arith.constant 14 : index
    %c0_63 = arith.constant 0 : index
    %c0_64 = arith.constant 0 : index
    %242 = vector.load %arg4[%c14_62, %c0_63, %c0_64] : memref<49x1x256xf32, #tpu.memory_space<vmem>>, vector<1x1x256xf32>
    %243 = vector.shape_cast %242 : vector<1x1x256xf32> to vector<1x256xf32>
    %244 = arith.mulf %241, %243 : vector<1x256xf32>
    %245 = arith.addf %189, %244 : vector<1x256xf32>
    %c18_i32 = arith.constant 18 : i32
    %246 = tpu.dynamic_rotate %31 by %c18_i32 dim 1 : vector<2x256xf32>, i32 -> vector<2x256xf32>
    %c15 = arith.constant 15 : index
    %247 = memref.load %arg5[%c15] : memref<98xf32, #tpu.memory_space<smem>>
    %248 = vector.extract_strided_slice %246 {offsets = [0, 0], sizes = [1, 256], strides = [1, 1]} : vector<2x256xf32> to vector<1x256xf32>
    %249 = vector.broadcast %247 : f32 to vector<1x256xf32>
    %250 = arith.mulf %249, %248 : vector<1x256xf32>
    %c64 = arith.constant 64 : index
    %251 = memref.load %arg5[%c64] : memref<98xf32, #tpu.memory_space<smem>>
    %252 = vector.extract_strided_slice %246 {offsets = [1, 0], sizes = [1, 256], strides = [1, 1]} : vector<2x256xf32> to vector<1x256xf32>
    %253 = vector.broadcast %251 : f32 to vector<1x256xf32>
    %254 = arith.mulf %253, %252 : vector<1x256xf32>
    %255 = arith.addf %250, %254 : vector<1x256xf32>
    %c15_65 = arith.constant 15 : index
    %c0_66 = arith.constant 0 : index
    %c0_67 = arith.constant 0 : index
    %256 = vector.load %arg4[%c15_65, %c0_66, %c0_67] : memref<49x1x256xf32, #tpu.memory_space<vmem>>, vector<1x1x256xf32>
    %257 = vector.shape_cast %256 : vector<1x1x256xf32> to vector<1x256xf32>
    %258 = arith.mulf %255, %257 : vector<1x256xf32>
    %259 = arith.addf %203, %258 : vector<1x256xf32>
    %c17_i32 = arith.constant 17 : i32
    %260 = tpu.dynamic_rotate %31 by %c17_i32 dim 1 : vector<2x256xf32>, i32 -> vector<2x256xf32>
    %c16 = arith.constant 16 : index
    %261 = memref.load %arg5[%c16] : memref<98xf32, #tpu.memory_space<smem>>
    %262 = vector.extract_strided_slice %260 {offsets = [0, 0], sizes = [1, 256], strides = [1, 1]} : vector<2x256xf32> to vector<1x256xf32>
    %263 = vector.broadcast %261 : f32 to vector<1x256xf32>
    %264 = arith.mulf %263, %262 : vector<1x256xf32>
    %c65 = arith.constant 65 : index
    %265 = memref.load %arg5[%c65] : memref<98xf32, #tpu.memory_space<smem>>
    %266 = vector.extract_strided_slice %260 {offsets = [1, 0], sizes = [1, 256], strides = [1, 1]} : vector<2x256xf32> to vector<1x256xf32>
    %267 = vector.broadcast %265 : f32 to vector<1x256xf32>
    %268 = arith.mulf %267, %266 : vector<1x256xf32>
    %269 = arith.addf %264, %268 : vector<1x256xf32>
    %c16_68 = arith.constant 16 : index
    %c0_69 = arith.constant 0 : index
    %c0_70 = arith.constant 0 : index
    %270 = vector.load %arg4[%c16_68, %c0_69, %c0_70] : memref<49x1x256xf32, #tpu.memory_space<vmem>>, vector<1x1x256xf32>
    %271 = vector.shape_cast %270 : vector<1x1x256xf32> to vector<1x256xf32>
    %272 = arith.mulf %269, %271 : vector<1x256xf32>
    %273 = arith.addf %217, %272 : vector<1x256xf32>
    %c16_i32 = arith.constant 16 : i32
    %274 = tpu.dynamic_rotate %31 by %c16_i32 dim 1 : vector<2x256xf32>, i32 -> vector<2x256xf32>
    %c17 = arith.constant 17 : index
    %275 = memref.load %arg5[%c17] : memref<98xf32, #tpu.memory_space<smem>>
    %276 = vector.extract_strided_slice %274 {offsets = [0, 0], sizes = [1, 256], strides = [1, 1]} : vector<2x256xf32> to vector<1x256xf32>
    %277 = vector.broadcast %275 : f32 to vector<1x256xf32>
    %278 = arith.mulf %277, %276 : vector<1x256xf32>
    %c66 = arith.constant 66 : index
    %279 = memref.load %arg5[%c66] : memref<98xf32, #tpu.memory_space<smem>>
    %280 = vector.extract_strided_slice %274 {offsets = [1, 0], sizes = [1, 256], strides = [1, 1]} : vector<2x256xf32> to vector<1x256xf32>
    %281 = vector.broadcast %279 : f32 to vector<1x256xf32>
    %282 = arith.mulf %281, %280 : vector<1x256xf32>
    %283 = arith.addf %278, %282 : vector<1x256xf32>
    %c17_71 = arith.constant 17 : index
    %c0_72 = arith.constant 0 : index
    %c0_73 = arith.constant 0 : index
    %284 = vector.load %arg4[%c17_71, %c0_72, %c0_73] : memref<49x1x256xf32, #tpu.memory_space<vmem>>, vector<1x1x256xf32>
    %285 = vector.shape_cast %284 : vector<1x1x256xf32> to vector<1x256xf32>
    %286 = arith.mulf %283, %285 : vector<1x256xf32>
    %287 = arith.addf %231, %286 : vector<1x256xf32>
    %c15_i32 = arith.constant 15 : i32
    %288 = tpu.dynamic_rotate %31 by %c15_i32 dim 1 : vector<2x256xf32>, i32 -> vector<2x256xf32>
    %c18 = arith.constant 18 : index
    %289 = memref.load %arg5[%c18] : memref<98xf32, #tpu.memory_space<smem>>
    %290 = vector.extract_strided_slice %288 {offsets = [0, 0], sizes = [1, 256], strides = [1, 1]} : vector<2x256xf32> to vector<1x256xf32>
    %291 = vector.broadcast %289 : f32 to vector<1x256xf32>
    %292 = arith.mulf %291, %290 : vector<1x256xf32>
    %c67 = arith.constant 67 : index
    %293 = memref.load %arg5[%c67] : memref<98xf32, #tpu.memory_space<smem>>
    %294 = vector.extract_strided_slice %288 {offsets = [1, 0], sizes = [1, 256], strides = [1, 1]} : vector<2x256xf32> to vector<1x256xf32>
    %295 = vector.broadcast %293 : f32 to vector<1x256xf32>
    %296 = arith.mulf %295, %294 : vector<1x256xf32>
    %297 = arith.addf %292, %296 : vector<1x256xf32>
    %c18_74 = arith.constant 18 : index
    %c0_75 = arith.constant 0 : index
    %c0_76 = arith.constant 0 : index
    %298 = vector.load %arg4[%c18_74, %c0_75, %c0_76] : memref<49x1x256xf32, #tpu.memory_space<vmem>>, vector<1x1x256xf32>
    %299 = vector.shape_cast %298 : vector<1x1x256xf32> to vector<1x256xf32>
    %300 = arith.mulf %297, %299 : vector<1x256xf32>
    %301 = arith.addf %245, %300 : vector<1x256xf32>
    %c14_i32 = arith.constant 14 : i32
    %302 = tpu.dynamic_rotate %31 by %c14_i32 dim 1 : vector<2x256xf32>, i32 -> vector<2x256xf32>
    %c19 = arith.constant 19 : index
    %303 = memref.load %arg5[%c19] : memref<98xf32, #tpu.memory_space<smem>>
    %304 = vector.extract_strided_slice %302 {offsets = [0, 0], sizes = [1, 256], strides = [1, 1]} : vector<2x256xf32> to vector<1x256xf32>
    %305 = vector.broadcast %303 : f32 to vector<1x256xf32>
    %306 = arith.mulf %305, %304 : vector<1x256xf32>
    %c68 = arith.constant 68 : index
    %307 = memref.load %arg5[%c68] : memref<98xf32, #tpu.memory_space<smem>>
    %308 = vector.extract_strided_slice %302 {offsets = [1, 0], sizes = [1, 256], strides = [1, 1]} : vector<2x256xf32> to vector<1x256xf32>
    %309 = vector.broadcast %307 : f32 to vector<1x256xf32>
    %310 = arith.mulf %309, %308 : vector<1x256xf32>
    %311 = arith.addf %306, %310 : vector<1x256xf32>
    %c19_77 = arith.constant 19 : index
    %c0_78 = arith.constant 0 : index
    %c0_79 = arith.constant 0 : index
    %312 = vector.load %arg4[%c19_77, %c0_78, %c0_79] : memref<49x1x256xf32, #tpu.memory_space<vmem>>, vector<1x1x256xf32>
    %313 = vector.shape_cast %312 : vector<1x1x256xf32> to vector<1x256xf32>
    %314 = arith.mulf %311, %313 : vector<1x256xf32>
    %315 = arith.addf %259, %314 : vector<1x256xf32>
    %c13_i32 = arith.constant 13 : i32
    %316 = tpu.dynamic_rotate %31 by %c13_i32 dim 1 : vector<2x256xf32>, i32 -> vector<2x256xf32>
    %c20 = arith.constant 20 : index
    %317 = memref.load %arg5[%c20] : memref<98xf32, #tpu.memory_space<smem>>
    %318 = vector.extract_strided_slice %316 {offsets = [0, 0], sizes = [1, 256], strides = [1, 1]} : vector<2x256xf32> to vector<1x256xf32>
    %319 = vector.broadcast %317 : f32 to vector<1x256xf32>
    %320 = arith.mulf %319, %318 : vector<1x256xf32>
    %c69 = arith.constant 69 : index
    %321 = memref.load %arg5[%c69] : memref<98xf32, #tpu.memory_space<smem>>
    %322 = vector.extract_strided_slice %316 {offsets = [1, 0], sizes = [1, 256], strides = [1, 1]} : vector<2x256xf32> to vector<1x256xf32>
    %323 = vector.broadcast %321 : f32 to vector<1x256xf32>
    %324 = arith.mulf %323, %322 : vector<1x256xf32>
    %325 = arith.addf %320, %324 : vector<1x256xf32>
    %c20_80 = arith.constant 20 : index
    %c0_81 = arith.constant 0 : index
    %c0_82 = arith.constant 0 : index
    %326 = vector.load %arg4[%c20_80, %c0_81, %c0_82] : memref<49x1x256xf32, #tpu.memory_space<vmem>>, vector<1x1x256xf32>
    %327 = vector.shape_cast %326 : vector<1x1x256xf32> to vector<1x256xf32>
    %328 = arith.mulf %325, %327 : vector<1x256xf32>
    %329 = arith.addf %273, %328 : vector<1x256xf32>
    %c3_i32 = arith.constant 3 : i32
    %330 = tpu.dynamic_rotate %31 by %c3_i32 dim 1 : vector<2x256xf32>, i32 -> vector<2x256xf32>
    %c21 = arith.constant 21 : index
    %331 = memref.load %arg5[%c21] : memref<98xf32, #tpu.memory_space<smem>>
    %332 = vector.extract_strided_slice %330 {offsets = [0, 0], sizes = [1, 256], strides = [1, 1]} : vector<2x256xf32> to vector<1x256xf32>
    %333 = vector.broadcast %331 : f32 to vector<1x256xf32>
    %334 = arith.mulf %333, %332 : vector<1x256xf32>
    %c70 = arith.constant 70 : index
    %335 = memref.load %arg5[%c70] : memref<98xf32, #tpu.memory_space<smem>>
    %336 = vector.extract_strided_slice %330 {offsets = [1, 0], sizes = [1, 256], strides = [1, 1]} : vector<2x256xf32> to vector<1x256xf32>
    %337 = vector.broadcast %335 : f32 to vector<1x256xf32>
    %338 = arith.mulf %337, %336 : vector<1x256xf32>
    %339 = arith.addf %334, %338 : vector<1x256xf32>
    %c21_83 = arith.constant 21 : index
    %c0_84 = arith.constant 0 : index
    %c0_85 = arith.constant 0 : index
    %340 = vector.load %arg4[%c21_83, %c0_84, %c0_85] : memref<49x1x256xf32, #tpu.memory_space<vmem>>, vector<1x1x256xf32>
    %341 = vector.shape_cast %340 : vector<1x1x256xf32> to vector<1x256xf32>
    %342 = arith.mulf %339, %341 : vector<1x256xf32>
    %343 = arith.addf %287, %342 : vector<1x256xf32>
    %c2_i32 = arith.constant 2 : i32
    %344 = tpu.dynamic_rotate %31 by %c2_i32 dim 1 : vector<2x256xf32>, i32 -> vector<2x256xf32>
    %c22 = arith.constant 22 : index
    %345 = memref.load %arg5[%c22] : memref<98xf32, #tpu.memory_space<smem>>
    %346 = vector.extract_strided_slice %344 {offsets = [0, 0], sizes = [1, 256], strides = [1, 1]} : vector<2x256xf32> to vector<1x256xf32>
    %347 = vector.broadcast %345 : f32 to vector<1x256xf32>
    %348 = arith.mulf %347, %346 : vector<1x256xf32>
    %c71 = arith.constant 71 : index
    %349 = memref.load %arg5[%c71] : memref<98xf32, #tpu.memory_space<smem>>
    %350 = vector.extract_strided_slice %344 {offsets = [1, 0], sizes = [1, 256], strides = [1, 1]} : vector<2x256xf32> to vector<1x256xf32>
    %351 = vector.broadcast %349 : f32 to vector<1x256xf32>
    %352 = arith.mulf %351, %350 : vector<1x256xf32>
    %353 = arith.addf %348, %352 : vector<1x256xf32>
    %c22_86 = arith.constant 22 : index
    %c0_87 = arith.constant 0 : index
    %c0_88 = arith.constant 0 : index
    %354 = vector.load %arg4[%c22_86, %c0_87, %c0_88] : memref<49x1x256xf32, #tpu.memory_space<vmem>>, vector<1x1x256xf32>
    %355 = vector.shape_cast %354 : vector<1x1x256xf32> to vector<1x256xf32>
    %356 = arith.mulf %353, %355 : vector<1x256xf32>
    %357 = arith.addf %301, %356 : vector<1x256xf32>
    %c1_i32 = arith.constant 1 : i32
    %358 = tpu.dynamic_rotate %31 by %c1_i32 dim 1 : vector<2x256xf32>, i32 -> vector<2x256xf32>
    %c23 = arith.constant 23 : index
    %359 = memref.load %arg5[%c23] : memref<98xf32, #tpu.memory_space<smem>>
    %360 = vector.extract_strided_slice %358 {offsets = [0, 0], sizes = [1, 256], strides = [1, 1]} : vector<2x256xf32> to vector<1x256xf32>
    %361 = vector.broadcast %359 : f32 to vector<1x256xf32>
    %362 = arith.mulf %361, %360 : vector<1x256xf32>
    %c72 = arith.constant 72 : index
    %363 = memref.load %arg5[%c72] : memref<98xf32, #tpu.memory_space<smem>>
    %364 = vector.extract_strided_slice %358 {offsets = [1, 0], sizes = [1, 256], strides = [1, 1]} : vector<2x256xf32> to vector<1x256xf32>
    %365 = vector.broadcast %363 : f32 to vector<1x256xf32>
    %366 = arith.mulf %365, %364 : vector<1x256xf32>
    %367 = arith.addf %362, %366 : vector<1x256xf32>
    %c23_89 = arith.constant 23 : index
    %c0_90 = arith.constant 0 : index
    %c0_91 = arith.constant 0 : index
    %368 = vector.load %arg4[%c23_89, %c0_90, %c0_91] : memref<49x1x256xf32, #tpu.memory_space<vmem>>, vector<1x1x256xf32>
    %369 = vector.shape_cast %368 : vector<1x1x256xf32> to vector<1x256xf32>
    %370 = arith.mulf %367, %369 : vector<1x256xf32>
    %371 = arith.addf %315, %370 : vector<1x256xf32>
    %c24 = arith.constant 24 : index
    %372 = memref.load %arg5[%c24] : memref<98xf32, #tpu.memory_space<smem>>
    %373 = vector.extract_strided_slice %31 {offsets = [0, 0], sizes = [1, 256], strides = [1, 1]} : vector<2x256xf32> to vector<1x256xf32>
    %374 = vector.broadcast %372 : f32 to vector<1x256xf32>
    %375 = arith.mulf %374, %373 : vector<1x256xf32>
    %c73 = arith.constant 73 : index
    %376 = memref.load %arg5[%c73] : memref<98xf32, #tpu.memory_space<smem>>
    %377 = vector.extract_strided_slice %31 {offsets = [1, 0], sizes = [1, 256], strides = [1, 1]} : vector<2x256xf32> to vector<1x256xf32>
    %378 = vector.broadcast %376 : f32 to vector<1x256xf32>
    %379 = arith.mulf %378, %377 : vector<1x256xf32>
    %380 = arith.addf %375, %379 : vector<1x256xf32>
    %c24_92 = arith.constant 24 : index
    %c0_93 = arith.constant 0 : index
    %c0_94 = arith.constant 0 : index
    %381 = vector.load %arg4[%c24_92, %c0_93, %c0_94] : memref<49x1x256xf32, #tpu.memory_space<vmem>>, vector<1x1x256xf32>
    %382 = vector.shape_cast %381 : vector<1x1x256xf32> to vector<1x256xf32>
    %383 = arith.mulf %380, %382 : vector<1x256xf32>
    %384 = arith.addf %329, %383 : vector<1x256xf32>
    %c255_i32 = arith.constant 255 : i32
    %385 = tpu.dynamic_rotate %31 by %c255_i32 dim 1 : vector<2x256xf32>, i32 -> vector<2x256xf32>
    %c25 = arith.constant 25 : index
    %386 = memref.load %arg5[%c25] : memref<98xf32, #tpu.memory_space<smem>>
    %387 = vector.extract_strided_slice %385 {offsets = [0, 0], sizes = [1, 256], strides = [1, 1]} : vector<2x256xf32> to vector<1x256xf32>
    %388 = vector.broadcast %386 : f32 to vector<1x256xf32>
    %389 = arith.mulf %388, %387 : vector<1x256xf32>
    %c74 = arith.constant 74 : index
    %390 = memref.load %arg5[%c74] : memref<98xf32, #tpu.memory_space<smem>>
    %391 = vector.extract_strided_slice %385 {offsets = [1, 0], sizes = [1, 256], strides = [1, 1]} : vector<2x256xf32> to vector<1x256xf32>
    %392 = vector.broadcast %390 : f32 to vector<1x256xf32>
    %393 = arith.mulf %392, %391 : vector<1x256xf32>
    %394 = arith.addf %389, %393 : vector<1x256xf32>
    %c25_95 = arith.constant 25 : index
    %c0_96 = arith.constant 0 : index
    %c0_97 = arith.constant 0 : index
    %395 = vector.load %arg4[%c25_95, %c0_96, %c0_97] : memref<49x1x256xf32, #tpu.memory_space<vmem>>, vector<1x1x256xf32>
    %396 = vector.shape_cast %395 : vector<1x1x256xf32> to vector<1x256xf32>
    %397 = arith.mulf %394, %396 : vector<1x256xf32>
    %398 = arith.addf %343, %397 : vector<1x256xf32>
    %c254_i32 = arith.constant 254 : i32
    %399 = tpu.dynamic_rotate %31 by %c254_i32 dim 1 : vector<2x256xf32>, i32 -> vector<2x256xf32>
    %c26 = arith.constant 26 : index
    %400 = memref.load %arg5[%c26] : memref<98xf32, #tpu.memory_space<smem>>
    %401 = vector.extract_strided_slice %399 {offsets = [0, 0], sizes = [1, 256], strides = [1, 1]} : vector<2x256xf32> to vector<1x256xf32>
    %402 = vector.broadcast %400 : f32 to vector<1x256xf32>
    %403 = arith.mulf %402, %401 : vector<1x256xf32>
    %c75 = arith.constant 75 : index
    %404 = memref.load %arg5[%c75] : memref<98xf32, #tpu.memory_space<smem>>
    %405 = vector.extract_strided_slice %399 {offsets = [1, 0], sizes = [1, 256], strides = [1, 1]} : vector<2x256xf32> to vector<1x256xf32>
    %406 = vector.broadcast %404 : f32 to vector<1x256xf32>
    %407 = arith.mulf %406, %405 : vector<1x256xf32>
    %408 = arith.addf %403, %407 : vector<1x256xf32>
    %c26_98 = arith.constant 26 : index
    %c0_99 = arith.constant 0 : index
    %c0_100 = arith.constant 0 : index
    %409 = vector.load %arg4[%c26_98, %c0_99, %c0_100] : memref<49x1x256xf32, #tpu.memory_space<vmem>>, vector<1x1x256xf32>
    %410 = vector.shape_cast %409 : vector<1x1x256xf32> to vector<1x256xf32>
    %411 = arith.mulf %408, %410 : vector<1x256xf32>
    %412 = arith.addf %357, %411 : vector<1x256xf32>
    %c253_i32 = arith.constant 253 : i32
    %413 = tpu.dynamic_rotate %31 by %c253_i32 dim 1 : vector<2x256xf32>, i32 -> vector<2x256xf32>
    %c27 = arith.constant 27 : index
    %414 = memref.load %arg5[%c27] : memref<98xf32, #tpu.memory_space<smem>>
    %415 = vector.extract_strided_slice %413 {offsets = [0, 0], sizes = [1, 256], strides = [1, 1]} : vector<2x256xf32> to vector<1x256xf32>
    %416 = vector.broadcast %414 : f32 to vector<1x256xf32>
    %417 = arith.mulf %416, %415 : vector<1x256xf32>
    %c76 = arith.constant 76 : index
    %418 = memref.load %arg5[%c76] : memref<98xf32, #tpu.memory_space<smem>>
    %419 = vector.extract_strided_slice %413 {offsets = [1, 0], sizes = [1, 256], strides = [1, 1]} : vector<2x256xf32> to vector<1x256xf32>
    %420 = vector.broadcast %418 : f32 to vector<1x256xf32>
    %421 = arith.mulf %420, %419 : vector<1x256xf32>
    %422 = arith.addf %417, %421 : vector<1x256xf32>
    %c27_101 = arith.constant 27 : index
    %c0_102 = arith.constant 0 : index
    %c0_103 = arith.constant 0 : index
    %423 = vector.load %arg4[%c27_101, %c0_102, %c0_103] : memref<49x1x256xf32, #tpu.memory_space<vmem>>, vector<1x1x256xf32>
    %424 = vector.shape_cast %423 : vector<1x1x256xf32> to vector<1x256xf32>
    %425 = arith.mulf %422, %424 : vector<1x256xf32>
    %426 = arith.addf %371, %425 : vector<1x256xf32>
    %c243_i32 = arith.constant 243 : i32
    %427 = tpu.dynamic_rotate %31 by %c243_i32 dim 1 : vector<2x256xf32>, i32 -> vector<2x256xf32>
    %c28 = arith.constant 28 : index
    %428 = memref.load %arg5[%c28] : memref<98xf32, #tpu.memory_space<smem>>
    %429 = vector.extract_strided_slice %427 {offsets = [0, 0], sizes = [1, 256], strides = [1, 1]} : vector<2x256xf32> to vector<1x256xf32>
    %430 = vector.broadcast %428 : f32 to vector<1x256xf32>
    %431 = arith.mulf %430, %429 : vector<1x256xf32>
    %c77 = arith.constant 77 : index
    %432 = memref.load %arg5[%c77] : memref<98xf32, #tpu.memory_space<smem>>
    %433 = vector.extract_strided_slice %427 {offsets = [1, 0], sizes = [1, 256], strides = [1, 1]} : vector<2x256xf32> to vector<1x256xf32>
    %434 = vector.broadcast %432 : f32 to vector<1x256xf32>
    %435 = arith.mulf %434, %433 : vector<1x256xf32>
    %436 = arith.addf %431, %435 : vector<1x256xf32>
    %c28_104 = arith.constant 28 : index
    %c0_105 = arith.constant 0 : index
    %c0_106 = arith.constant 0 : index
    %437 = vector.load %arg4[%c28_104, %c0_105, %c0_106] : memref<49x1x256xf32, #tpu.memory_space<vmem>>, vector<1x1x256xf32>
    %438 = vector.shape_cast %437 : vector<1x1x256xf32> to vector<1x256xf32>
    %439 = arith.mulf %436, %438 : vector<1x256xf32>
    %440 = arith.addf %384, %439 : vector<1x256xf32>
    %c242_i32 = arith.constant 242 : i32
    %441 = tpu.dynamic_rotate %31 by %c242_i32 dim 1 : vector<2x256xf32>, i32 -> vector<2x256xf32>
    %c29 = arith.constant 29 : index
    %442 = memref.load %arg5[%c29] : memref<98xf32, #tpu.memory_space<smem>>
    %443 = vector.extract_strided_slice %441 {offsets = [0, 0], sizes = [1, 256], strides = [1, 1]} : vector<2x256xf32> to vector<1x256xf32>
    %444 = vector.broadcast %442 : f32 to vector<1x256xf32>
    %445 = arith.mulf %444, %443 : vector<1x256xf32>
    %c78 = arith.constant 78 : index
    %446 = memref.load %arg5[%c78] : memref<98xf32, #tpu.memory_space<smem>>
    %447 = vector.extract_strided_slice %441 {offsets = [1, 0], sizes = [1, 256], strides = [1, 1]} : vector<2x256xf32> to vector<1x256xf32>
    %448 = vector.broadcast %446 : f32 to vector<1x256xf32>
    %449 = arith.mulf %448, %447 : vector<1x256xf32>
    %450 = arith.addf %445, %449 : vector<1x256xf32>
    %c29_107 = arith.constant 29 : index
    %c0_108 = arith.constant 0 : index
    %c0_109 = arith.constant 0 : index
    %451 = vector.load %arg4[%c29_107, %c0_108, %c0_109] : memref<49x1x256xf32, #tpu.memory_space<vmem>>, vector<1x1x256xf32>
    %452 = vector.shape_cast %451 : vector<1x1x256xf32> to vector<1x256xf32>
    %453 = arith.mulf %450, %452 : vector<1x256xf32>
    %454 = arith.addf %398, %453 : vector<1x256xf32>
    %c241_i32 = arith.constant 241 : i32
    %455 = tpu.dynamic_rotate %31 by %c241_i32 dim 1 : vector<2x256xf32>, i32 -> vector<2x256xf32>
    %c30 = arith.constant 30 : index
    %456 = memref.load %arg5[%c30] : memref<98xf32, #tpu.memory_space<smem>>
    %457 = vector.extract_strided_slice %455 {offsets = [0, 0], sizes = [1, 256], strides = [1, 1]} : vector<2x256xf32> to vector<1x256xf32>
    %458 = vector.broadcast %456 : f32 to vector<1x256xf32>
    %459 = arith.mulf %458, %457 : vector<1x256xf32>
    %c79 = arith.constant 79 : index
    %460 = memref.load %arg5[%c79] : memref<98xf32, #tpu.memory_space<smem>>
    %461 = vector.extract_strided_slice %455 {offsets = [1, 0], sizes = [1, 256], strides = [1, 1]} : vector<2x256xf32> to vector<1x256xf32>
    %462 = vector.broadcast %460 : f32 to vector<1x256xf32>
    %463 = arith.mulf %462, %461 : vector<1x256xf32>
    %464 = arith.addf %459, %463 : vector<1x256xf32>
    %c30_110 = arith.constant 30 : index
    %c0_111 = arith.constant 0 : index
    %c0_112 = arith.constant 0 : index
    %465 = vector.load %arg4[%c30_110, %c0_111, %c0_112] : memref<49x1x256xf32, #tpu.memory_space<vmem>>, vector<1x1x256xf32>
    %466 = vector.shape_cast %465 : vector<1x1x256xf32> to vector<1x256xf32>
    %467 = arith.mulf %464, %466 : vector<1x256xf32>
    %468 = arith.addf %412, %467 : vector<1x256xf32>
    %c240_i32 = arith.constant 240 : i32
    %469 = tpu.dynamic_rotate %31 by %c240_i32 dim 1 : vector<2x256xf32>, i32 -> vector<2x256xf32>
    %c31 = arith.constant 31 : index
    %470 = memref.load %arg5[%c31] : memref<98xf32, #tpu.memory_space<smem>>
    %471 = vector.extract_strided_slice %469 {offsets = [0, 0], sizes = [1, 256], strides = [1, 1]} : vector<2x256xf32> to vector<1x256xf32>
    %472 = vector.broadcast %470 : f32 to vector<1x256xf32>
    %473 = arith.mulf %472, %471 : vector<1x256xf32>
    %c80 = arith.constant 80 : index
    %474 = memref.load %arg5[%c80] : memref<98xf32, #tpu.memory_space<smem>>
    %475 = vector.extract_strided_slice %469 {offsets = [1, 0], sizes = [1, 256], strides = [1, 1]} : vector<2x256xf32> to vector<1x256xf32>
    %476 = vector.broadcast %474 : f32 to vector<1x256xf32>
    %477 = arith.mulf %476, %475 : vector<1x256xf32>
    %478 = arith.addf %473, %477 : vector<1x256xf32>
    %c31_113 = arith.constant 31 : index
    %c0_114 = arith.constant 0 : index
    %c0_115 = arith.constant 0 : index
    %479 = vector.load %arg4[%c31_113, %c0_114, %c0_115] : memref<49x1x256xf32, #tpu.memory_space<vmem>>, vector<1x1x256xf32>
    %480 = vector.shape_cast %479 : vector<1x1x256xf32> to vector<1x256xf32>
    %481 = arith.mulf %478, %480 : vector<1x256xf32>
    %482 = arith.addf %426, %481 : vector<1x256xf32>
    %c239_i32 = arith.constant 239 : i32
    %483 = tpu.dynamic_rotate %31 by %c239_i32 dim 1 : vector<2x256xf32>, i32 -> vector<2x256xf32>
    %c32 = arith.constant 32 : index
    %484 = memref.load %arg5[%c32] : memref<98xf32, #tpu.memory_space<smem>>
    %485 = vector.extract_strided_slice %483 {offsets = [0, 0], sizes = [1, 256], strides = [1, 1]} : vector<2x256xf32> to vector<1x256xf32>
    %486 = vector.broadcast %484 : f32 to vector<1x256xf32>
    %487 = arith.mulf %486, %485 : vector<1x256xf32>
    %c81 = arith.constant 81 : index
    %488 = memref.load %arg5[%c81] : memref<98xf32, #tpu.memory_space<smem>>
    %489 = vector.extract_strided_slice %483 {offsets = [1, 0], sizes = [1, 256], strides = [1, 1]} : vector<2x256xf32> to vector<1x256xf32>
    %490 = vector.broadcast %488 : f32 to vector<1x256xf32>
    %491 = arith.mulf %490, %489 : vector<1x256xf32>
    %492 = arith.addf %487, %491 : vector<1x256xf32>
    %c32_116 = arith.constant 32 : index
    %c0_117 = arith.constant 0 : index
    %c0_118 = arith.constant 0 : index
    %493 = vector.load %arg4[%c32_116, %c0_117, %c0_118] : memref<49x1x256xf32, #tpu.memory_space<vmem>>, vector<1x1x256xf32>
    %494 = vector.shape_cast %493 : vector<1x1x256xf32> to vector<1x256xf32>
    %495 = arith.mulf %492, %494 : vector<1x256xf32>
    %496 = arith.addf %440, %495 : vector<1x256xf32>
    %c238_i32 = arith.constant 238 : i32
    %497 = tpu.dynamic_rotate %31 by %c238_i32 dim 1 : vector<2x256xf32>, i32 -> vector<2x256xf32>
    %c33 = arith.constant 33 : index
    %498 = memref.load %arg5[%c33] : memref<98xf32, #tpu.memory_space<smem>>
    %499 = vector.extract_strided_slice %497 {offsets = [0, 0], sizes = [1, 256], strides = [1, 1]} : vector<2x256xf32> to vector<1x256xf32>
    %500 = vector.broadcast %498 : f32 to vector<1x256xf32>
    %501 = arith.mulf %500, %499 : vector<1x256xf32>
    %c82 = arith.constant 82 : index
    %502 = memref.load %arg5[%c82] : memref<98xf32, #tpu.memory_space<smem>>
    %503 = vector.extract_strided_slice %497 {offsets = [1, 0], sizes = [1, 256], strides = [1, 1]} : vector<2x256xf32> to vector<1x256xf32>
    %504 = vector.broadcast %502 : f32 to vector<1x256xf32>
    %505 = arith.mulf %504, %503 : vector<1x256xf32>
    %506 = arith.addf %501, %505 : vector<1x256xf32>
    %c33_119 = arith.constant 33 : index
    %c0_120 = arith.constant 0 : index
    %c0_121 = arith.constant 0 : index
    %507 = vector.load %arg4[%c33_119, %c0_120, %c0_121] : memref<49x1x256xf32, #tpu.memory_space<vmem>>, vector<1x1x256xf32>
    %508 = vector.shape_cast %507 : vector<1x1x256xf32> to vector<1x256xf32>
    %509 = arith.mulf %506, %508 : vector<1x256xf32>
    %510 = arith.addf %454, %509 : vector<1x256xf32>
    %c237_i32 = arith.constant 237 : i32
    %511 = tpu.dynamic_rotate %31 by %c237_i32 dim 1 : vector<2x256xf32>, i32 -> vector<2x256xf32>
    %c34 = arith.constant 34 : index
    %512 = memref.load %arg5[%c34] : memref<98xf32, #tpu.memory_space<smem>>
    %513 = vector.extract_strided_slice %511 {offsets = [0, 0], sizes = [1, 256], strides = [1, 1]} : vector<2x256xf32> to vector<1x256xf32>
    %514 = vector.broadcast %512 : f32 to vector<1x256xf32>
    %515 = arith.mulf %514, %513 : vector<1x256xf32>
    %c83 = arith.constant 83 : index
    %516 = memref.load %arg5[%c83] : memref<98xf32, #tpu.memory_space<smem>>
    %517 = vector.extract_strided_slice %511 {offsets = [1, 0], sizes = [1, 256], strides = [1, 1]} : vector<2x256xf32> to vector<1x256xf32>
    %518 = vector.broadcast %516 : f32 to vector<1x256xf32>
    %519 = arith.mulf %518, %517 : vector<1x256xf32>
    %520 = arith.addf %515, %519 : vector<1x256xf32>
    %c34_122 = arith.constant 34 : index
    %c0_123 = arith.constant 0 : index
    %c0_124 = arith.constant 0 : index
    %521 = vector.load %arg4[%c34_122, %c0_123, %c0_124] : memref<49x1x256xf32, #tpu.memory_space<vmem>>, vector<1x1x256xf32>
    %522 = vector.shape_cast %521 : vector<1x1x256xf32> to vector<1x256xf32>
    %523 = arith.mulf %520, %522 : vector<1x256xf32>
    %524 = arith.addf %468, %523 : vector<1x256xf32>
    %c227_i32 = arith.constant 227 : i32
    %525 = tpu.dynamic_rotate %31 by %c227_i32 dim 1 : vector<2x256xf32>, i32 -> vector<2x256xf32>
    %c35 = arith.constant 35 : index
    %526 = memref.load %arg5[%c35] : memref<98xf32, #tpu.memory_space<smem>>
    %527 = vector.extract_strided_slice %525 {offsets = [0, 0], sizes = [1, 256], strides = [1, 1]} : vector<2x256xf32> to vector<1x256xf32>
    %528 = vector.broadcast %526 : f32 to vector<1x256xf32>
    %529 = arith.mulf %528, %527 : vector<1x256xf32>
    %c84 = arith.constant 84 : index
    %530 = memref.load %arg5[%c84] : memref<98xf32, #tpu.memory_space<smem>>
    %531 = vector.extract_strided_slice %525 {offsets = [1, 0], sizes = [1, 256], strides = [1, 1]} : vector<2x256xf32> to vector<1x256xf32>
    %532 = vector.broadcast %530 : f32 to vector<1x256xf32>
    %533 = arith.mulf %532, %531 : vector<1x256xf32>
    %534 = arith.addf %529, %533 : vector<1x256xf32>
    %c35_125 = arith.constant 35 : index
    %c0_126 = arith.constant 0 : index
    %c0_127 = arith.constant 0 : index
    %535 = vector.load %arg4[%c35_125, %c0_126, %c0_127] : memref<49x1x256xf32, #tpu.memory_space<vmem>>, vector<1x1x256xf32>
    %536 = vector.shape_cast %535 : vector<1x1x256xf32> to vector<1x256xf32>
    %537 = arith.mulf %534, %536 : vector<1x256xf32>
    %538 = arith.addf %482, %537 : vector<1x256xf32>
    %c226_i32 = arith.constant 226 : i32
    %539 = tpu.dynamic_rotate %31 by %c226_i32 dim 1 : vector<2x256xf32>, i32 -> vector<2x256xf32>
    %c36 = arith.constant 36 : index
    %540 = memref.load %arg5[%c36] : memref<98xf32, #tpu.memory_space<smem>>
    %541 = vector.extract_strided_slice %539 {offsets = [0, 0], sizes = [1, 256], strides = [1, 1]} : vector<2x256xf32> to vector<1x256xf32>
    %542 = vector.broadcast %540 : f32 to vector<1x256xf32>
    %543 = arith.mulf %542, %541 : vector<1x256xf32>
    %c85 = arith.constant 85 : index
    %544 = memref.load %arg5[%c85] : memref<98xf32, #tpu.memory_space<smem>>
    %545 = vector.extract_strided_slice %539 {offsets = [1, 0], sizes = [1, 256], strides = [1, 1]} : vector<2x256xf32> to vector<1x256xf32>
    %546 = vector.broadcast %544 : f32 to vector<1x256xf32>
    %547 = arith.mulf %546, %545 : vector<1x256xf32>
    %548 = arith.addf %543, %547 : vector<1x256xf32>
    %c36_128 = arith.constant 36 : index
    %c0_129 = arith.constant 0 : index
    %c0_130 = arith.constant 0 : index
    %549 = vector.load %arg4[%c36_128, %c0_129, %c0_130] : memref<49x1x256xf32, #tpu.memory_space<vmem>>, vector<1x1x256xf32>
    %550 = vector.shape_cast %549 : vector<1x1x256xf32> to vector<1x256xf32>
    %551 = arith.mulf %548, %550 : vector<1x256xf32>
    %552 = arith.addf %496, %551 : vector<1x256xf32>
    %c225_i32 = arith.constant 225 : i32
    %553 = tpu.dynamic_rotate %31 by %c225_i32 dim 1 : vector<2x256xf32>, i32 -> vector<2x256xf32>
    %c37 = arith.constant 37 : index
    %554 = memref.load %arg5[%c37] : memref<98xf32, #tpu.memory_space<smem>>
    %555 = vector.extract_strided_slice %553 {offsets = [0, 0], sizes = [1, 256], strides = [1, 1]} : vector<2x256xf32> to vector<1x256xf32>
    %556 = vector.broadcast %554 : f32 to vector<1x256xf32>
    %557 = arith.mulf %556, %555 : vector<1x256xf32>
    %c86 = arith.constant 86 : index
    %558 = memref.load %arg5[%c86] : memref<98xf32, #tpu.memory_space<smem>>
    %559 = vector.extract_strided_slice %553 {offsets = [1, 0], sizes = [1, 256], strides = [1, 1]} : vector<2x256xf32> to vector<1x256xf32>
    %560 = vector.broadcast %558 : f32 to vector<1x256xf32>
    %561 = arith.mulf %560, %559 : vector<1x256xf32>
    %562 = arith.addf %557, %561 : vector<1x256xf32>
    %c37_131 = arith.constant 37 : index
    %c0_132 = arith.constant 0 : index
    %c0_133 = arith.constant 0 : index
    %563 = vector.load %arg4[%c37_131, %c0_132, %c0_133] : memref<49x1x256xf32, #tpu.memory_space<vmem>>, vector<1x1x256xf32>
    %564 = vector.shape_cast %563 : vector<1x1x256xf32> to vector<1x256xf32>
    %565 = arith.mulf %562, %564 : vector<1x256xf32>
    %566 = arith.addf %510, %565 : vector<1x256xf32>
    %c224_i32 = arith.constant 224 : i32
    %567 = tpu.dynamic_rotate %31 by %c224_i32 dim 1 : vector<2x256xf32>, i32 -> vector<2x256xf32>
    %c38 = arith.constant 38 : index
    %568 = memref.load %arg5[%c38] : memref<98xf32, #tpu.memory_space<smem>>
    %569 = vector.extract_strided_slice %567 {offsets = [0, 0], sizes = [1, 256], strides = [1, 1]} : vector<2x256xf32> to vector<1x256xf32>
    %570 = vector.broadcast %568 : f32 to vector<1x256xf32>
    %571 = arith.mulf %570, %569 : vector<1x256xf32>
    %c87 = arith.constant 87 : index
    %572 = memref.load %arg5[%c87] : memref<98xf32, #tpu.memory_space<smem>>
    %573 = vector.extract_strided_slice %567 {offsets = [1, 0], sizes = [1, 256], strides = [1, 1]} : vector<2x256xf32> to vector<1x256xf32>
    %574 = vector.broadcast %572 : f32 to vector<1x256xf32>
    %575 = arith.mulf %574, %573 : vector<1x256xf32>
    %576 = arith.addf %571, %575 : vector<1x256xf32>
    %c38_134 = arith.constant 38 : index
    %c0_135 = arith.constant 0 : index
    %c0_136 = arith.constant 0 : index
    %577 = vector.load %arg4[%c38_134, %c0_135, %c0_136] : memref<49x1x256xf32, #tpu.memory_space<vmem>>, vector<1x1x256xf32>
    %578 = vector.shape_cast %577 : vector<1x1x256xf32> to vector<1x256xf32>
    %579 = arith.mulf %576, %578 : vector<1x256xf32>
    %580 = arith.addf %524, %579 : vector<1x256xf32>
    %c223_i32 = arith.constant 223 : i32
    %581 = tpu.dynamic_rotate %31 by %c223_i32 dim 1 : vector<2x256xf32>, i32 -> vector<2x256xf32>
    %c39 = arith.constant 39 : index
    %582 = memref.load %arg5[%c39] : memref<98xf32, #tpu.memory_space<smem>>
    %583 = vector.extract_strided_slice %581 {offsets = [0, 0], sizes = [1, 256], strides = [1, 1]} : vector<2x256xf32> to vector<1x256xf32>
    %584 = vector.broadcast %582 : f32 to vector<1x256xf32>
    %585 = arith.mulf %584, %583 : vector<1x256xf32>
    %c88 = arith.constant 88 : index
    %586 = memref.load %arg5[%c88] : memref<98xf32, #tpu.memory_space<smem>>
    %587 = vector.extract_strided_slice %581 {offsets = [1, 0], sizes = [1, 256], strides = [1, 1]} : vector<2x256xf32> to vector<1x256xf32>
    %588 = vector.broadcast %586 : f32 to vector<1x256xf32>
    %589 = arith.mulf %588, %587 : vector<1x256xf32>
    %590 = arith.addf %585, %589 : vector<1x256xf32>
    %c39_137 = arith.constant 39 : index
    %c0_138 = arith.constant 0 : index
    %c0_139 = arith.constant 0 : index
    %591 = vector.load %arg4[%c39_137, %c0_138, %c0_139] : memref<49x1x256xf32, #tpu.memory_space<vmem>>, vector<1x1x256xf32>
    %592 = vector.shape_cast %591 : vector<1x1x256xf32> to vector<1x256xf32>
    %593 = arith.mulf %590, %592 : vector<1x256xf32>
    %594 = arith.addf %538, %593 : vector<1x256xf32>
    %c222_i32 = arith.constant 222 : i32
    %595 = tpu.dynamic_rotate %31 by %c222_i32 dim 1 : vector<2x256xf32>, i32 -> vector<2x256xf32>
    %c40 = arith.constant 40 : index
    %596 = memref.load %arg5[%c40] : memref<98xf32, #tpu.memory_space<smem>>
    %597 = vector.extract_strided_slice %595 {offsets = [0, 0], sizes = [1, 256], strides = [1, 1]} : vector<2x256xf32> to vector<1x256xf32>
    %598 = vector.broadcast %596 : f32 to vector<1x256xf32>
    %599 = arith.mulf %598, %597 : vector<1x256xf32>
    %c89 = arith.constant 89 : index
    %600 = memref.load %arg5[%c89] : memref<98xf32, #tpu.memory_space<smem>>
    %601 = vector.extract_strided_slice %595 {offsets = [1, 0], sizes = [1, 256], strides = [1, 1]} : vector<2x256xf32> to vector<1x256xf32>
    %602 = vector.broadcast %600 : f32 to vector<1x256xf32>
    %603 = arith.mulf %602, %601 : vector<1x256xf32>
    %604 = arith.addf %599, %603 : vector<1x256xf32>
    %c40_140 = arith.constant 40 : index
    %c0_141 = arith.constant 0 : index
    %c0_142 = arith.constant 0 : index
    %605 = vector.load %arg4[%c40_140, %c0_141, %c0_142] : memref<49x1x256xf32, #tpu.memory_space<vmem>>, vector<1x1x256xf32>
    %606 = vector.shape_cast %605 : vector<1x1x256xf32> to vector<1x256xf32>
    %607 = arith.mulf %604, %606 : vector<1x256xf32>
    %608 = arith.addf %552, %607 : vector<1x256xf32>
    %c221_i32 = arith.constant 221 : i32
    %609 = tpu.dynamic_rotate %31 by %c221_i32 dim 1 : vector<2x256xf32>, i32 -> vector<2x256xf32>
    %c41 = arith.constant 41 : index
    %610 = memref.load %arg5[%c41] : memref<98xf32, #tpu.memory_space<smem>>
    %611 = vector.extract_strided_slice %609 {offsets = [0, 0], sizes = [1, 256], strides = [1, 1]} : vector<2x256xf32> to vector<1x256xf32>
    %612 = vector.broadcast %610 : f32 to vector<1x256xf32>
    %613 = arith.mulf %612, %611 : vector<1x256xf32>
    %c90 = arith.constant 90 : index
    %614 = memref.load %arg5[%c90] : memref<98xf32, #tpu.memory_space<smem>>
    %615 = vector.extract_strided_slice %609 {offsets = [1, 0], sizes = [1, 256], strides = [1, 1]} : vector<2x256xf32> to vector<1x256xf32>
    %616 = vector.broadcast %614 : f32 to vector<1x256xf32>
    %617 = arith.mulf %616, %615 : vector<1x256xf32>
    %618 = arith.addf %613, %617 : vector<1x256xf32>
    %c41_143 = arith.constant 41 : index
    %c0_144 = arith.constant 0 : index
    %c0_145 = arith.constant 0 : index
    %619 = vector.load %arg4[%c41_143, %c0_144, %c0_145] : memref<49x1x256xf32, #tpu.memory_space<vmem>>, vector<1x1x256xf32>
    %620 = vector.shape_cast %619 : vector<1x1x256xf32> to vector<1x256xf32>
    %621 = arith.mulf %618, %620 : vector<1x256xf32>
    %622 = arith.addf %566, %621 : vector<1x256xf32>
    %c211_i32 = arith.constant 211 : i32
    %623 = tpu.dynamic_rotate %31 by %c211_i32 dim 1 : vector<2x256xf32>, i32 -> vector<2x256xf32>
    %c42 = arith.constant 42 : index
    %624 = memref.load %arg5[%c42] : memref<98xf32, #tpu.memory_space<smem>>
    %625 = vector.extract_strided_slice %623 {offsets = [0, 0], sizes = [1, 256], strides = [1, 1]} : vector<2x256xf32> to vector<1x256xf32>
    %626 = vector.broadcast %624 : f32 to vector<1x256xf32>
    %627 = arith.mulf %626, %625 : vector<1x256xf32>
    %c91 = arith.constant 91 : index
    %628 = memref.load %arg5[%c91] : memref<98xf32, #tpu.memory_space<smem>>
    %629 = vector.extract_strided_slice %623 {offsets = [1, 0], sizes = [1, 256], strides = [1, 1]} : vector<2x256xf32> to vector<1x256xf32>
    %630 = vector.broadcast %628 : f32 to vector<1x256xf32>
    %631 = arith.mulf %630, %629 : vector<1x256xf32>
    %632 = arith.addf %627, %631 : vector<1x256xf32>
    %c42_146 = arith.constant 42 : index
    %c0_147 = arith.constant 0 : index
    %c0_148 = arith.constant 0 : index
    %633 = vector.load %arg4[%c42_146, %c0_147, %c0_148] : memref<49x1x256xf32, #tpu.memory_space<vmem>>, vector<1x1x256xf32>
    %634 = vector.shape_cast %633 : vector<1x1x256xf32> to vector<1x256xf32>
    %635 = arith.mulf %632, %634 : vector<1x256xf32>
    %636 = arith.addf %580, %635 : vector<1x256xf32>
    %c210_i32 = arith.constant 210 : i32
    %637 = tpu.dynamic_rotate %31 by %c210_i32 dim 1 : vector<2x256xf32>, i32 -> vector<2x256xf32>
    %c43 = arith.constant 43 : index
    %638 = memref.load %arg5[%c43] : memref<98xf32, #tpu.memory_space<smem>>
    %639 = vector.extract_strided_slice %637 {offsets = [0, 0], sizes = [1, 256], strides = [1, 1]} : vector<2x256xf32> to vector<1x256xf32>
    %640 = vector.broadcast %638 : f32 to vector<1x256xf32>
    %641 = arith.mulf %640, %639 : vector<1x256xf32>
    %c92 = arith.constant 92 : index
    %642 = memref.load %arg5[%c92] : memref<98xf32, #tpu.memory_space<smem>>
    %643 = vector.extract_strided_slice %637 {offsets = [1, 0], sizes = [1, 256], strides = [1, 1]} : vector<2x256xf32> to vector<1x256xf32>
    %644 = vector.broadcast %642 : f32 to vector<1x256xf32>
    %645 = arith.mulf %644, %643 : vector<1x256xf32>
    %646 = arith.addf %641, %645 : vector<1x256xf32>
    %c43_149 = arith.constant 43 : index
    %c0_150 = arith.constant 0 : index
    %c0_151 = arith.constant 0 : index
    %647 = vector.load %arg4[%c43_149, %c0_150, %c0_151] : memref<49x1x256xf32, #tpu.memory_space<vmem>>, vector<1x1x256xf32>
    %648 = vector.shape_cast %647 : vector<1x1x256xf32> to vector<1x256xf32>
    %649 = arith.mulf %646, %648 : vector<1x256xf32>
    %650 = arith.addf %594, %649 : vector<1x256xf32>
    %c209_i32 = arith.constant 209 : i32
    %651 = tpu.dynamic_rotate %31 by %c209_i32 dim 1 : vector<2x256xf32>, i32 -> vector<2x256xf32>
    %c44 = arith.constant 44 : index
    %652 = memref.load %arg5[%c44] : memref<98xf32, #tpu.memory_space<smem>>
    %653 = vector.extract_strided_slice %651 {offsets = [0, 0], sizes = [1, 256], strides = [1, 1]} : vector<2x256xf32> to vector<1x256xf32>
    %654 = vector.broadcast %652 : f32 to vector<1x256xf32>
    %655 = arith.mulf %654, %653 : vector<1x256xf32>
    %c93 = arith.constant 93 : index
    %656 = memref.load %arg5[%c93] : memref<98xf32, #tpu.memory_space<smem>>
    %657 = vector.extract_strided_slice %651 {offsets = [1, 0], sizes = [1, 256], strides = [1, 1]} : vector<2x256xf32> to vector<1x256xf32>
    %658 = vector.broadcast %656 : f32 to vector<1x256xf32>
    %659 = arith.mulf %658, %657 : vector<1x256xf32>
    %660 = arith.addf %655, %659 : vector<1x256xf32>
    %c44_152 = arith.constant 44 : index
    %c0_153 = arith.constant 0 : index
    %c0_154 = arith.constant 0 : index
    %661 = vector.load %arg4[%c44_152, %c0_153, %c0_154] : memref<49x1x256xf32, #tpu.memory_space<vmem>>, vector<1x1x256xf32>
    %662 = vector.shape_cast %661 : vector<1x1x256xf32> to vector<1x256xf32>
    %663 = arith.mulf %660, %662 : vector<1x256xf32>
    %664 = arith.addf %608, %663 : vector<1x256xf32>
    %c208_i32 = arith.constant 208 : i32
    %665 = tpu.dynamic_rotate %31 by %c208_i32 dim 1 : vector<2x256xf32>, i32 -> vector<2x256xf32>
    %c45 = arith.constant 45 : index
    %666 = memref.load %arg5[%c45] : memref<98xf32, #tpu.memory_space<smem>>
    %667 = vector.extract_strided_slice %665 {offsets = [0, 0], sizes = [1, 256], strides = [1, 1]} : vector<2x256xf32> to vector<1x256xf32>
    %668 = vector.broadcast %666 : f32 to vector<1x256xf32>
    %669 = arith.mulf %668, %667 : vector<1x256xf32>
    %c94 = arith.constant 94 : index
    %670 = memref.load %arg5[%c94] : memref<98xf32, #tpu.memory_space<smem>>
    %671 = vector.extract_strided_slice %665 {offsets = [1, 0], sizes = [1, 256], strides = [1, 1]} : vector<2x256xf32> to vector<1x256xf32>
    %672 = vector.broadcast %670 : f32 to vector<1x256xf32>
    %673 = arith.mulf %672, %671 : vector<1x256xf32>
    %674 = arith.addf %669, %673 : vector<1x256xf32>
    %c45_155 = arith.constant 45 : index
    %c0_156 = arith.constant 0 : index
    %c0_157 = arith.constant 0 : index
    %675 = vector.load %arg4[%c45_155, %c0_156, %c0_157] : memref<49x1x256xf32, #tpu.memory_space<vmem>>, vector<1x1x256xf32>
    %676 = vector.shape_cast %675 : vector<1x1x256xf32> to vector<1x256xf32>
    %677 = arith.mulf %674, %676 : vector<1x256xf32>
    %678 = arith.addf %622, %677 : vector<1x256xf32>
    %c207_i32 = arith.constant 207 : i32
    %679 = tpu.dynamic_rotate %31 by %c207_i32 dim 1 : vector<2x256xf32>, i32 -> vector<2x256xf32>
    %c46 = arith.constant 46 : index
    %680 = memref.load %arg5[%c46] : memref<98xf32, #tpu.memory_space<smem>>
    %681 = vector.extract_strided_slice %679 {offsets = [0, 0], sizes = [1, 256], strides = [1, 1]} : vector<2x256xf32> to vector<1x256xf32>
    %682 = vector.broadcast %680 : f32 to vector<1x256xf32>
    %683 = arith.mulf %682, %681 : vector<1x256xf32>
    %c95 = arith.constant 95 : index
    %684 = memref.load %arg5[%c95] : memref<98xf32, #tpu.memory_space<smem>>
    %685 = vector.extract_strided_slice %679 {offsets = [1, 0], sizes = [1, 256], strides = [1, 1]} : vector<2x256xf32> to vector<1x256xf32>
    %686 = vector.broadcast %684 : f32 to vector<1x256xf32>
    %687 = arith.mulf %686, %685 : vector<1x256xf32>
    %688 = arith.addf %683, %687 : vector<1x256xf32>
    %c46_158 = arith.constant 46 : index
    %c0_159 = arith.constant 0 : index
    %c0_160 = arith.constant 0 : index
    %689 = vector.load %arg4[%c46_158, %c0_159, %c0_160] : memref<49x1x256xf32, #tpu.memory_space<vmem>>, vector<1x1x256xf32>
    %690 = vector.shape_cast %689 : vector<1x1x256xf32> to vector<1x256xf32>
    %691 = arith.mulf %688, %690 : vector<1x256xf32>
    %692 = arith.addf %636, %691 : vector<1x256xf32>
    %c206_i32 = arith.constant 206 : i32
    %693 = tpu.dynamic_rotate %31 by %c206_i32 dim 1 : vector<2x256xf32>, i32 -> vector<2x256xf32>
    %c47 = arith.constant 47 : index
    %694 = memref.load %arg5[%c47] : memref<98xf32, #tpu.memory_space<smem>>
    %695 = vector.extract_strided_slice %693 {offsets = [0, 0], sizes = [1, 256], strides = [1, 1]} : vector<2x256xf32> to vector<1x256xf32>
    %696 = vector.broadcast %694 : f32 to vector<1x256xf32>
    %697 = arith.mulf %696, %695 : vector<1x256xf32>
    %c96 = arith.constant 96 : index
    %698 = memref.load %arg5[%c96] : memref<98xf32, #tpu.memory_space<smem>>
    %699 = vector.extract_strided_slice %693 {offsets = [1, 0], sizes = [1, 256], strides = [1, 1]} : vector<2x256xf32> to vector<1x256xf32>
    %700 = vector.broadcast %698 : f32 to vector<1x256xf32>
    %701 = arith.mulf %700, %699 : vector<1x256xf32>
    %702 = arith.addf %697, %701 : vector<1x256xf32>
    %c47_161 = arith.constant 47 : index
    %c0_162 = arith.constant 0 : index
    %c0_163 = arith.constant 0 : index
    %703 = vector.load %arg4[%c47_161, %c0_162, %c0_163] : memref<49x1x256xf32, #tpu.memory_space<vmem>>, vector<1x1x256xf32>
    %704 = vector.shape_cast %703 : vector<1x1x256xf32> to vector<1x256xf32>
    %705 = arith.mulf %702, %704 : vector<1x256xf32>
    %706 = arith.addf %650, %705 : vector<1x256xf32>
    %c205_i32 = arith.constant 205 : i32
    %707 = tpu.dynamic_rotate %31 by %c205_i32 dim 1 : vector<2x256xf32>, i32 -> vector<2x256xf32>
    %c48 = arith.constant 48 : index
    %708 = memref.load %arg5[%c48] : memref<98xf32, #tpu.memory_space<smem>>
    %709 = vector.extract_strided_slice %707 {offsets = [0, 0], sizes = [1, 256], strides = [1, 1]} : vector<2x256xf32> to vector<1x256xf32>
    %710 = vector.broadcast %708 : f32 to vector<1x256xf32>
    %711 = arith.mulf %710, %709 : vector<1x256xf32>
    %c97 = arith.constant 97 : index
    %712 = memref.load %arg5[%c97] : memref<98xf32, #tpu.memory_space<smem>>
    %713 = vector.extract_strided_slice %707 {offsets = [1, 0], sizes = [1, 256], strides = [1, 1]} : vector<2x256xf32> to vector<1x256xf32>
    %714 = vector.broadcast %712 : f32 to vector<1x256xf32>
    %715 = arith.mulf %714, %713 : vector<1x256xf32>
    %716 = arith.addf %711, %715 : vector<1x256xf32>
    %c48_164 = arith.constant 48 : index
    %c0_165 = arith.constant 0 : index
    %c0_166 = arith.constant 0 : index
    %717 = vector.load %arg4[%c48_164, %c0_165, %c0_166] : memref<49x1x256xf32, #tpu.memory_space<vmem>>, vector<1x1x256xf32>
    %718 = vector.shape_cast %717 : vector<1x1x256xf32> to vector<1x256xf32>
    %719 = arith.mulf %716, %718 : vector<1x256xf32>
    %720 = arith.addf %664, %719 : vector<1x256xf32>
    %721 = arith.addf %720, %678 : vector<1x256xf32>
    %722 = arith.addf %721, %692 : vector<1x256xf32>
    %723 = arith.addf %722, %706 : vector<1x256xf32>
    %724 = arith.negf %723 : vector<1x256xf32>
    %725 = math.exp %724 : vector<1x256xf32>
    %cst_167 = arith.constant 1.000000e+00 : f32
    %726 = vector.broadcast %cst_167 : f32 to vector<1x256xf32>
    %727 = arith.addf %726, %725 : vector<1x256xf32>
    %728 = arith.divf %726, %727 : vector<1x256xf32>
    %729 = vector.broadcast %728 : vector<1x256xf32> to vector<16x256xf32>
    %730 = arith.mulf %24, %729 : vector<16x256xf32>
    %c0_168 = arith.constant 0 : index
    %c0_169 = arith.constant 0 : index
    %c0_170 = arith.constant 0 : index
    %731 = vector.load %arg6[%c0_168, %c0_169, %c0_170] : memref<1x16x256xf32, #tpu.memory_space<vmem>>, vector<1x16x256xf32>
    %732 = vector.shape_cast %731 : vector<1x16x256xf32> to vector<16x256xf32>
    %733 = vector.shape_cast %730 : vector<16x256xf32> to vector<1x16x256xf32>
    tpu.vector_store %arg6[%c0_168, %c0_169, %c0_170], %733 {strides = array<i32>} : memref<1x16x256xf32, #tpu.memory_space<vmem>>, vector<1x16x256xf32>,
    return
  }
  func.func @transform_0(%arg0: i32) -> (i32, i32, i32) {
    %c0_i32 = arith.constant 0 : i32
    %c0_i32_0 = arith.constant 0 : i32
    %c0_i32_1 = arith.constant 0 : i32
    return %arg0, %c0_i32, %c0_i32_0 : i32, i32, i32
  }
  func.func @transform_1(%arg0: i32) -> (i32, i32) {
    %c0_i32 = arith.constant 0 : i32
    %c0_i32_0 = arith.constant 0 : i32
    %c0_i32_1 = arith.constant 0 : i32
    return %c0_i32, %c0_i32_0 : i32, i32
  }
  func.func @transform_2(%arg0: i32) -> (i32, i32) {
    %c0_i32 = arith.constant 0 : i32
    %c0_i32_0 = arith.constant 0 : i32
    %c0_i32_1 = arith.constant 0 : i32
    return %c0_i32, %c0_i32_0 : i32, i32
  }
  func.func @transform_3(%arg0: i32) -> (i32, i32, i32) {
    %c0_i32 = arith.constant 0 : i32
    %c0_i32_0 = arith.constant 0 : i32
    %c0_i32_1 = arith.constant 0 : i32
    %c0_i32_2 = arith.constant 0 : i32
    return %c0_i32, %c0_i32_0, %c0_i32_1 : i32, i32, i32
  }
  func.func @transform_4(%arg0: i32) -> i32 {
    %c0_i32 = arith.constant 0 : i32
    %c0_i32_0 = arith.constant 0 : i32
    return %c0_i32 : i32
  }
  func.func @transform_5(%arg0: i32) -> (i32, i32, i32) {
    %c0_i32 = arith.constant 0 : i32
    %c0_i32_0 = arith.constant 0 : i32
    %c0_i32_1 = arith.constant 0 : i32
    return %arg0, %c0_i32, %c0_i32_0 : i32, i32, i32
  }
}

module attributes {stable_mosaic.version = 11 : i64} {
  func.func @_conv3x3_kernel(%arg0: i32, %arg1: memref<1x32x256xf32, #tpu.memory_space<vmem>>, %arg2: memref<9x2x32xbf16, #tpu.memory_space<vmem>>, %arg3: memref<9x1x256xf32, #tpu.memory_space<vmem>>, %arg4: memref<2x1xf32, #tpu.memory_space<vmem>>, %arg5: memref<1x2x256xf32, #tpu.memory_space<vmem>>) attributes {dimension_semantics = [#tpu.dimension_semantics<parallel>], iteration_bounds = array<i64: 2>, scalar_prefetch = 0 : i64, scratch_operands = 0 : i64, tpu.core_type = #tpu.core_type<tc>, window_params = [{transform_indices = @transform_0, window_bounds = array<i64: 1, 32, 256>}, {pipeline_mode = #tpu.pipeline_mode<synchronous>, transform_indices = @transform_1, window_bounds = array<i64: 9, 2, 32>}, {pipeline_mode = #tpu.pipeline_mode<synchronous>, transform_indices = @transform_2, window_bounds = array<i64: 9, 1, 256>}, {pipeline_mode = #tpu.pipeline_mode<synchronous>, transform_indices = @transform_3, window_bounds = array<i64: 2, 1>}, {transform_indices = @transform_4, window_bounds = array<i64: 1, 2, 256>}]} {
    %c0 = arith.constant 0 : index
    %c0_0 = arith.constant 0 : index
    %c0_1 = arith.constant 0 : index
    %0 = vector.load %arg1[%c0, %c0_0, %c0_1] : memref<1x32x256xf32, #tpu.memory_space<vmem>>, vector<1x32x256xf32>
    %1 = vector.shape_cast %0 : vector<1x32x256xf32> to vector<32x256xf32>
    %cst = arith.constant 0.000000e+00 : f32
    %2 = vector.broadcast %cst : f32 to vector<2x256xf32>
    %c17_i32 = arith.constant 17 : i32
    %3 = tpu.dynamic_rotate %1 by %c17_i32 dim 1 : vector<32x256xf32>, i32 -> vector<32x256xf32>
    %c0_2 = arith.constant 0 : index
    %c0_3 = arith.constant 0 : index
    %c0_4 = arith.constant 0 : index
    %4 = vector.load %arg3[%c0_2, %c0_3, %c0_4] : memref<9x1x256xf32, #tpu.memory_space<vmem>>, vector<1x1x256xf32>
    %5 = vector.shape_cast %4 : vector<1x1x256xf32> to vector<1x256xf32>
    %6 = vector.broadcast %5 : vector<1x256xf32> to vector<32x256xf32>
    %7 = arith.mulf %3, %6 : vector<32x256xf32>
    %8 = arith.truncf %7 : vector<32x256xf32> to vector<32x256xbf16>
    %c0_5 = arith.constant 0 : index
    %c0_6 = arith.constant 0 : index
    %c0_7 = arith.constant 0 : index
    %9 = vector.load %arg2[%c0_5, %c0_6, %c0_7] : memref<9x2x32xbf16, #tpu.memory_space<vmem>>, vector<1x2x32xbf16>
    %10 = vector.shape_cast %9 : vector<1x2x32xbf16> to vector<2x32xbf16>
    %cst_8 = arith.constant dense<0.000000e+00> : vector<2x256xf32>
    %11 = tpu.matmul %10, %8, %cst_8 {dimension_numbers = #tpu.dot_dimension_numbers<[1], [0], [0], [1], [0, 0, 1, 1], [], []>} : vector<2x32xbf16>, vector<32x256xbf16>, vector<2x256xf32> -> vector<2x256xf32>
    %12 = arith.addf %2, %11 : vector<2x256xf32>
    %c16_i32 = arith.constant 16 : i32
    %13 = tpu.dynamic_rotate %1 by %c16_i32 dim 1 : vector<32x256xf32>, i32 -> vector<32x256xf32>
    %c1 = arith.constant 1 : index
    %c0_9 = arith.constant 0 : index
    %c0_10 = arith.constant 0 : index
    %14 = vector.load %arg3[%c1, %c0_9, %c0_10] : memref<9x1x256xf32, #tpu.memory_space<vmem>>, vector<1x1x256xf32>
    %15 = vector.shape_cast %14 : vector<1x1x256xf32> to vector<1x256xf32>
    %16 = vector.broadcast %15 : vector<1x256xf32> to vector<32x256xf32>
    %17 = arith.mulf %13, %16 : vector<32x256xf32>
    %18 = arith.truncf %17 : vector<32x256xf32> to vector<32x256xbf16>
    %c1_11 = arith.constant 1 : index
    %c0_12 = arith.constant 0 : index
    %c0_13 = arith.constant 0 : index
    %19 = vector.load %arg2[%c1_11, %c0_12, %c0_13] : memref<9x2x32xbf16, #tpu.memory_space<vmem>>, vector<1x2x32xbf16>
    %20 = vector.shape_cast %19 : vector<1x2x32xbf16> to vector<2x32xbf16>
    %cst_14 = arith.constant dense<0.000000e+00> : vector<2x256xf32>
    %21 = tpu.matmul %20, %18, %cst_14 {dimension_numbers = #tpu.dot_dimension_numbers<[1], [0], [0], [1], [0, 0, 1, 1], [], []>} : vector<2x32xbf16>, vector<32x256xbf16>, vector<2x256xf32> -> vector<2x256xf32>
    %22 = arith.addf %12, %21 : vector<2x256xf32>
    %c15_i32 = arith.constant 15 : i32
    %23 = tpu.dynamic_rotate %1 by %c15_i32 dim 1 : vector<32x256xf32>, i32 -> vector<32x256xf32>
    %c2 = arith.constant 2 : index
    %c0_15 = arith.constant 0 : index
    %c0_16 = arith.constant 0 : index
    %24 = vector.load %arg3[%c2, %c0_15, %c0_16] : memref<9x1x256xf32, #tpu.memory_space<vmem>>, vector<1x1x256xf32>
    %25 = vector.shape_cast %24 : vector<1x1x256xf32> to vector<1x256xf32>
    %26 = vector.broadcast %25 : vector<1x256xf32> to vector<32x256xf32>
    %27 = arith.mulf %23, %26 : vector<32x256xf32>
    %28 = arith.truncf %27 : vector<32x256xf32> to vector<32x256xbf16>
    %c2_17 = arith.constant 2 : index
    %c0_18 = arith.constant 0 : index
    %c0_19 = arith.constant 0 : index
    %29 = vector.load %arg2[%c2_17, %c0_18, %c0_19] : memref<9x2x32xbf16, #tpu.memory_space<vmem>>, vector<1x2x32xbf16>
    %30 = vector.shape_cast %29 : vector<1x2x32xbf16> to vector<2x32xbf16>
    %cst_20 = arith.constant dense<0.000000e+00> : vector<2x256xf32>
    %31 = tpu.matmul %30, %28, %cst_20 {dimension_numbers = #tpu.dot_dimension_numbers<[1], [0], [0], [1], [0, 0, 1, 1], [], []>} : vector<2x32xbf16>, vector<32x256xbf16>, vector<2x256xf32> -> vector<2x256xf32>
    %32 = arith.addf %22, %31 : vector<2x256xf32>
    %c1_i32 = arith.constant 1 : i32
    %33 = tpu.dynamic_rotate %1 by %c1_i32 dim 1 : vector<32x256xf32>, i32 -> vector<32x256xf32>
    %c3 = arith.constant 3 : index
    %c0_21 = arith.constant 0 : index
    %c0_22 = arith.constant 0 : index
    %34 = vector.load %arg3[%c3, %c0_21, %c0_22] : memref<9x1x256xf32, #tpu.memory_space<vmem>>, vector<1x1x256xf32>
    %35 = vector.shape_cast %34 : vector<1x1x256xf32> to vector<1x256xf32>
    %36 = vector.broadcast %35 : vector<1x256xf32> to vector<32x256xf32>
    %37 = arith.mulf %33, %36 : vector<32x256xf32>
    %38 = arith.truncf %37 : vector<32x256xf32> to vector<32x256xbf16>
    %c3_23 = arith.constant 3 : index
    %c0_24 = arith.constant 0 : index
    %c0_25 = arith.constant 0 : index
    %39 = vector.load %arg2[%c3_23, %c0_24, %c0_25] : memref<9x2x32xbf16, #tpu.memory_space<vmem>>, vector<1x2x32xbf16>
    %40 = vector.shape_cast %39 : vector<1x2x32xbf16> to vector<2x32xbf16>
    %cst_26 = arith.constant dense<0.000000e+00> : vector<2x256xf32>
    %41 = tpu.matmul %40, %38, %cst_26 {dimension_numbers = #tpu.dot_dimension_numbers<[1], [0], [0], [1], [0, 0, 1, 1], [], []>} : vector<2x32xbf16>, vector<32x256xbf16>, vector<2x256xf32> -> vector<2x256xf32>
    %42 = arith.addf %32, %41 : vector<2x256xf32>
    %c4 = arith.constant 4 : index
    %c0_27 = arith.constant 0 : index
    %c0_28 = arith.constant 0 : index
    %43 = vector.load %arg3[%c4, %c0_27, %c0_28] : memref<9x1x256xf32, #tpu.memory_space<vmem>>, vector<1x1x256xf32>
    %44 = vector.shape_cast %43 : vector<1x1x256xf32> to vector<1x256xf32>
    %45 = vector.broadcast %44 : vector<1x256xf32> to vector<32x256xf32>
    %46 = arith.mulf %1, %45 : vector<32x256xf32>
    %47 = arith.truncf %46 : vector<32x256xf32> to vector<32x256xbf16>
    %c4_29 = arith.constant 4 : index
    %c0_30 = arith.constant 0 : index
    %c0_31 = arith.constant 0 : index
    %48 = vector.load %arg2[%c4_29, %c0_30, %c0_31] : memref<9x2x32xbf16, #tpu.memory_space<vmem>>, vector<1x2x32xbf16>
    %49 = vector.shape_cast %48 : vector<1x2x32xbf16> to vector<2x32xbf16>
    %cst_32 = arith.constant dense<0.000000e+00> : vector<2x256xf32>
    %50 = tpu.matmul %49, %47, %cst_32 {dimension_numbers = #tpu.dot_dimension_numbers<[1], [0], [0], [1], [0, 0, 1, 1], [], []>} : vector<2x32xbf16>, vector<32x256xbf16>, vector<2x256xf32> -> vector<2x256xf32>
    %51 = arith.addf %42, %50 : vector<2x256xf32>
    %c255_i32 = arith.constant 255 : i32
    %52 = tpu.dynamic_rotate %1 by %c255_i32 dim 1 : vector<32x256xf32>, i32 -> vector<32x256xf32>
    %c5 = arith.constant 5 : index
    %c0_33 = arith.constant 0 : index
    %c0_34 = arith.constant 0 : index
    %53 = vector.load %arg3[%c5, %c0_33, %c0_34] : memref<9x1x256xf32, #tpu.memory_space<vmem>>, vector<1x1x256xf32>
    %54 = vector.shape_cast %53 : vector<1x1x256xf32> to vector<1x256xf32>
    %55 = vector.broadcast %54 : vector<1x256xf32> to vector<32x256xf32>
    %56 = arith.mulf %52, %55 : vector<32x256xf32>
    %57 = arith.truncf %56 : vector<32x256xf32> to vector<32x256xbf16>
    %c5_35 = arith.constant 5 : index
    %c0_36 = arith.constant 0 : index
    %c0_37 = arith.constant 0 : index
    %58 = vector.load %arg2[%c5_35, %c0_36, %c0_37] : memref<9x2x32xbf16, #tpu.memory_space<vmem>>, vector<1x2x32xbf16>
    %59 = vector.shape_cast %58 : vector<1x2x32xbf16> to vector<2x32xbf16>
    %cst_38 = arith.constant dense<0.000000e+00> : vector<2x256xf32>
    %60 = tpu.matmul %59, %57, %cst_38 {dimension_numbers = #tpu.dot_dimension_numbers<[1], [0], [0], [1], [0, 0, 1, 1], [], []>} : vector<2x32xbf16>, vector<32x256xbf16>, vector<2x256xf32> -> vector<2x256xf32>
    %61 = arith.addf %51, %60 : vector<2x256xf32>
    %c241_i32 = arith.constant 241 : i32
    %62 = tpu.dynamic_rotate %1 by %c241_i32 dim 1 : vector<32x256xf32>, i32 -> vector<32x256xf32>
    %c6 = arith.constant 6 : index
    %c0_39 = arith.constant 0 : index
    %c0_40 = arith.constant 0 : index
    %63 = vector.load %arg3[%c6, %c0_39, %c0_40] : memref<9x1x256xf32, #tpu.memory_space<vmem>>, vector<1x1x256xf32>
    %64 = vector.shape_cast %63 : vector<1x1x256xf32> to vector<1x256xf32>
    %65 = vector.broadcast %64 : vector<1x256xf32> to vector<32x256xf32>
    %66 = arith.mulf %62, %65 : vector<32x256xf32>
    %67 = arith.truncf %66 : vector<32x256xf32> to vector<32x256xbf16>
    %c6_41 = arith.constant 6 : index
    %c0_42 = arith.constant 0 : index
    %c0_43 = arith.constant 0 : index
    %68 = vector.load %arg2[%c6_41, %c0_42, %c0_43] : memref<9x2x32xbf16, #tpu.memory_space<vmem>>, vector<1x2x32xbf16>
    %69 = vector.shape_cast %68 : vector<1x2x32xbf16> to vector<2x32xbf16>
    %cst_44 = arith.constant dense<0.000000e+00> : vector<2x256xf32>
    %70 = tpu.matmul %69, %67, %cst_44 {dimension_numbers = #tpu.dot_dimension_numbers<[1], [0], [0], [1], [0, 0, 1, 1], [], []>} : vector<2x32xbf16>, vector<32x256xbf16>, vector<2x256xf32> -> vector<2x256xf32>
    %71 = arith.addf %61, %70 : vector<2x256xf32>
    %c240_i32 = arith.constant 240 : i32
    %72 = tpu.dynamic_rotate %1 by %c240_i32 dim 1 : vector<32x256xf32>, i32 -> vector<32x256xf32>
    %c7 = arith.constant 7 : index
    %c0_45 = arith.constant 0 : index
    %c0_46 = arith.constant 0 : index
    %73 = vector.load %arg3[%c7, %c0_45, %c0_46] : memref<9x1x256xf32, #tpu.memory_space<vmem>>, vector<1x1x256xf32>
    %74 = vector.shape_cast %73 : vector<1x1x256xf32> to vector<1x256xf32>
    %75 = vector.broadcast %74 : vector<1x256xf32> to vector<32x256xf32>
    %76 = arith.mulf %72, %75 : vector<32x256xf32>
    %77 = arith.truncf %76 : vector<32x256xf32> to vector<32x256xbf16>
    %c7_47 = arith.constant 7 : index
    %c0_48 = arith.constant 0 : index
    %c0_49 = arith.constant 0 : index
    %78 = vector.load %arg2[%c7_47, %c0_48, %c0_49] : memref<9x2x32xbf16, #tpu.memory_space<vmem>>, vector<1x2x32xbf16>
    %79 = vector.shape_cast %78 : vector<1x2x32xbf16> to vector<2x32xbf16>
    %cst_50 = arith.constant dense<0.000000e+00> : vector<2x256xf32>
    %80 = tpu.matmul %79, %77, %cst_50 {dimension_numbers = #tpu.dot_dimension_numbers<[1], [0], [0], [1], [0, 0, 1, 1], [], []>} : vector<2x32xbf16>, vector<32x256xbf16>, vector<2x256xf32> -> vector<2x256xf32>
    %81 = arith.addf %71, %80 : vector<2x256xf32>
    %c239_i32 = arith.constant 239 : i32
    %82 = tpu.dynamic_rotate %1 by %c239_i32 dim 1 : vector<32x256xf32>, i32 -> vector<32x256xf32>
    %c8 = arith.constant 8 : index
    %c0_51 = arith.constant 0 : index
    %c0_52 = arith.constant 0 : index
    %83 = vector.load %arg3[%c8, %c0_51, %c0_52] : memref<9x1x256xf32, #tpu.memory_space<vmem>>, vector<1x1x256xf32>
    %84 = vector.shape_cast %83 : vector<1x1x256xf32> to vector<1x256xf32>
    %85 = vector.broadcast %84 : vector<1x256xf32> to vector<32x256xf32>
    %86 = arith.mulf %82, %85 : vector<32x256xf32>
    %87 = arith.truncf %86 : vector<32x256xf32> to vector<32x256xbf16>
    %c8_53 = arith.constant 8 : index
    %c0_54 = arith.constant 0 : index
    %c0_55 = arith.constant 0 : index
    %88 = vector.load %arg2[%c8_53, %c0_54, %c0_55] : memref<9x2x32xbf16, #tpu.memory_space<vmem>>, vector<1x2x32xbf16>
    %89 = vector.shape_cast %88 : vector<1x2x32xbf16> to vector<2x32xbf16>
    %cst_56 = arith.constant dense<0.000000e+00> : vector<2x256xf32>
    %90 = tpu.matmul %89, %87, %cst_56 {dimension_numbers = #tpu.dot_dimension_numbers<[1], [0], [0], [1], [0, 0, 1, 1], [], []>} : vector<2x32xbf16>, vector<32x256xbf16>, vector<2x256xf32> -> vector<2x256xf32>
    %91 = arith.addf %81, %90 : vector<2x256xf32>
    %c0_57 = arith.constant 0 : index
    %c0_58 = arith.constant 0 : index
    %92 = vector.load %arg4[%c0_57, %c0_58] : memref<2x1xf32, #tpu.memory_space<vmem>>, vector<2x1xf32>
    %93 = vector.broadcast %92 : vector<2x1xf32> to vector<2x256xf32>
    %94 = arith.addf %91, %93 : vector<2x256xf32>
    %c0_59 = arith.constant 0 : index
    %c0_60 = arith.constant 0 : index
    %c0_61 = arith.constant 0 : index
    %95 = vector.load %arg5[%c0_59, %c0_60, %c0_61] : memref<1x2x256xf32, #tpu.memory_space<vmem>>, vector<1x2x256xf32>
    %96 = vector.shape_cast %95 : vector<1x2x256xf32> to vector<2x256xf32>
    %97 = vector.shape_cast %94 : vector<2x256xf32> to vector<1x2x256xf32>
    tpu.vector_store %arg5[%c0_59, %c0_60, %c0_61], %97 {strides = array<i32>} : memref<1x2x256xf32, #tpu.memory_space<vmem>>, vector<1x2x256xf32>,
    return
  }
  func.func @transform_0(%arg0: i32) -> (i32, i32, i32) {
    %c0_i32 = arith.constant 0 : i32
    %c0_i32_0 = arith.constant 0 : i32
    %c0_i32_1 = arith.constant 0 : i32
    return %arg0, %c0_i32, %c0_i32_0 : i32, i32, i32
  }
  func.func @transform_1(%arg0: i32) -> (i32, i32, i32) {
    %c0_i32 = arith.constant 0 : i32
    %c0_i32_0 = arith.constant 0 : i32
    %c0_i32_1 = arith.constant 0 : i32
    %c0_i32_2 = arith.constant 0 : i32
    return %c0_i32, %c0_i32_0, %c0_i32_1 : i32, i32, i32
  }
  func.func @transform_2(%arg0: i32) -> (i32, i32, i32) {
    %c0_i32 = arith.constant 0 : i32
    %c0_i32_0 = arith.constant 0 : i32
    %c0_i32_1 = arith.constant 0 : i32
    %c0_i32_2 = arith.constant 0 : i32
    return %c0_i32, %c0_i32_0, %c0_i32_1 : i32, i32, i32
  }
  func.func @transform_3(%arg0: i32) -> (i32, i32) {
    %c0_i32 = arith.constant 0 : i32
    %c0_i32_0 = arith.constant 0 : i32
    %c0_i32_1 = arith.constant 0 : i32
    return %c0_i32, %c0_i32_0 : i32, i32
  }
  func.func @transform_4(%arg0: i32) -> (i32, i32, i32) {
    %c0_i32 = arith.constant 0 : i32
    %c0_i32_0 = arith.constant 0 : i32
    %c0_i32_1 = arith.constant 0 : i32
    return %arg0, %c0_i32, %c0_i32_0 : i32, i32, i32
  }
}

module attributes {stable_mosaic.version = 11 : i64} {
  func.func @_matmul_bias_relu_kernel(%arg0: i32, %arg1: i32, %arg2: memref<16x32xbf16, #tpu.memory_space<vmem>>, %arg3: memref<1x32x128xbf16, #tpu.memory_space<vmem>>, %arg4: memref<16x1xf32, #tpu.memory_space<vmem>>, %arg5: memref<1x16x128xf32, #tpu.memory_space<vmem>>) attributes {dimension_semantics = [#tpu.dimension_semantics<parallel>, #tpu.dimension_semantics<parallel>], iteration_bounds = array<i64: 2, 2>, scalar_prefetch = 0 : i64, scratch_operands = 0 : i64, tpu.core_type = #tpu.core_type<tc>, window_params = [{pipeline_mode = #tpu.pipeline_mode<synchronous>, transform_indices = @transform_0, window_bounds = array<i64: 16, 32>}, {transform_indices = @transform_1, window_bounds = array<i64: 1, 32, 128>}, {pipeline_mode = #tpu.pipeline_mode<synchronous>, transform_indices = @transform_2, window_bounds = array<i64: 16, 1>}, {transform_indices = @transform_3, window_bounds = array<i64: 1, 16, 128>}]} {
    %c0 = arith.constant 0 : index
    %c0_0 = arith.constant 0 : index
    %0 = vector.load %arg2[%c0, %c0_0] : memref<16x32xbf16, #tpu.memory_space<vmem>>, vector<16x32xbf16>
    %c0_1 = arith.constant 0 : index
    %c0_2 = arith.constant 0 : index
    %c0_3 = arith.constant 0 : index
    %1 = vector.load %arg3[%c0_1, %c0_2, %c0_3] : memref<1x32x128xbf16, #tpu.memory_space<vmem>>, vector<1x32x128xbf16>
    %2 = vector.shape_cast %1 : vector<1x32x128xbf16> to vector<32x128xbf16>
    %cst = arith.constant dense<0.000000e+00> : vector<16x128xf32>
    %3 = tpu.matmul %0, %2, %cst {dimension_numbers = #tpu.dot_dimension_numbers<[1], [0], [0], [1], [0, 0, 1, 1], [], []>} : vector<16x32xbf16>, vector<32x128xbf16>, vector<16x128xf32> -> vector<16x128xf32>
    %c0_4 = arith.constant 0 : index
    %c0_5 = arith.constant 0 : index
    %4 = vector.load %arg4[%c0_4, %c0_5] : memref<16x1xf32, #tpu.memory_space<vmem>>, vector<16x1xf32>
    %5 = vector.broadcast %4 : vector<16x1xf32> to vector<16x128xf32>
    %6 = arith.addf %3, %5 : vector<16x128xf32>
    %cst_6 = arith.constant 0.000000e+00 : f32
    %7 = vector.broadcast %cst_6 : f32 to vector<16x128xf32>
    %8 = arith.maximumf %6, %7 : vector<16x128xf32>
    %c0_7 = arith.constant 0 : index
    %c0_8 = arith.constant 0 : index
    %c0_9 = arith.constant 0 : index
    %9 = vector.load %arg5[%c0_7, %c0_8, %c0_9] : memref<1x16x128xf32, #tpu.memory_space<vmem>>, vector<1x16x128xf32>
    %10 = vector.shape_cast %9 : vector<1x16x128xf32> to vector<16x128xf32>
    %11 = vector.shape_cast %8 : vector<16x128xf32> to vector<1x16x128xf32>
    tpu.vector_store %arg5[%c0_7, %c0_8, %c0_9], %11 {strides = array<i32>} : memref<1x16x128xf32, #tpu.memory_space<vmem>>, vector<1x16x128xf32>,
    return
  }
  func.func @transform_0(%arg0: i32, %arg1: i32) -> (i32, i32) {
    %c0_i32 = arith.constant 0 : i32
    %c0_i32_0 = arith.constant 0 : i32
    %c0_i32_1 = arith.constant 0 : i32
    return %c0_i32, %c0_i32_0 : i32, i32
  }
  func.func @transform_1(%arg0: i32, %arg1: i32) -> (i32, i32, i32) {
    %c0_i32 = arith.constant 0 : i32
    %c0_i32_0 = arith.constant 0 : i32
    return %arg0, %c0_i32, %arg1 : i32, i32, i32
  }
  func.func @transform_2(%arg0: i32, %arg1: i32) -> (i32, i32) {
    %c0_i32 = arith.constant 0 : i32
    %c0_i32_0 = arith.constant 0 : i32
    %c0_i32_1 = arith.constant 0 : i32
    return %c0_i32, %c0_i32_0 : i32, i32
  }
  func.func @transform_3(%arg0: i32, %arg1: i32) -> (i32, i32, i32) {
    %c0_i32 = arith.constant 0 : i32
    %c0_i32_0 = arith.constant 0 : i32
    return %arg0, %c0_i32, %arg1 : i32, i32, i32
  }
}

</mosaic_0001>

<llo_original>
// kernel: combination_module_dcn.6
$region0: #{combination_module_dcn.6}
  #allocation0 [shape = 'u32[]', space=smem, size = 0x4, offset = 0x4, fixed_abs, tag = 'smem constant byte address 0x4 - core index']
  #allocation1 [shape = 'u32[144,128]{1,0:T(1,128)}', space=vmem, size = 0x12000, scoped, tag = 'internal scratch']
  %s0 = inlined_call_operand.vmem [shape: f32[128,8], index: 0, kind: input, shape index: {}]
  %s1 = inlined_call_operand.hbm [shape: f32[8,16], index: 1, kind: input, shape index: {}]
  %s2 = inlined_call_operand.vmem [shape: f32[128,64], index: 2, kind: input, shape index: {}]
  %s3 = inlined_call_operand.vmem [shape: f32[256,16], index: 3, kind: output, shape index: {}]
  %s4 = sld [smem:[#allocation0]]
  $region49: #{combination_module_dcn.6} parent=0
    _
  %s6 = ssub.s32 1, %s4
  %s7 = scalar_select 0, %s6, %s4
  $region1: #{combination_module_dcn.6} parent=0
    #allocation2 [shape = 'u8[4096]{0}', space=vmem, size = 0x1000, scoped, tag = 'input window, operand 1, single buffered']
    #allocation3 [shape = 's32[2]{0}', space=sflag, size = 0x8, scoped, tag = 'scoped memory for combination_module_dcn.6']
    %8 = vsyncpa [#allocation3], 0
    loop: start=0, step=1, limit=4
    $region2: #{combination_module_dcn.6} parent=1 // loop_pre_header
      _
    $region3: #{combination_module_dcn.6} parent=1 // loop_header
      %s10 = sphi 0, %s14
      %p11 = scmp.ge.s32.totalorder %s10, 4
      %s20 = sphi 0, %s22
      %s23 = sphi 0, %s20
      %s24 = sphi 0, %s23
      %s40 = sphi 0, %s24
      %s44 = sphi 0, %s44
      %s46 = sphi 0, %s44
      %s47 = sphi 0, %s46
      %s61 = sphi 0, %s47
      %s65 = sphi 0, %s65
      %s67 = sphi 0, %s65
      %s68 = sphi 0, %s67
      %s82 = sphi 0, %s68
      %s88 = sphi 0, %s90
      %s91 = sphi 0, %s88
      %s92 = sphi 0, %s91
      %s108 = sphi 0, %s92
    $region4: #{combination_module_dcn.6} parent=1 // loop_header_branch
      %13 = sbr.rel (%p11) target = $region8
    $region5: #{combination_module_dcn.6} parent=1 // loop_body
      %s15 = ssub.s32 %s10, 1
      %s16 = ssub.s32 %s10, 2
      %s17 = sadd.s32 %s10, 1
      %s18 = ssub.s32 %s10, %s17
      %p19 = scmp.eq.s32.totalorder %s18, 0
      %s21 = sadd.s32 %s20, 1
      %s22 = scalar_select %p19, %s20, %s21
      %p25 = pneg %p19
      %p26 = scmp.eq.s32.totalorder %s10, 1
      %p27 = por %p25, %p26
      %p28 = scmp.ne.s32.totalorder %s20, %s23
      %p29 = scmp.eq.s32.totalorder %s10, 0
      %p30 = por %p28, %p29
      %p31 = scmp.ne.s32.totalorder %s20, %s23
      %p32 = scmp.eq.s32.totalorder %s15, 1
      %p33 = por %p31, %p32
      %p34 = scmp.ne.s32.totalorder %s23, %s24
      %p35 = scmp.eq.s32.totalorder %s15, 0
      %p36 = por %p34, %p35
      %p37 = scmp.ne.s32.totalorder %s23, %s24
      %p38 = scmp.eq.s32.totalorder %s16, 1
      %p39 = por %p37, %p38
      %p41 = scmp.ne.s32.totalorder %s24, %s40
      %p42 = scmp.eq.s32.totalorder %s16, 0
      %p43 = por %p41, %p42
      %s45 = sadd.s32 %s44, 1
      %p48 = scmp.eq.s32.totalorder %s10, 1
      %p49 = scmp.ne.s32.totalorder %s44, %s46
      %p50 = scmp.eq.s32.totalorder %s10, 0
      %p51 = por %p49, %p50
      %p52 = scmp.ne.s32.totalorder %s44, %s46
      %p53 = scmp.eq.s32.totalorder %s15, 1
      %p54 = por %p52, %p53
      %p55 = scmp.ne.s32.totalorder %s46, %s47
      %p56 = scmp.eq.s32.totalorder %s15, 0
      %p57 = por %p55, %p56
      %p58 = scmp.ne.s32.totalorder %s46, %s47
      %p59 = scmp.eq.s32.totalorder %s16, 1
      %p60 = por %p58, %p59
      %p62 = scmp.ne.s32.totalorder %s47, %s61
      %p63 = scmp.eq.s32.totalorder %s16, 0
      %p64 = por %p62, %p63
      %s66 = sadd.s32 %s65, 1
      %p69 = scmp.eq.s32.totalorder %s10, 1
      %p70 = scmp.ne.s32.totalorder %s65, %s67
      %p71 = scmp.eq.s32.totalorder %s10, 0
      %p72 = por %p70, %p71
      %p73 = scmp.ne.s32.totalorder %s65, %s67
      %p74 = scmp.eq.s32.totalorder %s15, 1
      %p75 = por %p73, %p74
      %p76 = scmp.ne.s32.totalorder %s67, %s68
      %p77 = scmp.eq.s32.totalorder %s15, 0
      %p78 = por %p76, %p77
      %p79 = scmp.ne.s32.totalorder %s67, %s68
      %p80 = scmp.eq.s32.totalorder %s16, 1
      %p81 = por %p79, %p80
      %p83 = scmp.ne.s32.totalorder %s68, %s82
      %p84 = scmp.eq.s32.totalorder %s16, 0
      %p85 = por %p83, %p84
      %s86 = ssub.s32 %s10, %s17
      %p87 = scmp.eq.s32.totalorder %s86, 0
      %s89 = sadd.s32 %s88, 1
      %s90 = scalar_select %p87, %s88, %s89
      %p93 = pneg %p87
      %p94 = scmp.eq.s32.totalorder %s10, 1
      %p95 = por %p93, %p94
      %p96 = scmp.ne.s32.totalorder %s88, %s91
      %p97 = scmp.eq.s32.totalorder %s10, 0
      %p98 = por %p96, %p97
      %p99 = scmp.ne.s32.totalorder %s88, %s91
      %p100 = scmp.eq.s32.totalorder %s15, 1
      %p101 = por %p99, %p100
      %p102 = scmp.ne.s32.totalorder %s91, %s92
      %p103 = scmp.eq.s32.totalorder %s15, 0
      %p104 = por %p102, %p103
      %p105 = scmp.ne.s32.totalorder %s91, %s92
      %p106 = scmp.eq.s32.totalorder %s16, 1
      %p107 = por %p105, %p106
      %p109 = scmp.ne.s32.totalorder %s92, %s108
      %p110 = scmp.eq.s32.totalorder %s16, 0
      %p111 = por %p109, %p110
      %p112 = scmp.le.s32.totalorder 1, %s10
      %p113 = scmp.lt.s32.totalorder %s10, 3
      %p114 = pnand %p112, %p113
      %p115 = pneg %p114
      // Predicated region
      $region9: #{combination_module_dcn.6} parent=5 // pred_check
        _
      $region10: #{combination_module_dcn.6} parent=5 // pred_check_branch
        %117 = sbr.rel (%p114) target = $region12
      $region11: #{combination_module_dcn.6} parent=5 // pred_region
        %s118 = ssub.s32 %s10, 1
        // Predicated region
        $region13: #{combination_module_dcn.6} parent=11 // pred_check
          %p119 = pneg %p57
        $region14: #{combination_module_dcn.6} parent=11 // pred_check_branch
          %121 = sbr.rel (%p119) target = $region16
        $region15: #{combination_module_dcn.6} parent=11 // pred_region
          %s123 = ssub.s32 128, 128
          %124 = vsyncadd [#allocation3], %s123
          %s126 = sshll.u32 [#allocation2], 4
          %s127 = int_to_ptr.vmem [resolvable:$true] %s126
          %129 = dma.hbm_to_vmem [thread:$0]  %s1, 128, %s127, [#allocation3]
        $region16: #{combination_module_dcn.6} parent=11 // pred_fallthru
          _
        // Predicated region
        $region17: #{combination_module_dcn.6} parent=11 // pred_check
          %p130 = pneg %p78
        $region18: #{combination_module_dcn.6} parent=11 // pred_check_branch
          %132 = sbr.rel (%p130) target = $region20
        $region19: #{combination_module_dcn.6} parent=11 // pred_region
          _
        $region20: #{combination_module_dcn.6} parent=11 // pred_fallthru
          _
      $region12: #{combination_module_dcn.6} parent=5 // pred_fallthru
        _
      %p133 = scmp.lt.s32.totalorder %s10, 2
      // Predicated region
      $region21: #{combination_module_dcn.6} parent=5 // pred_check
        %p134 = pneg %p133
      $region22: #{combination_module_dcn.6} parent=5 // pred_check_branch
        %136 = sbr.rel (%p134) target = $region24
      $region23: #{combination_module_dcn.6} parent=5 // pred_region
        // Predicated region
        $region25: #{combination_module_dcn.6} parent=23 // pred_check
          %p137 = pneg %p30
        $region26: #{combination_module_dcn.6} parent=23 // pred_check_branch
          %139 = sbr.rel (%p137) target = $region28
        $region27: #{combination_module_dcn.6} parent=23 // pred_region
          %s140 = smul.u32 8, %s10
          %p141 = scmp.lt.s32.totalorder %s140, 15
          %s142 = scalar_select %p141, %s140, 15
          %s143 = smul.addr %s142, 8
          %s144 = scalar_lea.vmem %s0, %s143
          %s145 = smul.u32 8, %s10
        $region28: #{combination_module_dcn.6} parent=23 // pred_fallthru
          _
      $region24: #{combination_module_dcn.6} parent=5 // pred_fallthru
        _
      %p146 = scmp.le.s32.totalorder 1, %s10
      %p147 = scmp.lt.s32.totalorder %s10, 3
      %p148 = pnand %p146, %p147
      %p149 = pneg %p148
      // Predicated region
      $region29: #{combination_module_dcn.6} parent=5 // pred_check
        _
      $region30: #{combination_module_dcn.6} parent=5 // pred_check_branch
        %151 = sbr.rel (%p148) target = $region32
      $region31: #{combination_module_dcn.6} parent=5 // pred_region
        %s152 = ssub.s32 %s10, 1
        // Predicated region
        $region33: #{combination_module_dcn.6} parent=31 // pred_check
          %p153 = pneg %p57
        $region34: #{combination_module_dcn.6} parent=31 // pred_check_branch
          %155 = sbr.rel (%p153) target = $region36
        $region35: #{combination_module_dcn.6} parent=31 // pred_region
          %156 = dma.done [#allocation3], 128
        $region36: #{combination_module_dcn.6} parent=31 // pred_fallthru
          _
        %s157 = smul.u32 8, %s15
        %p158 = scmp.lt.s32.totalorder %s157, 15
        %s159 = scalar_select %p158, %s157, 15
        %s160 = smul.addr %s159, 8
        %s161 = scalar_lea.vmem %s0, %s160
        %p162 = pneg %p36
        %p163 = pneg %p33
        %p164 = pneg %p57
        %p165 = pneg %p54
        %p166 = pneg %p78
        %p167 = pneg %p75
        %p168 = pneg %p104
        %p169 = pneg %p101
        %s170 = smul.u32 16, %s15
        %p171 = scmp.lt.s32.totalorder %s170, 31
        %s172 = scalar_select %p171, %s170, 31
        %s173 = smul.addr %s172, 8
        %s174 = scalar_lea.vmem %s3, %s173
        %s175 = smul.u32 8, %s15
        %p176 = scmp.lt.s32.totalorder %s175, 15
        %s177 = scalar_select %p176, %s175, 15
        %s178 = smul.addr %s177, 8
        %s179 = scalar_lea.vmem %s0, %s178
        %s180 = smul.u32 8, %s15
        %s181 = smul.u32 16, %s15
        %p182 = scmp.lt.s32.totalorder %s181, 31
        %s183 = scalar_select %p182, %s181, 31
        %s184 = smul.addr %s183, 8
        %s185 = scalar_lea.vmem %s3, %s184
        %s186 = smul.u32 16, %s15
        %v187 = vld [vmem:[%s179] sm:$0xff]
        %v188 = vld [vmem:[%s179 + $0x8] sm:$0xff]
        %v189 = vld [vmem:[%s179 + $0x10] sm:$0xff]
        %v190 = vld [vmem:[%s179 + $0x18] sm:$0xff]
        %v191 = vld [vmem:[%s179 + $0x20] sm:$0xff]
        %v192 = vld [vmem:[%s179 + $0x28] sm:$0xff]
        %v193 = vld [vmem:[%s179 + $0x30] sm:$0xff]
        %v194 = vld [vmem:[%s179 + $0x38] sm:$0xff]
        %v195 = vld [vmem:[#allocation2] sm:$0xff]
        %vm196 = vcmask 64512
        %v198 = vsel %vm196, %v187, 0
        %v201 = vsel %vm196, %v188, 0
        %v204 = vsel %vm196, %v189, 0
        %v207 = vsel %vm196, %v190, 0
        %v210 = vsel %vm196, %v191, 0
        %v213 = vsel %vm196, %v192, 0
        %v216 = vsel %vm196, %v193, 0
        %v219 = vsel %vm196, %v194, 0
        %221 = vmatprep.subr.mxu0 0.0
        %222 = vmatpush1.msra.mxu0 0.0
        %223 = vmatprep.subr.mxu0 0.0
        %224 = vmatpush1.msra.mxu0 0.0
        %225 = vmatprep.subr.mxu0 0.0
        %226 = vmatpush1.msra.mxu0 0.0
        %227 = vmatprep.subr.mxu0 0.0
        %228 = vmatpush1.msra.mxu0 0.0
        %229 = vmatprep.subr.mxu0 0.0
        %230 = vmatpush1.msra.mxu0 0.0
        %231 = vmatprep.subr.mxu0 0.0
        %232 = vmatpush1.msra.mxu0 0.0
        %233 = vmatprep.subr.mxu0 0.0
        %234 = vmatpush1.msra.mxu0 0.0
        %235 = vmatprep.subr.mxu0 0.0
        %236 = vmatpush1.msra.mxu0 0.0
        %237 = vmatprep.subr.mxu0 0.0
        %238 = vmatpush1.msra.mxu0 0.0
        %239 = vmatprep.subr.mxu0 0.0
        %240 = vmatpush1.msra.mxu0 0.0
        %241 = vmatprep.subr.mxu0 0.0
        %242 = vmatpush1.msra.mxu0 0.0
        %243 = vmatprep.subr.mxu0 0.0
        %244 = vmatpush1.msra.mxu0 0.0
        %245 = vmatprep.subr.mxu0 0.0
        %246 = vmatpush1.msra.mxu0 0.0
        %247 = vmatprep.subr.mxu0 0.0
        %248 = vmatpush1.msra.mxu0 0.0
        %249 = vmatprep.subr.mxu0 0.0
        %250 = vmatpush1.msra.mxu0 0.0
        %251 = vmatprep.subr.mxu0 0.0
        %252 = vmatpush1.msra.mxu0 %v195
        %253 = vmatprep.subr.mxu0 0.0
        %254 = vmatpush2.msra.mxu0 0.0
        %255 = vmatprep.subr.mxu0 0.0
        %256 = vmatpush2.msra.mxu0 0.0
        %257 = vmatprep.subr.mxu0 0.0
        %258 = vmatpush2.msra.mxu0 0.0
        %259 = vmatprep.subr.mxu0 0.0
        %260 = vmatpush2.msra.mxu0 0.0
        %261 = vmatprep.subr.mxu0 0.0
        %262 = vmatpush2.msra.mxu0 0.0
        %263 = vmatprep.subr.mxu0 0.0
        %264 = vmatpush2.msra.mxu0 0.0
        %265 = vmatprep.subr.mxu0 0.0
        %266 = vmatpush2.msra.mxu0 0.0
        %267 = vmatprep.subr.mxu0 0.0
        %268 = vmatpush2.msra.mxu0 0.0
        %269 = vmatprep.subr.mxu0 0.0
        %270 = vmatpush2.msra.mxu0 0.0
        %271 = vmatprep.subr.mxu0 0.0
        %272 = vmatpush2.msra.mxu0 0.0
        %273 = vmatprep.subr.mxu0 0.0
        %274 = vmatpush2.msra.mxu0 0.0
        %275 = vmatprep.subr.mxu0 0.0
        %276 = vmatpush2.msra.mxu0 0.0
        %277 = vmatprep.subr.mxu0 0.0
        %278 = vmatpush2.msra.mxu0 0.0
        %279 = vmatprep.subr.mxu0 0.0
        %280 = vmatpush2.msra.mxu0 0.0
        %281 = vmatprep.subr.mxu0 0.0
        %282 = vmatpush2.msra.mxu0 0.0
        %283 = vmatprep.subr.mxu0 0.0
        %284 = vmatpush2.msra.mxu0 0.0
        %285 = vmatprep.mubr.f32.mxu0 0.0
        %286 = vmatmul.mubr.f32.gmra.mxu0 %v198
        %v287 = vpop.f32.mrf.mxu0
        %v288 = vadd.f32 0.0, %v287
        %v289 = vpop.f32.mrf.mxu0
        %290 = vmatprep.mubr.f32.mxu0 0.0
        %291 = vmatmul.mubr.f32.gmra.mxu0 %v201
        %v292 = vpop.f32.mrf.mxu0
        %v293 = vadd.f32 0.0, %v292
        %v294 = vpop.f32.mrf.mxu0
        %295 = vmatprep.mubr.f32.mxu0 0.0
        %296 = vmatmul.mubr.f32.gmra.mxu0 %v204
        %v297 = vpop.f32.mrf.mxu0
        %v298 = vadd.f32 0.0, %v297
        %v299 = vpop.f32.mrf.mxu0
        %300 = vmatprep.mubr.f32.mxu0 0.0
        %301 = vmatmul.mubr.f32.gmra.mxu0 %v207
        %v302 = vpop.f32.mrf.mxu0
        %v303 = vadd.f32 0.0, %v302
        %v304 = vpop.f32.mrf.mxu0
        %305 = vmatprep.mubr.f32.mxu0 0.0
        %306 = vmatmul.mubr.f32.gmra.mxu0 %v210
        %v307 = vpop.f32.mrf.mxu0
        %v308 = vadd.f32 0.0, %v307
        %v309 = vpop.f32.mrf.mxu0
        %310 = vmatprep.mubr.f32.mxu0 0.0
        %311 = vmatmul.mubr.f32.gmra.mxu0 %v213
        %v312 = vpop.f32.mrf.mxu0
        %v313 = vadd.f32 0.0, %v312
        %v314 = vpop.f32.mrf.mxu0
        %315 = vmatprep.mubr.f32.mxu0 0.0
        %316 = vmatmul.mubr.f32.gmra.mxu0 %v216
        %v317 = vpop.f32.mrf.mxu0
        %v318 = vadd.f32 0.0, %v317
        %v319 = vpop.f32.mrf.mxu0
        %320 = vmatprep.mubr.f32.mxu0 0.0
        %321 = vmatmul.mubr.f32.gmra.mxu0 %v219
        %v322 = vpop.f32.mrf.mxu0
        %v323 = vadd.f32 0.0, %v322
        %v324 = vpop.f32.mrf.mxu0
        %325 = vdwg.mxu0
        %v326 = vld [vmem:[%s2] sm:$0xff]
        %v327 = vld [vmem:[%s2 + $0x8] sm:$0xff]
        %v328 = vld [vmem:[%s2 + $0x10] sm:$0xff]
        %v329 = vld [vmem:[%s2 + $0x18] sm:$0xff]
        %v330 = vld [vmem:[%s2 + $0x20] sm:$0xff]
        %v331 = vld [vmem:[%s2 + $0x28] sm:$0xff]
        %v332 = vld [vmem:[%s2 + $0x30] sm:$0xff]
        %v333 = vld [vmem:[%s2 + $0x38] sm:$0xff]
        %v334 = vld [vmem:[%s2 + $0x40] sm:$0xff]
        %v335 = vld [vmem:[%s2 + $0x48] sm:$0xff]
        %v336 = vld [vmem:[%s2 + $0x50] sm:$0xff]
        %v337 = vld [vmem:[%s2 + $0x58] sm:$0xff]
        %v338 = vld [vmem:[%s2 + $0x60] sm:$0xff]
        %v339 = vld [vmem:[%s2 + $0x68] sm:$0xff]
        %v340 = vld [vmem:[%s2 + $0x70] sm:$0xff]
        %v341 = vld [vmem:[%s2 + $0x78] sm:$0xff]
        %vm342 = vcmask 523264
        %v344 = vsel %vm342, %v326, 0
        %v347 = vsel %vm342, %v327, 0
        %v350 = vsel %vm342, %v328, 0
        %v353 = vsel %vm342, %v329, 0
        %v356 = vsel %vm342, %v330, 0
        %v359 = vsel %vm342, %v331, 0
        %v362 = vsel %vm342, %v332, 0
        %v365 = vsel %vm342, %v333, 0
        %v368 = vsel %vm342, %v334, 0
        %v371 = vsel %vm342, %v335, 0
        %v374 = vsel %vm342, %v336, 0
        %v377 = vsel %vm342, %v337, 0
        %v380 = vsel %vm342, %v338, 0
        %v383 = vsel %vm342, %v339, 0
        %v386 = vsel %vm342, %v340, 0
        %v389 = vsel %vm342, %v341, 0
        %391 = vmatprep.subr.mxu0 0.0
        %392 = vmatpush1.msra.mxu0 0.0
        %393 = vmatprep.subr.mxu0 0.0
        %394 = vmatpush1.msra.mxu0 0.0
        %395 = vmatprep.subr.mxu0 0.0
        %396 = vmatpush1.msra.mxu0 0.0
        %397 = vmatprep.subr.mxu0 0.0
        %398 = vmatpush1.msra.mxu0 0.0
        %399 = vmatprep.subr.mxu0 0.0
        %400 = vmatpush1.msra.mxu0 0.0
        %401 = vmatprep.subr.mxu0 0.0
        %402 = vmatpush1.msra.mxu0 0.0
        %403 = vmatprep.subr.mxu0 0.0
        %404 = vmatpush1.msra.mxu0 0.0
        %405 = vmatprep.subr.mxu0 0.0
        %406 = vmatpush1.msra.mxu0 0.0
        %407 = vmatprep.subr.mxu0 0.0
        %408 = vmatpush1.msra.mxu0 %v323
        %409 = vmatprep.subr.mxu0 0.0
        %410 = vmatpush1.msra.mxu0 %v318
        %411 = vmatprep.subr.mxu0 0.0
        %412 = vmatpush1.msra.mxu0 %v313
        %413 = vmatprep.subr.mxu0 0.0
        %414 = vmatpush1.msra.mxu0 %v308
        %415 = vmatprep.subr.mxu0 0.0
        %416 = vmatpush1.msra.mxu0 %v303
        %417 = vmatprep.subr.mxu0 0.0
        %418 = vmatpush1.msra.mxu0 %v298
        %419 = vmatprep.subr.mxu0 0.0
        %420 = vmatpush1.msra.mxu0 %v293
        %421 = vmatprep.subr.mxu0 0.0
        %422 = vmatpush1.msra.mxu0 %v288
        %423 = vmatprep.subr.mxu0 0.0
        %424 = vmatpush2.msra.mxu0 0.0
        %425 = vmatprep.subr.mxu0 0.0
        %426 = vmatpush2.msra.mxu0 0.0
        %427 = vmatprep.subr.mxu0 0.0
        %428 = vmatpush2.msra.mxu0 0.0
        %429 = vmatprep.subr.mxu0 0.0
        %430 = vmatpush2.msra.mxu0 0.0
        %431 = vmatprep.subr.mxu0 0.0
        %432 = vmatpush2.msra.mxu0 0.0
        %433 = vmatprep.subr.mxu0 0.0
        %434 = vmatpush2.msra.mxu0 0.0
        %435 = vmatprep.subr.mxu0 0.0
        %436 = vmatpush2.msra.mxu0 0.0
        %437 = vmatprep.subr.mxu0 0.0
        %438 = vmatpush2.msra.mxu0 0.0
        %439 = vmatprep.subr.mxu0 0.0
        %440 = vmatpush2.msra.mxu0 0.0
        %441 = vmatprep.subr.mxu0 0.0
        %442 = vmatpush2.msra.mxu0 0.0
        %443 = vmatprep.subr.mxu0 0.0
        %444 = vmatpush2.msra.mxu0 0.0
        %445 = vmatprep.subr.mxu0 0.0
        %446 = vmatpush2.msra.mxu0 0.0
        %447 = vmatprep.subr.mxu0 0.0
        %448 = vmatpush2.msra.mxu0 0.0
        %449 = vmatprep.subr.mxu0 0.0
        %450 = vmatpush2.msra.mxu0 0.0
        %451 = vmatprep.subr.mxu0 0.0
        %452 = vmatpush2.msra.mxu0 0.0
        %453 = vmatprep.subr.mxu0 0.0
        %454 = vmatpush2.msra.mxu0 0.0
        %455 = vmatprep.mubr.f32.mxu0 0.0
        %456 = vmatmul.mubr.f32.gmra.mxu0 %v344
        %v457 = vpop.f32.mrf.mxu0
        %v458 = vadd.f32 0.0, %v457
        %v459 = vpop.f32.mrf.mxu0
        %460 = vmatprep.mubr.f32.mxu0 0.0
        %461 = vmatmul.mubr.f32.gmra.mxu0 %v347
        %v462 = vpop.f32.mrf.mxu0
        %v463 = vadd.f32 0.0, %v462
        %v464 = vpop.f32.mrf.mxu0
        %465 = vmatprep.mubr.f32.mxu0 0.0
        %466 = vmatmul.mubr.f32.gmra.mxu0 %v350
        %v467 = vpop.f32.mrf.mxu0
        %v468 = vadd.f32 0.0, %v467
        %v469 = vpop.f32.mrf.mxu0
        %470 = vmatprep.mubr.f32.mxu0 0.0
        %471 = vmatmul.mubr.f32.gmra.mxu0 %v353
        %v472 = vpop.f32.mrf.mxu0
        %v473 = vadd.f32 0.0, %v472
        %v474 = vpop.f32.mrf.mxu0
        %475 = vmatprep.mubr.f32.mxu0 0.0
        %476 = vmatmul.mubr.f32.gmra.mxu0 %v356
        %v477 = vpop.f32.mrf.mxu0
        %v478 = vadd.f32 0.0, %v477
        %v479 = vpop.f32.mrf.mxu0
        %480 = vmatprep.mubr.f32.mxu0 0.0
        %481 = vmatmul.mubr.f32.gmra.mxu0 %v359
        %v482 = vpop.f32.mrf.mxu0
        %v483 = vadd.f32 0.0, %v482
        %v484 = vpop.f32.mrf.mxu0
        %485 = vmatprep.mubr.f32.mxu0 0.0
        %486 = vmatmul.mubr.f32.gmra.mxu0 %v362
        %v487 = vpop.f32.mrf.mxu0
        %v488 = vadd.f32 0.0, %v487
        %v489 = vpop.f32.mrf.mxu0
        %490 = vmatprep.mubr.f32.mxu0 0.0
        %491 = vmatmul.mubr.f32.gmra.mxu0 %v365
        %v492 = vpop.f32.mrf.mxu0
        %v493 = vadd.f32 0.0, %v492
        %v494 = vpop.f32.mrf.mxu0
        %495 = vmatprep.mubr.f32.mxu0 0.0
        %496 = vmatmul.mubr.f32.gmra.mxu0 %v368
        %v497 = vpop.f32.mrf.mxu0
        %v498 = vadd.f32 0.0, %v497
        %v499 = vpop.f32.mrf.mxu0
        %500 = vmatprep.mubr.f32.mxu0 0.0
        %501 = vmatmul.mubr.f32.gmra.mxu0 %v371
        %v502 = vpop.f32.mrf.mxu0
        %v503 = vadd.f32 0.0, %v502
        %v504 = vpop.f32.mrf.mxu0
        %505 = vmatprep.mubr.f32.mxu0 0.0
        %506 = vmatmul.mubr.f32.gmra.mxu0 %v374
        %v507 = vpop.f32.mrf.mxu0
        %v508 = vadd.f32 0.0, %v507
        %v509 = vpop.f32.mrf.mxu0
        %510 = vmatprep.mubr.f32.mxu0 0.0
        %511 = vmatmul.mubr.f32.gmra.mxu0 %v377
        %v512 = vpop.f32.mrf.mxu0
        %v513 = vadd.f32 0.0, %v512
        %v514 = vpop.f32.mrf.mxu0
        %515 = vmatprep.mubr.f32.mxu0 0.0
        %516 = vmatmul.mubr.f32.gmra.mxu0 %v380
        %v517 = vpop.f32.mrf.mxu0
        %v518 = vadd.f32 0.0, %v517
        %v519 = vpop.f32.mrf.mxu0
        %520 = vmatprep.mubr.f32.mxu0 0.0
        %521 = vmatmul.mubr.f32.gmra.mxu0 %v383
        %v522 = vpop.f32.mrf.mxu0
        %v523 = vadd.f32 0.0, %v522
        %v524 = vpop.f32.mrf.mxu0
        %525 = vmatprep.mubr.f32.mxu0 0.0
        %526 = vmatmul.mubr.f32.gmra.mxu0 %v386
        %v527 = vpop.f32.mrf.mxu0
        %v528 = vadd.f32 0.0, %v527
        %v529 = vpop.f32.mrf.mxu0
        %530 = vmatprep.mubr.f32.mxu0 0.0
        %531 = vmatmul.mubr.f32.gmra.mxu0 %v389
        %v532 = vpop.f32.mrf.mxu0
        %v533 = vadd.f32 0.0, %v532
        %v534 = vpop.f32.mrf.mxu0
        %535 = vdwg.mxu0
        %vm536 = vcmask 130048
        %537 = vst.msk [vmem:[%s185] sm:$0xff] %vm536, %v458
        %538 = vst.msk [vmem:[%s185 + $0x8] sm:$0xff] %vm536, %v463
        %539 = vst.msk [vmem:[%s185 + $0x10] sm:$0xff] %vm536, %v468
        %540 = vst.msk [vmem:[%s185 + $0x18] sm:$0xff] %vm536, %v473
        %541 = vst.msk [vmem:[%s185 + $0x20] sm:$0xff] %vm536, %v478
        %542 = vst.msk [vmem:[%s185 + $0x28] sm:$0xff] %vm536, %v483
        %543 = vst.msk [vmem:[%s185 + $0x30] sm:$0xff] %vm536, %v488
        %544 = vst.msk [vmem:[%s185 + $0x38] sm:$0xff] %vm536, %v493
        %545 = vst.msk [vmem:[%s185 + $0x40] sm:$0xff] %vm536, %v498
        %546 = vst.msk [vmem:[%s185 + $0x48] sm:$0xff] %vm536, %v503
        %547 = vst.msk [vmem:[%s185 + $0x50] sm:$0xff] %vm536, %v508
        %548 = vst.msk [vmem:[%s185 + $0x58] sm:$0xff] %vm536, %v513
        %549 = vst.msk [vmem:[%s185 + $0x60] sm:$0xff] %vm536, %v518
        %550 = vst.msk [vmem:[%s185 + $0x68] sm:$0xff] %vm536, %v523
        %551 = vst.msk [vmem:[%s185 + $0x70] sm:$0xff] %vm536, %v528
        %552 = vst.msk [vmem:[%s185 + $0x78] sm:$0xff] %vm536, %v533
        %s553 = smul.u32 16, %s15
        %p554 = scmp.lt.s32.totalorder %s553, 31
        %s555 = scalar_select %p554, %s553, 31
        %s556 = smul.addr %s555, 8
        %s557 = scalar_lea.vmem %s3, %s556
        // Predicated region
        $region37: #{combination_module_dcn.6} parent=31 // pred_check
          %p558 = pneg %p101
        $region38: #{combination_module_dcn.6} parent=31 // pred_check_branch
          %560 = sbr.rel (%p558) target = $region40
        $region39: #{combination_module_dcn.6} parent=31 // pred_region
          %s561 = smul.u32 16, %s15
        $region40: #{combination_module_dcn.6} parent=31 // pred_fallthru
          _
      $region32: #{combination_module_dcn.6} parent=5 // pred_fallthru
        _
      %p562 = scmp.le.s32.totalorder 2, %s10
      // Predicated region
      $region41: #{combination_module_dcn.6} parent=5 // pred_check
        %p563 = pneg %p562
      $region42: #{combination_module_dcn.6} parent=5 // pred_check_branch
        %565 = sbr.rel (%p563) target = $region44
      $region43: #{combination_module_dcn.6} parent=5 // pred_region
        %s566 = ssub.s32 %s10, 2
        // Predicated region
        $region45: #{combination_module_dcn.6} parent=43 // pred_check
          %p567 = pneg %p107
        $region46: #{combination_module_dcn.6} parent=43 // pred_check_branch
          %569 = sbr.rel (%p567) target = $region48
        $region47: #{combination_module_dcn.6} parent=43 // pred_region
          %s570 = smul.u32 16, %s16
          %p571 = scmp.lt.s32.totalorder %s570, 31
          %s572 = scalar_select %p571, %s570, 31
          %s573 = smul.addr %s572, 8
          %s574 = scalar_lea.vmem %s3, %s573
        $region48: #{combination_module_dcn.6} parent=43 // pred_fallthru
          _
      $region44: #{combination_module_dcn.6} parent=5 // pred_fallthru
        _
    $region6: #{combination_module_dcn.6} parent=1 // loop_footer
      %s14 = sadd.s32 1, %s10
    $region7: #{combination_module_dcn.6} parent=1 // loop_footer_branch
      %9 = sbr.rel target = $region3
    $region8: #{combination_module_dcn.6} parent=1 // loop_exit
      _
    %575 = vsyncpa [#allocation3], 1
    %s576 = scalar_lea.sflag [#allocation3], 1
    %577 = vsyncpa %s576, 1

// kernel: mul.85
$region0: #{mul.85}
  %s0 = inlined_call_operand.vmem [shape: f32[2,9,16,16], index: 0, kind: input, shape index: {}]
  %s1 = inlined_call_operand.vmem [shape: f32[2,2304], index: 1, kind: output, shape index: {}]
  $region1: #{mul.85} parent=0
    #allocation0 [shape = 'u8[73728]{0}', space=vmem, size = 0x12000, scoped, tag = 'scoped mem for output reshape']
    %v2 = vld [vmem:[%s0] ss:$8 sm:$0xf]
    %v3 = vld [vmem:[%s0] ss:$8 sm:$0xf0]
    %vm4 = vcmask 1047556
    %v5 = vsel %vm4, %v3, %v2
    %vm6 = vcmask 130048
    %7 = vst.msk [vmem:[#allocation0] ss:$8 sm:$0xf] %vm6, %v5
    %8 = vst.msk [vmem:[#allocation0] ss:$8 sm:$0xf0] %vm6, %v5
    %s9 = scalar_lea.vmem %s0, 64
    %v10 = vld [vmem:[%s9] ss:$8 sm:$0xf]
    %s11 = scalar_lea.vmem %s0, 64
    %v12 = vld [vmem:[%s11] ss:$8 sm:$0xf0]
    %vm13 = vcmask 1047556
    %v14 = vsel %vm13, %v12, %v10
    %vm15 = vcmask 130048
    %s16 = scalar_lea.vmem [#allocation0], 64
    %17 = vst.msk [vmem:[%s16] ss:$8 sm:$0xf] %vm15, %v14
    %s18 = scalar_lea.vmem [#allocation0], 64
    %19 = vst.msk [vmem:[%s18] ss:$8 sm:$0xf0] %vm15, %v14
    %s20 = scalar_lea.vmem %s0, 128
    %v21 = vld [vmem:[%s20] ss:$8 sm:$0xf]
    %s22 = scalar_lea.vmem %s0, 128
    %v23 = vld [vmem:[%s22] ss:$8 sm:$0xf0]
    %vm24 = vcmask 1047556
    %v25 = vsel %vm24, %v23, %v21
    %vm26 = vcmask 130048
    %s27 = scalar_lea.vmem [#allocation0], 128
    %28 = vst.msk [vmem:[%s27] ss:$8 sm:$0x3] %vm26, %v25
    %s29 = scalar_lea.vmem [#allocation0], 4294967281
    %30 = vst.msk [vmem:[%s29] ss:$8 sm:$0x3c] %vm26, %v25
    %s31 = scalar_lea.vmem [#allocation0], 4294967281
    %32 = vst.msk [vmem:[%s31] ss:$8 sm:$0xc0] %vm26, %v25
    %s33 = scalar_lea.vmem %s0, 192
    %v34 = vld [vmem:[%s33] ss:$8 sm:$0xf]
    %s35 = scalar_lea.vmem %s0, 192
    %v36 = vld [vmem:[%s35] ss:$8 sm:$0xf0]
    %vm37 = vcmask 1047556
    %v38 = vsel %vm37, %v36, %v34
    %vm39 = vcmask 130048
    %s40 = scalar_lea.vmem [#allocation0], 49
    %41 = vst.msk [vmem:[%s40] ss:$8 sm:$0xf] %vm39, %v38
    %s42 = scalar_lea.vmem [#allocation0], 49
    %43 = vst.msk [vmem:[%s42] ss:$8 sm:$0xf0] %vm39, %v38
    %s44 = scalar_lea.vmem %s0, 256
    %v45 = vld [vmem:[%s44] ss:$8 sm:$0xf]
    %vm46 = vcmask 130048
    %s47 = scalar_lea.vmem [#allocation0], 113
    %48 = vst.msk [vmem:[%s47] ss:$8 sm:$0xf] %vm46, %v45
    %s49 = scalar_lea.vmem %s0, 7
    %s50 = smov 3
    %v51 = vld [vmem:[%s49] ss:$144 sm:%s50]
    %s52 = scalar_lea.vmem %s0, 4294967023
    %s53 = smov 12
    %v54 = vld [vmem:[%s52] ss:$144 sm:%s53]
    %vm55 = vcmask 1043458
    %v56 = vsel %vm55, %v54, %v51
    %s57 = scalar_lea.vmem %s0, 4294966743
    %s58 = smov 48
    %v59 = vld [vmem:[%s57] ss:$144 sm:%s58]
    %vm60 = vcmask 1045508
    %v61 = vsel %vm60, %v59, %v56
    %s62 = scalar_lea.vmem %s0, 4294966463
    %s63 = smov 192
    %v64 = vld [vmem:[%s62] ss:$144 sm:%s63]
    %vm65 = vcmask 1047558
    %v66 = vsel %vm65, %v64, %v61
    %67 = vrot.lane.b32.xlu0 %v66, 112
    %v68 = vpop.permute.xlu0 %67
    %vm69 = vcmask 1048448
    %70 = vst.msk [vmem:[#allocation0] sm:$0x3] %vm69, %v68
    %s71 = scalar_lea.vmem [#allocation0], 6
    %72 = vst.msk [vmem:[%s71] sm:$0xc] %vm69, %v68
    %s73 = scalar_lea.vmem [#allocation0], 12
    %74 = vst.msk [vmem:[%s73] sm:$0x30] %vm69, %v68
    %s75 = scalar_lea.vmem [#allocation0], 18
    %76 = vst.msk [vmem:[%s75] sm:$0xc0] %vm69, %v68
    %s77 = scalar_lea.vmem %s0, 39
    %s78 = smov 3
    %v79 = vld [vmem:[%s77] ss:$144 sm:%s78]
    %s80 = scalar_lea.vmem %s0, 4294967055
    %s81 = smov 12
    %v82 = vld [vmem:[%s80] ss:$144 sm:%s81]
    %vm83 = vcmask 1043458
    %v84 = vsel %vm83, %v82, %v79
    %s85 = scalar_lea.vmem %s0, 4294966775
    %s86 = smov 48
    %v87 = vld [vmem:[%s85] ss:$144 sm:%s86]
    %vm88 = vcmask 1045508
    %v89 = vsel %vm88, %v87, %v84
    %s90 = scalar_lea.vmem %s0, 4294966495
    %s91 = smov 192
    %v92 = vld [vmem:[%s90] ss:$144 sm:%s91]
    %vm93 = vcmask 1047558
    %v94 = vsel %vm93, %v92, %v89
    %95 = vrot.lane.b32.xlu0 %v94, 112
    %v96 = vpop.permute.xlu0 %95
    %vm97 = vcmask 1048448
    %s98 = scalar_lea.vmem [#allocation0], 32
    %99 = vst.msk [vmem:[%s98] sm:$0x3] %vm97, %v96
    %s100 = scalar_lea.vmem [#allocation0], 38
    %101 = vst.msk [vmem:[%s100] sm:$0xc] %vm97, %v96
    %s102 = scalar_lea.vmem [#allocation0], 44
    %103 = vst.msk [vmem:[%s102] sm:$0x30] %vm97, %v96
    %s104 = scalar_lea.vmem [#allocation0], 50
    %105 = vst.msk [vmem:[%s104] sm:$0xc0] %vm97, %v96
    %s106 = scalar_lea.vmem %s0, 71
    %s107 = smov 3
    %v108 = vld [vmem:[%s106] ss:$144 sm:%s107]
    %s109 = scalar_lea.vmem %s0, 4294967087
    %s110 = smov 12
    %v111 = vld [vmem:[%s109] ss:$144 sm:%s110]
    %vm112 = vcmask 1043458
    %v113 = vsel %vm112, %v111, %v108
    %s114 = scalar_lea.vmem %s0, 4294966807
    %s115 = smov 48
    %v116 = vld [vmem:[%s114] ss:$144 sm:%s115]
    %vm117 = vcmask 1045508
    %v118 = vsel %vm117, %v116, %v113
    %s119 = scalar_lea.vmem %s0, 4294966527
    %s120 = smov 192
    %v121 = vld [vmem:[%s119] ss:$144 sm:%s120]
    %vm122 = vcmask 1047558
    %v123 = vsel %vm122, %v121, %v118
    %124 = vrot.lane.b32.xlu0 %v123, 112
    %v125 = vpop.permute.xlu0 %124
    %vm126 = vcmask 1048448
    %s127 = scalar_lea.vmem [#allocation0], 64
    %128 = vst.msk [vmem:[%s127] sm:$0x3] %vm126, %v125
    %s129 = scalar_lea.vmem [#allocation0], 70
    %130 = vst.msk [vmem:[%s129] sm:$0xc] %vm126, %v125
    %s131 = scalar_lea.vmem [#allocation0], 76
    %132 = vst.msk [vmem:[%s131] sm:$0x30] %vm126, %v125
    %s133 = scalar_lea.vmem [#allocation0], 82
    %134 = vst.msk [vmem:[%s133] sm:$0xc0] %vm126, %v125
    %s135 = scalar_lea.vmem %s0, 103
    %s136 = smov 3
    %v137 = vld [vmem:[%s135] ss:$144 sm:%s136]
    %s138 = scalar_lea.vmem %s0, 4294967119
    %s139 = smov 12
    %v140 = vld [vmem:[%s138] ss:$144 sm:%s139]
    %vm141 = vcmask 1043458
    %v142 = vsel %vm141, %v140, %v137
    %s143 = scalar_lea.vmem %s0, 4294966839
    %s144 = smov 48
    %v145 = vld [vmem:[%s143] ss:$144 sm:%s144]
    %vm146 = vcmask 1045508
    %v147 = vsel %vm146, %v145, %v142
    %s148 = scalar_lea.vmem %s0, 4294966559
    %s149 = smov 192
    %v150 = vld [vmem:[%s148] ss:$144 sm:%s149]
    %vm151 = vcmask 1047558
    %v152 = vsel %vm151, %v150, %v147
    %153 = vrot.lane.b32.xlu0 %v152, 112
    %v154 = vpop.permute.xlu0 %153
    %vm155 = vcmask 1048448
    %s156 = scalar_lea.vmem [#allocation0], 96
    %157 = vst.msk [vmem:[%s156] sm:$0x3] %vm155, %v154
    %s158 = scalar_lea.vmem [#allocation0], 102
    %159 = vst.msk [vmem:[%s158] sm:$0xc] %vm155, %v154
    %s160 = scalar_lea.vmem [#allocation0], 108
    %161 = vst.msk [vmem:[%s160] sm:$0x30] %vm155, %v154
    %s162 = scalar_lea.vmem [#allocation0], 114
    %163 = vst.msk [vmem:[%s162] sm:$0xc0] %vm155, %v154
    %s164 = scalar_lea.vmem %s0, 135
    %s165 = smov 3
    %v166 = vld [vmem:[%s164] ss:$144 sm:%s165]
    %s167 = scalar_lea.vmem %s0, 4294967151
    %s168 = smov 12
    %v169 = vld [vmem:[%s167] ss:$144 sm:%s168]
    %vm170 = vcmask 1043458
    %v171 = vsel %vm170, %v169, %v166
    %172 = vrot.lane.b32.xlu0 %v171, 112
    %v173 = vpop.permute.xlu0 %172
    %vm174 = vcmask 1048448
    %s175 = scalar_lea.vmem [#allocation0], 128
    %176 = vst.msk [vmem:[%s175] sm:$0x3] %vm174, %v173
    %s177 = scalar_lea.vmem [#allocation0], 134
    %178 = vst.msk [vmem:[%s177] sm:$0xc] %vm174, %v173
    %s179 = scalar_lea.vmem %s0, 6
    %s180 = smov 3
    %v181 = vld [vmem:[%s179] ss:$144 sm:%s180]
    %s182 = scalar_lea.vmem %s0, 4294967022
    %s183 = smov 12
    %v184 = vld [vmem:[%s182] ss:$144 sm:%s183]
    %vm185 = vcmask 1043458
    %v186 = vsel %vm185, %v184, %v181
    %s187 = scalar_lea.vmem %s0, 4294966742
    %s188 = smov 48
    %v189 = vld [vmem:[%s187] ss:$144 sm:%s188]
    %vm190 = vcmask 1045508
    %v191 = vsel %vm190, %v189, %v186
    %s192 = scalar_lea.vmem %s0, 4294966462
    %s193 = smov 192
    %v194 = vld [vmem:[%s192] ss:$144 sm:%s193]
    %vm195 = vcmask 1047558
    %v196 = vsel %vm195, %v194, %v191
    %197 = vrot.lane.b32.xlu0 %v196, 96
    %v198 = vpop.permute.xlu0 %197
    %vm199 = vcmask 917248
    %200 = vst.msk [vmem:[#allocation0] sm:$0x3] %vm199, %v198
    %s201 = scalar_lea.vmem [#allocation0], 6
    %202 = vst.msk [vmem:[%s201] sm:$0xc] %vm199, %v198
    %s203 = scalar_lea.vmem [#allocation0], 12
    %204 = vst.msk [vmem:[%s203] sm:$0x30] %vm199, %v198
    %s205 = scalar_lea.vmem [#allocation0], 18
    %206 = vst.msk [vmem:[%s205] sm:$0xc0] %vm199, %v198
    %s207 = scalar_lea.vmem %s0, 38
    %s208 = smov 3
    %v209 = vld [vmem:[%s207] ss:$144 sm:%s208]
    %s210 = scalar_lea.vmem %s0, 4294967054
    %s211 = smov 12
    %v212 = vld [vmem:[%s210] ss:$144 sm:%s211]
    %vm213 = vcmask 1043458
    %v214 = vsel %vm213, %v212, %v209
    %s215 = scalar_lea.vmem %s0, 4294966774
    %s216 = smov 48
    %v217 = vld [vmem:[%s215] ss:$144 sm:%s216]
    %vm218 = vcmask 1045508
    %v219 = vsel %vm218, %v217, %v214
    %s220 = scalar_lea.vmem %s0, 4294966494
    %s221 = smov 192
    %v222 = vld [vmem:[%s220] ss:$144 sm:%s221]
    %vm223 = vcmask 1047558
    %v224 = vsel %vm223, %v222, %v219
    %225 = vrot.lane.b32.xlu0 %v224, 96
    %v226 = vpop.permute.xlu0 %225
    %vm227 = vcmask 917248
    %s228 = scalar_lea.vmem [#allocation0], 32
    %229 = vst.msk [vmem:[%s228] sm:$0x3] %vm227, %v226
    %s230 = scalar_lea.vmem [#allocation0], 38
    %231 = vst.msk [vmem:[%s230] sm:$0xc] %vm227, %v226
    %s232 = scalar_lea.vmem [#allocation0], 44
    %233 = vst.msk [vmem:[%s232] sm:$0x30] %vm227, %v226
    %s234 = scalar_lea.vmem [#allocation0], 50
    %235 = vst.msk [vmem:[%s234] sm:$0xc0] %vm227, %v226
    %s236 = scalar_lea.vmem %s0, 70
    %s237 = smov 3
    %v238 = vld [vmem:[%s236] ss:$144 sm:%s237]
    %s239 = scalar_lea.vmem %s0, 4294967086
    %s240 = smov 12
    %v241 = vld [vmem:[%s239] ss:$144 sm:%s240]
    %vm242 = vcmask 1043458
    %v243 = vsel %vm242, %v241, %v238
    %s244 = scalar_lea.vmem %s0, 4294966806
    %s245 = smov 48
    %v246 = vld [vmem:[%s244] ss:$144 sm:%s245]
    %vm247 = vcmask 1045508
    %v248 = vsel %vm247, %v246, %v243
    %s249 = scalar_lea.vmem %s0, 4294966526
    %s250 = smov 192
    %v251 = vld [vmem:[%s249] ss:$144 sm:%s250]
    %vm252 = vcmask 1047558
    %v253 = vsel %vm252, %v251, %v248
    %254 = vrot.lane.b32.xlu0 %v253, 96
    %v255 = vpop.permute.xlu0 %254
    %vm256 = vcmask 917248
    %s257 = scalar_lea.vmem [#allocation0], 64
    %258 = vst.msk [vmem:[%s257] sm:$0x3] %vm256, %v255
    %s259 = scalar_lea.vmem [#allocation0], 70
    %260 = vst.msk [vmem:[%s259] sm:$0xc] %vm256, %v255
    %s261 = scalar_lea.vmem [#allocation0], 76
    %262 = vst.msk [vmem:[%s261] sm:$0x30] %vm256, %v255
    %s263 = scalar_lea.vmem [#allocation0], 82
    %264 = vst.msk [vmem:[%s263] sm:$0xc0] %vm256, %v255
    %s265 = scalar_lea.vmem %s0, 102
    %s266 = smov 3
    %v267 = vld [vmem:[%s265] ss:$144 sm:%s266]
    %s268 = scalar_lea.vmem %s0, 4294967118
    %s269 = smov 12
    %v270 = vld [vmem:[%s268] ss:$144 sm:%s269]
    %vm271 = vcmask 1043458
    %v272 = vsel %vm271, %v270, %v267
    %s273 = scalar_lea.vmem %s0, 4294966838
    %s274 = smov 48
    %v275 = vld [vmem:[%s273] ss:$144 sm:%s274]
    %vm276 = vcmask 1045508
    %v277 = vsel %vm276, %v275, %v272
    %s278 = scalar_lea.vmem %s0, 4294966558
    %s279 = smov 192
    %v280 = vld [vmem:[%s278] ss:$144 sm:%s279]
    %vm281 = vcmask 1047558
    %v282 = vsel %vm281, %v280, %v277
    %283 = vrot.lane.b32.xlu0 %v282, 96
    %v284 = vpop.permute.xlu0 %283
    %vm285 = vcmask 917248
    %s286 = scalar_lea.vmem [#allocation0], 96
    %287 = vst.msk [vmem:[%s286] sm:$0x3] %vm285, %v284
    %s288 = scalar_lea.vmem [#allocation0], 102
    %289 = vst.msk [vmem:[%s288] sm:$0xc] %vm285, %v284
    %s290 = scalar_lea.vmem [#allocation0], 108
    %291 = vst.msk [vmem:[%s290] sm:$0x30] %vm285, %v284
    %s292 = scalar_lea.vmem [#allocation0], 114
    %293 = vst.msk [vmem:[%s292] sm:$0xc0] %vm285, %v284
    %s294 = scalar_lea.vmem %s0, 134
    %s295 = smov 3
    %v296 = vld [vmem:[%s294] ss:$144 sm:%s295]
    %s297 = scalar_lea.vmem %s0, 4294967150
    %s298 = smov 12
    %v299 = vld [vmem:[%s297] ss:$144 sm:%s298]
    %vm300 = vcmask 1043458
    %v301 = vsel %vm300, %v299, %v296
    %302 = vrot.lane.b32.xlu0 %v301, 96
    %v303 = vpop.permute.xlu0 %302
    %vm304 = vcmask 917248
    %s305 = scalar_lea.vmem [#allocation0], 128
    %306 = vst.msk [vmem:[%s305] sm:$0x3] %vm304, %v303
    %s307 = scalar_lea.vmem [#allocation0], 134
    %308 = vst.msk [vmem:[%s307] sm:$0xc] %vm304, %v303
    %s309 = scalar_lea.vmem %s0, 5
    %s310 = smov 3
    %v311 = vld [vmem:[%s309] ss:$144 sm:%s310]
    %s312 = scalar_lea.vmem %s0, 4294967021
    %s313 = smov 12
    %v314 = vld [vmem:[%s312] ss:$144 sm:%s313]
    %vm315 = vcmask 1043458
    %v316 = vsel %vm315, %v314, %v311
    %s317 = scalar_lea.vmem %s0, 4294966741
    %s318 = smov 48
    %v319 = vld [vmem:[%s317] ss:$144 sm:%s318]
    %vm320 = vcmask 1045508
    %v321 = vsel %vm320, %v319, %v316
    %s322 = scalar_lea.vmem %s0, 4294966461
    %s323 = smov 192
    %v324 = vld [vmem:[%s322] ss:$144 sm:%s323]
    %vm325 = vcmask 1047558
    %v326 = vsel %vm325, %v324, %v321
    %327 = vrot.lane.b32.xlu0 %v326, 80
    %v328 = vpop.permute.xlu0 %327
    %vm329 = vcmask 786048
    %330 = vst.msk [vmem:[#allocation0] sm:$0x3] %vm329, %v328
    %s331 = scalar_lea.vmem [#allocation0], 6
    %332 = vst.msk [vmem:[%s331] sm:$0xc] %vm329, %v328
    %s333 = scalar_lea.vmem [#allocation0], 12
    %334 = vst.msk [vmem:[%s333] sm:$0x30] %vm329, %v328
    %s335 = scalar_lea.vmem [#allocation0], 18
    %336 = vst.msk [vmem:[%s335] sm:$0xc0] %vm329, %v328
    %s337 = scalar_lea.vmem %s0, 37
    %s338 = smov 3
    %v339 = vld [vmem:[%s337] ss:$144 sm:%s338]
    %s340 = scalar_lea.vmem %s0, 4294967053
    %s341 = smov 12
    %v342 = vld [vmem:[%s340] ss:$144 sm:%s341]
    %vm343 = vcmask 1043458
    %v344 = vsel %vm343, %v342, %v339
    %s345 = scalar_lea.vmem %s0, 4294966773
    %s346 = smov 48
    %v347 = vld [vmem:[%s345] ss:$144 sm:%s346]
    %vm348 = vcmask 1045508
    %v349 = vsel %vm348, %v347, %v344
    %s350 = scalar_lea.vmem %s0, 4294966493
    %s351 = smov 192
    %v352 = vld [vmem:[%s350] ss:$144 sm:%s351]
    %vm353 = vcmask 1047558
    %v354 = vsel %vm353, %v352, %v349
    %355 = vrot.lane.b32.xlu0 %v354, 80
    %v356 = vpop.permute.xlu0 %355
    %vm357 = vcmask 786048
    %s358 = scalar_lea.vmem [#allocation0], 32
    %359 = vst.msk [vmem:[%s358] sm:$0x3] %vm357, %v356
    %s360 = scalar_lea.vmem [#allocation0], 38
    %361 = vst.msk [vmem:[%s360] sm:$0xc] %vm357, %v356
    %s362 = scalar_lea.vmem [#allocation0], 44
    %363 = vst.msk [vmem:[%s362] sm:$0x30] %vm357, %v356
    %s364 = scalar_lea.vmem [#allocation0], 50
    %365 = vst.msk [vmem:[%s364] sm:$0xc0] %vm357, %v356
    %s366 = scalar_lea.vmem %s0, 69
    %s367 = smov 3
    %v368 = vld [vmem:[%s366] ss:$144 sm:%s367]
    %s369 = scalar_lea.vmem %s0, 4294967085
    %s370 = smov 12
    %v371 = vld [vmem:[%s369] ss:$144 sm:%s370]
    %vm372 = vcmask 1043458
    %v373 = vsel %vm372, %v371, %v368
    %s374 = scalar_lea.vmem %s0, 4294966805
    %s375 = smov 48
    %v376 = vld [vmem:[%s374] ss:$144 sm:%s375]
    %vm377 = vcmask 1045508
    %v378 = vsel %vm377, %v376, %v373
    %s379 = scalar_lea.vmem %s0, 4294966525
    %s380 = smov 192
    %v381 = vld [vmem:[%s379] ss:$144 sm:%s380]
    %vm382 = vcmask 1047558
    %v383 = vsel %vm382, %v381, %v378
    %384 = vrot.lane.b32.xlu0 %v383, 80
    %v385 = vpop.permute.xlu0 %384
    %vm386 = vcmask 786048
    %s387 = scalar_lea.vmem [#allocation0], 64
    %388 = vst.msk [vmem:[%s387] sm:$0x3] %vm386, %v385
    %s389 = scalar_lea.vmem [#allocation0], 70
    %390 = vst.msk [vmem:[%s389] sm:$0xc] %vm386, %v385
    %s391 = scalar_lea.vmem [#allocation0], 76
    %392 = vst.msk [vmem:[%s391] sm:$0x30] %vm386, %v385
    %s393 = scalar_lea.vmem [#allocation0], 82
    %394 = vst.msk [vmem:[%s393] sm:$0xc0] %vm386, %v385
    %s395 = scalar_lea.vmem %s0, 101
    %s396 = smov 3
    %v397 = vld [vmem:[%s395] ss:$144 sm:%s396]
    %s398 = scalar_lea.vmem %s0, 4294967117
    %s399 = smov 12
    %v400 = vld [vmem:[%s398] ss:$144 sm:%s399]
    %vm401 = vcmask 1043458
    %v402 = vsel %vm401, %v400, %v397
    %s403 = scalar_lea.vmem %s0, 4294966837
    %s404 = smov 48
    %v405 = vld [vmem:[%s403] ss:$144 sm:%s404]
    %vm406 = vcmask 1045508
    %v407 = vsel %vm406, %v405, %v402
    %s408 = scalar_lea.vmem %s0, 4294966557
    %s409 = smov 192
    %v410 = vld [vmem:[%s408] ss:$144 sm:%s409]
    %vm411 = vcmask 1047558
    %v412 = vsel %vm411, %v410, %v407
    %413 = vrot.lane.b32.xlu0 %v412, 80
    %v414 = vpop.permute.xlu0 %413
    %vm415 = vcmask 786048
    %s416 = scalar_lea.vmem [#allocation0], 96
    %417 = vst.msk [vmem:[%s416] sm:$0x3] %vm415, %v414
    %s418 = scalar_lea.vmem [#allocation0], 102
    %419 = vst.msk [vmem:[%s418] sm:$0xc] %vm415, %v414
    %s420 = scalar_lea.vmem [#allocation0], 108
    %421 = vst.msk [vmem:[%s420] sm:$0x30] %vm415, %v414
    %s422 = scalar_lea.vmem [#allocation0], 114
    %423 = vst.msk [vmem:[%s422] sm:$0xc0] %vm415, %v414
    %s424 = scalar_lea.vmem %s0, 133
    %s425 = smov 3
    %v426 = vld [vmem:[%s424] ss:$144 sm:%s425]
    %s427 = scalar_lea.vmem %s0, 4294967149
    %s428 = smov 12
    %v429 = vld [vmem:[%s427] ss:$144 sm:%s428]
    %vm430 = vcmask 1043458
    %v431 = vsel %vm430, %v429, %v426
    %432 = vrot.lane.b32.xlu0 %v431, 80
    %v433 = vpop.permute.xlu0 %432
    %vm434 = vcmask 786048
    %s435 = scalar_lea.vmem [#allocation0], 128
    %436 = vst.msk [vmem:[%s435] sm:$0x3] %vm434, %v433
    %s437 = scalar_lea.vmem [#allocation0], 134
    %438 = vst.msk [vmem:[%s437] sm:$0xc] %vm434, %v433
    %s439 = scalar_lea.vmem %s0, 4
    %s440 = smov 3
    %v441 = vld [vmem:[%s439] ss:$144 sm:%s440]
    %s442 = scalar_lea.vmem %s0, 4294967020
    %s443 = smov 12
    %v444 = vld [vmem:[%s442] ss:$144 sm:%s443]
    %vm445 = vcmask 1043458
    %v446 = vsel %vm445, %v444, %v441
    %s447 = scalar_lea.vmem %s0, 4294966740
    %s448 = smov 48
    %v449 = vld [vmem:[%s447] ss:$144 sm:%s448]
    %vm450 = vcmask 1045508
    %v451 = vsel %vm450, %v449, %v446
    %s452 = scalar_lea.vmem %s0, 4294966460
    %s453 = smov 192
    %v454 = vld [vmem:[%s452] ss:$144 sm:%s453]
    %vm455 = vcmask 1047558
    %v456 = vsel %vm455, %v454, %v451
    %457 = vrot.lane.b32.xlu0 %v456, 64
    %v458 = vpop.permute.xlu0 %457
    %vm459 = vcmask 654848
    %460 = vst.msk [vmem:[#allocation0] sm:$0x3] %vm459, %v458
    %s461 = scalar_lea.vmem [#allocation0], 6
    %462 = vst.msk [vmem:[%s461] sm:$0xc] %vm459, %v458
    %s463 = scalar_lea.vmem [#allocation0], 12
    %464 = vst.msk [vmem:[%s463] sm:$0x30] %vm459, %v458
    %s465 = scalar_lea.vmem [#allocation0], 18
    %466 = vst.msk [vmem:[%s465] sm:$0xc0] %vm459, %v458
    %s467 = scalar_lea.vmem %s0, 36
    %s468 = smov 3
    %v469 = vld [vmem:[%s467] ss:$144 sm:%s468]
    %s470 = scalar_lea.vmem %s0, 4294967052
    %s471 = smov 12
    %v472 = vld [vmem:[%s470] ss:$144 sm:%s471]
    %vm473 = vcmask 1043458
    %v474 = vsel %vm473, %v472, %v469
    %s475 = scalar_lea.vmem %s0, 4294966772
    %s476 = smov 48
    %v477 = vld [vmem:[%s475] ss:$144 sm:%s476]
    %vm478 = vcmask 1045508
    %v479 = vsel %vm478, %v477, %v474
    %s480 = scalar_lea.vmem %s0, 4294966492
    %s481 = smov 192
    %v482 = vld [vmem:[%s480] ss:$144 sm:%s481]
    %vm483 = vcmask 1047558
    %v484 = vsel %vm483, %v482, %v479
    %485 = vrot.lane.b32.xlu0 %v484, 64
    %v486 = vpop.permute.xlu0 %485
    %vm487 = vcmask 654848
    %s488 = scalar_lea.vmem [#allocation0], 32
    %489 = vst.msk [vmem:[%s488] sm:$0x3] %vm487, %v486
    %s490 = scalar_lea.vmem [#allocation0], 38
    %491 = vst.msk [vmem:[%s490] sm:$0xc] %vm487, %v486
    %s492 = scalar_lea.vmem [#allocation0], 44
    %493 = vst.msk [vmem:[%s492] sm:$0x30] %vm487, %v486
    %s494 = scalar_lea.vmem [#allocation0], 50
    %495 = vst.msk [vmem:[%s494] sm:$0xc0] %vm487, %v486
    %s496 = scalar_lea.vmem %s0, 68
    %s497 = smov 3
    %v498 = vld [vmem:[%s496] ss:$144 sm:%s497]
    %s499 = scalar_lea.vmem %s0, 4294967084
    %s500 = smov 12
    %v501 = vld [vmem:[%s499] ss:$144 sm:%s500]
    %vm502 = vcmask 1043458
    %v503 = vsel %vm502, %v501, %v498
    %s504 = scalar_lea.vmem %s0, 4294966804
    %s505 = smov 48
    %v506 = vld [vmem:[%s504] ss:$144 sm:%s505]
    %vm507 = vcmask 1045508
    %v508 = vsel %vm507, %v506, %v503
    %s509 = scalar_lea.vmem %s0, 4294966524
    %s510 = smov 192
    %v511 = vld [vmem:[%s509] ss:$144 sm:%s510]
    %vm512 = vcmask 1047558
    %v513 = vsel %vm512, %v511, %v508
    %514 = vrot.lane.b32.xlu0 %v513, 64
    %v515 = vpop.permute.xlu0 %514
    %vm516 = vcmask 654848
    %s517 = scalar_lea.vmem [#allocation0], 64
    %518 = vst.msk [vmem:[%s517] sm:$0x3] %vm516, %v515
    %s519 = scalar_lea.vmem [#allocation0], 70
    %520 = vst.msk [vmem:[%s519] sm:$0xc] %vm516, %v515
    %s521 = scalar_lea.vmem [#allocation0], 76
    %522 = vst.msk [vmem:[%s521] sm:$0x30] %vm516, %v515
    %s523 = scalar_lea.vmem [#allocation0], 82
    %524 = vst.msk [vmem:[%s523] sm:$0xc0] %vm516, %v515
    %s525 = scalar_lea.vmem %s0, 100
    %s526 = smov 3
    %v527 = vld [vmem:[%s525] ss:$144 sm:%s526]
    %s528 = scalar_lea.vmem %s0, 4294967116
    %s529 = smov 12
    %v530 = vld [vmem:[%s528] ss:$144 sm:%s529]
    %vm531 = vcmask 1043458
    %v532 = vsel %vm531, %v530, %v527
    %s533 = scalar_lea.vmem %s0, 4294966836
    %s534 = smov 48
    %v535 = vld [vmem:[%s533] ss:$144 sm:%s534]
    %vm536 = vcmask 1045508
    %v537 = vsel %vm536, %v535, %v532
    %s538 = scalar_lea.vmem %s0, 4294966556
    %s539 = smov 192
    %v540 = vld [vmem:[%s538] ss:$144 sm:%s539]
    %vm541 = vcmask 1047558
    %v542 = vsel %vm541, %v540, %v537
    %543 = vrot.lane.b32.xlu0 %v542, 64
    %v544 = vpop.permute.xlu0 %543
    %vm545 = vcmask 654848
    %s546 = scalar_lea.vmem [#allocation0], 96
    %547 = vst.msk [vmem:[%s546] sm:$0x3] %vm545, %v544
    %s548 = scalar_lea.vmem [#allocation0], 102
    %549 = vst.msk [vmem:[%s548] sm:$0xc] %vm545, %v544
    %s550 = scalar_lea.vmem [#allocation0], 108
    %551 = vst.msk [vmem:[%s550] sm:$0x30] %vm545, %v544
    %s552 = scalar_lea.vmem [#allocation0], 114
    %553 = vst.msk [vmem:[%s552] sm:$0xc0] %vm545, %v544
    %s554 = scalar_lea.vmem %s0, 132
    %s555 = smov 3
    %v556 = vld [vmem:[%s554] ss:$144 sm:%s555]
    %s557 = scalar_lea.vmem %s0, 4294967148
    %s558 = smov 12
    %v559 = vld [vmem:[%s557] ss:$144 sm:%s558]
    %vm560 = vcmask 1043458
    %v561 = vsel %vm560, %v559, %v556
    %562 = vrot.lane.b32.xlu0 %v561, 64
    %v563 = vpop.permute.xlu0 %562
    %vm564 = vcmask 654848
    %s565 = scalar_lea.vmem [#allocation0], 128
    %566 = vst.msk [vmem:[%s565] sm:$0x3] %vm564, %v563
    %s567 = scalar_lea.vmem [#allocation0], 134
    %568 = vst.msk [vmem:[%s567] sm:$0xc] %vm564, %v563
    %s569 = scalar_lea.vmem %s0, 3
    %s570 = smov 3
    %v571 = vld [vmem:[%s569] ss:$144 sm:%s570]
    %s572 = scalar_lea.vmem %s0, 4294967019
    %s573 = smov 12
    %v574 = vld [vmem:[%s572] ss:$144 sm:%s573]
    %vm575 = vcmask 1043458
    %v576 = vsel %vm575, %v574, %v571
    %s577 = scalar_lea.vmem %s0, 4294966739
    %s578 = smov 48
    %v579 = vld [vmem:[%s577] ss:$144 sm:%s578]
    %vm580 = vcmask 1045508
    %v581 = vsel %vm580, %v579, %v576
    %s582 = scalar_lea.vmem %s0, 4294966459
    %s583 = smov 192
    %v584 = vld [vmem:[%s582] ss:$144 sm:%s583]
    %vm585 = vcmask 1047558
    %v586 = vsel %vm585, %v584, %v581
    %587 = vrot.lane.b32.xlu0 %v586, 48
    %v588 = vpop.permute.xlu0 %587
    %vm589 = vcmask 523648
    %590 = vst.msk [vmem:[#allocation0] sm:$0x3] %vm589, %v588
    %s591 = scalar_lea.vmem [#allocation0], 6
    %592 = vst.msk [vmem:[%s591] sm:$0xc] %vm589, %v588
    %s593 = scalar_lea.vmem [#allocation0], 12
    %594 = vst.msk [vmem:[%s593] sm:$0x30] %vm589, %v588
    %s595 = scalar_lea.vmem [#allocation0], 18
    %596 = vst.msk [vmem:[%s595] sm:$0xc0] %vm589, %v588
    %s597 = scalar_lea.vmem %s0, 35
    %s598 = smov 3
    %v599 = vld [vmem:[%s597] ss:$144 sm:%s598]
    %s600 = scalar_lea.vmem %s0, 4294967051
    %s601 = smov 12
    %v602 = vld [vmem:[%s600] ss:$144 sm:%s601]
    %vm603 = vcmask 1043458
    %v604 = vsel %vm603, %v602, %v599
    %s605 = scalar_lea.vmem %s0, 4294966771
    %s606 = smov 48
    %v607 = vld [vmem:[%s605] ss:$144 sm:%s606]
    %vm608 = vcmask 1045508
    %v609 = vsel %vm608, %v607, %v604
    %s610 = scalar_lea.vmem %s0, 4294966491
    %s611 = smov 192
    %v612 = vld [vmem:[%s610] ss:$144 sm:%s611]
    %vm613 = vcmask 1047558
    %v614 = vsel %vm613, %v612, %v609
    %615 = vrot.lane.b32.xlu0 %v614, 48
    %v616 = vpop.permute.xlu0 %615
    %vm617 = vcmask 523648
    %s618 = scalar_lea.vmem [#allocation0], 32
    %619 = vst.msk [vmem:[%s618] sm:$0x3] %vm617, %v616
    %s620 = scalar_lea.vmem [#allocation0], 38
    %621 = vst.msk [vmem:[%s620] sm:$0xc] %vm617, %v616
    %s622 = scalar_lea.vmem [#allocation0], 44
    %623 = vst.msk [vmem:[%s622] sm:$0x30] %vm617, %v616
    %s624 = scalar_lea.vmem [#allocation0], 50
    %625 = vst.msk [vmem:[%s624] sm:$0xc0] %vm617, %v616
    %s626 = scalar_lea.vmem %s0, 67
    %s627 = smov 3
    %v628 = vld [vmem:[%s626] ss:$144 sm:%s627]
    %s629 = scalar_lea.vmem %s0, 4294967083
    %s630 = smov 12
    %v631 = vld [vmem:[%s629] ss:$144 sm:%s630]
    %vm632 = vcmask 1043458
    %v633 = vsel %vm632, %v631, %v628
    %s634 = scalar_lea.vmem %s0, 4294966803
    %s635 = smov 48
    %v636 = vld [vmem:[%s634] ss:$144 sm:%s635]
    %vm637 = vcmask 1045508
    %v638 = vsel %vm637, %v636, %v633
    %s639 = scalar_lea.vmem %s0, 4294966523
    %s640 = smov 192
    %v641 = vld [vmem:[%s639] ss:$144 sm:%s640]
    %vm642 = vcmask 1047558
    %v643 = vsel %vm642, %v641, %v638
    %644 = vrot.lane.b32.xlu0 %v643, 48
    %v645 = vpop.permute.xlu0 %644
    %vm646 = vcmask 523648
    %s647 = scalar_lea.vmem [#allocation0], 64
    %648 = vst.msk [vmem:[%s647] sm:$0x3] %vm646, %v645
    %s649 = scalar_lea.vmem [#allocation0], 70
    %650 = vst.msk [vmem:[%s649] sm:$0xc] %vm646, %v645
    %s651 = scalar_lea.vmem [#allocation0], 76
    %652 = vst.msk [vmem:[%s651] sm:$0x30] %vm646, %v645
    %s653 = scalar_lea.vmem [#allocation0], 82
    %654 = vst.msk [vmem:[%s653] sm:$0xc0] %vm646, %v645
    %s655 = scalar_lea.vmem %s0, 99
    %s656 = smov 3
    %v657 = vld [vmem:[%s655] ss:$144 sm:%s656]
    %s658 = scalar_lea.vmem %s0, 4294967115
    %s659 = smov 12
    %v660 = vld [vmem:[%s658] ss:$144 sm:%s659]
    %vm661 = vcmask 1043458
    %v662 = vsel %vm661, %v660, %v657
    %s663 = scalar_lea.vmem %s0, 4294966835
    %s664 = smov 48
    %v665 = vld [vmem:[%s663] ss:$144 sm:%s664]
    %vm666 = vcmask 1045508
    %v667 = vsel %vm666, %v665, %v662
    %s668 = scalar_lea.vmem %s0, 4294966555
    %s669 = smov 192
    %v670 = vld [vmem:[%s668] ss:$144 sm:%s669]
    %vm671 = vcmask 1047558
    %v672 = vsel %vm671, %v670, %v667
    %673 = vrot.lane.b32.xlu0 %v672, 48
    %v674 = vpop.permute.xlu0 %673
    %vm675 = vcmask 523648
    %s676 = scalar_lea.vmem [#allocation0], 96
    %677 = vst.msk [vmem:[%s676] sm:$0x3] %vm675, %v674
    %s678 = scalar_lea.vmem [#allocation0], 102
    %679 = vst.msk [vmem:[%s678] sm:$0xc] %vm675, %v674
    %s680 = scalar_lea.vmem [#allocation0], 108
    %681 = vst.msk [vmem:[%s680] sm:$0x30] %vm675, %v674
    %s682 = scalar_lea.vmem [#allocation0], 114
    %683 = vst.msk [vmem:[%s682] sm:$0xc0] %vm675, %v674
    %s684 = scalar_lea.vmem %s0, 131
    %s685 = smov 3
    %v686 = vld [vmem:[%s684] ss:$144 sm:%s685]
    %s687 = scalar_lea.vmem %s0, 4294967147
    %s688 = smov 12
    %v689 = vld [vmem:[%s687] ss:$144 sm:%s688]
    %vm690 = vcmask 1043458
    %v691 = vsel %vm690, %v689, %v686
    %692 = vrot.lane.b32.xlu0 %v691, 48
    %v693 = vpop.permute.xlu0 %692
    %vm694 = vcmask 523648
    %s695 = scalar_lea.vmem [#allocation0], 128
    %696 = vst.msk [vmem:[%s695] sm:$0x3] %vm694, %v693
    %s697 = scalar_lea.vmem [#allocation0], 134
    %698 = vst.msk [vmem:[%s697] sm:$0xc] %vm694, %v693
    %s699 = scalar_lea.vmem %s0, 2
    %s700 = smov 3
    %v701 = vld [vmem:[%s699] ss:$144 sm:%s700]
    %s702 = scalar_lea.vmem %s0, 4294967018
    %s703 = smov 12
    %v704 = vld [vmem:[%s702] ss:$144 sm:%s703]
    %vm705 = vcmask 1043458
    %v706 = vsel %vm705, %v704, %v701
    %s707 = scalar_lea.vmem %s0, 4294966738
    %s708 = smov 48
    %v709 = vld [vmem:[%s707] ss:$144 sm:%s708]
    %vm710 = vcmask 1045508
    %v711 = vsel %vm710, %v709, %v706
    %s712 = scalar_lea.vmem %s0, 4294966458
    %s713 = smov 192
    %v714 = vld [vmem:[%s712] ss:$144 sm:%s713]
    %vm715 = vcmask 1047558
    %v716 = vsel %vm715, %v714, %v711
    %717 = vrot.lane.b32.xlu0 %v716, 32
    %v718 = vpop.permute.xlu0 %717
    %vm719 = vcmask 392448
    %720 = vst.msk [vmem:[#allocation0] sm:$0x3] %vm719, %v718
    %s721 = scalar_lea.vmem [#allocation0], 6
    %722 = vst.msk [vmem:[%s721] sm:$0xc] %vm719, %v718
    %s723 = scalar_lea.vmem [#allocation0], 12
    %724 = vst.msk [vmem:[%s723] sm:$0x30] %vm719, %v718
    %s725 = scalar_lea.vmem [#allocation0], 18
    %726 = vst.msk [vmem:[%s725] sm:$0xc0] %vm719, %v718
    %s727 = scalar_lea.vmem %s0, 34
    %s728 = smov 3
    %v729 = vld [vmem:[%s727] ss:$144 sm:%s728]
    %s730 = scalar_lea.vmem %s0, 4294967050
    %s731 = smov 12
    %v732 = vld [vmem:[%s730] ss:$144 sm:%s731]
    %vm733 = vcmask 1043458
    %v734 = vsel %vm733, %v732, %v729
    %s735 = scalar_lea.vmem %s0, 4294966770
    %s736 = smov 48
    %v737 = vld [vmem:[%s735] ss:$144 sm:%s736]
    %vm738 = vcmask 1045508
    %v739 = vsel %vm738, %v737, %v734
    %s740 = scalar_lea.vmem %s0, 4294966490
    %s741 = smov 192
    %v742 = vld [vmem:[%s740] ss:$144 sm:%s741]
    %vm743 = vcmask 1047558
    %v744 = vsel %vm743, %v742, %v739
    %745 = vrot.lane.b32.xlu0 %v744, 32
    %v746 = vpop.permute.xlu0 %745
    %vm747 = vcmask 392448
    %s748 = scalar_lea.vmem [#allocation0], 32
    %749 = vst.msk [vmem:[%s748] sm:$0x3] %vm747, %v746
    %s750 = scalar_lea.vmem [#allocation0], 38
    %751 = vst.msk [vmem:[%s750] sm:$0xc] %vm747, %v746
    %s752 = scalar_lea.vmem [#allocation0], 44
    %753 = vst.msk [vmem:[%s752] sm:$0x30] %vm747, %v746
    %s754 = scalar_lea.vmem [#allocation0], 50
    %755 = vst.msk [vmem:[%s754] sm:$0xc0] %vm747, %v746
    %s756 = scalar_lea.vmem %s0, 66
    %s757 = smov 3
    %v758 = vld [vmem:[%s756] ss:$144 sm:%s757]
    %s759 = scalar_lea.vmem %s0, 4294967082
    %s760 = smov 12
    %v761 = vld [vmem:[%s759] ss:$144 sm:%s760]
    %vm762 = vcmask 1043458
    %v763 = vsel %vm762, %v761, %v758
    %s764 = scalar_lea.vmem %s0, 4294966802
    %s765 = smov 48
    %v766 = vld [vmem:[%s764] ss:$144 sm:%s765]
    %vm767 = vcmask 1045508
    %v768 = vsel %vm767, %v766, %v763
    %s769 = scalar_lea.vmem %s0, 4294966522
    %s770 = smov 192
    %v771 = vld [vmem:[%s769] ss:$144 sm:%s770]
    %vm772 = vcmask 1047558
    %v773 = vsel %vm772, %v771, %v768
    %774 = vrot.lane.b32.xlu0 %v773, 32
    %v775 = vpop.permute.xlu0 %774
    %vm776 = vcmask 392448
    %s777 = scalar_lea.vmem [#allocation0], 64
    %778 = vst.msk [vmem:[%s777] sm:$0x3] %vm776, %v775
    %s779 = scalar_lea.vmem [#allocation0], 70
    %780 = vst.msk [vmem:[%s779] sm:$0xc] %vm776, %v775
    %s781 = scalar_lea.vmem [#allocation0], 76
    %782 = vst.msk [vmem:[%s781] sm:$0x30] %vm776, %v775
    %s783 = scalar_lea.vmem [#allocation0], 82
    %784 = vst.msk [vmem:[%s783] sm:$0xc0] %vm776, %v775
    %s785 = scalar_lea.vmem %s0, 98
    %s786 = smov 3
    %v787 = vld [vmem:[%s785] ss:$144 sm:%s786]
    %s788 = scalar_lea.vmem %s0, 4294967114
    %s789 = smov 12
    %v790 = vld [vmem:[%s788] ss:$144 sm:%s789]
    %vm791 = vcmask 1043458
    %v792 = vsel %vm791, %v790, %v787
    %s793 = scalar_lea.vmem %s0, 4294966834
    %s794 = smov 48
    %v795 = vld [vmem:[%s793] ss:$144 sm:%s794]
    %vm796 = vcmask 1045508
    %v797 = vsel %vm796, %v795, %v792
    %s798 = scalar_lea.vmem %s0, 4294966554
    %s799 = smov 192
    %v800 = vld [vmem:[%s798] ss:$144 sm:%s799]
    %vm801 = vcmask 1047558
    %v802 = vsel %vm801, %v800, %v797
    %803 = vrot.lane.b32.xlu0 %v802, 32
    %v804 = vpop.permute.xlu0 %803
    %vm805 = vcmask 392448
    %s806 = scalar_lea.vmem [#allocation0], 96
    %807 = vst.msk [vmem:[%s806] sm:$0x3] %vm805, %v804
    %s808 = scalar_lea.vmem [#allocation0], 102
    %809 = vst.msk [vmem:[%s808] sm:$0xc] %vm805, %v804
    %s810 = scalar_lea.vmem [#allocation0], 108
    %811 = vst.msk [vmem:[%s810] sm:$0x30] %vm805, %v804
    %s812 = scalar_lea.vmem [#allocation0], 114
    %813 = vst.msk [vmem:[%s812] sm:$0xc0] %vm805, %v804
    %s814 = scalar_lea.vmem %s0, 130
    %s815 = smov 3
    %v816 = vld [vmem:[%s814] ss:$144 sm:%s815]
    %s817 = scalar_lea.vmem %s0, 4294967146
    %s818 = smov 12
    %v819 = vld [vmem:[%s817] ss:$144 sm:%s818]
    %vm820 = vcmask 1043458
    %v821 = vsel %vm820, %v819, %v816
    %822 = vrot.lane.b32.xlu0 %v821, 32
    %v823 = vpop.permute.xlu0 %822
    %vm824 = vcmask 392448
    %s825 = scalar_lea.vmem [#allocation0], 128
    %826 = vst.msk [vmem:[%s825] sm:$0x3] %vm824, %v823
    %s827 = scalar_lea.vmem [#allocation0], 134
    %828 = vst.msk [vmem:[%s827] sm:$0xc] %vm824, %v823
    %s829 = scalar_lea.vmem %s0, 1
    %s830 = smov 3
    %v831 = vld [vmem:[%s829] ss:$144 sm:%s830]
    %s832 = scalar_lea.vmem %s0, 4294967017
    %s833 = smov 12
    %v834 = vld [vmem:[%s832] ss:$144 sm:%s833]
    %vm835 = vcmask 1043458
    %v836 = vsel %vm835, %v834, %v831
    %s837 = scalar_lea.vmem %s0, 4294966737
    %s838 = smov 48
    %v839 = vld [vmem:[%s837] ss:$144 sm:%s838]
    %vm840 = vcmask 1045508
    %v841 = vsel %vm840, %v839, %v836
    %s842 = scalar_lea.vmem %s0, 4294966457
    %s843 = smov 192
    %v844 = vld [vmem:[%s842] ss:$144 sm:%s843]
    %vm845 = vcmask 1047558
    %v846 = vsel %vm845, %v844, %v841
    %847 = vrot.lane.b32.xlu0 %v846, 16
    %v848 = vpop.permute.xlu0 %847
    %vm849 = vcmask 261248
    %850 = vst.msk [vmem:[#allocation0] sm:$0x3] %vm849, %v848
    %s851 = scalar_lea.vmem [#allocation0], 6
    %852 = vst.msk [vmem:[%s851] sm:$0xc] %vm849, %v848
    %s853 = scalar_lea.vmem [#allocation0], 12
    %854 = vst.msk [vmem:[%s853] sm:$0x30] %vm849, %v848
    %s855 = scalar_lea.vmem [#allocation0], 18
    %856 = vst.msk [vmem:[%s855] sm:$0xc0] %vm849, %v848
    %s857 = scalar_lea.vmem %s0, 33
    %s858 = smov 3
    %v859 = vld [vmem:[%s857] ss:$144 sm:%s858]
    %s860 = scalar_lea.vmem %s0, 4294967049
    %s861 = smov 12
    %v862 = vld [vmem:[%s860] ss:$144 sm:%s861]
    %vm863 = vcmask 1043458
    %v864 = vsel %vm863, %v862, %v859
    %s865 = scalar_lea.vmem %s0, 4294966769
    %s866 = smov 48
    %v867 = vld [vmem:[%s865] ss:$144 sm:%s866]
    %vm868 = vcmask 1045508
    %v869 = vsel %vm868, %v867, %v864
    %s870 = scalar_lea.vmem %s0, 4294966489
    %s871 = smov 192
    %v872 = vld [vmem:[%s870] ss:$144 sm:%s871]
    %vm873 = vcmask 1047558
    %v874 = vsel %vm873, %v872, %v869
    %875 = vrot.lane.b32.xlu0 %v874, 16
    %v876 = vpop.permute.xlu0 %875
    %vm877 = vcmask 261248
    %s878 = scalar_lea.vmem [#allocation0], 32
    %879 = vst.msk [vmem:[%s878] sm:$0x3] %vm877, %v876
    %s880 = scalar_lea.vmem [#allocation0], 38
    %881 = vst.msk [vmem:[%s880] sm:$0xc] %vm877, %v876
    %s882 = scalar_lea.vmem [#allocation0], 44
    %883 = vst.msk [vmem:[%s882] sm:$0x30] %vm877, %v876
    %s884 = scalar_lea.vmem [#allocation0], 50
    %885 = vst.msk [vmem:[%s884] sm:$0xc0] %vm877, %v876
    %s886 = scalar_lea.vmem %s0, 65
    %s887 = smov 3
    %v888 = vld [vmem:[%s886] ss:$144 sm:%s887]
    %s889 = scalar_lea.vmem %s0, 4294967081
    %s890 = smov 12
    %v891 = vld [vmem:[%s889] ss:$144 sm:%s890]
    %vm892 = vcmask 1043458
    %v893 = vsel %vm892, %v891, %v888
    %s894 = scalar_lea.vmem %s0, 4294966801
    %s895 = smov 48
    %v896 = vld [vmem:[%s894] ss:$144 sm:%s895]
    %vm897 = vcmask 1045508
    %v898 = vsel %vm897, %v896, %v893
    %s899 = scalar_lea.vmem %s0, 4294966521
    %s900 = smov 192
    %v901 = vld [vmem:[%s899] ss:$144 sm:%s900]
    %vm902 = vcmask 1047558
    %v903 = vsel %vm902, %v901, %v898
    %904 = vrot.lane.b32.xlu0 %v903, 16
    %v905 = vpop.permute.xlu0 %904
    %vm906 = vcmask 261248
    %s907 = scalar_lea.vmem [#allocation0], 64
    %908 = vst.msk [vmem:[%s907] sm:$0x3] %vm906, %v905
    %s909 = scalar_lea.vmem [#allocation0], 70
    %910 = vst.msk [vmem:[%s909] sm:$0xc] %vm906, %v905
    %s911 = scalar_lea.vmem [#allocation0], 76
    %912 = vst.msk [vmem:[%s911] sm:$0x30] %vm906, %v905
    %s913 = scalar_lea.vmem [#allocation0], 82
    %914 = vst.msk [vmem:[%s913] sm:$0xc0] %vm906, %v905
    %s915 = scalar_lea.vmem %s0, 97
    %s916 = smov 3
    %v917 = vld [vmem:[%s915] ss:$144 sm:%s916]
    %s918 = scalar_lea.vmem %s0, 4294967113
    %s919 = smov 12
    %v920 = vld [vmem:[%s918] ss:$144 sm:%s919]
    %vm921 = vcmask 1043458
    %v922 = vsel %vm921, %v920, %v917
    %s923 = scalar_lea.vmem %s0, 4294966833
    %s924 = smov 48
    %v925 = vld [vmem:[%s923] ss:$144 sm:%s924]
    %vm926 = vcmask 1045508
    %v927 = vsel %vm926, %v925, %v922
    %s928 = scalar_lea.vmem %s0, 4294966553
    %s929 = smov 192
    %v930 = vld [vmem:[%s928] ss:$144 sm:%s929]
    %vm931 = vcmask 1047558
    %v932 = vsel %vm931, %v930, %v927
    %933 = vrot.lane.b32.xlu0 %v932, 16
    %v934 = vpop.permute.xlu0 %933
    %vm935 = vcmask 261248
    %s936 = scalar_lea.vmem [#allocation0], 96
    %937 = vst.msk [vmem:[%s936] sm:$0x3] %vm935, %v934
    %s938 = scalar_lea.vmem [#allocation0], 102
    %939 = vst.msk [vmem:[%s938] sm:$0xc] %vm935, %v934
    %s940 = scalar_lea.vmem [#allocation0], 108
    %941 = vst.msk [vmem:[%s940] sm:$0x30] %vm935, %v934
    %s942 = scalar_lea.vmem [#allocation0], 114
    %943 = vst.msk [vmem:[%s942] sm:$0xc0] %vm935, %v934
    %s944 = scalar_lea.vmem %s0, 129
    %s945 = smov 3
    %v946 = vld [vmem:[%s944] ss:$144 sm:%s945]
    %s947 = scalar_lea.vmem %s0, 4294967145
    %s948 = smov 12
    %v949 = vld [vmem:[%s947] ss:$144 sm:%s948]
    %vm950 = vcmask 1043458
    %v951 = vsel %vm950, %v949, %v946
    %952 = vrot.lane.b32.xlu0 %v951, 16
    %v953 = vpop.permute.xlu0 %952
    %vm954 = vcmask 261248
    %s955 = scalar_lea.vmem [#allocation0], 128
    %956 = vst.msk [vmem:[%s955] sm:$0x3] %vm954, %v953
    %s957 = scalar_lea.vmem [#allocation0], 134
    %958 = vst.msk [vmem:[%s957] sm:$0xc] %vm954, %v953
    %s960 = sshll.u32 1, 2
    %s961 = ssub.s32 %s960, 1
    %v963 = vld [vmem:[#allocation0] sm:%s961]
    %s964 = sshll.u32 1, 2
    %s965 = ssub.s32 %s964, 1
    %966 = vst [vmem:[%s1] sm:%s965] %v963
    %s967 = scalar_lea.vmem [#allocation0], 8
    %v968 = vld [vmem:[%s967] sm:%s961]
    %s969 = sshll.u32 1, 2
    %s970 = ssub.s32 %s969, 1
    %s971 = scalar_lea.vmem %s1, 2
    %972 = vst [vmem:[%s971] sm:%s970] %v968
    %s973 = scalar_lea.vmem [#allocation0], 16
    %v974 = vld [vmem:[%s973] sm:%s961]
    %s975 = sshll.u32 1, 2
    %s976 = ssub.s32 %s975, 1
    %s977 = smul.addr 2, 2
    %s978 = scalar_lea.vmem %s1, %s977
    %979 = vst [vmem:[%s978] sm:%s976] %v974
    %s980 = scalar_lea.vmem [#allocation0], 24
    %v981 = vld [vmem:[%s980] sm:%s961]
    %s982 = sshll.u32 1, 2
    %s983 = ssub.s32 %s982, 1
    %s984 = smul.addr 2, 3
    %s985 = scalar_lea.vmem %s1, %s984
    %986 = vst [vmem:[%s985] sm:%s983] %v981
    %s987 = scalar_lea.vmem [#allocation0], 32
    %v988 = vld [vmem:[%s987] sm:%s961]
    %s989 = sshll.u32 1, 2
    %s990 = ssub.s32 %s989, 1
    %s991 = smul.addr 2, 4
    %s992 = scalar_lea.vmem %s1, %s991
    %993 = vst [vmem:[%s992] sm:%s990] %v988
    %s994 = scalar_lea.vmem [#allocation0], 40
    %v995 = vld [vmem:[%s994] sm:%s961]
    %s996 = sshll.u32 1, 2
    %s997 = ssub.s32 %s996, 1
    %s998 = smul.addr 2, 5
    %s999 = scalar_lea.vmem %s1, %s998
    %1000 = vst [vmem:[%s999] sm:%s997] %v995
    %s1001 = scalar_lea.vmem [#allocation0], 48
    %v1002 = vld [vmem:[%s1001] sm:%s961]
    %s1003 = sshll.u32 1, 2
    %s1004 = ssub.s32 %s1003, 1
    %s1005 = smul.addr 2, 6
    %s1006 = scalar_lea.vmem %s1, %s1005
    %1007 = vst [vmem:[%s1006] sm:%s1004] %v1002
    %s1008 = scalar_lea.vmem [#allocation0], 56
    %v1009 = vld [vmem:[%s1008] sm:%s961]
    %s1010 = sshll.u32 1, 2
    %s1011 = ssub.s32 %s1010, 1
    %s1012 = smul.addr 2, 7
    %s1013 = scalar_lea.vmem %s1, %s1012
    %1014 = vst [vmem:[%s1013] sm:%s1011] %v1009
    %s1015 = scalar_lea.vmem [#allocation0], 64
    %v1016 = vld [vmem:[%s1015] sm:%s961]
    %s1017 = sshll.u32 1, 2
    %s1018 = ssub.s32 %s1017, 1
    %s1019 = smul.addr 2, 8
    %s1020 = scalar_lea.vmem %s1, %s1019
    %1021 = vst [vmem:[%s1020] sm:%s1018] %v1016
    %s1022 = scalar_lea.vmem [#allocation0], 72
    %v1023 = vld [vmem:[%s1022] sm:%s961]
    %s1024 = sshll.u32 1, 2
    %s1025 = ssub.s32 %s1024, 1
    %s1026 = smul.addr 2, 9
    %s1027 = scalar_lea.vmem %s1, %s1026
    %1028 = vst [vmem:[%s1027] sm:%s1025] %v1023
    %s1029 = scalar_lea.vmem [#allocation0], 80
    %v1030 = vld [vmem:[%s1029] sm:%s961]
    %s1031 = sshll.u32 1, 2
    %s1032 = ssub.s32 %s1031, 1
    %s1033 = smul.addr 2, 10
    %s1034 = scalar_lea.vmem %s1, %s1033
    %1035 = vst [vmem:[%s1034] sm:%s1032] %v1030
    %s1036 = scalar_lea.vmem [#allocation0], 88
    %v1037 = vld [vmem:[%s1036] sm:%s961]
    %s1038 = sshll.u32 1, 2
    %s1039 = ssub.s32 %s1038, 1
    %s1040 = smul.addr 2, 11
    %s1041 = scalar_lea.vmem %s1, %s1040
    %1042 = vst [vmem:[%s1041] sm:%s1039] %v1037
    %s1043 = scalar_lea.vmem [#allocation0], 96
    %v1044 = vld [vmem:[%s1043] sm:%s961]
    %s1045 = sshll.u32 1, 2
    %s1046 = ssub.s32 %s1045, 1
    %s1047 = smul.addr 2, 12
    %s1048 = scalar_lea.vmem %s1, %s1047
    %1049 = vst [vmem:[%s1048] sm:%s1046] %v1044
    %s1050 = scalar_lea.vmem [#allocation0], 104
    %v1051 = vld [vmem:[%s1050] sm:%s961]
    %s1052 = sshll.u32 1, 2
    %s1053 = ssub.s32 %s1052, 1
    %s1054 = smul.addr 2, 13
    %s1055 = scalar_lea.vmem %s1, %s1054
    %1056 = vst [vmem:[%s1055] sm:%s1053] %v1051
    %s1057 = scalar_lea.vmem [#allocation0], 112
    %v1058 = vld [vmem:[%s1057] sm:%s961]
    %s1059 = sshll.u32 1, 2
    %s1060 = ssub.s32 %s1059, 1
    %s1061 = smul.addr 2, 14
    %s1062 = scalar_lea.vmem %s1, %s1061
    %1063 = vst [vmem:[%s1062] sm:%s1060] %v1058
    %s1064 = scalar_lea.vmem [#allocation0], 120
    %v1065 = vld [vmem:[%s1064] sm:%s961]
    %s1066 = sshll.u32 1, 2
    %s1067 = ssub.s32 %s1066, 1
    %s1068 = smul.addr 2, 15
    %s1069 = scalar_lea.vmem %s1, %s1068
    %1070 = vst [vmem:[%s1069] sm:%s1067] %v1065
    %s1071 = scalar_lea.vmem [#allocation0], 128
    %v1072 = vld [vmem:[%s1071] sm:%s961]
    %s1073 = sshll.u32 1, 2
    %s1074 = ssub.s32 %s1073, 1
    %s1075 = smul.addr 2, 16
    %s1076 = scalar_lea.vmem %s1, %s1075
    %1077 = vst [vmem:[%s1076] sm:%s1074] %v1072
    %s1078 = scalar_lea.vmem [#allocation0], 136
    %v1079 = vld [vmem:[%s1078] sm:%s961]
    %s1080 = sshll.u32 1, 2
    %s1081 = ssub.s32 %s1080, 1
    %s1082 = smul.addr 2, 17
    %s1083 = scalar_lea.vmem %s1, %s1082
    %1084 = vst [vmem:[%s1083] sm:%s1081] %v1079

// kernel: combination_module_dcn.7
$region0: #{combination_module_dcn.7}
  #allocation0 [shape = 'u32[]', space=smem, size = 0x4, offset = 0x4, fixed_abs, tag = 'smem constant byte address 0x4 - core index']
  #allocation1 [shape = 'u32[144,128]{1,0:T(1,128)}', space=vmem, size = 0x12000, scoped, tag = 'internal scratch']
  %s0 = inlined_call_operand.vmem [shape: f32[2,8,256], index: 0, kind: input, shape index: {}]
  %s1 = inlined_call_operand.vmem [shape: bf16[9,18,8], index: 1, kind: input, shape index: {}]
  %s2 = inlined_call_operand.vmem [shape: f32[9,1,256], index: 2, kind: input, shape index: {}]
  %s3 = inlined_call_operand.vmem [shape: f32[18,1], index: 3, kind: input, shape index: {}]
  %s4 = inlined_call_operand.vmem [shape: f32[2,18,256], index: 4, kind: output, shape index: {}]
  %s5 = sld [smem:[#allocation0]]
  $region49: #{combination_module_dcn.7} parent=0
    _
  %s7 = ssub.s32 1, %s5
  %s8 = scalar_select 0, %s7, %s5
  loop: start=0, step=1, limit=4
  $region2: #{combination_module_dcn.7} parent=0 // loop_pre_header
    _
  $region3: #{combination_module_dcn.7} parent=0 // loop_header
    %s10 = sphi 0, %s14
    %p11 = scmp.ge.s32.totalorder %s10, 4
    %s20 = sphi 0, %s22
    %s23 = sphi 0, %s20
    %s24 = sphi 0, %s23
    %s40 = sphi 0, %s24
    %s44 = sphi 0, %s44
    %s46 = sphi 0, %s44
    %s47 = sphi 0, %s46
    %s61 = sphi 0, %s47
    %s65 = sphi 0, %s65
    %s67 = sphi 0, %s65
    %s68 = sphi 0, %s67
    %s82 = sphi 0, %s68
    %s86 = sphi 0, %s86
    %s88 = sphi 0, %s86
    %s89 = sphi 0, %s88
    %s103 = sphi 0, %s89
    %s109 = sphi 0, %s111
    %s112 = sphi 0, %s109
    %s113 = sphi 0, %s112
    %s129 = sphi 0, %s113
  $region4: #{combination_module_dcn.7} parent=0 // loop_header_branch
    %13 = sbr.rel (%p11) target = $region8
  $region5: #{combination_module_dcn.7} parent=0 // loop_body
    %s15 = ssub.s32 %s10, 1
    %s16 = ssub.s32 %s10, 2
    %s17 = sadd.s32 %s10, 1
    %s18 = ssub.s32 %s10, %s17
    %p19 = scmp.eq.s32.totalorder %s18, 0
    %s21 = sadd.s32 %s20, 1
    %s22 = scalar_select %p19, %s20, %s21
    %p25 = pneg %p19
    %p26 = scmp.eq.s32.totalorder %s10, 1
    %p27 = por %p25, %p26
    %p28 = scmp.ne.s32.totalorder %s20, %s23
    %p29 = scmp.eq.s32.totalorder %s10, 0
    %p30 = por %p28, %p29
    %p31 = scmp.ne.s32.totalorder %s20, %s23
    %p32 = scmp.eq.s32.totalorder %s15, 1
    %p33 = por %p31, %p32
    %p34 = scmp.ne.s32.totalorder %s23, %s24
    %p35 = scmp.eq.s32.totalorder %s15, 0
    %p36 = por %p34, %p35
    %p37 = scmp.ne.s32.totalorder %s23, %s24
    %p38 = scmp.eq.s32.totalorder %s16, 1
    %p39 = por %p37, %p38
    %p41 = scmp.ne.s32.totalorder %s24, %s40
    %p42 = scmp.eq.s32.totalorder %s16, 0
    %p43 = por %p41, %p42
    %s45 = sadd.s32 %s44, 1
    %p48 = scmp.eq.s32.totalorder %s10, 1
    %p49 = scmp.ne.s32.totalorder %s44, %s46
    %p50 = scmp.eq.s32.totalorder %s10, 0
    %p51 = por %p49, %p50
    %p52 = scmp.ne.s32.totalorder %s44, %s46
    %p53 = scmp.eq.s32.totalorder %s15, 1
    %p54 = por %p52, %p53
    %p55 = scmp.ne.s32.totalorder %s46, %s47
    %p56 = scmp.eq.s32.totalorder %s15, 0
    %p57 = por %p55, %p56
    %p58 = scmp.ne.s32.totalorder %s46, %s47
    %p59 = scmp.eq.s32.totalorder %s16, 1
    %p60 = por %p58, %p59
    %p62 = scmp.ne.s32.totalorder %s47, %s61
    %p63 = scmp.eq.s32.totalorder %s16, 0
    %p64 = por %p62, %p63
    %s66 = sadd.s32 %s65, 1
    %p69 = scmp.eq.s32.totalorder %s10, 1
    %p70 = scmp.ne.s32.totalorder %s65, %s67
    %p71 = scmp.eq.s32.totalorder %s10, 0
    %p72 = por %p70, %p71
    %p73 = scmp.ne.s32.totalorder %s65, %s67
    %p74 = scmp.eq.s32.totalorder %s15, 1
    %p75 = por %p73, %p74
    %p76 = scmp.ne.s32.totalorder %s67, %s68
    %p77 = scmp.eq.s32.totalorder %s15, 0
    %p78 = por %p76, %p77
    %p79 = scmp.ne.s32.totalorder %s67, %s68
    %p80 = scmp.eq.s32.totalorder %s16, 1
    %p81 = por %p79, %p80
    %p83 = scmp.ne.s32.totalorder %s68, %s82
    %p84 = scmp.eq.s32.totalorder %s16, 0
    %p85 = por %p83, %p84
    %s87 = sadd.s32 %s86, 1
    %p90 = scmp.eq.s32.totalorder %s10, 1
    %p91 = scmp.ne.s32.totalorder %s86, %s88
    %p92 = scmp.eq.s32.totalorder %s10, 0
    %p93 = por %p91, %p92
    %p94 = scmp.ne.s32.totalorder %s86, %s88
    %p95 = scmp.eq.s32.totalorder %s15, 1
    %p96 = por %p94, %p95
    %p97 = scmp.ne.s32.totalorder %s88, %s89
    %p98 = scmp.eq.s32.totalorder %s15, 0
    %p99 = por %p97, %p98
    %p100 = scmp.ne.s32.totalorder %s88, %s89
    %p101 = scmp.eq.s32.totalorder %s16, 1
    %p102 = por %p100, %p101
    %p104 = scmp.ne.s32.totalorder %s89, %s103
    %p105 = scmp.eq.s32.totalorder %s16, 0
    %p106 = por %p104, %p105
    %s107 = ssub.s32 %s10, %s17
    %p108 = scmp.eq.s32.totalorder %s107, 0
    %s110 = sadd.s32 %s109, 1
    %s111 = scalar_select %p108, %s109, %s110
    %p114 = pneg %p108
    %p115 = scmp.eq.s32.totalorder %s10, 1
    %p116 = por %p114, %p115
    %p117 = scmp.ne.s32.totalorder %s109, %s112
    %p118 = scmp.eq.s32.totalorder %s10, 0
    %p119 = por %p117, %p118
    %p120 = scmp.ne.s32.totalorder %s109, %s112
    %p121 = scmp.eq.s32.totalorder %s15, 1
    %p122 = por %p120, %p121
    %p123 = scmp.ne.s32.totalorder %s112, %s113
    %p124 = scmp.eq.s32.totalorder %s15, 0
    %p125 = por %p123, %p124
    %p126 = scmp.ne.s32.totalorder %s112, %s113
    %p127 = scmp.eq.s32.totalorder %s16, 1
    %p128 = por %p126, %p127
    %p130 = scmp.ne.s32.totalorder %s113, %s129
    %p131 = scmp.eq.s32.totalorder %s16, 0
    %p132 = por %p130, %p131
    %p133 = scmp.le.s32.totalorder 1, %s10
    %p134 = scmp.lt.s32.totalorder %s10, 3
    %p135 = pnand %p133, %p134
    %p136 = pneg %p135
    // Predicated region
    $region9: #{combination_module_dcn.7} parent=5 // pred_check
      _
    $region10: #{combination_module_dcn.7} parent=5 // pred_check_branch
      %138 = sbr.rel (%p135) target = $region12
    $region11: #{combination_module_dcn.7} parent=5 // pred_region
      %s139 = ssub.s32 %s10, 1
      // Predicated region
      $region13: #{combination_module_dcn.7} parent=11 // pred_check
        %p140 = pneg %p57
      $region14: #{combination_module_dcn.7} parent=11 // pred_check_branch
        %142 = sbr.rel (%p140) target = $region16
      $region15: #{combination_module_dcn.7} parent=11 // pred_region
        _
      $region16: #{combination_module_dcn.7} parent=11 // pred_fallthru
        _
      // Predicated region
      $region17: #{combination_module_dcn.7} parent=11 // pred_check
        %p143 = pneg %p78
      $region18: #{combination_module_dcn.7} parent=11 // pred_check_branch
        %145 = sbr.rel (%p143) target = $region20
      $region19: #{combination_module_dcn.7} parent=11 // pred_region
        _
      $region20: #{combination_module_dcn.7} parent=11 // pred_fallthru
        _
      // Predicated region
      $region21: #{combination_module_dcn.7} parent=11 // pred_check
        %p146 = pneg %p99
      $region22: #{combination_module_dcn.7} parent=11 // pred_check_branch
        %148 = sbr.rel (%p146) target = $region24
      $region23: #{combination_module_dcn.7} parent=11 // pred_region
        _
      $region24: #{combination_module_dcn.7} parent=11 // pred_fallthru
        _
    $region12: #{combination_module_dcn.7} parent=5 // pred_fallthru
      _
    %p149 = scmp.lt.s32.totalorder %s10, 2
    // Predicated region
    $region25: #{combination_module_dcn.7} parent=5 // pred_check
      %p150 = pneg %p149
    $region26: #{combination_module_dcn.7} parent=5 // pred_check_branch
      %152 = sbr.rel (%p150) target = $region28
    $region27: #{combination_module_dcn.7} parent=5 // pred_region
      // Predicated region
      $region29: #{combination_module_dcn.7} parent=27 // pred_check
        %p153 = pneg %p30
      $region30: #{combination_module_dcn.7} parent=27 // pred_check_branch
        %155 = sbr.rel (%p153) target = $region32
      $region31: #{combination_module_dcn.7} parent=27 // pred_region
        %p156 = scmp.lt.s32.totalorder %s10, 1
        %s157 = scalar_select %p156, %s10, 1
        %s158 = smul.addr %s157, 2
        %s159 = smul.addr %s158, 8
        %s160 = scalar_lea.vmem %s0, %s159
      $region32: #{combination_module_dcn.7} parent=27 // pred_fallthru
        _
    $region28: #{combination_module_dcn.7} parent=5 // pred_fallthru
      _
    %p161 = scmp.le.s32.totalorder 1, %s10
    %p162 = scmp.lt.s32.totalorder %s10, 3
    %p163 = pnand %p161, %p162
    %p164 = pneg %p163
    // Predicated region
    $region33: #{combination_module_dcn.7} parent=5 // pred_check
      _
    $region34: #{combination_module_dcn.7} parent=5 // pred_check_branch
      %166 = sbr.rel (%p163) target = $region36
    $region35: #{combination_module_dcn.7} parent=5 // pred_region
      %s167 = ssub.s32 %s10, 1
      %p168 = scmp.lt.s32.totalorder %s15, 1
      %s169 = scalar_select %p168, %s15, 1
      %s170 = smul.addr %s169, 2
      %s171 = smul.addr %s170, 8
      %s172 = scalar_lea.vmem %s0, %s171
      %p173 = pneg %p36
      %p174 = pneg %p33
      %p175 = pneg %p57
      %p176 = pneg %p54
      %p177 = pneg %p78
      %p178 = pneg %p75
      %p179 = pneg %p99
      %p180 = pneg %p96
      %p181 = pneg %p125
      %p182 = pneg %p122
      %p183 = scmp.lt.s32.totalorder %s15, 1
      %s184 = scalar_select %p183, %s15, 1
      %s185 = smul.addr %s184, 6
      %s186 = smul.addr %s185, 8
      %s187 = scalar_lea.vmem %s4, %s186
      %p188 = scmp.lt.s32.totalorder %s15, 1
      %s189 = scalar_select %p188, %s15, 1
      %s190 = smul.addr %s189, 2
      %s191 = smul.addr %s190, 8
      %s192 = scalar_lea.vmem %s0, %s191
      %p193 = scmp.lt.s32.totalorder %s15, 1
      %s194 = scalar_select %p193, %s15, 1
      %s195 = smul.addr %s194, 6
      %s196 = smul.addr %s195, 8
      %s197 = scalar_lea.vmem %s4, %s196
      %v199 = vld [vmem:[%s192] sm:$0xff]
      %v200 = vld [vmem:[%s192 + $0x8] sm:$0xff]
      %201 = vrot.lane.b32.xlu0 %v199, 17
      %v202 = vpop.permute.xlu0 %201
      %203 = vrot.lane.b32.xlu0 %v200, 17
      %v204 = vpop.permute.xlu0 %203
      %v205 = vlaneseq
      %v206 = vand.u32 %v205, 127
      %vm207 = vcmp.lt.s32.totalorder %v206, 17
      %v208 = vsel %vm207, %v202, %v204
      %v209 = vsel %vm207, %v204, %v202
      %v210 = vld [vmem:[%s2] sm:$0x3]
      %v212 = vlaneseq
      %v213 = vshrl.u32 %v212, 7
      %v214 = vsub.s32 0, %v213
      %v215 = vrot.slane %v210, %v214
      %v216 = vlaneseq
      %v217 = vshrl.u32 %v216, 7
      %v218 = vsub.s32 1, %v217
      %v219 = vrot.slane %v210, %v218
      %v222 = vmul.f32 %v209, %v215
      %v223 = vmul.f32 %v208, %v219
      %v224 = vpack.c.bf16 %v222, %v222
      %v225 = vpack.c.bf16 %v223, %v223
      %v226 = vld [vmem:[%s1] sm:$0xf]
      %v227 = vld [vmem:[%s1 + $0x4] sm:$0xf]
      %v228 = vld [vmem:[%s1 + $0x8] sm:$0x1]
      %229 = vrot.lane.b32.xlu0 %v199, 16
      %v230 = vpop.permute.xlu0 %229
      %231 = vrot.lane.b32.xlu0 %v200, 16
      %v232 = vpop.permute.xlu0 %231
      %vm233 = vcmp.lt.s32.totalorder %v206, 16
      %v234 = vsel %vm233, %v230, %v232
      %v235 = vsel %vm233, %v232, %v230
      %s236 = scalar_lea.vmem %s2, 2
      %v237 = vld [vmem:[%s236] sm:$0x3]
      %v239 = vlaneseq
      %v240 = vshrl.u32 %v239, 7
      %v241 = vsub.s32 0, %v240
      %v242 = vrot.slane %v237, %v241
      %v243 = vlaneseq
      %v244 = vshrl.u32 %v243, 7
      %v245 = vsub.s32 1, %v244
      %v246 = vrot.slane %v237, %v245
      %v249 = vmul.f32 %v235, %v242
      %v250 = vmul.f32 %v234, %v246
      %v251 = vpack.c.bf16 %v249, %v249
      %v252 = vpack.c.bf16 %v250, %v250
      %s253 = scalar_lea.vmem %s1, 12
      %v254 = vld [vmem:[%s253] sm:$0xf]
      %v255 = vld [vmem:[%s253 + $0x4] sm:$0xf]
      %v256 = vld [vmem:[%s253 + $0x8] sm:$0x1]
      %v260 = vunpack.c.l.b16 %v254
      %v261 = vunpack.c.l.b16 %v255
      %v262 = vunpack.c.l.b16 %v256
      %v263 = vpack.c.b16 %v261, %v260
      %v264 = vpack.c.b16 %v262, %v262
      %vm265 = vcmask 64512
      %v267 = vsel %vm265, %v263, 0
      %v270 = vsel %vm265, %v264, 0
      %vm272 = vcmask 1043456
      %v274 = vsel %vm272, %v251, 0
      %v277 = vsel %vm272, %v252, 0
      %279 = vmatprep.subr.bf16.mxu0 0
      %280 = vmatpush1.bf16.msra.mxu0 0
      %281 = vmatprep.subr.bf16.mxu0 0
      %282 = vmatpush1.bf16.msra.mxu0 0
      %283 = vmatprep.subr.bf16.mxu0 0
      %284 = vmatpush1.bf16.msra.mxu0 0
      %285 = vmatprep.subr.bf16.mxu0 0
      %286 = vmatpush1.bf16.msra.mxu0 0
      %287 = vmatprep.subr.bf16.mxu0 0
      %288 = vmatpush1.bf16.msra.mxu0 0
      %289 = vmatprep.subr.bf16.mxu0 0
      %290 = vmatpush1.bf16.msra.mxu0 0
      %291 = vmatprep.subr.bf16.mxu0 0
      %292 = vmatpush1.bf16.msra.mxu0 0
      %293 = vmatprep.subr.bf16.mxu0 %v277
      %294 = vmatpush1.bf16.msra.mxu0 %v274
      %295 = vmatprep.subr.bf16.mxu0 0
      %296 = vmatpush2.bf16.msra.mxu0 0
      %297 = vmatprep.subr.bf16.mxu0 0
      %298 = vmatpush2.bf16.msra.mxu0 0
      %299 = vmatprep.subr.bf16.mxu0 0
      %300 = vmatpush2.bf16.msra.mxu0 0
      %301 = vmatprep.subr.bf16.mxu0 0
      %302 = vmatpush2.bf16.msra.mxu0 0
      %303 = vmatprep.subr.bf16.mxu0 0
      %304 = vmatpush2.bf16.msra.mxu0 0
      %305 = vmatprep.subr.bf16.mxu0 0
      %306 = vmatpush2.bf16.msra.mxu0 0
      %307 = vmatprep.subr.bf16.mxu0 0
      %308 = vmatpush2.bf16.msra.mxu0 0
      %309 = vmatprep.subr.bf16.mxu0 0
      %310 = vmatpush2.bf16.msra.mxu0 0
      %311 = vmatprep.mubr.bf16.mxu0 0
      %312 = vmatmul.mubr.bf16.gmra.mxu0 %v267
      %v313 = vpop.f32.mrf.mxu0
      %v314 = vadd.f32 0.0, %v313
      %v315 = vpop.f32.mrf.mxu0
      %v316 = vadd.f32 0.0, %v315
      %v317 = vpop.f32.mrf.mxu0
      %v318 = vadd.f32 0.0, %v317
      %v319 = vpop.f32.mrf.mxu0
      %v320 = vadd.f32 0.0, %v319
      %321 = vmatprep.mubr.bf16.mxu0 0
      %322 = vmatmul.mubr.bf16.gmra.mxu0 %v270
      %v323 = vpop.f32.mrf.mxu0
      %v324 = vadd.f32 0.0, %v323
      %v325 = vpop.f32.mrf.mxu0
      %v326 = vadd.f32 0.0, %v325
      %v327 = vpop.f32.mrf.mxu0
      %v328 = vpop.f32.mrf.mxu0
      %329 = vdwg.mxu0
      %v333 = vunpack.c.l.b16 %v226
      %v334 = vunpack.c.l.b16 %v227
      %v335 = vunpack.c.l.b16 %v228
      %v336 = vpack.c.b16 %v334, %v333
      %v337 = vpack.c.b16 %v335, %v335
      %v339 = vsel %vm265, %v336, 0
      %v342 = vsel %vm265, %v337, 0
      %v345 = vsel %vm272, %v224, 0
      %v348 = vsel %vm272, %v225, 0
      %350 = vmatprep.subr.bf16.mxu0 0
      %351 = vmatpush1.bf16.msra.mxu0 0
      %352 = vmatprep.subr.bf16.mxu0 0
      %353 = vmatpush1.bf16.msra.mxu0 0
      %354 = vmatprep.subr.bf16.mxu0 0
      %355 = vmatpush1.bf16.msra.mxu0 0
      %356 = vmatprep.subr.bf16.mxu0 0
      %357 = vmatpush1.bf16.msra.mxu0 0
      %358 = vmatprep.subr.bf16.mxu0 0
      %359 = vmatpush1.bf16.msra.mxu0 0
      %360 = vmatprep.subr.bf16.mxu0 0
      %361 = vmatpush1.bf16.msra.mxu0 0
      %362 = vmatprep.subr.bf16.mxu0 0
      %363 = vmatpush1.bf16.msra.mxu0 0
      %364 = vmatprep.subr.bf16.mxu0 %v348
      %365 = vmatpush1.bf16.msra.mxu0 %v345
      %366 = vmatprep.subr.bf16.mxu0 0
      %367 = vmatpush2.bf16.msra.mxu0 0
      %368 = vmatprep.subr.bf16.mxu0 0
      %369 = vmatpush2.bf16.msra.mxu0 0
      %370 = vmatprep.subr.bf16.mxu0 0
      %371 = vmatpush2.bf16.msra.mxu0 0
      %372 = vmatprep.subr.bf16.mxu0 0
      %373 = vmatpush2.bf16.msra.mxu0 0
      %374 = vmatprep.subr.bf16.mxu0 0
      %375 = vmatpush2.bf16.msra.mxu0 0
      %376 = vmatprep.subr.bf16.mxu0 0
      %377 = vmatpush2.bf16.msra.mxu0 0
      %378 = vmatprep.subr.bf16.mxu0 0
      %379 = vmatpush2.bf16.msra.mxu0 0
      %380 = vmatprep.subr.bf16.mxu0 0
      %381 = vmatpush2.bf16.msra.mxu0 0
      %382 = vmatprep.mubr.bf16.mxu0 0
      %383 = vmatmul.mubr.bf16.gmra.mxu0 %v339
      %v384 = vpop.f32.mrf.mxu0
      %v385 = vadd.f32 %v314, %v384
      %v386 = vpop.f32.mrf.mxu0
      %v387 = vadd.f32 %v316, %v386
      %v388 = vpop.f32.mrf.mxu0
      %v389 = vadd.f32 %v318, %v388
      %v390 = vpop.f32.mrf.mxu0
      %v391 = vadd.f32 %v320, %v390
      %392 = vmatprep.mubr.bf16.mxu0 0
      %393 = vmatmul.mubr.bf16.gmra.mxu0 %v342
      %v394 = vpop.f32.mrf.mxu0
      %v395 = vadd.f32 %v324, %v394
      %v396 = vpop.f32.mrf.mxu0
      %v397 = vadd.f32 %v326, %v396
      %v398 = vpop.f32.mrf.mxu0
      %v399 = vpop.f32.mrf.mxu0
      %400 = vdwg.mxu0
      %401 = vrot.lane.b32.xlu0 %v199, 15
      %v402 = vpop.permute.xlu0 %401
      %403 = vrot.lane.b32.xlu0 %v200, 15
      %v404 = vpop.permute.xlu0 %403
      %vm405 = vcmp.lt.s32.totalorder %v206, 15
      %v406 = vsel %vm405, %v402, %v404
      %v407 = vsel %vm405, %v404, %v402
      %s408 = scalar_lea.vmem %s2, 4
      %v409 = vld [vmem:[%s408] sm:$0x3]
      %v411 = vlaneseq
      %v412 = vshrl.u32 %v411, 7
      %v413 = vsub.s32 0, %v412
      %v414 = vrot.slane %v409, %v413
      %v415 = vlaneseq
      %v416 = vshrl.u32 %v415, 7
      %v417 = vsub.s32 1, %v416
      %v418 = vrot.slane %v409, %v417
      %v421 = vmul.f32 %v407, %v414
      %v422 = vmul.f32 %v406, %v418
      %v423 = vpack.c.bf16 %v421, %v421
      %v424 = vpack.c.bf16 %v422, %v422
      %s425 = scalar_lea.vmem %s1, 24
      %v426 = vld [vmem:[%s425] sm:$0xf]
      %v427 = vld [vmem:[%s425 + $0x4] sm:$0xf]
      %v428 = vld [vmem:[%s425 + $0x8] sm:$0x1]
      %v432 = vunpack.c.l.b16 %v426
      %v433 = vunpack.c.l.b16 %v427
      %v434 = vunpack.c.l.b16 %v428
      %v435 = vpack.c.b16 %v433, %v432
      %v436 = vpack.c.b16 %v434, %v434
      %v438 = vsel %vm265, %v435, 0
      %v441 = vsel %vm265, %v436, 0
      %v444 = vsel %vm272, %v423, 0
      %v447 = vsel %vm272, %v424, 0
      %449 = vmatprep.subr.bf16.mxu0 0
      %450 = vmatpush1.bf16.msra.mxu0 0
      %451 = vmatprep.subr.bf16.mxu0 0
      %452 = vmatpush1.bf16.msra.mxu0 0
      %453 = vmatprep.subr.bf16.mxu0 0
      %454 = vmatpush1.bf16.msra.mxu0 0
      %455 = vmatprep.subr.bf16.mxu0 0
      %456 = vmatpush1.bf16.msra.mxu0 0
      %457 = vmatprep.subr.bf16.mxu0 0
      %458 = vmatpush1.bf16.msra.mxu0 0
      %459 = vmatprep.subr.bf16.mxu0 0
      %460 = vmatpush1.bf16.msra.mxu0 0
      %461 = vmatprep.subr.bf16.mxu0 0
      %462 = vmatpush1.bf16.msra.mxu0 0
      %463 = vmatprep.subr.bf16.mxu0 %v447
      %464 = vmatpush1.bf16.msra.mxu0 %v444
      %465 = vmatprep.subr.bf16.mxu0 0
      %466 = vmatpush2.bf16.msra.mxu0 0
      %467 = vmatprep.subr.bf16.mxu0 0
      %468 = vmatpush2.bf16.msra.mxu0 0
      %469 = vmatprep.subr.bf16.mxu0 0
      %470 = vmatpush2.bf16.msra.mxu0 0
      %471 = vmatprep.subr.bf16.mxu0 0
      %472 = vmatpush2.bf16.msra.mxu0 0
      %473 = vmatprep.subr.bf16.mxu0 0
      %474 = vmatpush2.bf16.msra.mxu0 0
      %475 = vmatprep.subr.bf16.mxu0 0
      %476 = vmatpush2.bf16.msra.mxu0 0
      %477 = vmatprep.subr.bf16.mxu0 0
      %478 = vmatpush2.bf16.msra.mxu0 0
      %479 = vmatprep.subr.bf16.mxu0 0
      %480 = vmatpush2.bf16.msra.mxu0 0
      %481 = vmatprep.mubr.bf16.mxu0 0
      %482 = vmatmul.mubr.bf16.gmra.mxu0 %v438
      %v483 = vpop.f32.mrf.mxu0
      %v484 = vadd.f32 0.0, %v483
      %v485 = vpop.f32.mrf.mxu0
      %v486 = vadd.f32 0.0, %v485
      %v487 = vpop.f32.mrf.mxu0
      %v488 = vadd.f32 0.0, %v487
      %v489 = vpop.f32.mrf.mxu0
      %v490 = vadd.f32 0.0, %v489
      %491 = vmatprep.mubr.bf16.mxu0 0
      %492 = vmatmul.mubr.bf16.gmra.mxu0 %v441
      %v493 = vpop.f32.mrf.mxu0
      %v494 = vadd.f32 0.0, %v493
      %v495 = vpop.f32.mrf.mxu0
      %v496 = vadd.f32 0.0, %v495
      %v497 = vpop.f32.mrf.mxu0
      %v498 = vpop.f32.mrf.mxu0
      %499 = vdwg.mxu0
      %v500 = vadd.f32 %v385, %v484
      %v501 = vadd.f32 %v387, %v486
      %v502 = vadd.f32 %v389, %v488
      %v503 = vadd.f32 %v391, %v490
      %v504 = vadd.f32 %v395, %v494
      %v505 = vadd.f32 %v397, %v496
      %506 = vrot.lane.b32.xlu0 %v199, 1
      %v507 = vpop.permute.xlu0 %506
      %508 = vrot.lane.b32.xlu0 %v200, 1
      %v509 = vpop.permute.xlu0 %508
      %vm510 = vcmp.lt.s32.totalorder %v206, 1
      %v511 = vsel %vm510, %v507, %v509
      %v512 = vsel %vm510, %v509, %v507
      %s513 = scalar_lea.vmem %s2, 6
      %v514 = vld [vmem:[%s513] sm:$0x3]
      %v516 = vlaneseq
      %v517 = vshrl.u32 %v516, 7
      %v518 = vsub.s32 0, %v517
      %v519 = vrot.slane %v514, %v518
      %v520 = vlaneseq
      %v521 = vshrl.u32 %v520, 7
      %v522 = vsub.s32 1, %v521
      %v523 = vrot.slane %v514, %v522
      %v526 = vmul.f32 %v512, %v519
      %v527 = vmul.f32 %v511, %v523
      %v528 = vpack.c.bf16 %v526, %v526
      %v529 = vpack.c.bf16 %v527, %v527
      %s530 = scalar_lea.vmem %s1, 36
      %v531 = vld [vmem:[%s530] sm:$0xf]
      %v532 = vld [vmem:[%s530 + $0x4] sm:$0xf]
      %v533 = vld [vmem:[%s530 + $0x8] sm:$0x1]
      %v537 = vunpack.c.l.b16 %v531
      %v538 = vunpack.c.l.b16 %v532
      %v539 = vunpack.c.l.b16 %v533
      %v540 = vpack.c.b16 %v538, %v537
      %v541 = vpack.c.b16 %v539, %v539
      %v543 = vsel %vm265, %v540, 0
      %v546 = vsel %vm265, %v541, 0
      %v549 = vsel %vm272, %v528, 0
      %v552 = vsel %vm272, %v529, 0
      %554 = vmatprep.subr.bf16.mxu0 0
      %555 = vmatpush1.bf16.msra.mxu0 0
      %556 = vmatprep.subr.bf16.mxu0 0
      %557 = vmatpush1.bf16.msra.mxu0 0
      %558 = vmatprep.subr.bf16.mxu0 0
      %559 = vmatpush1.bf16.msra.mxu0 0
      %560 = vmatprep.subr.bf16.mxu0 0
      %561 = vmatpush1.bf16.msra.mxu0 0
      %562 = vmatprep.subr.bf16.mxu0 0
      %563 = vmatpush1.bf16.msra.mxu0 0
      %564 = vmatprep.subr.bf16.mxu0 0
      %565 = vmatpush1.bf16.msra.mxu0 0
      %566 = vmatprep.subr.bf16.mxu0 0
      %567 = vmatpush1.bf16.msra.mxu0 0
      %568 = vmatprep.subr.bf16.mxu0 %v552
      %569 = vmatpush1.bf16.msra.mxu0 %v549
      %570 = vmatprep.subr.bf16.mxu0 0
      %571 = vmatpush2.bf16.msra.mxu0 0
      %572 = vmatprep.subr.bf16.mxu0 0
      %573 = vmatpush2.bf16.msra.mxu0 0
      %574 = vmatprep.subr.bf16.mxu0 0
      %575 = vmatpush2.bf16.msra.mxu0 0
      %576 = vmatprep.subr.bf16.mxu0 0
      %577 = vmatpush2.bf16.msra.mxu0 0
      %578 = vmatprep.subr.bf16.mxu0 0
      %579 = vmatpush2.bf16.msra.mxu0 0
      %580 = vmatprep.subr.bf16.mxu0 0
      %581 = vmatpush2.bf16.msra.mxu0 0
      %582 = vmatprep.subr.bf16.mxu0 0
      %583 = vmatpush2.bf16.msra.mxu0 0
      %584 = vmatprep.subr.bf16.mxu0 0
      %585 = vmatpush2.bf16.msra.mxu0 0
      %586 = vmatprep.mubr.bf16.mxu0 0
      %587 = vmatmul.mubr.bf16.gmra.mxu0 %v543
      %v588 = vpop.f32.mrf.mxu0
      %v589 = vadd.f32 0.0, %v588
      %v590 = vpop.f32.mrf.mxu0
      %v591 = vadd.f32 0.0, %v590
      %v592 = vpop.f32.mrf.mxu0
      %v593 = vadd.f32 0.0, %v592
      %v594 = vpop.f32.mrf.mxu0
      %v595 = vadd.f32 0.0, %v594
      %596 = vmatprep.mubr.bf16.mxu0 0
      %597 = vmatmul.mubr.bf16.gmra.mxu0 %v546
      %v598 = vpop.f32.mrf.mxu0
      %v599 = vadd.f32 0.0, %v598
      %v600 = vpop.f32.mrf.mxu0
      %v601 = vadd.f32 0.0, %v600
      %v602 = vpop.f32.mrf.mxu0
      %v603 = vpop.f32.mrf.mxu0
      %604 = vdwg.mxu0
      %v605 = vadd.f32 %v500, %v589
      %v606 = vadd.f32 %v501, %v591
      %v607 = vadd.f32 %v502, %v593
      %v608 = vadd.f32 %v503, %v595
      %v609 = vadd.f32 %v504, %v599
      %v610 = vadd.f32 %v505, %v601
      %s611 = scalar_lea.vmem %s2, 8
      %v612 = vld [vmem:[%s611] sm:$0x3]
      %v614 = vlaneseq
      %v615 = vshrl.u32 %v614, 7
      %v616 = vsub.s32 0, %v615
      %v617 = vrot.slane %v612, %v616
      %v618 = vlaneseq
      %v619 = vshrl.u32 %v618, 7
      %v620 = vsub.s32 1, %v619
      %v621 = vrot.slane %v612, %v620
      %v624 = vmul.f32 %v199, %v617
      %v625 = vmul.f32 %v200, %v621
      %v626 = vpack.c.bf16 %v624, %v624
      %v627 = vpack.c.bf16 %v625, %v625
      %s628 = scalar_lea.vmem %s1, 48
      %v629 = vld [vmem:[%s628] sm:$0xf]
      %v630 = vld [vmem:[%s628 + $0x4] sm:$0xf]
      %v631 = vld [vmem:[%s628 + $0x8] sm:$0x1]
      %v635 = vunpack.c.l.b16 %v629
      %v636 = vunpack.c.l.b16 %v630
      %v637 = vunpack.c.l.b16 %v631
      %v638 = vpack.c.b16 %v636, %v635
      %v639 = vpack.c.b16 %v637, %v637
      %v641 = vsel %vm265, %v638, 0
      %v644 = vsel %vm265, %v639, 0
      %v647 = vsel %vm272, %v626, 0
      %v650 = vsel %vm272, %v627, 0
      %652 = vmatprep.subr.bf16.mxu0 0
      %653 = vmatpush1.bf16.msra.mxu0 0
      %654 = vmatprep.subr.bf16.mxu0 0
      %655 = vmatpush1.bf16.msra.mxu0 0
      %656 = vmatprep.subr.bf16.mxu0 0
      %657 = vmatpush1.bf16.msra.mxu0 0
      %658 = vmatprep.subr.bf16.mxu0 0
      %659 = vmatpush1.bf16.msra.mxu0 0
      %660 = vmatprep.subr.bf16.mxu0 0
      %661 = vmatpush1.bf16.msra.mxu0 0
      %662 = vmatprep.subr.bf16.mxu0 0
      %663 = vmatpush1.bf16.msra.mxu0 0
      %664 = vmatprep.subr.bf16.mxu0 0
      %665 = vmatpush1.bf16.msra.mxu0 0
      %666 = vmatprep.subr.bf16.mxu0 %v650
      %667 = vmatpush1.bf16.msra.mxu0 %v647
      %668 = vmatprep.subr.bf16.mxu0 0
      %669 = vmatpush2.bf16.msra.mxu0 0
      %670 = vmatprep.subr.bf16.mxu0 0
      %671 = vmatpush2.bf16.msra.mxu0 0
      %672 = vmatprep.subr.bf16.mxu0 0
      %673 = vmatpush2.bf16.msra.mxu0 0
      %674 = vmatprep.subr.bf16.mxu0 0
      %675 = vmatpush2.bf16.msra.mxu0 0
      %676 = vmatprep.subr.bf16.mxu0 0
      %677 = vmatpush2.bf16.msra.mxu0 0
      %678 = vmatprep.subr.bf16.mxu0 0
      %679 = vmatpush2.bf16.msra.mxu0 0
      %680 = vmatprep.subr.bf16.mxu0 0
      %681 = vmatpush2.bf16.msra.mxu0 0
      %682 = vmatprep.subr.bf16.mxu0 0
      %683 = vmatpush2.bf16.msra.mxu0 0
      %684 = vmatprep.mubr.bf16.mxu0 0
      %685 = vmatmul.mubr.bf16.gmra.mxu0 %v641
      %v686 = vpop.f32.mrf.mxu0
      %v687 = vadd.f32 0.0, %v686
      %v688 = vpop.f32.mrf.mxu0
      %v689 = vadd.f32 0.0, %v688
      %v690 = vpop.f32.mrf.mxu0
      %v691 = vadd.f32 0.0, %v690
      %v692 = vpop.f32.mrf.mxu0
      %v693 = vadd.f32 0.0, %v692
      %694 = vmatprep.mubr.bf16.mxu0 0
      %695 = vmatmul.mubr.bf16.gmra.mxu0 %v644
      %v696 = vpop.f32.mrf.mxu0
      %v697 = vadd.f32 0.0, %v696
      %v698 = vpop.f32.mrf.mxu0
      %v699 = vadd.f32 0.0, %v698
      %v700 = vpop.f32.mrf.mxu0
      %v701 = vpop.f32.mrf.mxu0
      %702 = vdwg.mxu0
      %v703 = vadd.f32 %v605, %v687
      %v704 = vadd.f32 %v606, %v689
      %v705 = vadd.f32 %v607, %v691
      %v706 = vadd.f32 %v608, %v693
      %v707 = vadd.f32 %v609, %v697
      %v708 = vadd.f32 %v610, %v699
      %709 = vrot.lane.b32.xlu0 %v199, 127
      %v710 = vpop.permute.xlu0 %709
      %711 = vrot.lane.b32.xlu0 %v200, 127
      %v712 = vpop.permute.xlu0 %711
      %vm713 = vcmp.lt.s32.totalorder %v206, 127
      %v714 = vsel %vm713, %v710, %v712
      %v715 = vsel %vm713, %v712, %v710
      %s716 = scalar_lea.vmem %s2, 10
      %v717 = vld [vmem:[%s716] sm:$0x3]
      %v719 = vlaneseq
      %v720 = vshrl.u32 %v719, 7
      %v721 = vsub.s32 0, %v720
      %v722 = vrot.slane %v717, %v721
      %v723 = vlaneseq
      %v724 = vshrl.u32 %v723, 7
      %v725 = vsub.s32 1, %v724
      %v726 = vrot.slane %v717, %v725
      %v729 = vmul.f32 %v714, %v722
      %v730 = vmul.f32 %v715, %v726
      %v731 = vpack.c.bf16 %v729, %v729
      %v732 = vpack.c.bf16 %v730, %v730
      %s733 = scalar_lea.vmem %s1, 60
      %v734 = vld [vmem:[%s733] sm:$0xf]
      %v735 = vld [vmem:[%s733 + $0x4] sm:$0xf]
      %v736 = vld [vmem:[%s733 + $0x8] sm:$0x1]
      %v740 = vunpack.c.l.b16 %v734
      %v741 = vunpack.c.l.b16 %v735
      %v742 = vunpack.c.l.b16 %v736
      %v743 = vpack.c.b16 %v741, %v740
      %v744 = vpack.c.b16 %v742, %v742
      %v746 = vsel %vm265, %v743, 0
      %v749 = vsel %vm265, %v744, 0
      %v752 = vsel %vm272, %v731, 0
      %v755 = vsel %vm272, %v732, 0
      %757 = vmatprep.subr.bf16.mxu0 0
      %758 = vmatpush1.bf16.msra.mxu0 0
      %759 = vmatprep.subr.bf16.mxu0 0
      %760 = vmatpush1.bf16.msra.mxu0 0
      %761 = vmatprep.subr.bf16.mxu0 0
      %762 = vmatpush1.bf16.msra.mxu0 0
      %763 = vmatprep.subr.bf16.mxu0 0
      %764 = vmatpush1.bf16.msra.mxu0 0
      %765 = vmatprep.subr.bf16.mxu0 0
      %766 = vmatpush1.bf16.msra.mxu0 0
      %767 = vmatprep.subr.bf16.mxu0 0
      %768 = vmatpush1.bf16.msra.mxu0 0
      %769 = vmatprep.subr.bf16.mxu0 0
      %770 = vmatpush1.bf16.msra.mxu0 0
      %771 = vmatprep.subr.bf16.mxu0 %v755
      %772 = vmatpush1.bf16.msra.mxu0 %v752
      %773 = vmatprep.subr.bf16.mxu0 0
      %774 = vmatpush2.bf16.msra.mxu0 0
      %775 = vmatprep.subr.bf16.mxu0 0
      %776 = vmatpush2.bf16.msra.mxu0 0
      %777 = vmatprep.subr.bf16.mxu0 0
      %778 = vmatpush2.bf16.msra.mxu0 0
      %779 = vmatprep.subr.bf16.mxu0 0
      %780 = vmatpush2.bf16.msra.mxu0 0
      %781 = vmatprep.subr.bf16.mxu0 0
      %782 = vmatpush2.bf16.msra.mxu0 0
      %783 = vmatprep.subr.bf16.mxu0 0
      %784 = vmatpush2.bf16.msra.mxu0 0
      %785 = vmatprep.subr.bf16.mxu0 0
      %786 = vmatpush2.bf16.msra.mxu0 0
      %787 = vmatprep.subr.bf16.mxu0 0
      %788 = vmatpush2.bf16.msra.mxu0 0
      %789 = vmatprep.mubr.bf16.mxu0 0
      %790 = vmatmul.mubr.bf16.gmra.mxu0 %v746
      %v791 = vpop.f32.mrf.mxu0
      %v792 = vadd.f32 0.0, %v791
      %v793 = vpop.f32.mrf.mxu0
      %v794 = vadd.f32 0.0, %v793
      %v795 = vpop.f32.mrf.mxu0
      %v796 = vadd.f32 0.0, %v795
      %v797 = vpop.f32.mrf.mxu0
      %v798 = vadd.f32 0.0, %v797
      %799 = vmatprep.mubr.bf16.mxu0 0
      %800 = vmatmul.mubr.bf16.gmra.mxu0 %v749
      %v801 = vpop.f32.mrf.mxu0
      %v802 = vadd.f32 0.0, %v801
      %v803 = vpop.f32.mrf.mxu0
      %v804 = vadd.f32 0.0, %v803
      %v805 = vpop.f32.mrf.mxu0
      %v806 = vpop.f32.mrf.mxu0
      %807 = vdwg.mxu0
      %v808 = vadd.f32 %v703, %v792
      %v809 = vadd.f32 %v704, %v794
      %v810 = vadd.f32 %v705, %v796
      %v811 = vadd.f32 %v706, %v798
      %v812 = vadd.f32 %v707, %v802
      %v813 = vadd.f32 %v708, %v804
      %814 = vrot.lane.b32.xlu0 %v199, 113
      %v815 = vpop.permute.xlu0 %814
      %816 = vrot.lane.b32.xlu0 %v200, 113
      %v817 = vpop.permute.xlu0 %816
      %vm818 = vcmp.lt.s32.totalorder %v206, 113
      %v819 = vsel %vm818, %v815, %v817
      %v820 = vsel %vm818, %v817, %v815
      %s821 = scalar_lea.vmem %s2, 12
      %v822 = vld [vmem:[%s821] sm:$0x3]
      %v824 = vlaneseq
      %v825 = vshrl.u32 %v824, 7
      %v826 = vsub.s32 0, %v825
      %v827 = vrot.slane %v822, %v826
      %v828 = vlaneseq
      %v829 = vshrl.u32 %v828, 7
      %v830 = vsub.s32 1, %v829
      %v831 = vrot.slane %v822, %v830
      %v834 = vmul.f32 %v819, %v827
      %v835 = vmul.f32 %v820, %v831
      %v836 = vpack.c.bf16 %v834, %v834
      %v837 = vpack.c.bf16 %v835, %v835
      %s838 = scalar_lea.vmem %s1, 72
      %v839 = vld [vmem:[%s838] sm:$0xf]
      %v840 = vld [vmem:[%s838 + $0x4] sm:$0xf]
      %v841 = vld [vmem:[%s838 + $0x8] sm:$0x1]
      %v845 = vunpack.c.l.b16 %v839
      %v846 = vunpack.c.l.b16 %v840
      %v847 = vunpack.c.l.b16 %v841
      %v848 = vpack.c.b16 %v846, %v845
      %v849 = vpack.c.b16 %v847, %v847
      %v851 = vsel %vm265, %v848, 0
      %v854 = vsel %vm265, %v849, 0
      %v857 = vsel %vm272, %v836, 0
      %v860 = vsel %vm272, %v837, 0
      %862 = vmatprep.subr.bf16.mxu0 0
      %863 = vmatpush1.bf16.msra.mxu0 0
      %864 = vmatprep.subr.bf16.mxu0 0
      %865 = vmatpush1.bf16.msra.mxu0 0
      %866 = vmatprep.subr.bf16.mxu0 0
      %867 = vmatpush1.bf16.msra.mxu0 0
      %868 = vmatprep.subr.bf16.mxu0 0
      %869 = vmatpush1.bf16.msra.mxu0 0
      %870 = vmatprep.subr.bf16.mxu0 0
      %871 = vmatpush1.bf16.msra.mxu0 0
      %872 = vmatprep.subr.bf16.mxu0 0
      %873 = vmatpush1.bf16.msra.mxu0 0
      %874 = vmatprep.subr.bf16.mxu0 0
      %875 = vmatpush1.bf16.msra.mxu0 0
      %876 = vmatprep.subr.bf16.mxu0 %v860
      %877 = vmatpush1.bf16.msra.mxu0 %v857
      %878 = vmatprep.subr.bf16.mxu0 0
      %879 = vmatpush2.bf16.msra.mxu0 0
      %880 = vmatprep.subr.bf16.mxu0 0
      %881 = vmatpush2.bf16.msra.mxu0 0
      %882 = vmatprep.subr.bf16.mxu0 0
      %883 = vmatpush2.bf16.msra.mxu0 0
      %884 = vmatprep.subr.bf16.mxu0 0
      %885 = vmatpush2.bf16.msra.mxu0 0
      %886 = vmatprep.subr.bf16.mxu0 0
      %887 = vmatpush2.bf16.msra.mxu0 0
      %888 = vmatprep.subr.bf16.mxu0 0
      %889 = vmatpush2.bf16.msra.mxu0 0
      %890 = vmatprep.subr.bf16.mxu0 0
      %891 = vmatpush2.bf16.msra.mxu0 0
      %892 = vmatprep.subr.bf16.mxu0 0
      %893 = vmatpush2.bf16.msra.mxu0 0
      %894 = vmatprep.mubr.bf16.mxu0 0
      %895 = vmatmul.mubr.bf16.gmra.mxu0 %v851
      %v896 = vpop.f32.mrf.mxu0
      %v897 = vadd.f32 0.0, %v896
      %v898 = vpop.f32.mrf.mxu0
      %v899 = vadd.f32 0.0, %v898
      %v900 = vpop.f32.mrf.mxu0
      %v901 = vadd.f32 0.0, %v900
      %v902 = vpop.f32.mrf.mxu0
      %v903 = vadd.f32 0.0, %v902
      %904 = vmatprep.mubr.bf16.mxu0 0
      %905 = vmatmul.mubr.bf16.gmra.mxu0 %v854
      %v906 = vpop.f32.mrf.mxu0
      %v907 = vadd.f32 0.0, %v906
      %v908 = vpop.f32.mrf.mxu0
      %v909 = vadd.f32 0.0, %v908
      %v910 = vpop.f32.mrf.mxu0
      %v911 = vpop.f32.mrf.mxu0
      %912 = vdwg.mxu0
      %v913 = vadd.f32 %v808, %v897
      %v914 = vadd.f32 %v809, %v899
      %v915 = vadd.f32 %v810, %v901
      %v916 = vadd.f32 %v811, %v903
      %v917 = vadd.f32 %v812, %v907
      %v918 = vadd.f32 %v813, %v909
      %919 = vrot.lane.b32.xlu0 %v199, 112
      %v920 = vpop.permute.xlu0 %919
      %921 = vrot.lane.b32.xlu0 %v200, 112
      %v922 = vpop.permute.xlu0 %921
      %vm923 = vcmp.lt.s32.totalorder %v206, 112
      %v924 = vsel %vm923, %v920, %v922
      %v925 = vsel %vm923, %v922, %v920
      %s926 = scalar_lea.vmem %s2, 14
      %v927 = vld [vmem:[%s926] sm:$0x3]
      %v929 = vlaneseq
      %v930 = vshrl.u32 %v929, 7
      %v931 = vsub.s32 0, %v930
      %v932 = vrot.slane %v927, %v931
      %v933 = vlaneseq
      %v934 = vshrl.u32 %v933, 7
      %v935 = vsub.s32 1, %v934
      %v936 = vrot.slane %v927, %v935
      %v939 = vmul.f32 %v924, %v932
      %v940 = vmul.f32 %v925, %v936
      %v941 = vpack.c.bf16 %v939, %v939
      %v942 = vpack.c.bf16 %v940, %v940
      %s943 = scalar_lea.vmem %s1, 84
      %v944 = vld [vmem:[%s943] sm:$0xf]
      %v945 = vld [vmem:[%s943 + $0x4] sm:$0xf]
      %v946 = vld [vmem:[%s943 + $0x8] sm:$0x1]
      %v950 = vunpack.c.l.b16 %v944
      %v951 = vunpack.c.l.b16 %v945
      %v952 = vunpack.c.l.b16 %v946
      %v953 = vpack.c.b16 %v951, %v950
      %v954 = vpack.c.b16 %v952, %v952
      %v956 = vsel %vm265, %v953, 0
      %v959 = vsel %vm265, %v954, 0
      %v962 = vsel %vm272, %v941, 0
      %v965 = vsel %vm272, %v942, 0
      %967 = vmatprep.subr.bf16.mxu0 0
      %968 = vmatpush1.bf16.msra.mxu0 0
      %969 = vmatprep.subr.bf16.mxu0 0
      %970 = vmatpush1.bf16.msra.mxu0 0
      %971 = vmatprep.subr.bf16.mxu0 0
      %972 = vmatpush1.bf16.msra.mxu0 0
      %973 = vmatprep.subr.bf16.mxu0 0
      %974 = vmatpush1.bf16.msra.mxu0 0
      %975 = vmatprep.subr.bf16.mxu0 0
      %976 = vmatpush1.bf16.msra.mxu0 0
      %977 = vmatprep.subr.bf16.mxu0 0
      %978 = vmatpush1.bf16.msra.mxu0 0
      %979 = vmatprep.subr.bf16.mxu0 0
      %980 = vmatpush1.bf16.msra.mxu0 0
      %981 = vmatprep.subr.bf16.mxu0 %v965
      %982 = vmatpush1.bf16.msra.mxu0 %v962
      %983 = vmatprep.subr.bf16.mxu0 0
      %984 = vmatpush2.bf16.msra.mxu0 0
      %985 = vmatprep.subr.bf16.mxu0 0
      %986 = vmatpush2.bf16.msra.mxu0 0
      %987 = vmatprep.subr.bf16.mxu0 0
      %988 = vmatpush2.bf16.msra.mxu0 0
      %989 = vmatprep.subr.bf16.mxu0 0
      %990 = vmatpush2.bf16.msra.mxu0 0
      %991 = vmatprep.subr.bf16.mxu0 0
      %992 = vmatpush2.bf16.msra.mxu0 0
      %993 = vmatprep.subr.bf16.mxu0 0
      %994 = vmatpush2.bf16.msra.mxu0 0
      %995 = vmatprep.subr.bf16.mxu0 0
      %996 = vmatpush2.bf16.msra.mxu0 0
      %997 = vmatprep.subr.bf16.mxu0 0
      %998 = vmatpush2.bf16.msra.mxu0 0
      %999 = vmatprep.mubr.bf16.mxu0 0
      %1000 = vmatmul.mubr.bf16.gmra.mxu0 %v956
      %v1001 = vpop.f32.mrf.mxu0
      %v1002 = vadd.f32 0.0, %v1001
      %v1003 = vpop.f32.mrf.mxu0
      %v1004 = vadd.f32 0.0, %v1003
      %v1005 = vpop.f32.mrf.mxu0
      %v1006 = vadd.f32 0.0, %v1005
      %v1007 = vpop.f32.mrf.mxu0
      %v1008 = vadd.f32 0.0, %v1007
      %1009 = vmatprep.mubr.bf16.mxu0 0
      %1010 = vmatmul.mubr.bf16.gmra.mxu0 %v959
      %v1011 = vpop.f32.mrf.mxu0
      %v1012 = vadd.f32 0.0, %v1011
      %v1013 = vpop.f32.mrf.mxu0
      %v1014 = vadd.f32 0.0, %v1013
      %v1015 = vpop.f32.mrf.mxu0
      %v1016 = vpop.f32.mrf.mxu0
      %1017 = vdwg.mxu0
      %v1018 = vadd.f32 %v913, %v1002
      %v1019 = vadd.f32 %v914, %v1004
      %v1020 = vadd.f32 %v915, %v1006
      %v1021 = vadd.f32 %v916, %v1008
      %v1022 = vadd.f32 %v917, %v1012
      %v1023 = vadd.f32 %v918, %v1014
      %1024 = vrot.lane.b32.xlu0 %v199, 111
      %v1025 = vpop.permute.xlu0 %1024
      %1026 = vrot.lane.b32.xlu0 %v200, 111
      %v1027 = vpop.permute.xlu0 %1026
      %vm1028 = vcmp.lt.s32.totalorder %v206, 111
      %v1029 = vsel %vm1028, %v1025, %v1027
      %v1030 = vsel %vm1028, %v1027, %v1025
      %s1031 = scalar_lea.vmem %s2, 16
      %v1032 = vld [vmem:[%s1031] sm:$0x3]
      %v1034 = vlaneseq
      %v1035 = vshrl.u32 %v1034, 7
      %v1036 = vsub.s32 0, %v1035
      %v1037 = vrot.slane %v1032, %v1036
      %v1038 = vlaneseq
      %v1039 = vshrl.u32 %v1038, 7
      %v1040 = vsub.s32 1, %v1039
      %v1041 = vrot.slane %v1032, %v1040
      %v1044 = vmul.f32 %v1029, %v1037
      %v1045 = vmul.f32 %v1030, %v1041
      %v1046 = vpack.c.bf16 %v1044, %v1044
      %v1047 = vpack.c.bf16 %v1045, %v1045
      %s1048 = scalar_lea.vmem %s1, 96
      %v1049 = vld [vmem:[%s1048] sm:$0xf]
      %v1050 = vld [vmem:[%s1048 + $0x4] sm:$0xf]
      %v1051 = vld [vmem:[%s1048 + $0x8] sm:$0x1]
      %v1055 = vunpack.c.l.b16 %v1049
      %v1056 = vunpack.c.l.b16 %v1050
      %v1057 = vunpack.c.l.b16 %v1051
      %v1058 = vpack.c.b16 %v1056, %v1055
      %v1059 = vpack.c.b16 %v1057, %v1057
      %v1061 = vsel %vm265, %v1058, 0
      %v1064 = vsel %vm265, %v1059, 0
      %v1067 = vsel %vm272, %v1046, 0
      %v1070 = vsel %vm272, %v1047, 0
      %1072 = vmatprep.subr.bf16.mxu0 0
      %1073 = vmatpush1.bf16.msra.mxu0 0
      %1074 = vmatprep.subr.bf16.mxu0 0
      %1075 = vmatpush1.bf16.msra.mxu0 0
      %1076 = vmatprep.subr.bf16.mxu0 0
      %1077 = vmatpush1.bf16.msra.mxu0 0
      %1078 = vmatprep.subr.bf16.mxu0 0
      %1079 = vmatpush1.bf16.msra.mxu0 0
      %1080 = vmatprep.subr.bf16.mxu0 0
      %1081 = vmatpush1.bf16.msra.mxu0 0
      %1082 = vmatprep.subr.bf16.mxu0 0
      %1083 = vmatpush1.bf16.msra.mxu0 0
      %1084 = vmatprep.subr.bf16.mxu0 0
      %1085 = vmatpush1.bf16.msra.mxu0 0
      %1086 = vmatprep.subr.bf16.mxu0 %v1070
      %1087 = vmatpush1.bf16.msra.mxu0 %v1067
      %1088 = vmatprep.subr.bf16.mxu0 0
      %1089 = vmatpush2.bf16.msra.mxu0 0
      %1090 = vmatprep.subr.bf16.mxu0 0
      %1091 = vmatpush2.bf16.msra.mxu0 0
      %1092 = vmatprep.subr.bf16.mxu0 0
      %1093 = vmatpush2.bf16.msra.mxu0 0
      %1094 = vmatprep.subr.bf16.mxu0 0
      %1095 = vmatpush2.bf16.msra.mxu0 0
      %1096 = vmatprep.subr.bf16.mxu0 0
      %1097 = vmatpush2.bf16.msra.mxu0 0
      %1098 = vmatprep.subr.bf16.mxu0 0
      %1099 = vmatpush2.bf16.msra.mxu0 0
      %1100 = vmatprep.subr.bf16.mxu0 0
      %1101 = vmatpush2.bf16.msra.mxu0 0
      %1102 = vmatprep.subr.bf16.mxu0 0
      %1103 = vmatpush2.bf16.msra.mxu0 0
      %1104 = vmatprep.mubr.bf16.mxu0 0
      %1105 = vmatmul.mubr.bf16.gmra.mxu0 %v1061
      %v1106 = vpop.f32.mrf.mxu0
      %v1107 = vadd.f32 0.0, %v1106
      %v1108 = vpop.f32.mrf.mxu0
      %v1109 = vadd.f32 0.0, %v1108
      %v1110 = vpop.f32.mrf.mxu0
      %v1111 = vadd.f32 0.0, %v1110
      %v1112 = vpop.f32.mrf.mxu0
      %v1113 = vadd.f32 0.0, %v1112
      %1114 = vmatprep.mubr.bf16.mxu0 0
      %1115 = vmatmul.mubr.bf16.gmra.mxu0 %v1064
      %v1116 = vpop.f32.mrf.mxu0
      %v1117 = vadd.f32 0.0, %v1116
      %v1118 = vpop.f32.mrf.mxu0
      %v1119 = vadd.f32 0.0, %v1118
      %v1120 = vpop.f32.mrf.mxu0
      %v1121 = vpop.f32.mrf.mxu0
      %1122 = vdwg.mxu0
      %v1123 = vadd.f32 %v1018, %v1107
      %v1124 = vadd.f32 %v1019, %v1109
      %v1125 = vadd.f32 %v1020, %v1111
      %v1126 = vadd.f32 %v1021, %v1113
      %v1127 = vadd.f32 %v1022, %v1117
      %v1128 = vadd.f32 %v1023, %v1119
      %v1129 = vld [vmem:[%s3] sm:$0xff]
      %v1130 = vld [vmem:[%s3 + $0x8] sm:$0xff]
      %v1131 = vld [vmem:[%s3 + $0x10] sm:$0x3]
      %1133 = vset.pattern.permute.xlu0 0
      %1134 = vperm.xlu0 %1133, %v1129
      %v1135 = vpop.permute.xlu0 %1134
      %1138 = vset.pattern.permute.xlu0 0
      %1139 = vperm.xlu0 %1138, %v1130
      %v1140 = vpop.permute.xlu0 %1139
      %1143 = vset.pattern.permute.xlu0 0
      %1144 = vperm.xlu0 %1143, %v1131
      %v1145 = vpop.permute.xlu0 %1144
      %v1147 = vadd.f32 %v1123, %v1135
      %v1148 = vadd.f32 %v1124, %v1135
      %v1149 = vadd.f32 %v1125, %v1140
      %v1150 = vadd.f32 %v1126, %v1140
      %v1151 = vadd.f32 %v1127, %v1145
      %v1152 = vadd.f32 %v1128, %v1145
      %1153 = vst [vmem:[%s197] sm:$0xff] %v1147
      %1154 = vst [vmem:[%s197 + $0x8] sm:$0xff] %v1148
      %1155 = vst [vmem:[%s197 + $0x10] sm:$0xff] %v1149
      %1156 = vst [vmem:[%s197 + $0x18] sm:$0xff] %v1150
      %1157 = vst [vmem:[%s197 + $0x20] sm:$0x3] %v1151
      %1158 = vst [vmem:[%s197 + $0x28] sm:$0x3] %v1152
      %p1159 = scmp.lt.s32.totalorder %s15, 1
      %s1160 = scalar_select %p1159, %s15, 1
      %s1161 = smul.addr %s1160, 6
      %s1162 = smul.addr %s1161, 8
      %s1163 = scalar_lea.vmem %s4, %s1162
      // Predicated region
      $region37: #{combination_module_dcn.7} parent=35 // pred_check
        %p1164 = pneg %p122
      $region38: #{combination_module_dcn.7} parent=35 // pred_check_branch
        %1166 = sbr.rel (%p1164) target = $region40
      $region39: #{combination_module_dcn.7} parent=35 // pred_region
        _
      $region40: #{combination_module_dcn.7} parent=35 // pred_fallthru
        _
    $region36: #{combination_module_dcn.7} parent=5 // pred_fallthru
      _
    %p1167 = scmp.le.s32.totalorder 2, %s10
    // Predicated region
    $region41: #{combination_module_dcn.7} parent=5 // pred_check
      %p1168 = pneg %p1167
    $region42: #{combination_module_dcn.7} parent=5 // pred_check_branch
      %1170 = sbr.rel (%p1168) target = $region44
    $region43: #{combination_module_dcn.7} parent=5 // pred_region
      %s1171 = ssub.s32 %s10, 2
      // Predicated region
      $region45: #{combination_module_dcn.7} parent=43 // pred_check
        %p1172 = pneg %p128
      $region46: #{combination_module_dcn.7} parent=43 // pred_check_branch
        %1174 = sbr.rel (%p1172) target = $region48
      $region47: #{combination_module_dcn.7} parent=43 // pred_region
        %p1175 = scmp.lt.s32.totalorder %s16, 1
        %s1176 = scalar_select %p1175, %s16, 1
        %s1177 = smul.addr %s1176, 6
        %s1178 = smul.addr %s1177, 8
        %s1179 = scalar_lea.vmem %s4, %s1178
      $region48: #{combination_module_dcn.7} parent=43 // pred_fallthru
        _
    $region44: #{combination_module_dcn.7} parent=5 // pred_fallthru
      _
  $region6: #{combination_module_dcn.7} parent=0 // loop_footer
    %s14 = sadd.s32 1, %s10
  $region7: #{combination_module_dcn.7} parent=0 // loop_footer_branch
    %9 = sbr.rel target = $region3
  $region8: #{combination_module_dcn.7} parent=0 // loop_exit
    _

// kernel: combination_module_dcn.8
$region0: #{combination_module_dcn.8}
  #allocation0 [shape = 'u32[]', space=smem, size = 0x4, offset = 0x4, fixed_abs, tag = 'smem constant byte address 0x4 - core index']
  #allocation1 [shape = 'u32[144,128]{1,0:T(1,128)}', space=vmem, size = 0x12000, scoped, tag = 'internal scratch']
  %s0 = inlined_call_operand.vmem [shape: bf16[16,72], index: 0, kind: input, shape index: {}]
  %s1 = inlined_call_operand.vmem [shape: bf16[2,72,256], index: 1, kind: input, shape index: {}]
  %s2 = inlined_call_operand.vmem [shape: f32[16,1], index: 2, kind: input, shape index: {}]
  %s3 = inlined_call_operand.vmem [shape: f32[2,16,256], index: 3, kind: output, shape index: {}]
  %s4 = sld [smem:[#allocation0]]
  $region120: #{combination_module_dcn.8} parent=0
    _
  %s6 = ssub.s32 1, %s4
  %s7 = scalar_select 0, %s6, %s4
  $region1: #{combination_module_dcn.8} parent=0
    #allocation2 [shape = 'u8[36864]{0}', space=vmem, size = 0x9000, scoped, tag = 'input window, operand 1']
    #allocation3 [shape = 'u8[16384]{0}', space=vmem, size = 0x4000, scoped, tag = 'output window, operand 0']
    loop: start=0, step=1, limit=6
    $region2: #{combination_module_dcn.8} parent=1 // loop_pre_header
      _
    $region3: #{combination_module_dcn.8} parent=1 // loop_header
      %s9 = sphi 0, %s13
      %p10 = scmp.ge.s32.totalorder %s9, 6
      %s16 = sphi 0, %s28
      %s17 = sphi 0, %s24
      %s18 = sphi 0, %s16
      %s19 = sphi 0, %s17
      %s20 = sphi 0, %s18
      %s21 = sphi 0, %s19
      %s29 = sphi 0, %s29
      %s31 = sphi 0, %s29
      %s32 = sphi 0, %s31
      %s46 = sphi 0, %s32
      %s54 = sphi 0, %s56
      %s57 = sphi 0, %s54
      %s58 = sphi 0, %s57
      %s74 = sphi 0, %s58
      %s78 = sphi 0, %s78
      %s80 = sphi 0, %s78
      %s81 = sphi 0, %s80
      %s95 = sphi 0, %s81
      %s103 = sphi 0, %s105
      %s106 = sphi 0, %s103
      %s107 = sphi 0, %s106
      %s123 = sphi 0, %s107
    $region4: #{combination_module_dcn.8} parent=1 // loop_header_branch
      %12 = sbr.rel (%p10) target = $region8
    $region5: #{combination_module_dcn.8} parent=1 // loop_body
      %s14 = ssub.s32 %s9, 1
      %s15 = ssub.s32 %s9, 2
      %s22 = sadd.s32 1, %s17
      %p23 = scmp.ge.s32.totalorder %s22, 2
      %s24 = scalar_select %p23, 0, %s22
      %s25 = sadd.s32 1, %s16
      %s26 = scalar_select %p23, %s25, %s16
      %p27 = scmp.ge.s32.totalorder %s26, 2
      %s28 = scalar_select %p27, 0, %s26
      %s30 = sadd.s32 %s29, 1
      %p33 = scmp.eq.s32.totalorder %s9, 3
      %p34 = scmp.ne.s32.totalorder %s29, %s31
      %p35 = scmp.eq.s32.totalorder %s9, 0
      %p36 = por %p34, %p35
      %p37 = scmp.ne.s32.totalorder %s29, %s31
      %p38 = scmp.eq.s32.totalorder %s14, 3
      %p39 = por %p37, %p38
      %p40 = scmp.ne.s32.totalorder %s31, %s32
      %p41 = scmp.eq.s32.totalorder %s14, 0
      %p42 = por %p40, %p41
      %p43 = scmp.ne.s32.totalorder %s31, %s32
      %p44 = scmp.eq.s32.totalorder %s15, 3
      %p45 = por %p43, %p44
      %p47 = scmp.ne.s32.totalorder %s32, %s46
      %p48 = scmp.eq.s32.totalorder %s15, 0
      %p49 = por %p47, %p48
      %s50 = ssub.s32 %s16, %s28
      %s51 = ssub.s32 %s17, %s24
      %s52 = sor.u32 %s50, %s51
      %p53 = scmp.eq.s32.totalorder %s52, 0
      %s55 = sadd.s32 %s54, 1
      %s56 = scalar_select %p53, %s54, %s55
      %p59 = pneg %p53
      %p60 = scmp.eq.s32.totalorder %s9, 3
      %p61 = por %p59, %p60
      %p62 = scmp.ne.s32.totalorder %s54, %s57
      %p63 = scmp.eq.s32.totalorder %s9, 0
      %p64 = por %p62, %p63
      %p65 = scmp.ne.s32.totalorder %s54, %s57
      %p66 = scmp.eq.s32.totalorder %s14, 3
      %p67 = por %p65, %p66
      %p68 = scmp.ne.s32.totalorder %s57, %s58
      %p69 = scmp.eq.s32.totalorder %s14, 0
      %p70 = por %p68, %p69
      %p71 = scmp.ne.s32.totalorder %s57, %s58
      %p72 = scmp.eq.s32.totalorder %s15, 3
      %p73 = por %p71, %p72
      %p75 = scmp.ne.s32.totalorder %s58, %s74
      %p76 = scmp.eq.s32.totalorder %s15, 0
      %p77 = por %p75, %p76
      %s79 = sadd.s32 %s78, 1
      %p82 = scmp.eq.s32.totalorder %s9, 3
      %p83 = scmp.ne.s32.totalorder %s78, %s80
      %p84 = scmp.eq.s32.totalorder %s9, 0
      %p85 = por %p83, %p84
      %p86 = scmp.ne.s32.totalorder %s78, %s80
      %p87 = scmp.eq.s32.totalorder %s14, 3
      %p88 = por %p86, %p87
      %p89 = scmp.ne.s32.totalorder %s80, %s81
      %p90 = scmp.eq.s32.totalorder %s14, 0
      %p91 = por %p89, %p90
      %p92 = scmp.ne.s32.totalorder %s80, %s81
      %p93 = scmp.eq.s32.totalorder %s15, 3
      %p94 = por %p92, %p93
      %p96 = scmp.ne.s32.totalorder %s81, %s95
      %p97 = scmp.eq.s32.totalorder %s15, 0
      %p98 = por %p96, %p97
      %s99 = ssub.s32 %s16, %s28
      %s100 = ssub.s32 %s17, %s24
      %s101 = sor.u32 %s99, %s100
      %p102 = scmp.eq.s32.totalorder %s101, 0
      %s104 = sadd.s32 %s103, 1
      %s105 = scalar_select %p102, %s103, %s104
      %p108 = pneg %p102
      %p109 = scmp.eq.s32.totalorder %s9, 3
      %p110 = por %p108, %p109
      %p111 = scmp.ne.s32.totalorder %s103, %s106
      %p112 = scmp.eq.s32.totalorder %s9, 0
      %p113 = por %p111, %p112
      %p114 = scmp.ne.s32.totalorder %s103, %s106
      %p115 = scmp.eq.s32.totalorder %s14, 3
      %p116 = por %p114, %p115
      %p117 = scmp.ne.s32.totalorder %s106, %s107
      %p118 = scmp.eq.s32.totalorder %s14, 0
      %p119 = por %p117, %p118
      %p120 = scmp.ne.s32.totalorder %s106, %s107
      %p121 = scmp.eq.s32.totalorder %s15, 3
      %p122 = por %p120, %p121
      %p124 = scmp.ne.s32.totalorder %s107, %s123
      %p125 = scmp.eq.s32.totalorder %s15, 0
      %p126 = por %p124, %p125
      %p127 = scmp.le.s32.totalorder 1, %s9
      %p128 = scmp.lt.s32.totalorder %s9, 5
      %p129 = pnand %p127, %p128
      %p130 = pneg %p129
      // Predicated region
      $region9: #{combination_module_dcn.8} parent=5 // pred_check
        _
      $region10: #{combination_module_dcn.8} parent=5 // pred_check_branch
        %132 = sbr.rel (%p129) target = $region12
      $region11: #{combination_module_dcn.8} parent=5 // pred_region
        %s133 = ssub.s32 %s9, 1
        // Predicated region
        $region13: #{combination_module_dcn.8} parent=11 // pred_check
          %p134 = pneg %p42
        $region14: #{combination_module_dcn.8} parent=11 // pred_check_branch
          %136 = sbr.rel (%p134) target = $region16
        $region15: #{combination_module_dcn.8} parent=11 // pred_region
          _
        $region16: #{combination_module_dcn.8} parent=11 // pred_fallthru
          _
        // Predicated region
        $region17: #{combination_module_dcn.8} parent=11 // pred_check
          %p137 = pneg %p91
        $region18: #{combination_module_dcn.8} parent=11 // pred_check_branch
          %139 = sbr.rel (%p137) target = $region20
        $region19: #{combination_module_dcn.8} parent=11 // pred_region
          _
        $region20: #{combination_module_dcn.8} parent=11 // pred_fallthru
          _
      $region12: #{combination_module_dcn.8} parent=5 // pred_fallthru
        _
      %p140 = scmp.lt.s32.totalorder %s9, 4
      // Predicated region
      $region21: #{combination_module_dcn.8} parent=5 // pred_check
        %p141 = pneg %p140
      $region22: #{combination_module_dcn.8} parent=5 // pred_check_branch
        %143 = sbr.rel (%p141) target = $region24
      $region23: #{combination_module_dcn.8} parent=5 // pred_region
        // Predicated region
        $region25: #{combination_module_dcn.8} parent=23 // pred_check
          %p144 = pneg %p64
        $region26: #{combination_module_dcn.8} parent=23 // pred_check_branch
          %146 = sbr.rel (%p144) target = $region28
        $region27: #{combination_module_dcn.8} parent=23 // pred_region
          %s147 = sand.u32 %s54, 1
          %s148 = sand.u32 %s54, 1
          %s149 = smul.addr %s148, 36
          %s150 = scalar_lea.vmem [#allocation2], %s149
          %s151 = smul.addr %s16, 18
          %s152 = sadd.s32 %s17, %s151
          %s153 = smul.addr %s152, 4
          %s154 = scalar_lea.vmem %s1, %s153
          // Predicated region
          $region29: #{combination_module_dcn.8} parent=27 // pred_check
            _
          $region30: #{combination_module_dcn.8} parent=27 // pred_check_branch
            %156 = sbr.rel (0) target = $region32
          $region31: #{combination_module_dcn.8} parent=27 // pred_region
            // Predicated region
            $region33: #{combination_module_dcn.8} parent=31 // pred_check
              _
            $region34: #{combination_module_dcn.8} parent=31 // pred_check_branch
              %158 = sbr.rel target = $region36
            $region35: #{combination_module_dcn.8} parent=31 // pred_region
              // Predicated region
              $region48: #{combination_module_dcn.8} parent=35 // pred_check
                _
              $region49: #{combination_module_dcn.8} parent=35 // pred_check_branch
                %190 = sbr.rel (0) target = $region51
              $region50: #{combination_module_dcn.8} parent=35 // pred_region
                loop: start=0, step=1, limit=1
                $region52: #{combination_module_dcn.8} parent=50 // loop_pre_header
                  _
                $region53: #{combination_module_dcn.8} parent=50 // loop_header
                  %s192 = sphi 0, %s196
                  %p193 = scmp.ge.s32.totalorder %s192, 1
                  %s197 = sphi %s154, %s154
                  %s198 = sphi %s150, %s150
                $region54: #{combination_module_dcn.8} parent=50 // loop_header_branch
                  %195 = sbr.rel (%p193) target = $region58
                $region55: #{combination_module_dcn.8} parent=50 // loop_body
                  _
                $region56: #{combination_module_dcn.8} parent=50 // loop_footer
                  %s196 = sadd.s32 1, %s192
                $region57: #{combination_module_dcn.8} parent=50 // loop_footer_branch
                  %191 = sbr.rel target = $region53
                $region58: #{combination_module_dcn.8} parent=50 // loop_exit
                  _
                %s200 = ssub.s32 16, 1
                loop: start=0, step=1, limit=1
                $region59: #{combination_module_dcn.8} parent=50 // loop_pre_header
                  _
                $region60: #{combination_module_dcn.8} parent=50 // loop_header
                  %s202 = sphi 0, %s206
                  %p203 = scmp.ge.s32.totalorder %s202, 1
                  %s207 = sphi %s154, %s154
                  %s208 = sphi %s150, %s150
                $region61: #{combination_module_dcn.8} parent=50 // loop_header_branch
                  %205 = sbr.rel (%p203) target = $region65
                $region62: #{combination_module_dcn.8} parent=50 // loop_body
                  %v209 = vld [vmem:[%s207] sm:%s200]
                  %210 = vst [vmem:[%s208] sm:%s200] %v209
                  %v211 = vld [vmem:[%s207 + $0x8] sm:%s200]
                  %212 = vst [vmem:[%s208 + $0x4] sm:%s200] %v211
                  %v213 = vld [vmem:[%s207 + $0x10] sm:%s200]
                  %214 = vst [vmem:[%s208 + $0x8] sm:%s200] %v213
                  %v215 = vld [vmem:[%s207 + $0x18] sm:%s200]
                  %216 = vst [vmem:[%s208 + $0xc] sm:%s200] %v215
                  %v217 = vld [vmem:[%s207 + $0x20] sm:%s200]
                  %218 = vst [vmem:[%s208 + $0x10] sm:%s200] %v217
                  %v219 = vld [vmem:[%s207 + $0x28] sm:%s200]
                  %220 = vst [vmem:[%s208 + $0x14] sm:%s200] %v219
                  %v221 = vld [vmem:[%s207 + $0x30] sm:%s200]
                  %222 = vst [vmem:[%s208 + $0x18] sm:%s200] %v221
                  %v223 = vld [vmem:[%s207 + $0x38] sm:%s200]
                  %224 = vst [vmem:[%s208 + $0x1c] sm:%s200] %v223
                  %v225 = vld [vmem:[%s207 + $0x40] sm:%s200]
                  %226 = vst [vmem:[%s208 + $0x20] sm:%s200] %v225
                $region63: #{combination_module_dcn.8} parent=50 // loop_footer
                  %s206 = sadd.s32 1, %s202
                $region64: #{combination_module_dcn.8} parent=50 // loop_footer_branch
                  %201 = sbr.rel target = $region60
                $region65: #{combination_module_dcn.8} parent=50 // loop_exit
                  _
              $region51: #{combination_module_dcn.8} parent=35 // pred_fallthru
                _
            $region36: #{combination_module_dcn.8} parent=31 // pred_fallthru
              _
            // Predicated region
            $region37: #{combination_module_dcn.8} parent=31 // pred_check
              _
            $region38: #{combination_module_dcn.8} parent=31 // pred_check_branch
              %160 = sbr.rel (0) target = $region40
            $region39: #{combination_module_dcn.8} parent=31 // pred_region
              %s162 = ssub.s32 16, 1
              loop: start=0, step=1, limit=1
              $region41: #{combination_module_dcn.8} parent=39 // loop_pre_header
                _
              $region42: #{combination_module_dcn.8} parent=39 // loop_header
                %s164 = sphi 0, %s168
                %p165 = scmp.ge.s32.totalorder %s164, 1
                %s169 = sphi %s154, %s154
                %s170 = sphi %s150, %s150
              $region43: #{combination_module_dcn.8} parent=39 // loop_header_branch
                %167 = sbr.rel (%p165) target = $region47
              $region44: #{combination_module_dcn.8} parent=39 // loop_body
                %v171 = vld [vmem:[%s169] sm:%s162]
                %172 = vst [vmem:[%s170] sm:%s162] %v171
                %v173 = vld [vmem:[%s169 + $0x8] sm:%s162]
                %174 = vst [vmem:[%s170 + $0x4] sm:%s162] %v173
                %v175 = vld [vmem:[%s169 + $0x10] sm:%s162]
                %176 = vst [vmem:[%s170 + $0x8] sm:%s162] %v175
                %v177 = vld [vmem:[%s169 + $0x18] sm:%s162]
                %178 = vst [vmem:[%s170 + $0xc] sm:%s162] %v177
                %v179 = vld [vmem:[%s169 + $0x20] sm:%s162]
                %180 = vst [vmem:[%s170 + $0x10] sm:%s162] %v179
                %v181 = vld [vmem:[%s169 + $0x28] sm:%s162]
                %182 = vst [vmem:[%s170 + $0x14] sm:%s162] %v181
                %v183 = vld [vmem:[%s169 + $0x30] sm:%s162]
                %184 = vst [vmem:[%s170 + $0x18] sm:%s162] %v183
                %v185 = vld [vmem:[%s169 + $0x38] sm:%s162]
                %186 = vst [vmem:[%s170 + $0x1c] sm:%s162] %v185
                %v187 = vld [vmem:[%s169 + $0x40] sm:%s162]
                %188 = vst [vmem:[%s170 + $0x20] sm:%s162] %v187
              $region45: #{combination_module_dcn.8} parent=39 // loop_footer
                %s168 = sadd.s32 1, %s164
              $region46: #{combination_module_dcn.8} parent=39 // loop_footer_branch
                %163 = sbr.rel target = $region42
              $region47: #{combination_module_dcn.8} parent=39 // loop_exit
                _
            $region40: #{combination_module_dcn.8} parent=31 // pred_fallthru
              _
          $region32: #{combination_module_dcn.8} parent=27 // pred_fallthru
            _
          %227 = vnop
        $region28: #{combination_module_dcn.8} parent=23 // pred_fallthru
          _
      $region24: #{combination_module_dcn.8} parent=5 // pred_fallthru
        _
      %p228 = scmp.le.s32.totalorder 1, %s9
      %p229 = scmp.lt.s32.totalorder %s9, 5
      %p230 = pnand %p228, %p229
      %p231 = pneg %p230
      // Predicated region
      $region66: #{combination_module_dcn.8} parent=5 // pred_check
        _
      $region67: #{combination_module_dcn.8} parent=5 // pred_check_branch
        %233 = sbr.rel (%p230) target = $region69
      $region68: #{combination_module_dcn.8} parent=5 // pred_region
        %s234 = ssub.s32 %s9, 1
        %s235 = sand.u32 %s57, 1
        %s236 = sand.u32 %s57, 1
        %s237 = smul.addr %s236, 36
        %s238 = scalar_lea.vmem [#allocation2], %s237
        // Predicated region
        $region70: #{combination_module_dcn.8} parent=68 // pred_check
          %p239 = pneg %p70
        $region71: #{combination_module_dcn.8} parent=68 // pred_check_branch
          %241 = sbr.rel (%p239) target = $region73
        $region72: #{combination_module_dcn.8} parent=68 // pred_region
          _
        $region73: #{combination_module_dcn.8} parent=68 // pred_fallthru
          _
        %p242 = pneg %p42
        %p243 = pneg %p39
        %s244 = sand.u32 %s57, 1
        %s245 = sand.u32 %s57, 1
        %s246 = smul.addr %s245, 36
        %s247 = scalar_lea.vmem [#allocation2], %s246
        %p248 = pneg %p70
        %p249 = pneg %p67
        %p250 = pneg %p91
        %p251 = pneg %p88
        %p252 = pneg %p119
        %p253 = pneg %p116
        %s254 = sand.u32 %s106, 1
        %s255 = sand.u32 %s106, 1
        %s256 = smul.addr %s255, 16
        %s257 = scalar_lea.vmem [#allocation3], %s256
        %v259 = vld [vmem:[%s0] sm:$0xf]
        %v260 = vld [vmem:[%s0 + $0x4] sm:$0xf]
        %v261 = vld [vmem:[%s238] sm:$0xf]
        %v262 = vld [vmem:[%s238 + $0x4] sm:$0xf]
        %v263 = vld [vmem:[%s238 + $0x8] sm:$0xf]
        %v264 = vld [vmem:[%s238 + $0xc] sm:$0xf]
        %v265 = vld [vmem:[%s238 + $0x10] sm:$0xf]
        %v266 = vld [vmem:[%s238 + $0x14] sm:$0xf]
        %v267 = vld [vmem:[%s238 + $0x18] sm:$0xf]
        %v268 = vld [vmem:[%s238 + $0x1c] sm:$0xf]
        %v269 = vld [vmem:[%s238 + $0x20] sm:$0xf]
        %v270 = vld [vmem:[%s2] sm:$0xff]
        %v271 = vld [vmem:[%s2 + $0x8] sm:$0xff]
        %273 = vset.pattern.permute.xlu0 0
        %274 = vperm.xlu0 %273, %v270
        %v275 = vpop.permute.xlu0 %274
        %278 = vset.pattern.permute.xlu0 0
        %279 = vperm.xlu0 %278, %v271
        %v280 = vpop.permute.xlu0 %279
        %v284 = vunpack.c.l.b16 %v259
        %v285 = vunpack.c.l.b16 %v260
        %v286 = vpack.c.b16 %v285, %v284
        %v296 = vunpack.c.l.b16 %v261
        %v297 = vunpack.c.l.b16 %v262
        %v298 = vunpack.c.l.b16 %v263
        %v299 = vunpack.c.l.b16 %v264
        %v300 = vunpack.c.l.b16 %v265
        %v301 = vunpack.c.l.b16 %v266
        %v302 = vunpack.c.l.b16 %v267
        %v303 = vunpack.c.l.b16 %v268
        %v304 = vunpack.c.l.b16 %v269
        %v305 = vpack.c.b16 %v297, %v296
        %v306 = vpack.c.b16 %v299, %v298
        %v307 = vpack.c.b16 %v301, %v300
        %v308 = vpack.c.b16 %v303, %v302
        %v309 = vpack.c.b16 %v304, %v304
        %vm314 = vcmask 588800
        %v316 = vsel %vm314, %v286, 0
        %vm318 = vcmask 1043456
        %v320 = vsel %vm318, %v309, 0
        %322 = vmatprep.subr.bf16.mxu0 0
        %323 = vmatpush1.bf16.msra.mxu0 0
        %324 = vmatprep.subr.bf16.mxu0 0
        %325 = vmatpush1.bf16.msra.mxu0 0
        %326 = vmatprep.subr.bf16.mxu0 0
        %327 = vmatpush1.bf16.msra.mxu0 0
        %328 = vmatprep.subr.bf16.mxu0 0
        %329 = vmatpush1.bf16.msra.mxu0 %v320
        %330 = vmatprep.subr.bf16.mxu0 0
        %331 = vmatpush1.bf16.msra.mxu0 %v308
        %332 = vmatprep.subr.bf16.mxu0 0
        %333 = vmatpush1.bf16.msra.mxu0 %v307
        %334 = vmatprep.subr.bf16.mxu0 0
        %335 = vmatpush1.bf16.msra.mxu0 %v306
        %336 = vmatprep.subr.bf16.mxu0 0
        %337 = vmatpush1.bf16.msra.mxu0 %v305
        %338 = vmatprep.subr.bf16.mxu0 0
        %339 = vmatpush2.bf16.msra.mxu0 0
        %340 = vmatprep.subr.bf16.mxu0 0
        %341 = vmatpush2.bf16.msra.mxu0 0
        %342 = vmatprep.subr.bf16.mxu0 0
        %343 = vmatpush2.bf16.msra.mxu0 0
        %344 = vmatprep.subr.bf16.mxu0 0
        %345 = vmatpush2.bf16.msra.mxu0 0
        %346 = vmatprep.subr.bf16.mxu0 0
        %347 = vmatpush2.bf16.msra.mxu0 0
        %348 = vmatprep.subr.bf16.mxu0 0
        %349 = vmatpush2.bf16.msra.mxu0 0
        %350 = vmatprep.subr.bf16.mxu0 0
        %351 = vmatpush2.bf16.msra.mxu0 0
        %352 = vmatprep.subr.bf16.mxu0 0
        %353 = vmatpush2.bf16.msra.mxu0 0
        %354 = vmatprep.mubr.bf16.mxu0 0
        %355 = vmatmul.mubr.bf16.gmra.mxu0 %v316
        %v356 = vpop.f32.mrf.mxu0
        %v357 = vadd.f32 %v275, %v356
        %v358 = vpop.f32.mrf.mxu0
        %v359 = vpop.f32.mrf.mxu0
        %v360 = vadd.f32 %v280, %v359
        %v361 = vpop.f32.mrf.mxu0
        %362 = vdwg.mxu0
        %v363 = vmax.f32 %v357, 0.0
        %v364 = vmax.f32 %v360, 0.0
        %365 = vst [vmem:[%s257] sm:$0xff] %v363
        %366 = vst [vmem:[%s257 + $0x8] sm:$0xff] %v364
        %s367 = sand.u32 %s106, 1
        %s368 = sand.u32 %s106, 1
        %s369 = smul.addr %s368, 16
        %s370 = scalar_lea.vmem [#allocation3], %s369
        // Predicated region
        $region74: #{combination_module_dcn.8} parent=68 // pred_check
          %p371 = pneg %p116
        $region75: #{combination_module_dcn.8} parent=68 // pred_check_branch
          %373 = sbr.rel (%p371) target = $region77
        $region76: #{combination_module_dcn.8} parent=68 // pred_region
          %s374 = smul.addr %s18, 4
          %s375 = sadd.s32 %s19, %s374
          %s376 = smul.addr %s375, 8
          %s377 = scalar_lea.vmem %s3, %s376
          // Predicated region
          $region78: #{combination_module_dcn.8} parent=76 // pred_check
            _
          $region79: #{combination_module_dcn.8} parent=76 // pred_check_branch
            %379 = sbr.rel (0) target = $region81
          $region80: #{combination_module_dcn.8} parent=76 // pred_region
            // Predicated region
            $region82: #{combination_module_dcn.8} parent=80 // pred_check
              _
            $region83: #{combination_module_dcn.8} parent=80 // pred_check_branch
              %381 = sbr.rel (0) target = $region85
            $region84: #{combination_module_dcn.8} parent=80 // pred_region
              // Predicated region
              $region97: #{combination_module_dcn.8} parent=84 // pred_check
                _
              $region98: #{combination_module_dcn.8} parent=84 // pred_check_branch
                %399 = sbr.rel (0) target = $region100
              $region99: #{combination_module_dcn.8} parent=84 // pred_region
                loop: start=0, step=1, limit=1
                $region101: #{combination_module_dcn.8} parent=99 // loop_pre_header
                  _
                $region102: #{combination_module_dcn.8} parent=99 // loop_header
                  %s401 = sphi 0, %s405
                  %p402 = scmp.ge.s32.totalorder %s401, 1
                  %s406 = sphi %s370, %s370
                  %s407 = sphi %s377, %s377
                $region103: #{combination_module_dcn.8} parent=99 // loop_header_branch
                  %404 = sbr.rel (%p402) target = $region107
                $region104: #{combination_module_dcn.8} parent=99 // loop_body
                  %v408 = vld [vmem:[%s406] sm:$0xff]
                  %409 = vst [vmem:[%s407] sm:$0xff] %v408
                  %v410 = vld [vmem:[%s406 + $0x8] sm:$0xff]
                  %411 = vst [vmem:[%s407 + $0x10] sm:$0xff] %v410
                $region105: #{combination_module_dcn.8} parent=99 // loop_footer
                  %s405 = sadd.s32 1, %s401
                $region106: #{combination_module_dcn.8} parent=99 // loop_footer_branch
                  %400 = sbr.rel target = $region102
                $region107: #{combination_module_dcn.8} parent=99 // loop_exit
                  _
              $region100: #{combination_module_dcn.8} parent=84 // pred_fallthru
                _
              // Predicated region
              $region108: #{combination_module_dcn.8} parent=84 // pred_check
                _
              $region109: #{combination_module_dcn.8} parent=84 // pred_check_branch
                %413 = sbr.rel target = $region111
              $region110: #{combination_module_dcn.8} parent=84 // pred_region
                _
              $region111: #{combination_module_dcn.8} parent=84 // pred_fallthru
                _
            $region85: #{combination_module_dcn.8} parent=80 // pred_fallthru
              _
            // Predicated region
            $region86: #{combination_module_dcn.8} parent=80 // pred_check
              _
            $region87: #{combination_module_dcn.8} parent=80 // pred_check_branch
              %383 = sbr.rel target = $region89
            $region88: #{combination_module_dcn.8} parent=80 // pred_region
              %s385 = ssub.s32 256, 1
              loop: start=0, step=1, limit=1
              $region90: #{combination_module_dcn.8} parent=88 // loop_pre_header
                _
              $region91: #{combination_module_dcn.8} parent=88 // loop_header
                %s387 = sphi 0, %s391
                %p388 = scmp.ge.s32.totalorder %s387, 1
                %s392 = sphi %s370, %s370
                %s393 = sphi %s377, %s377
              $region92: #{combination_module_dcn.8} parent=88 // loop_header_branch
                %390 = sbr.rel (%p388) target = $region96
              $region93: #{combination_module_dcn.8} parent=88 // loop_body
                %v394 = vld [vmem:[%s392] sm:%s385]
                %395 = vst [vmem:[%s393] sm:%s385] %v394
                %v396 = vld [vmem:[%s392 + $0x8] sm:%s385]
                %397 = vst [vmem:[%s393 + $0x10] sm:%s385] %v396
              $region94: #{combination_module_dcn.8} parent=88 // loop_footer
                %s391 = sadd.s32 1, %s387
              $region95: #{combination_module_dcn.8} parent=88 // loop_footer_branch
                %386 = sbr.rel target = $region91
              $region96: #{combination_module_dcn.8} parent=88 // loop_exit
                _
            $region89: #{combination_module_dcn.8} parent=80 // pred_fallthru
              _
          $region81: #{combination_module_dcn.8} parent=76 // pred_fallthru
            _
          %414 = vnop
        $region77: #{combination_module_dcn.8} parent=68 // pred_fallthru
          _
      $region69: #{combination_module_dcn.8} parent=5 // pred_fallthru
        _
      %p415 = scmp.le.s32.totalorder 2, %s9
      // Predicated region
      $region112: #{combination_module_dcn.8} parent=5 // pred_check
        %p416 = pneg %p415
      $region113: #{combination_module_dcn.8} parent=5 // pred_check_branch
        %418 = sbr.rel (%p416) target = $region115
      $region114: #{combination_module_dcn.8} parent=5 // pred_region
        %s419 = ssub.s32 %s9, 2
        // Predicated region
        $region116: #{combination_module_dcn.8} parent=114 // pred_check
          %p420 = pneg %p122
        $region117: #{combination_module_dcn.8} parent=114 // pred_check_branch
          %422 = sbr.rel (%p420) target = $region119
        $region118: #{combination_module_dcn.8} parent=114 // pred_region
          %s423 = sand.u32 %s107, 1
          %s424 = sand.u32 %s107, 1
          %s425 = smul.addr %s424, 16
          %s426 = scalar_lea.vmem [#allocation3], %s425
        $region119: #{combination_module_dcn.8} parent=114 // pred_fallthru
          _
      $region115: #{combination_module_dcn.8} parent=5 // pred_fallthru
        _
    $region6: #{combination_module_dcn.8} parent=1 // loop_footer
      %s13 = sadd.s32 1, %s9
    $region7: #{combination_module_dcn.8} parent=1 // loop_footer_branch
      %8 = sbr.rel target = $region3
    $region8: #{combination_module_dcn.8} parent=1 // loop_exit
      _

// kernel: mul.114
$region0: #{mul.114}
  %s0 = inlined_call_operand.vmem [shape: f32[2,1,16,16], index: 0, kind: input, shape index: {}]
  %s1 = inlined_call_operand.vmem [shape: f32[2,256], index: 1, kind: output, shape index: {}]
  $region1: #{mul.114} parent=0
    #allocation0 [shape = 'u8[8192]{0}', space=vmem, size = 0x2000, scoped, tag = 'scoped mem for output reshape']
    %v2 = vld [vmem:[%s0] ss:$8 sm:$0xf]
    %vm3 = vcmask 130048
    %4 = vst.msk [vmem:[#allocation0] ss:$8 sm:$0x3] %vm3, %v2
    %s5 = scalar_lea.vmem [#allocation0], 4294967281
    %6 = vst.msk [vmem:[%s5] ss:$8 sm:$0xc] %vm3, %v2
    %s7 = scalar_lea.vmem %s0, 7
    %s8 = smov 3
    %v9 = vld [vmem:[%s7] ss:$16 sm:%s8]
    %s10 = scalar_lea.vmem %s0, 4294967279
    %s11 = smov 12
    %v12 = vld [vmem:[%s10] ss:$16 sm:%s11]
    %vm13 = vcmask 1043458
    %v14 = vsel %vm13, %v12, %v9
    %15 = vrot.lane.b32.xlu0 %v14, 112
    %v16 = vpop.permute.xlu0 %15
    %vm17 = vcmask 1048448
    %18 = vst.msk [vmem:[#allocation0] sm:$0x3] %vm17, %v16
    %s19 = scalar_lea.vmem [#allocation0], 6
    %20 = vst.msk [vmem:[%s19] sm:$0xc] %vm17, %v16
    %s21 = scalar_lea.vmem %s0, 6
    %s22 = smov 3
    %v23 = vld [vmem:[%s21] ss:$16 sm:%s22]
    %s24 = scalar_lea.vmem %s0, 4294967278
    %s25 = smov 12
    %v26 = vld [vmem:[%s24] ss:$16 sm:%s25]
    %vm27 = vcmask 1043458
    %v28 = vsel %vm27, %v26, %v23
    %29 = vrot.lane.b32.xlu0 %v28, 96
    %v30 = vpop.permute.xlu0 %29
    %vm31 = vcmask 917248
    %32 = vst.msk [vmem:[#allocation0] sm:$0x3] %vm31, %v30
    %s33 = scalar_lea.vmem [#allocation0], 6
    %34 = vst.msk [vmem:[%s33] sm:$0xc] %vm31, %v30
    %s35 = scalar_lea.vmem %s0, 5
    %s36 = smov 3
    %v37 = vld [vmem:[%s35] ss:$16 sm:%s36]
    %s38 = scalar_lea.vmem %s0, 4294967277
    %s39 = smov 12
    %v40 = vld [vmem:[%s38] ss:$16 sm:%s39]
    %vm41 = vcmask 1043458
    %v42 = vsel %vm41, %v40, %v37
    %43 = vrot.lane.b32.xlu0 %v42, 80
    %v44 = vpop.permute.xlu0 %43
    %vm45 = vcmask 786048
    %46 = vst.msk [vmem:[#allocation0] sm:$0x3] %vm45, %v44
    %s47 = scalar_lea.vmem [#allocation0], 6
    %48 = vst.msk [vmem:[%s47] sm:$0xc] %vm45, %v44
    %s49 = scalar_lea.vmem %s0, 4
    %s50 = smov 3
    %v51 = vld [vmem:[%s49] ss:$16 sm:%s50]
    %s52 = scalar_lea.vmem %s0, 4294967276
    %s53 = smov 12
    %v54 = vld [vmem:[%s52] ss:$16 sm:%s53]
    %vm55 = vcmask 1043458
    %v56 = vsel %vm55, %v54, %v51
    %57 = vrot.lane.b32.xlu0 %v56, 64
    %v58 = vpop.permute.xlu0 %57
    %vm59 = vcmask 654848
    %60 = vst.msk [vmem:[#allocation0] sm:$0x3] %vm59, %v58
    %s61 = scalar_lea.vmem [#allocation0], 6
    %62 = vst.msk [vmem:[%s61] sm:$0xc] %vm59, %v58
    %s63 = scalar_lea.vmem %s0, 3
    %s64 = smov 3
    %v65 = vld [vmem:[%s63] ss:$16 sm:%s64]
    %s66 = scalar_lea.vmem %s0, 4294967275
    %s67 = smov 12
    %v68 = vld [vmem:[%s66] ss:$16 sm:%s67]
    %vm69 = vcmask 1043458
    %v70 = vsel %vm69, %v68, %v65
    %71 = vrot.lane.b32.xlu0 %v70, 48
    %v72 = vpop.permute.xlu0 %71
    %vm73 = vcmask 523648
    %74 = vst.msk [vmem:[#allocation0] sm:$0x3] %vm73, %v72
    %s75 = scalar_lea.vmem [#allocation0], 6
    %76 = vst.msk [vmem:[%s75] sm:$0xc] %vm73, %v72
    %s77 = scalar_lea.vmem %s0, 2
    %s78 = smov 3
    %v79 = vld [vmem:[%s77] ss:$16 sm:%s78]
    %s80 = scalar_lea.vmem %s0, 4294967274
    %s81 = smov 12
    %v82 = vld [vmem:[%s80] ss:$16 sm:%s81]
    %vm83 = vcmask 1043458
    %v84 = vsel %vm83, %v82, %v79
    %85 = vrot.lane.b32.xlu0 %v84, 32
    %v86 = vpop.permute.xlu0 %85
    %vm87 = vcmask 392448
    %88 = vst.msk [vmem:[#allocation0] sm:$0x3] %vm87, %v86
    %s89 = scalar_lea.vmem [#allocation0], 6
    %90 = vst.msk [vmem:[%s89] sm:$0xc] %vm87, %v86
    %s91 = scalar_lea.vmem %s0, 1
    %s92 = smov 3
    %v93 = vld [vmem:[%s91] ss:$16 sm:%s92]
    %s94 = scalar_lea.vmem %s0, 4294967273
    %s95 = smov 12
    %v96 = vld [vmem:[%s94] ss:$16 sm:%s95]
    %vm97 = vcmask 1043458
    %v98 = vsel %vm97, %v96, %v93
    %99 = vrot.lane.b32.xlu0 %v98, 16
    %v100 = vpop.permute.xlu0 %99
    %vm101 = vcmask 261248
    %102 = vst.msk [vmem:[#allocation0] sm:$0x3] %vm101, %v100
    %s103 = scalar_lea.vmem [#allocation0], 6
    %104 = vst.msk [vmem:[%s103] sm:$0xc] %vm101, %v100
    %s106 = sshll.u32 1, 2
    %s107 = ssub.s32 %s106, 1
    %v109 = vld [vmem:[#allocation0] sm:%s107]
    %s110 = sshll.u32 1, 2
    %s111 = ssub.s32 %s110, 1
    %112 = vst [vmem:[%s1] sm:%s111] %v109
    %s113 = scalar_lea.vmem [#allocation0], 8
    %v114 = vld [vmem:[%s113] sm:%s107]
    %s115 = sshll.u32 1, 2
    %s116 = ssub.s32 %s115, 1
    %s117 = scalar_lea.vmem %s1, 2
    %118 = vst [vmem:[%s117] sm:%s116] %v114

// kernel: combination_module_dcn.10
$region0: #{combination_module_dcn.10}
  #allocation0 [shape = 'u32[]', space=smem, size = 0x4, offset = 0x4, fixed_abs, tag = 'smem constant byte address 0x4 - core index']
  #allocation1 [shape = 'u32[144,128]{1,0:T(1,128)}', space=vmem, size = 0x12000, scoped, tag = 'internal scratch']
  %s0 = inlined_call_operand.vmem [shape: f32[2,32,256], index: 0, kind: input, shape index: {}]
  %s1 = inlined_call_operand.vmem [shape: bf16[9,2,32], index: 1, kind: input, shape index: {}]
  %s2 = inlined_call_operand.vmem [shape: f32[9,1,256], index: 2, kind: input, shape index: {}]
  %s3 = inlined_call_operand.vmem [shape: f32[2,1], index: 3, kind: input, shape index: {}]
  %s4 = inlined_call_operand.vmem [shape: f32[2,2,256], index: 4, kind: output, shape index: {}]
  %s5 = sld [smem:[#allocation0]]
  $region49: #{combination_module_dcn.10} parent=0
    _
  %s7 = ssub.s32 1, %s5
  %s8 = scalar_select 0, %s7, %s5
  loop: start=0, step=1, limit=4
  $region2: #{combination_module_dcn.10} parent=0 // loop_pre_header
    _
  $region3: #{combination_module_dcn.10} parent=0 // loop_header
    %s10 = sphi 0, %s14
    %p11 = scmp.ge.s32.totalorder %s10, 4
    %s20 = sphi 0, %s22
    %s23 = sphi 0, %s20
    %s24 = sphi 0, %s23
    %s40 = sphi 0, %s24
    %s44 = sphi 0, %s44
    %s46 = sphi 0, %s44
    %s47 = sphi 0, %s46
    %s61 = sphi 0, %s47
    %s65 = sphi 0, %s65
    %s67 = sphi 0, %s65
    %s68 = sphi 0, %s67
    %s82 = sphi 0, %s68
    %s86 = sphi 0, %s86
    %s88 = sphi 0, %s86
    %s89 = sphi 0, %s88
    %s103 = sphi 0, %s89
    %s109 = sphi 0, %s111
    %s112 = sphi 0, %s109
    %s113 = sphi 0, %s112
    %s129 = sphi 0, %s113
  $region4: #{combination_module_dcn.10} parent=0 // loop_header_branch
    %13 = sbr.rel (%p11) target = $region8
  $region5: #{combination_module_dcn.10} parent=0 // loop_body
    %s15 = ssub.s32 %s10, 1
    %s16 = ssub.s32 %s10, 2
    %s17 = sadd.s32 %s10, 1
    %s18 = ssub.s32 %s10, %s17
    %p19 = scmp.eq.s32.totalorder %s18, 0
    %s21 = sadd.s32 %s20, 1
    %s22 = scalar_select %p19, %s20, %s21
    %p25 = pneg %p19
    %p26 = scmp.eq.s32.totalorder %s10, 1
    %p27 = por %p25, %p26
    %p28 = scmp.ne.s32.totalorder %s20, %s23
    %p29 = scmp.eq.s32.totalorder %s10, 0
    %p30 = por %p28, %p29
    %p31 = scmp.ne.s32.totalorder %s20, %s23
    %p32 = scmp.eq.s32.totalorder %s15, 1
    %p33 = por %p31, %p32
    %p34 = scmp.ne.s32.totalorder %s23, %s24
    %p35 = scmp.eq.s32.totalorder %s15, 0
    %p36 = por %p34, %p35
    %p37 = scmp.ne.s32.totalorder %s23, %s24
    %p38 = scmp.eq.s32.totalorder %s16, 1
    %p39 = por %p37, %p38
    %p41 = scmp.ne.s32.totalorder %s24, %s40
    %p42 = scmp.eq.s32.totalorder %s16, 0
    %p43 = por %p41, %p42
    %s45 = sadd.s32 %s44, 1
    %p48 = scmp.eq.s32.totalorder %s10, 1
    %p49 = scmp.ne.s32.totalorder %s44, %s46
    %p50 = scmp.eq.s32.totalorder %s10, 0
    %p51 = por %p49, %p50
    %p52 = scmp.ne.s32.totalorder %s44, %s46
    %p53 = scmp.eq.s32.totalorder %s15, 1
    %p54 = por %p52, %p53
    %p55 = scmp.ne.s32.totalorder %s46, %s47
    %p56 = scmp.eq.s32.totalorder %s15, 0
    %p57 = por %p55, %p56
    %p58 = scmp.ne.s32.totalorder %s46, %s47
    %p59 = scmp.eq.s32.totalorder %s16, 1
    %p60 = por %p58, %p59
    %p62 = scmp.ne.s32.totalorder %s47, %s61
    %p63 = scmp.eq.s32.totalorder %s16, 0
    %p64 = por %p62, %p63
    %s66 = sadd.s32 %s65, 1
    %p69 = scmp.eq.s32.totalorder %s10, 1
    %p70 = scmp.ne.s32.totalorder %s65, %s67
    %p71 = scmp.eq.s32.totalorder %s10, 0
    %p72 = por %p70, %p71
    %p73 = scmp.ne.s32.totalorder %s65, %s67
    %p74 = scmp.eq.s32.totalorder %s15, 1
    %p75 = por %p73, %p74
    %p76 = scmp.ne.s32.totalorder %s67, %s68
    %p77 = scmp.eq.s32.totalorder %s15, 0
    %p78 = por %p76, %p77
    %p79 = scmp.ne.s32.totalorder %s67, %s68
    %p80 = scmp.eq.s32.totalorder %s16, 1
    %p81 = por %p79, %p80
    %p83 = scmp.ne.s32.totalorder %s68, %s82
    %p84 = scmp.eq.s32.totalorder %s16, 0
    %p85 = por %p83, %p84
    %s87 = sadd.s32 %s86, 1
    %p90 = scmp.eq.s32.totalorder %s10, 1
    %p91 = scmp.ne.s32.totalorder %s86, %s88
    %p92 = scmp.eq.s32.totalorder %s10, 0
    %p93 = por %p91, %p92
    %p94 = scmp.ne.s32.totalorder %s86, %s88
    %p95 = scmp.eq.s32.totalorder %s15, 1
    %p96 = por %p94, %p95
    %p97 = scmp.ne.s32.totalorder %s88, %s89
    %p98 = scmp.eq.s32.totalorder %s15, 0
    %p99 = por %p97, %p98
    %p100 = scmp.ne.s32.totalorder %s88, %s89
    %p101 = scmp.eq.s32.totalorder %s16, 1
    %p102 = por %p100, %p101
    %p104 = scmp.ne.s32.totalorder %s89, %s103
    %p105 = scmp.eq.s32.totalorder %s16, 0
    %p106 = por %p104, %p105
    %s107 = ssub.s32 %s10, %s17
    %p108 = scmp.eq.s32.totalorder %s107, 0
    %s110 = sadd.s32 %s109, 1
    %s111 = scalar_select %p108, %s109, %s110
    %p114 = pneg %p108
    %p115 = scmp.eq.s32.totalorder %s10, 1
    %p116 = por %p114, %p115
    %p117 = scmp.ne.s32.totalorder %s109, %s112
    %p118 = scmp.eq.s32.totalorder %s10, 0
    %p119 = por %p117, %p118
    %p120 = scmp.ne.s32.totalorder %s109, %s112
    %p121 = scmp.eq.s32.totalorder %s15, 1
    %p122 = por %p120, %p121
    %p123 = scmp.ne.s32.totalorder %s112, %s113
    %p124 = scmp.eq.s32.totalorder %s15, 0
    %p125 = por %p123, %p124
    %p126 = scmp.ne.s32.totalorder %s112, %s113
    %p127 = scmp.eq.s32.totalorder %s16, 1
    %p128 = por %p126, %p127
    %p130 = scmp.ne.s32.totalorder %s113, %s129
    %p131 = scmp.eq.s32.totalorder %s16, 0
    %p132 = por %p130, %p131
    %p133 = scmp.le.s32.totalorder 1, %s10
    %p134 = scmp.lt.s32.totalorder %s10, 3
    %p135 = pnand %p133, %p134
    %p136 = pneg %p135
    // Predicated region
    $region9: #{combination_module_dcn.10} parent=5 // pred_check
      _
    $region10: #{combination_module_dcn.10} parent=5 // pred_check_branch
      %138 = sbr.rel (%p135) target = $region12
    $region11: #{combination_module_dcn.10} parent=5 // pred_region
      %s139 = ssub.s32 %s10, 1
      // Predicated region
      $region13: #{combination_module_dcn.10} parent=11 // pred_check
        %p140 = pneg %p57
      $region14: #{combination_module_dcn.10} parent=11 // pred_check_branch
        %142 = sbr.rel (%p140) target = $region16
      $region15: #{combination_module_dcn.10} parent=11 // pred_region
        _
      $region16: #{combination_module_dcn.10} parent=11 // pred_fallthru
        _
      // Predicated region
      $region17: #{combination_module_dcn.10} parent=11 // pred_check
        %p143 = pneg %p78
      $region18: #{combination_module_dcn.10} parent=11 // pred_check_branch
        %145 = sbr.rel (%p143) target = $region20
      $region19: #{combination_module_dcn.10} parent=11 // pred_region
        _
      $region20: #{combination_module_dcn.10} parent=11 // pred_fallthru
        _
      // Predicated region
      $region21: #{combination_module_dcn.10} parent=11 // pred_check
        %p146 = pneg %p99
      $region22: #{combination_module_dcn.10} parent=11 // pred_check_branch
        %148 = sbr.rel (%p146) target = $region24
      $region23: #{combination_module_dcn.10} parent=11 // pred_region
        _
      $region24: #{combination_module_dcn.10} parent=11 // pred_fallthru
        _
    $region12: #{combination_module_dcn.10} parent=5 // pred_fallthru
      _
    %p149 = scmp.lt.s32.totalorder %s10, 2
    // Predicated region
    $region25: #{combination_module_dcn.10} parent=5 // pred_check
      %p150 = pneg %p149
    $region26: #{combination_module_dcn.10} parent=5 // pred_check_branch
      %152 = sbr.rel (%p150) target = $region28
    $region27: #{combination_module_dcn.10} parent=5 // pred_region
      // Predicated region
      $region29: #{combination_module_dcn.10} parent=27 // pred_check
        %p153 = pneg %p30
      $region30: #{combination_module_dcn.10} parent=27 // pred_check_branch
        %155 = sbr.rel (%p153) target = $region32
      $region31: #{combination_module_dcn.10} parent=27 // pred_region
        %p156 = scmp.lt.s32.totalorder %s10, 1
        %s157 = scalar_select %p156, %s10, 1
        %s158 = smul.addr %s157, 8
        %s159 = smul.addr %s158, 8
        %s160 = scalar_lea.vmem %s0, %s159
      $region32: #{combination_module_dcn.10} parent=27 // pred_fallthru
        _
    $region28: #{combination_module_dcn.10} parent=5 // pred_fallthru
      _
    %p161 = scmp.le.s32.totalorder 1, %s10
    %p162 = scmp.lt.s32.totalorder %s10, 3
    %p163 = pnand %p161, %p162
    %p164 = pneg %p163
    // Predicated region
    $region33: #{combination_module_dcn.10} parent=5 // pred_check
      _
    $region34: #{combination_module_dcn.10} parent=5 // pred_check_branch
      %166 = sbr.rel (%p163) target = $region36
    $region35: #{combination_module_dcn.10} parent=5 // pred_region
      %s167 = ssub.s32 %s10, 1
      %p168 = scmp.lt.s32.totalorder %s15, 1
      %s169 = scalar_select %p168, %s15, 1
      %s170 = smul.addr %s169, 8
      %s171 = smul.addr %s170, 8
      %s172 = scalar_lea.vmem %s0, %s171
      %p173 = pneg %p36
      %p174 = pneg %p33
      %p175 = pneg %p57
      %p176 = pneg %p54
      %p177 = pneg %p78
      %p178 = pneg %p75
      %p179 = pneg %p99
      %p180 = pneg %p96
      %p181 = pneg %p125
      %p182 = pneg %p122
      %p183 = scmp.lt.s32.totalorder %s15, 1
      %s184 = scalar_select %p183, %s15, 1
      %s185 = smul.addr %s184, 2
      %s186 = smul.addr %s185, 2
      %s187 = scalar_lea.vmem %s4, %s186
      %p188 = scmp.lt.s32.totalorder %s15, 1
      %s189 = scalar_select %p188, %s15, 1
      %s190 = smul.addr %s189, 8
      %s191 = smul.addr %s190, 8
      %s192 = scalar_lea.vmem %s0, %s191
      %p193 = scmp.lt.s32.totalorder %s15, 1
      %s194 = scalar_select %p193, %s15, 1
      %s195 = smul.addr %s194, 2
      %s196 = smul.addr %s195, 2
      %s197 = scalar_lea.vmem %s4, %s196
      %v199 = vld [vmem:[%s192] sm:$0xff]
      %v200 = vld [vmem:[%s192 + $0x8] sm:$0xff]
      %v201 = vld [vmem:[%s192 + $0x10] sm:$0xff]
      %v202 = vld [vmem:[%s192 + $0x18] sm:$0xff]
      %v203 = vld [vmem:[%s192 + $0x20] sm:$0xff]
      %v204 = vld [vmem:[%s192 + $0x28] sm:$0xff]
      %v205 = vld [vmem:[%s192 + $0x30] sm:$0xff]
      %v206 = vld [vmem:[%s192 + $0x38] sm:$0xff]
      %207 = vrot.lane.b32.xlu0 %v199, 17
      %v208 = vpop.permute.xlu0 %207
      %209 = vrot.lane.b32.xlu0 %v201, 17
      %v210 = vpop.permute.xlu0 %209
      %211 = vrot.lane.b32.xlu0 %v203, 17
      %v212 = vpop.permute.xlu0 %211
      %213 = vrot.lane.b32.xlu0 %v205, 17
      %v214 = vpop.permute.xlu0 %213
      %215 = vrot.lane.b32.xlu0 %v200, 17
      %v216 = vpop.permute.xlu0 %215
      %217 = vrot.lane.b32.xlu0 %v202, 17
      %v218 = vpop.permute.xlu0 %217
      %219 = vrot.lane.b32.xlu0 %v204, 17
      %v220 = vpop.permute.xlu0 %219
      %221 = vrot.lane.b32.xlu0 %v206, 17
      %v222 = vpop.permute.xlu0 %221
      %v223 = vlaneseq
      %v224 = vand.u32 %v223, 127
      %vm225 = vcmp.lt.s32.totalorder %v224, 17
      %v226 = vsel %vm225, %v208, %v216
      %v227 = vsel %vm225, %v210, %v218
      %v228 = vsel %vm225, %v212, %v220
      %v229 = vsel %vm225, %v214, %v222
      %v230 = vsel %vm225, %v216, %v208
      %v231 = vsel %vm225, %v218, %v210
      %v232 = vsel %vm225, %v220, %v212
      %v233 = vsel %vm225, %v222, %v214
      %v234 = vld [vmem:[%s2] sm:$0x3]
      %v236 = vlaneseq
      %v237 = vshrl.u32 %v236, 7
      %v238 = vsub.s32 0, %v237
      %v239 = vrot.slane %v234, %v238
      %v240 = vlaneseq
      %v241 = vshrl.u32 %v240, 7
      %v242 = vsub.s32 1, %v241
      %v243 = vrot.slane %v234, %v242
      %v246 = vmul.f32 %v230, %v239
      %v247 = vmul.f32 %v226, %v243
      %v248 = vmul.f32 %v231, %v239
      %v249 = vmul.f32 %v227, %v243
      %v250 = vmul.f32 %v232, %v239
      %v251 = vmul.f32 %v228, %v243
      %v252 = vmul.f32 %v233, %v239
      %v253 = vmul.f32 %v229, %v243
      %v254 = vpack.c.bf16 %v248, %v246
      %v255 = vpack.c.bf16 %v249, %v247
      %v256 = vpack.c.bf16 %v252, %v250
      %v257 = vpack.c.bf16 %v253, %v251
      %v258 = vld [vmem:[%s1] sm:$0x1]
      %259 = vrot.lane.b32.xlu0 %v199, 16
      %v260 = vpop.permute.xlu0 %259
      %261 = vrot.lane.b32.xlu0 %v201, 16
      %v262 = vpop.permute.xlu0 %261
      %263 = vrot.lane.b32.xlu0 %v203, 16
      %v264 = vpop.permute.xlu0 %263
      %265 = vrot.lane.b32.xlu0 %v205, 16
      %v266 = vpop.permute.xlu0 %265
      %267 = vrot.lane.b32.xlu0 %v200, 16
      %v268 = vpop.permute.xlu0 %267
      %269 = vrot.lane.b32.xlu0 %v202, 16
      %v270 = vpop.permute.xlu0 %269
      %271 = vrot.lane.b32.xlu0 %v204, 16
      %v272 = vpop.permute.xlu0 %271
      %273 = vrot.lane.b32.xlu0 %v206, 16
      %v274 = vpop.permute.xlu0 %273
      %vm275 = vcmp.lt.s32.totalorder %v224, 16
      %v276 = vsel %vm275, %v260, %v268
      %v277 = vsel %vm275, %v262, %v270
      %v278 = vsel %vm275, %v264, %v272
      %v279 = vsel %vm275, %v266, %v274
      %v280 = vsel %vm275, %v268, %v260
      %v281 = vsel %vm275, %v270, %v262
      %v282 = vsel %vm275, %v272, %v264
      %v283 = vsel %vm275, %v274, %v266
      %s284 = scalar_lea.vmem %s2, 2
      %v285 = vld [vmem:[%s284] sm:$0x3]
      %v287 = vlaneseq
      %v288 = vshrl.u32 %v287, 7
      %v289 = vsub.s32 0, %v288
      %v290 = vrot.slane %v285, %v289
      %v291 = vlaneseq
      %v292 = vshrl.u32 %v291, 7
      %v293 = vsub.s32 1, %v292
      %v294 = vrot.slane %v285, %v293
      %v297 = vmul.f32 %v280, %v290
      %v298 = vmul.f32 %v276, %v294
      %v299 = vmul.f32 %v281, %v290
      %v300 = vmul.f32 %v277, %v294
      %v301 = vmul.f32 %v282, %v290
      %v302 = vmul.f32 %v278, %v294
      %v303 = vmul.f32 %v283, %v290
      %v304 = vmul.f32 %v279, %v294
      %v305 = vpack.c.bf16 %v299, %v297
      %v306 = vpack.c.bf16 %v300, %v298
      %v307 = vpack.c.bf16 %v303, %v301
      %v308 = vpack.c.bf16 %v304, %v302
      %s309 = scalar_lea.vmem %s1, 1
      %v310 = vld [vmem:[%s309] sm:$0x1]
      %vm311 = vcmask 261120
      %v313 = vsel %vm311, %v310, 0
      %315 = vmatprep.subr.bf16.mxu0 0
      %316 = vmatpush1.bf16.msra.mxu0 0
      %317 = vmatprep.subr.bf16.mxu0 0
      %318 = vmatpush1.bf16.msra.mxu0 0
      %319 = vmatprep.subr.bf16.mxu0 0
      %320 = vmatpush1.bf16.msra.mxu0 0
      %321 = vmatprep.subr.bf16.mxu0 0
      %322 = vmatpush1.bf16.msra.mxu0 0
      %323 = vmatprep.subr.bf16.mxu0 0
      %324 = vmatpush1.bf16.msra.mxu0 0
      %325 = vmatprep.subr.bf16.mxu0 0
      %326 = vmatpush1.bf16.msra.mxu0 0
      %327 = vmatprep.subr.bf16.mxu0 %v308
      %328 = vmatpush1.bf16.msra.mxu0 %v307
      %329 = vmatprep.subr.bf16.mxu0 %v306
      %330 = vmatpush1.bf16.msra.mxu0 %v305
      %331 = vmatprep.subr.bf16.mxu0 0
      %332 = vmatpush2.bf16.msra.mxu0 0
      %333 = vmatprep.subr.bf16.mxu0 0
      %334 = vmatpush2.bf16.msra.mxu0 0
      %335 = vmatprep.subr.bf16.mxu0 0
      %336 = vmatpush2.bf16.msra.mxu0 0
      %337 = vmatprep.subr.bf16.mxu0 0
      %338 = vmatpush2.bf16.msra.mxu0 0
      %339 = vmatprep.subr.bf16.mxu0 0
      %340 = vmatpush2.bf16.msra.mxu0 0
      %341 = vmatprep.subr.bf16.mxu0 0
      %342 = vmatpush2.bf16.msra.mxu0 0
      %343 = vmatprep.subr.bf16.mxu0 0
      %344 = vmatpush2.bf16.msra.mxu0 0
      %345 = vmatprep.subr.bf16.mxu0 0
      %346 = vmatpush2.bf16.msra.mxu0 0
      %347 = vmatprep.mubr.bf16.mxu0 0
      %348 = vmatmul.mubr.bf16.gmra.mxu0 %v313
      %v349 = vpop.f32.mrf.mxu0
      %v350 = vadd.f32 0.0, %v349
      %v351 = vpop.f32.mrf.mxu0
      %v352 = vadd.f32 0.0, %v351
      %v353 = vpop.f32.mrf.mxu0
      %v354 = vpop.f32.mrf.mxu0
      %355 = vdwg.mxu0
      %v357 = vsel %vm311, %v258, 0
      %359 = vmatprep.subr.bf16.mxu0 0
      %360 = vmatpush1.bf16.msra.mxu0 0
      %361 = vmatprep.subr.bf16.mxu0 0
      %362 = vmatpush1.bf16.msra.mxu0 0
      %363 = vmatprep.subr.bf16.mxu0 0
      %364 = vmatpush1.bf16.msra.mxu0 0
      %365 = vmatprep.subr.bf16.mxu0 0
      %366 = vmatpush1.bf16.msra.mxu0 0
      %367 = vmatprep.subr.bf16.mxu0 0
      %368 = vmatpush1.bf16.msra.mxu0 0
      %369 = vmatprep.subr.bf16.mxu0 0
      %370 = vmatpush1.bf16.msra.mxu0 0
      %371 = vmatprep.subr.bf16.mxu0 %v257
      %372 = vmatpush1.bf16.msra.mxu0 %v256
      %373 = vmatprep.subr.bf16.mxu0 %v255
      %374 = vmatpush1.bf16.msra.mxu0 %v254
      %375 = vmatprep.subr.bf16.mxu0 0
      %376 = vmatpush2.bf16.msra.mxu0 0
      %377 = vmatprep.subr.bf16.mxu0 0
      %378 = vmatpush2.bf16.msra.mxu0 0
      %379 = vmatprep.subr.bf16.mxu0 0
      %380 = vmatpush2.bf16.msra.mxu0 0
      %381 = vmatprep.subr.bf16.mxu0 0
      %382 = vmatpush2.bf16.msra.mxu0 0
      %383 = vmatprep.subr.bf16.mxu0 0
      %384 = vmatpush2.bf16.msra.mxu0 0
      %385 = vmatprep.subr.bf16.mxu0 0
      %386 = vmatpush2.bf16.msra.mxu0 0
      %387 = vmatprep.subr.bf16.mxu0 0
      %388 = vmatpush2.bf16.msra.mxu0 0
      %389 = vmatprep.subr.bf16.mxu0 0
      %390 = vmatpush2.bf16.msra.mxu0 0
      %391 = vmatprep.mubr.bf16.mxu0 0
      %392 = vmatmul.mubr.bf16.gmra.mxu0 %v357
      %v393 = vpop.f32.mrf.mxu0
      %v394 = vadd.f32 %v350, %v393
      %v395 = vpop.f32.mrf.mxu0
      %v396 = vadd.f32 %v352, %v395
      %v397 = vpop.f32.mrf.mxu0
      %v398 = vpop.f32.mrf.mxu0
      %399 = vdwg.mxu0
      %400 = vrot.lane.b32.xlu0 %v199, 15
      %v401 = vpop.permute.xlu0 %400
      %402 = vrot.lane.b32.xlu0 %v201, 15
      %v403 = vpop.permute.xlu0 %402
      %404 = vrot.lane.b32.xlu0 %v203, 15
      %v405 = vpop.permute.xlu0 %404
      %406 = vrot.lane.b32.xlu0 %v205, 15
      %v407 = vpop.permute.xlu0 %406
      %408 = vrot.lane.b32.xlu0 %v200, 15
      %v409 = vpop.permute.xlu0 %408
      %410 = vrot.lane.b32.xlu0 %v202, 15
      %v411 = vpop.permute.xlu0 %410
      %412 = vrot.lane.b32.xlu0 %v204, 15
      %v413 = vpop.permute.xlu0 %412
      %414 = vrot.lane.b32.xlu0 %v206, 15
      %v415 = vpop.permute.xlu0 %414
      %vm416 = vcmp.lt.s32.totalorder %v224, 15
      %v417 = vsel %vm416, %v401, %v409
      %v418 = vsel %vm416, %v403, %v411
      %v419 = vsel %vm416, %v405, %v413
      %v420 = vsel %vm416, %v407, %v415
      %v421 = vsel %vm416, %v409, %v401
      %v422 = vsel %vm416, %v411, %v403
      %v423 = vsel %vm416, %v413, %v405
      %v424 = vsel %vm416, %v415, %v407
      %s425 = scalar_lea.vmem %s2, 4
      %v426 = vld [vmem:[%s425] sm:$0x3]
      %v428 = vlaneseq
      %v429 = vshrl.u32 %v428, 7
      %v430 = vsub.s32 0, %v429
      %v431 = vrot.slane %v426, %v430
      %v432 = vlaneseq
      %v433 = vshrl.u32 %v432, 7
      %v434 = vsub.s32 1, %v433
      %v435 = vrot.slane %v426, %v434
      %v438 = vmul.f32 %v421, %v431
      %v439 = vmul.f32 %v417, %v435
      %v440 = vmul.f32 %v422, %v431
      %v441 = vmul.f32 %v418, %v435
      %v442 = vmul.f32 %v423, %v431
      %v443 = vmul.f32 %v419, %v435
      %v444 = vmul.f32 %v424, %v431
      %v445 = vmul.f32 %v420, %v435
      %v446 = vpack.c.bf16 %v440, %v438
      %v447 = vpack.c.bf16 %v441, %v439
      %v448 = vpack.c.bf16 %v444, %v442
      %v449 = vpack.c.bf16 %v445, %v443
      %s450 = scalar_lea.vmem %s1, 2
      %v451 = vld [vmem:[%s450] sm:$0x1]
      %v453 = vsel %vm311, %v451, 0
      %455 = vmatprep.subr.bf16.mxu0 0
      %456 = vmatpush1.bf16.msra.mxu0 0
      %457 = vmatprep.subr.bf16.mxu0 0
      %458 = vmatpush1.bf16.msra.mxu0 0
      %459 = vmatprep.subr.bf16.mxu0 0
      %460 = vmatpush1.bf16.msra.mxu0 0
      %461 = vmatprep.subr.bf16.mxu0 0
      %462 = vmatpush1.bf16.msra.mxu0 0
      %463 = vmatprep.subr.bf16.mxu0 0
      %464 = vmatpush1.bf16.msra.mxu0 0
      %465 = vmatprep.subr.bf16.mxu0 0
      %466 = vmatpush1.bf16.msra.mxu0 0
      %467 = vmatprep.subr.bf16.mxu0 %v449
      %468 = vmatpush1.bf16.msra.mxu0 %v448
      %469 = vmatprep.subr.bf16.mxu0 %v447
      %470 = vmatpush1.bf16.msra.mxu0 %v446
      %471 = vmatprep.subr.bf16.mxu0 0
      %472 = vmatpush2.bf16.msra.mxu0 0
      %473 = vmatprep.subr.bf16.mxu0 0
      %474 = vmatpush2.bf16.msra.mxu0 0
      %475 = vmatprep.subr.bf16.mxu0 0
      %476 = vmatpush2.bf16.msra.mxu0 0
      %477 = vmatprep.subr.bf16.mxu0 0
      %478 = vmatpush2.bf16.msra.mxu0 0
      %479 = vmatprep.subr.bf16.mxu0 0
      %480 = vmatpush2.bf16.msra.mxu0 0
      %481 = vmatprep.subr.bf16.mxu0 0
      %482 = vmatpush2.bf16.msra.mxu0 0
      %483 = vmatprep.subr.bf16.mxu0 0
      %484 = vmatpush2.bf16.msra.mxu0 0
      %485 = vmatprep.subr.bf16.mxu0 0
      %486 = vmatpush2.bf16.msra.mxu0 0
      %487 = vmatprep.mubr.bf16.mxu0 0
      %488 = vmatmul.mubr.bf16.gmra.mxu0 %v453
      %v489 = vpop.f32.mrf.mxu0
      %v490 = vadd.f32 0.0, %v489
      %v491 = vpop.f32.mrf.mxu0
      %v492 = vadd.f32 0.0, %v491
      %v493 = vpop.f32.mrf.mxu0
      %v494 = vpop.f32.mrf.mxu0
      %495 = vdwg.mxu0
      %v496 = vadd.f32 %v394, %v490
      %v497 = vadd.f32 %v396, %v492
      %498 = vrot.lane.b32.xlu0 %v199, 1
      %v499 = vpop.permute.xlu0 %498
      %500 = vrot.lane.b32.xlu0 %v201, 1
      %v501 = vpop.permute.xlu0 %500
      %502 = vrot.lane.b32.xlu0 %v203, 1
      %v503 = vpop.permute.xlu0 %502
      %504 = vrot.lane.b32.xlu0 %v205, 1
      %v505 = vpop.permute.xlu0 %504
      %506 = vrot.lane.b32.xlu0 %v200, 1
      %v507 = vpop.permute.xlu0 %506
      %508 = vrot.lane.b32.xlu0 %v202, 1
      %v509 = vpop.permute.xlu0 %508
      %510 = vrot.lane.b32.xlu0 %v204, 1
      %v511 = vpop.permute.xlu0 %510
      %512 = vrot.lane.b32.xlu0 %v206, 1
      %v513 = vpop.permute.xlu0 %512
      %vm514 = vcmp.lt.s32.totalorder %v224, 1
      %v515 = vsel %vm514, %v499, %v507
      %v516 = vsel %vm514, %v501, %v509
      %v517 = vsel %vm514, %v503, %v511
      %v518 = vsel %vm514, %v505, %v513
      %v519 = vsel %vm514, %v507, %v499
      %v520 = vsel %vm514, %v509, %v501
      %v521 = vsel %vm514, %v511, %v503
      %v522 = vsel %vm514, %v513, %v505
      %s523 = scalar_lea.vmem %s2, 6
      %v524 = vld [vmem:[%s523] sm:$0x3]
      %v526 = vlaneseq
      %v527 = vshrl.u32 %v526, 7
      %v528 = vsub.s32 0, %v527
      %v529 = vrot.slane %v524, %v528
      %v530 = vlaneseq
      %v531 = vshrl.u32 %v530, 7
      %v532 = vsub.s32 1, %v531
      %v533 = vrot.slane %v524, %v532
      %v536 = vmul.f32 %v519, %v529
      %v537 = vmul.f32 %v515, %v533
      %v538 = vmul.f32 %v520, %v529
      %v539 = vmul.f32 %v516, %v533
      %v540 = vmul.f32 %v521, %v529
      %v541 = vmul.f32 %v517, %v533
      %v542 = vmul.f32 %v522, %v529
      %v543 = vmul.f32 %v518, %v533
      %v544 = vpack.c.bf16 %v538, %v536
      %v545 = vpack.c.bf16 %v539, %v537
      %v546 = vpack.c.bf16 %v542, %v540
      %v547 = vpack.c.bf16 %v543, %v541
      %s548 = scalar_lea.vmem %s1, 3
      %v549 = vld [vmem:[%s548] sm:$0x1]
      %v551 = vsel %vm311, %v549, 0
      %553 = vmatprep.subr.bf16.mxu0 0
      %554 = vmatpush1.bf16.msra.mxu0 0
      %555 = vmatprep.subr.bf16.mxu0 0
      %556 = vmatpush1.bf16.msra.mxu0 0
      %557 = vmatprep.subr.bf16.mxu0 0
      %558 = vmatpush1.bf16.msra.mxu0 0
      %559 = vmatprep.subr.bf16.mxu0 0
      %560 = vmatpush1.bf16.msra.mxu0 0
      %561 = vmatprep.subr.bf16.mxu0 0
      %562 = vmatpush1.bf16.msra.mxu0 0
      %563 = vmatprep.subr.bf16.mxu0 0
      %564 = vmatpush1.bf16.msra.mxu0 0
      %565 = vmatprep.subr.bf16.mxu0 %v547
      %566 = vmatpush1.bf16.msra.mxu0 %v546
      %567 = vmatprep.subr.bf16.mxu0 %v545
      %568 = vmatpush1.bf16.msra.mxu0 %v544
      %569 = vmatprep.subr.bf16.mxu0 0
      %570 = vmatpush2.bf16.msra.mxu0 0
      %571 = vmatprep.subr.bf16.mxu0 0
      %572 = vmatpush2.bf16.msra.mxu0 0
      %573 = vmatprep.subr.bf16.mxu0 0
      %574 = vmatpush2.bf16.msra.mxu0 0
      %575 = vmatprep.subr.bf16.mxu0 0
      %576 = vmatpush2.bf16.msra.mxu0 0
      %577 = vmatprep.subr.bf16.mxu0 0
      %578 = vmatpush2.bf16.msra.mxu0 0
      %579 = vmatprep.subr.bf16.mxu0 0
      %580 = vmatpush2.bf16.msra.mxu0 0
      %581 = vmatprep.subr.bf16.mxu0 0
      %582 = vmatpush2.bf16.msra.mxu0 0
      %583 = vmatprep.subr.bf16.mxu0 0
      %584 = vmatpush2.bf16.msra.mxu0 0
      %585 = vmatprep.mubr.bf16.mxu0 0
      %586 = vmatmul.mubr.bf16.gmra.mxu0 %v551
      %v587 = vpop.f32.mrf.mxu0
      %v588 = vadd.f32 0.0, %v587
      %v589 = vpop.f32.mrf.mxu0
      %v590 = vadd.f32 0.0, %v589
      %v591 = vpop.f32.mrf.mxu0
      %v592 = vpop.f32.mrf.mxu0
      %593 = vdwg.mxu0
      %v594 = vadd.f32 %v496, %v588
      %v595 = vadd.f32 %v497, %v590
      %s596 = scalar_lea.vmem %s2, 8
      %v597 = vld [vmem:[%s596] sm:$0x3]
      %v599 = vlaneseq
      %v600 = vshrl.u32 %v599, 7
      %v601 = vsub.s32 0, %v600
      %v602 = vrot.slane %v597, %v601
      %v603 = vlaneseq
      %v604 = vshrl.u32 %v603, 7
      %v605 = vsub.s32 1, %v604
      %v606 = vrot.slane %v597, %v605
      %v609 = vmul.f32 %v199, %v602
      %v610 = vmul.f32 %v200, %v606
      %v611 = vmul.f32 %v201, %v602
      %v612 = vmul.f32 %v202, %v606
      %v613 = vmul.f32 %v203, %v602
      %v614 = vmul.f32 %v204, %v606
      %v615 = vmul.f32 %v205, %v602
      %v616 = vmul.f32 %v206, %v606
      %v617 = vpack.c.bf16 %v611, %v609
      %v618 = vpack.c.bf16 %v612, %v610
      %v619 = vpack.c.bf16 %v615, %v613
      %v620 = vpack.c.bf16 %v616, %v614
      %s621 = scalar_lea.vmem %s1, 4
      %v622 = vld [vmem:[%s621] sm:$0x1]
      %v624 = vsel %vm311, %v622, 0
      %626 = vmatprep.subr.bf16.mxu0 0
      %627 = vmatpush1.bf16.msra.mxu0 0
      %628 = vmatprep.subr.bf16.mxu0 0
      %629 = vmatpush1.bf16.msra.mxu0 0
      %630 = vmatprep.subr.bf16.mxu0 0
      %631 = vmatpush1.bf16.msra.mxu0 0
      %632 = vmatprep.subr.bf16.mxu0 0
      %633 = vmatpush1.bf16.msra.mxu0 0
      %634 = vmatprep.subr.bf16.mxu0 0
      %635 = vmatpush1.bf16.msra.mxu0 0
      %636 = vmatprep.subr.bf16.mxu0 0
      %637 = vmatpush1.bf16.msra.mxu0 0
      %638 = vmatprep.subr.bf16.mxu0 %v620
      %639 = vmatpush1.bf16.msra.mxu0 %v619
      %640 = vmatprep.subr.bf16.mxu0 %v618
      %641 = vmatpush1.bf16.msra.mxu0 %v617
      %642 = vmatprep.subr.bf16.mxu0 0
      %643 = vmatpush2.bf16.msra.mxu0 0
      %644 = vmatprep.subr.bf16.mxu0 0
      %645 = vmatpush2.bf16.msra.mxu0 0
      %646 = vmatprep.subr.bf16.mxu0 0
      %647 = vmatpush2.bf16.msra.mxu0 0
      %648 = vmatprep.subr.bf16.mxu0 0
      %649 = vmatpush2.bf16.msra.mxu0 0
      %650 = vmatprep.subr.bf16.mxu0 0
      %651 = vmatpush2.bf16.msra.mxu0 0
      %652 = vmatprep.subr.bf16.mxu0 0
      %653 = vmatpush2.bf16.msra.mxu0 0
      %654 = vmatprep.subr.bf16.mxu0 0
      %655 = vmatpush2.bf16.msra.mxu0 0
      %656 = vmatprep.subr.bf16.mxu0 0
      %657 = vmatpush2.bf16.msra.mxu0 0
      %658 = vmatprep.mubr.bf16.mxu0 0
      %659 = vmatmul.mubr.bf16.gmra.mxu0 %v624
      %v660 = vpop.f32.mrf.mxu0
      %v661 = vadd.f32 0.0, %v660
      %v662 = vpop.f32.mrf.mxu0
      %v663 = vadd.f32 0.0, %v662
      %v664 = vpop.f32.mrf.mxu0
      %v665 = vpop.f32.mrf.mxu0
      %666 = vdwg.mxu0
      %v667 = vadd.f32 %v594, %v661
      %v668 = vadd.f32 %v595, %v663
      %669 = vrot.lane.b32.xlu0 %v199, 127
      %v670 = vpop.permute.xlu0 %669
      %671 = vrot.lane.b32.xlu0 %v201, 127
      %v672 = vpop.permute.xlu0 %671
      %673 = vrot.lane.b32.xlu0 %v203, 127
      %v674 = vpop.permute.xlu0 %673
      %675 = vrot.lane.b32.xlu0 %v205, 127
      %v676 = vpop.permute.xlu0 %675
      %677 = vrot.lane.b32.xlu0 %v200, 127
      %v678 = vpop.permute.xlu0 %677
      %679 = vrot.lane.b32.xlu0 %v202, 127
      %v680 = vpop.permute.xlu0 %679
      %681 = vrot.lane.b32.xlu0 %v204, 127
      %v682 = vpop.permute.xlu0 %681
      %683 = vrot.lane.b32.xlu0 %v206, 127
      %v684 = vpop.permute.xlu0 %683
      %vm685 = vcmp.lt.s32.totalorder %v224, 127
      %v686 = vsel %vm685, %v670, %v678
      %v687 = vsel %vm685, %v672, %v680
      %v688 = vsel %vm685, %v674, %v682
      %v689 = vsel %vm685, %v676, %v684
      %v690 = vsel %vm685, %v678, %v670
      %v691 = vsel %vm685, %v680, %v672
      %v692 = vsel %vm685, %v682, %v674
      %v693 = vsel %vm685, %v684, %v676
      %s694 = scalar_lea.vmem %s2, 10
      %v695 = vld [vmem:[%s694] sm:$0x3]
      %v697 = vlaneseq
      %v698 = vshrl.u32 %v697, 7
      %v699 = vsub.s32 0, %v698
      %v700 = vrot.slane %v695, %v699
      %v701 = vlaneseq
      %v702 = vshrl.u32 %v701, 7
      %v703 = vsub.s32 1, %v702
      %v704 = vrot.slane %v695, %v703
      %v707 = vmul.f32 %v686, %v700
      %v708 = vmul.f32 %v690, %v704
      %v709 = vmul.f32 %v687, %v700
      %v710 = vmul.f32 %v691, %v704
      %v711 = vmul.f32 %v688, %v700
      %v712 = vmul.f32 %v692, %v704
      %v713 = vmul.f32 %v689, %v700
      %v714 = vmul.f32 %v693, %v704
      %v715 = vpack.c.bf16 %v709, %v707
      %v716 = vpack.c.bf16 %v710, %v708
      %v717 = vpack.c.bf16 %v713, %v711
      %v718 = vpack.c.bf16 %v714, %v712
      %s719 = scalar_lea.vmem %s1, 5
      %v720 = vld [vmem:[%s719] sm:$0x1]
      %v722 = vsel %vm311, %v720, 0
      %724 = vmatprep.subr.bf16.mxu0 0
      %725 = vmatpush1.bf16.msra.mxu0 0
      %726 = vmatprep.subr.bf16.mxu0 0
      %727 = vmatpush1.bf16.msra.mxu0 0
      %728 = vmatprep.subr.bf16.mxu0 0
      %729 = vmatpush1.bf16.msra.mxu0 0
      %730 = vmatprep.subr.bf16.mxu0 0
      %731 = vmatpush1.bf16.msra.mxu0 0
      %732 = vmatprep.subr.bf16.mxu0 0
      %733 = vmatpush1.bf16.msra.mxu0 0
      %734 = vmatprep.subr.bf16.mxu0 0
      %735 = vmatpush1.bf16.msra.mxu0 0
      %736 = vmatprep.subr.bf16.mxu0 %v718
      %737 = vmatpush1.bf16.msra.mxu0 %v717
      %738 = vmatprep.subr.bf16.mxu0 %v716
      %739 = vmatpush1.bf16.msra.mxu0 %v715
      %740 = vmatprep.subr.bf16.mxu0 0
      %741 = vmatpush2.bf16.msra.mxu0 0
      %742 = vmatprep.subr.bf16.mxu0 0
      %743 = vmatpush2.bf16.msra.mxu0 0
      %744 = vmatprep.subr.bf16.mxu0 0
      %745 = vmatpush2.bf16.msra.mxu0 0
      %746 = vmatprep.subr.bf16.mxu0 0
      %747 = vmatpush2.bf16.msra.mxu0 0
      %748 = vmatprep.subr.bf16.mxu0 0
      %749 = vmatpush2.bf16.msra.mxu0 0
      %750 = vmatprep.subr.bf16.mxu0 0
      %751 = vmatpush2.bf16.msra.mxu0 0
      %752 = vmatprep.subr.bf16.mxu0 0
      %753 = vmatpush2.bf16.msra.mxu0 0
      %754 = vmatprep.subr.bf16.mxu0 0
      %755 = vmatpush2.bf16.msra.mxu0 0
      %756 = vmatprep.mubr.bf16.mxu0 0
      %757 = vmatmul.mubr.bf16.gmra.mxu0 %v722
      %v758 = vpop.f32.mrf.mxu0
      %v759 = vadd.f32 0.0, %v758
      %v760 = vpop.f32.mrf.mxu0
      %v761 = vadd.f32 0.0, %v760
      %v762 = vpop.f32.mrf.mxu0
      %v763 = vpop.f32.mrf.mxu0
      %764 = vdwg.mxu0
      %v765 = vadd.f32 %v667, %v759
      %v766 = vadd.f32 %v668, %v761
      %767 = vrot.lane.b32.xlu0 %v199, 113
      %v768 = vpop.permute.xlu0 %767
      %769 = vrot.lane.b32.xlu0 %v201, 113
      %v770 = vpop.permute.xlu0 %769
      %771 = vrot.lane.b32.xlu0 %v203, 113
      %v772 = vpop.permute.xlu0 %771
      %773 = vrot.lane.b32.xlu0 %v205, 113
      %v774 = vpop.permute.xlu0 %773
      %775 = vrot.lane.b32.xlu0 %v200, 113
      %v776 = vpop.permute.xlu0 %775
      %777 = vrot.lane.b32.xlu0 %v202, 113
      %v778 = vpop.permute.xlu0 %777
      %779 = vrot.lane.b32.xlu0 %v204, 113
      %v780 = vpop.permute.xlu0 %779
      %781 = vrot.lane.b32.xlu0 %v206, 113
      %v782 = vpop.permute.xlu0 %781
      %vm783 = vcmp.lt.s32.totalorder %v224, 113
      %v784 = vsel %vm783, %v768, %v776
      %v785 = vsel %vm783, %v770, %v778
      %v786 = vsel %vm783, %v772, %v780
      %v787 = vsel %vm783, %v774, %v782
      %v788 = vsel %vm783, %v776, %v768
      %v789 = vsel %vm783, %v778, %v770
      %v790 = vsel %vm783, %v780, %v772
      %v791 = vsel %vm783, %v782, %v774
      %s792 = scalar_lea.vmem %s2, 12
      %v793 = vld [vmem:[%s792] sm:$0x3]
      %v795 = vlaneseq
      %v796 = vshrl.u32 %v795, 7
      %v797 = vsub.s32 0, %v796
      %v798 = vrot.slane %v793, %v797
      %v799 = vlaneseq
      %v800 = vshrl.u32 %v799, 7
      %v801 = vsub.s32 1, %v800
      %v802 = vrot.slane %v793, %v801
      %v805 = vmul.f32 %v784, %v798
      %v806 = vmul.f32 %v788, %v802
      %v807 = vmul.f32 %v785, %v798
      %v808 = vmul.f32 %v789, %v802
      %v809 = vmul.f32 %v786, %v798
      %v810 = vmul.f32 %v790, %v802
      %v811 = vmul.f32 %v787, %v798
      %v812 = vmul.f32 %v791, %v802
      %v813 = vpack.c.bf16 %v807, %v805
      %v814 = vpack.c.bf16 %v808, %v806
      %v815 = vpack.c.bf16 %v811, %v809
      %v816 = vpack.c.bf16 %v812, %v810
      %s817 = scalar_lea.vmem %s1, 6
      %v818 = vld [vmem:[%s817] sm:$0x1]
      %v820 = vsel %vm311, %v818, 0
      %822 = vmatprep.subr.bf16.mxu0 0
      %823 = vmatpush1.bf16.msra.mxu0 0
      %824 = vmatprep.subr.bf16.mxu0 0
      %825 = vmatpush1.bf16.msra.mxu0 0
      %826 = vmatprep.subr.bf16.mxu0 0
      %827 = vmatpush1.bf16.msra.mxu0 0
      %828 = vmatprep.subr.bf16.mxu0 0
      %829 = vmatpush1.bf16.msra.mxu0 0
      %830 = vmatprep.subr.bf16.mxu0 0
      %831 = vmatpush1.bf16.msra.mxu0 0
      %832 = vmatprep.subr.bf16.mxu0 0
      %833 = vmatpush1.bf16.msra.mxu0 0
      %834 = vmatprep.subr.bf16.mxu0 %v816
      %835 = vmatpush1.bf16.msra.mxu0 %v815
      %836 = vmatprep.subr.bf16.mxu0 %v814
      %837 = vmatpush1.bf16.msra.mxu0 %v813
      %838 = vmatprep.subr.bf16.mxu0 0
      %839 = vmatpush2.bf16.msra.mxu0 0
      %840 = vmatprep.subr.bf16.mxu0 0
      %841 = vmatpush2.bf16.msra.mxu0 0
      %842 = vmatprep.subr.bf16.mxu0 0
      %843 = vmatpush2.bf16.msra.mxu0 0
      %844 = vmatprep.subr.bf16.mxu0 0
      %845 = vmatpush2.bf16.msra.mxu0 0
      %846 = vmatprep.subr.bf16.mxu0 0
      %847 = vmatpush2.bf16.msra.mxu0 0
      %848 = vmatprep.subr.bf16.mxu0 0
      %849 = vmatpush2.bf16.msra.mxu0 0
      %850 = vmatprep.subr.bf16.mxu0 0
      %851 = vmatpush2.bf16.msra.mxu0 0
      %852 = vmatprep.subr.bf16.mxu0 0
      %853 = vmatpush2.bf16.msra.mxu0 0
      %854 = vmatprep.mubr.bf16.mxu0 0
      %855 = vmatmul.mubr.bf16.gmra.mxu0 %v820
      %v856 = vpop.f32.mrf.mxu0
      %v857 = vadd.f32 0.0, %v856
      %v858 = vpop.f32.mrf.mxu0
      %v859 = vadd.f32 0.0, %v858
      %v860 = vpop.f32.mrf.mxu0
      %v861 = vpop.f32.mrf.mxu0
      %862 = vdwg.mxu0
      %v863 = vadd.f32 %v765, %v857
      %v864 = vadd.f32 %v766, %v859
      %865 = vrot.lane.b32.xlu0 %v199, 112
      %v866 = vpop.permute.xlu0 %865
      %867 = vrot.lane.b32.xlu0 %v201, 112
      %v868 = vpop.permute.xlu0 %867
      %869 = vrot.lane.b32.xlu0 %v203, 112
      %v870 = vpop.permute.xlu0 %869
      %871 = vrot.lane.b32.xlu0 %v205, 112
      %v872 = vpop.permute.xlu0 %871
      %873 = vrot.lane.b32.xlu0 %v200, 112
      %v874 = vpop.permute.xlu0 %873
      %875 = vrot.lane.b32.xlu0 %v202, 112
      %v876 = vpop.permute.xlu0 %875
      %877 = vrot.lane.b32.xlu0 %v204, 112
      %v878 = vpop.permute.xlu0 %877
      %879 = vrot.lane.b32.xlu0 %v206, 112
      %v880 = vpop.permute.xlu0 %879
      %vm881 = vcmp.lt.s32.totalorder %v224, 112
      %v882 = vsel %vm881, %v866, %v874
      %v883 = vsel %vm881, %v868, %v876
      %v884 = vsel %vm881, %v870, %v878
      %v885 = vsel %vm881, %v872, %v880
      %v886 = vsel %vm881, %v874, %v866
      %v887 = vsel %vm881, %v876, %v868
      %v888 = vsel %vm881, %v878, %v870
      %v889 = vsel %vm881, %v880, %v872
      %s890 = scalar_lea.vmem %s2, 14
      %v891 = vld [vmem:[%s890] sm:$0x3]
      %v893 = vlaneseq
      %v894 = vshrl.u32 %v893, 7
      %v895 = vsub.s32 0, %v894
      %v896 = vrot.slane %v891, %v895
      %v897 = vlaneseq
      %v898 = vshrl.u32 %v897, 7
      %v899 = vsub.s32 1, %v898
      %v900 = vrot.slane %v891, %v899
      %v903 = vmul.f32 %v882, %v896
      %v904 = vmul.f32 %v886, %v900
      %v905 = vmul.f32 %v883, %v896
      %v906 = vmul.f32 %v887, %v900
      %v907 = vmul.f32 %v884, %v896
      %v908 = vmul.f32 %v888, %v900
      %v909 = vmul.f32 %v885, %v896
      %v910 = vmul.f32 %v889, %v900
      %v911 = vpack.c.bf16 %v905, %v903
      %v912 = vpack.c.bf16 %v906, %v904
      %v913 = vpack.c.bf16 %v909, %v907
      %v914 = vpack.c.bf16 %v910, %v908
      %s915 = scalar_lea.vmem %s1, 7
      %v916 = vld [vmem:[%s915] sm:$0x1]
      %v918 = vsel %vm311, %v916, 0
      %920 = vmatprep.subr.bf16.mxu0 0
      %921 = vmatpush1.bf16.msra.mxu0 0
      %922 = vmatprep.subr.bf16.mxu0 0
      %923 = vmatpush1.bf16.msra.mxu0 0
      %924 = vmatprep.subr.bf16.mxu0 0
      %925 = vmatpush1.bf16.msra.mxu0 0
      %926 = vmatprep.subr.bf16.mxu0 0
      %927 = vmatpush1.bf16.msra.mxu0 0
      %928 = vmatprep.subr.bf16.mxu0 0
      %929 = vmatpush1.bf16.msra.mxu0 0
      %930 = vmatprep.subr.bf16.mxu0 0
      %931 = vmatpush1.bf16.msra.mxu0 0
      %932 = vmatprep.subr.bf16.mxu0 %v914
      %933 = vmatpush1.bf16.msra.mxu0 %v913
      %934 = vmatprep.subr.bf16.mxu0 %v912
      %935 = vmatpush1.bf16.msra.mxu0 %v911
      %936 = vmatprep.subr.bf16.mxu0 0
      %937 = vmatpush2.bf16.msra.mxu0 0
      %938 = vmatprep.subr.bf16.mxu0 0
      %939 = vmatpush2.bf16.msra.mxu0 0
      %940 = vmatprep.subr.bf16.mxu0 0
      %941 = vmatpush2.bf16.msra.mxu0 0
      %942 = vmatprep.subr.bf16.mxu0 0
      %943 = vmatpush2.bf16.msra.mxu0 0
      %944 = vmatprep.subr.bf16.mxu0 0
      %945 = vmatpush2.bf16.msra.mxu0 0
      %946 = vmatprep.subr.bf16.mxu0 0
      %947 = vmatpush2.bf16.msra.mxu0 0
      %948 = vmatprep.subr.bf16.mxu0 0
      %949 = vmatpush2.bf16.msra.mxu0 0
      %950 = vmatprep.subr.bf16.mxu0 0
      %951 = vmatpush2.bf16.msra.mxu0 0
      %952 = vmatprep.mubr.bf16.mxu0 0
      %953 = vmatmul.mubr.bf16.gmra.mxu0 %v918
      %v954 = vpop.f32.mrf.mxu0
      %v955 = vadd.f32 0.0, %v954
      %v956 = vpop.f32.mrf.mxu0
      %v957 = vadd.f32 0.0, %v956
      %v958 = vpop.f32.mrf.mxu0
      %v959 = vpop.f32.mrf.mxu0
      %960 = vdwg.mxu0
      %v961 = vadd.f32 %v863, %v955
      %v962 = vadd.f32 %v864, %v957
      %963 = vrot.lane.b32.xlu0 %v199, 111
      %v964 = vpop.permute.xlu0 %963
      %965 = vrot.lane.b32.xlu0 %v201, 111
      %v966 = vpop.permute.xlu0 %965
      %967 = vrot.lane.b32.xlu0 %v203, 111
      %v968 = vpop.permute.xlu0 %967
      %969 = vrot.lane.b32.xlu0 %v205, 111
      %v970 = vpop.permute.xlu0 %969
      %971 = vrot.lane.b32.xlu0 %v200, 111
      %v972 = vpop.permute.xlu0 %971
      %973 = vrot.lane.b32.xlu0 %v202, 111
      %v974 = vpop.permute.xlu0 %973
      %975 = vrot.lane.b32.xlu0 %v204, 111
      %v976 = vpop.permute.xlu0 %975
      %977 = vrot.lane.b32.xlu0 %v206, 111
      %v978 = vpop.permute.xlu0 %977
      %vm979 = vcmp.lt.s32.totalorder %v224, 111
      %v980 = vsel %vm979, %v964, %v972
      %v981 = vsel %vm979, %v966, %v974
      %v982 = vsel %vm979, %v968, %v976
      %v983 = vsel %vm979, %v970, %v978
      %v984 = vsel %vm979, %v972, %v964
      %v985 = vsel %vm979, %v974, %v966
      %v986 = vsel %vm979, %v976, %v968
      %v987 = vsel %vm979, %v978, %v970
      %s988 = scalar_lea.vmem %s2, 16
      %v989 = vld [vmem:[%s988] sm:$0x3]
      %v991 = vlaneseq
      %v992 = vshrl.u32 %v991, 7
      %v993 = vsub.s32 0, %v992
      %v994 = vrot.slane %v989, %v993
      %v995 = vlaneseq
      %v996 = vshrl.u32 %v995, 7
      %v997 = vsub.s32 1, %v996
      %v998 = vrot.slane %v989, %v997
      %v1001 = vmul.f32 %v980, %v994
      %v1002 = vmul.f32 %v984, %v998
      %v1003 = vmul.f32 %v981, %v994
      %v1004 = vmul.f32 %v985, %v998
      %v1005 = vmul.f32 %v982, %v994
      %v1006 = vmul.f32 %v986, %v998
      %v1007 = vmul.f32 %v983, %v994
      %v1008 = vmul.f32 %v987, %v998
      %v1009 = vpack.c.bf16 %v1003, %v1001
      %v1010 = vpack.c.bf16 %v1004, %v1002
      %v1011 = vpack.c.bf16 %v1007, %v1005
      %v1012 = vpack.c.bf16 %v1008, %v1006
      %s1013 = scalar_lea.vmem %s1, 8
      %v1014 = vld [vmem:[%s1013] sm:$0x1]
      %v1016 = vsel %vm311, %v1014, 0
      %1018 = vmatprep.subr.bf16.mxu0 0
      %1019 = vmatpush1.bf16.msra.mxu0 0
      %1020 = vmatprep.subr.bf16.mxu0 0
      %1021 = vmatpush1.bf16.msra.mxu0 0
      %1022 = vmatprep.subr.bf16.mxu0 0
      %1023 = vmatpush1.bf16.msra.mxu0 0
      %1024 = vmatprep.subr.bf16.mxu0 0
      %1025 = vmatpush1.bf16.msra.mxu0 0
      %1026 = vmatprep.subr.bf16.mxu0 0
      %1027 = vmatpush1.bf16.msra.mxu0 0
      %1028 = vmatprep.subr.bf16.mxu0 0
      %1029 = vmatpush1.bf16.msra.mxu0 0
      %1030 = vmatprep.subr.bf16.mxu0 %v1012
      %1031 = vmatpush1.bf16.msra.mxu0 %v1011
      %1032 = vmatprep.subr.bf16.mxu0 %v1010
      %1033 = vmatpush1.bf16.msra.mxu0 %v1009
      %1034 = vmatprep.subr.bf16.mxu0 0
      %1035 = vmatpush2.bf16.msra.mxu0 0
      %1036 = vmatprep.subr.bf16.mxu0 0
      %1037 = vmatpush2.bf16.msra.mxu0 0
      %1038 = vmatprep.subr.bf16.mxu0 0
      %1039 = vmatpush2.bf16.msra.mxu0 0
      %1040 = vmatprep.subr.bf16.mxu0 0
      %1041 = vmatpush2.bf16.msra.mxu0 0
      %1042 = vmatprep.subr.bf16.mxu0 0
      %1043 = vmatpush2.bf16.msra.mxu0 0
      %1044 = vmatprep.subr.bf16.mxu0 0
      %1045 = vmatpush2.bf16.msra.mxu0 0
      %1046 = vmatprep.subr.bf16.mxu0 0
      %1047 = vmatpush2.bf16.msra.mxu0 0
      %1048 = vmatprep.subr.bf16.mxu0 0
      %1049 = vmatpush2.bf16.msra.mxu0 0
      %1050 = vmatprep.mubr.bf16.mxu0 0
      %1051 = vmatmul.mubr.bf16.gmra.mxu0 %v1016
      %v1052 = vpop.f32.mrf.mxu0
      %v1053 = vadd.f32 0.0, %v1052
      %v1054 = vpop.f32.mrf.mxu0
      %v1055 = vadd.f32 0.0, %v1054
      %v1056 = vpop.f32.mrf.mxu0
      %v1057 = vpop.f32.mrf.mxu0
      %1058 = vdwg.mxu0
      %v1059 = vadd.f32 %v961, %v1053
      %v1060 = vadd.f32 %v962, %v1055
      %v1061 = vld [vmem:[%s3] sm:$0x3]
      %1063 = vset.pattern.permute.xlu0 0
      %1064 = vperm.xlu0 %1063, %v1061
      %v1065 = vpop.permute.xlu0 %1064
      %v1067 = vadd.f32 %v1059, %v1065
      %v1068 = vadd.f32 %v1060, %v1065
      %v1071 = vcombine.low %v1067, %v1068
      %v1073 = vunpack.c.l.s4 1983009808
      %v1074 = vunpack.c.0.s8 %v1073
      %v1075 = vlaneseq
      %v1076 = vshrl.u32 %v1075, 7
      %v1077 = vsub.s32 %v1074, %v1076
      %v1078 = vrot.slane %v1071, %v1077
      %1080 = vst [vmem:[%s197] sm:$0xf] %v1078
      %p1081 = scmp.lt.s32.totalorder %s15, 1
      %s1082 = scalar_select %p1081, %s15, 1
      %s1083 = smul.addr %s1082, 2
      %s1084 = smul.addr %s1083, 2
      %s1085 = scalar_lea.vmem %s4, %s1084
      // Predicated region
      $region37: #{combination_module_dcn.10} parent=35 // pred_check
        %p1086 = pneg %p122
      $region38: #{combination_module_dcn.10} parent=35 // pred_check_branch
        %1088 = sbr.rel (%p1086) target = $region40
      $region39: #{combination_module_dcn.10} parent=35 // pred_region
        _
      $region40: #{combination_module_dcn.10} parent=35 // pred_fallthru
        _
    $region36: #{combination_module_dcn.10} parent=5 // pred_fallthru
      _
    %p1089 = scmp.le.s32.totalorder 2, %s10
    // Predicated region
    $region41: #{combination_module_dcn.10} parent=5 // pred_check
      %p1090 = pneg %p1089
    $region42: #{combination_module_dcn.10} parent=5 // pred_check_branch
      %1092 = sbr.rel (%p1090) target = $region44
    $region43: #{combination_module_dcn.10} parent=5 // pred_region
      %s1093 = ssub.s32 %s10, 2
      // Predicated region
      $region45: #{combination_module_dcn.10} parent=43 // pred_check
        %p1094 = pneg %p128
      $region46: #{combination_module_dcn.10} parent=43 // pred_check_branch
        %1096 = sbr.rel (%p1094) target = $region48
      $region47: #{combination_module_dcn.10} parent=43 // pred_region
        %p1097 = scmp.lt.s32.totalorder %s16, 1
        %s1098 = scalar_select %p1097, %s16, 1
        %s1099 = smul.addr %s1098, 2
        %s1100 = smul.addr %s1099, 2
        %s1101 = scalar_lea.vmem %s4, %s1100
      $region48: #{combination_module_dcn.10} parent=43 // pred_fallthru
        _
    $region44: #{combination_module_dcn.10} parent=5 // pred_fallthru
      _
  $region6: #{combination_module_dcn.10} parent=0 // loop_footer
    %s14 = sadd.s32 1, %s10
  $region7: #{combination_module_dcn.10} parent=0 // loop_footer_branch
    %9 = sbr.rel target = $region3
  $region8: #{combination_module_dcn.10} parent=0 // loop_exit
    _

// kernel: combination_module_dcn.9
$region0: #{combination_module_dcn.9}
  #allocation0 [shape = 'u32[]', space=smem, size = 0x4, offset = 0x4, fixed_abs, tag = 'smem constant byte address 0x4 - core index']
  #allocation1 [shape = 'u32[144,128]{1,0:T(1,128)}', space=vmem, size = 0x12000, scoped, tag = 'internal scratch']
  %s0 = inlined_call_operand.vmem [shape: f32[2,16,256], index: 0, kind: input, shape index: {}]
  %s1 = inlined_call_operand.vmem [shape: f32[4,16], index: 1, kind: input, shape index: {}]
  %s2 = inlined_call_operand.vmem [shape: f32[16,4], index: 2, kind: input, shape index: {}]
  %s3 = inlined_call_operand.vmem [shape: f32[49,1,256], index: 3, kind: input, shape index: {}]
  %s4 = inlined_call_operand.vmem [shape: f32[98], index: 4, kind: input, shape index: {}]
  %s5 = inlined_call_operand.vmem [shape: f32[2,16,256], index: 5, kind: output, shape index: {}]
  %s6 = sld [smem:[#allocation0]]
  $region57: #{combination_module_dcn.9} parent=0
    _
  %s8 = ssub.s32 1, %s6
  %s9 = scalar_select 0, %s8, %s6
  $region1: #{combination_module_dcn.9} parent=0
    #allocation2 [shape = 'u8[512]{0}', space=smem, size = 0x200, scoped, tag = 'input window, operand 4, single buffered']
    #allocation3 [shape = 's32[2]{0}', space=sflag, size = 0x8, scoped, tag = 'scoped memory for combination_module_dcn.9']
    %10 = vsyncpa [#allocation3], 0
    loop: start=0, step=1, limit=4
    $region2: #{combination_module_dcn.9} parent=1 // loop_pre_header
      _
    $region3: #{combination_module_dcn.9} parent=1 // loop_header
      %s12 = sphi 0, %s16
      %p13 = scmp.ge.s32.totalorder %s12, 4
      %s22 = sphi 0, %s24
      %s25 = sphi 0, %s22
      %s26 = sphi 0, %s25
      %s42 = sphi 0, %s26
      %s46 = sphi 0, %s46
      %s48 = sphi 0, %s46
      %s49 = sphi 0, %s48
      %s63 = sphi 0, %s49
      %s67 = sphi 0, %s67
      %s69 = sphi 0, %s67
      %s70 = sphi 0, %s69
      %s84 = sphi 0, %s70
      %s88 = sphi 0, %s88
      %s90 = sphi 0, %s88
      %s91 = sphi 0, %s90
      %s105 = sphi 0, %s91
      %s109 = sphi 0, %s109
      %s111 = sphi 0, %s109
      %s112 = sphi 0, %s111
      %s126 = sphi 0, %s112
      %s132 = sphi 0, %s134
      %s135 = sphi 0, %s132
      %s136 = sphi 0, %s135
      %s152 = sphi 0, %s136
    $region4: #{combination_module_dcn.9} parent=1 // loop_header_branch
      %15 = sbr.rel (%p13) target = $region8
    $region5: #{combination_module_dcn.9} parent=1 // loop_body
      %s17 = ssub.s32 %s12, 1
      %s18 = ssub.s32 %s12, 2
      %s19 = sadd.s32 %s12, 1
      %s20 = ssub.s32 %s12, %s19
      %p21 = scmp.eq.s32.totalorder %s20, 0
      %s23 = sadd.s32 %s22, 1
      %s24 = scalar_select %p21, %s22, %s23
      %p27 = pneg %p21
      %p28 = scmp.eq.s32.totalorder %s12, 1
      %p29 = por %p27, %p28
      %p30 = scmp.ne.s32.totalorder %s22, %s25
      %p31 = scmp.eq.s32.totalorder %s12, 0
      %p32 = por %p30, %p31
      %p33 = scmp.ne.s32.totalorder %s22, %s25
      %p34 = scmp.eq.s32.totalorder %s17, 1
      %p35 = por %p33, %p34
      %p36 = scmp.ne.s32.totalorder %s25, %s26
      %p37 = scmp.eq.s32.totalorder %s17, 0
      %p38 = por %p36, %p37
      %p39 = scmp.ne.s32.totalorder %s25, %s26
      %p40 = scmp.eq.s32.totalorder %s18, 1
      %p41 = por %p39, %p40
      %p43 = scmp.ne.s32.totalorder %s26, %s42
      %p44 = scmp.eq.s32.totalorder %s18, 0
      %p45 = por %p43, %p44
      %s47 = sadd.s32 %s46, 1
      %p50 = scmp.eq.s32.totalorder %s12, 1
      %p51 = scmp.ne.s32.totalorder %s46, %s48
      %p52 = scmp.eq.s32.totalorder %s12, 0
      %p53 = por %p51, %p52
      %p54 = scmp.ne.s32.totalorder %s46, %s48
      %p55 = scmp.eq.s32.totalorder %s17, 1
      %p56 = por %p54, %p55
      %p57 = scmp.ne.s32.totalorder %s48, %s49
      %p58 = scmp.eq.s32.totalorder %s17, 0
      %p59 = por %p57, %p58
      %p60 = scmp.ne.s32.totalorder %s48, %s49
      %p61 = scmp.eq.s32.totalorder %s18, 1
      %p62 = por %p60, %p61
      %p64 = scmp.ne.s32.totalorder %s49, %s63
      %p65 = scmp.eq.s32.totalorder %s18, 0
      %p66 = por %p64, %p65
      %s68 = sadd.s32 %s67, 1
      %p71 = scmp.eq.s32.totalorder %s12, 1
      %p72 = scmp.ne.s32.totalorder %s67, %s69
      %p73 = scmp.eq.s32.totalorder %s12, 0
      %p74 = por %p72, %p73
      %p75 = scmp.ne.s32.totalorder %s67, %s69
      %p76 = scmp.eq.s32.totalorder %s17, 1
      %p77 = por %p75, %p76
      %p78 = scmp.ne.s32.totalorder %s69, %s70
      %p79 = scmp.eq.s32.totalorder %s17, 0
      %p80 = por %p78, %p79
      %p81 = scmp.ne.s32.totalorder %s69, %s70
      %p82 = scmp.eq.s32.totalorder %s18, 1
      %p83 = por %p81, %p82
      %p85 = scmp.ne.s32.totalorder %s70, %s84
      %p86 = scmp.eq.s32.totalorder %s18, 0
      %p87 = por %p85, %p86
      %s89 = sadd.s32 %s88, 1
      %p92 = scmp.eq.s32.totalorder %s12, 1
      %p93 = scmp.ne.s32.totalorder %s88, %s90
      %p94 = scmp.eq.s32.totalorder %s12, 0
      %p95 = por %p93, %p94
      %p96 = scmp.ne.s32.totalorder %s88, %s90
      %p97 = scmp.eq.s32.totalorder %s17, 1
      %p98 = por %p96, %p97
      %p99 = scmp.ne.s32.totalorder %s90, %s91
      %p100 = scmp.eq.s32.totalorder %s17, 0
      %p101 = por %p99, %p100
      %p102 = scmp.ne.s32.totalorder %s90, %s91
      %p103 = scmp.eq.s32.totalorder %s18, 1
      %p104 = por %p102, %p103
      %p106 = scmp.ne.s32.totalorder %s91, %s105
      %p107 = scmp.eq.s32.totalorder %s18, 0
      %p108 = por %p106, %p107
      %s110 = sadd.s32 %s109, 1
      %p113 = scmp.eq.s32.totalorder %s12, 1
      %p114 = scmp.ne.s32.totalorder %s109, %s111
      %p115 = scmp.eq.s32.totalorder %s12, 0
      %p116 = por %p114, %p115
      %p117 = scmp.ne.s32.totalorder %s109, %s111
      %p118 = scmp.eq.s32.totalorder %s17, 1
      %p119 = por %p117, %p118
      %p120 = scmp.ne.s32.totalorder %s111, %s112
      %p121 = scmp.eq.s32.totalorder %s17, 0
      %p122 = por %p120, %p121
      %p123 = scmp.ne.s32.totalorder %s111, %s112
      %p124 = scmp.eq.s32.totalorder %s18, 1
      %p125 = por %p123, %p124
      %p127 = scmp.ne.s32.totalorder %s112, %s126
      %p128 = scmp.eq.s32.totalorder %s18, 0
      %p129 = por %p127, %p128
      %s130 = ssub.s32 %s12, %s19
      %p131 = scmp.eq.s32.totalorder %s130, 0
      %s133 = sadd.s32 %s132, 1
      %s134 = scalar_select %p131, %s132, %s133
      %p137 = pneg %p131
      %p138 = scmp.eq.s32.totalorder %s12, 1
      %p139 = por %p137, %p138
      %p140 = scmp.ne.s32.totalorder %s132, %s135
      %p141 = scmp.eq.s32.totalorder %s12, 0
      %p142 = por %p140, %p141
      %p143 = scmp.ne.s32.totalorder %s132, %s135
      %p144 = scmp.eq.s32.totalorder %s17, 1
      %p145 = por %p143, %p144
      %p146 = scmp.ne.s32.totalorder %s135, %s136
      %p147 = scmp.eq.s32.totalorder %s17, 0
      %p148 = por %p146, %p147
      %p149 = scmp.ne.s32.totalorder %s135, %s136
      %p150 = scmp.eq.s32.totalorder %s18, 1
      %p151 = por %p149, %p150
      %p153 = scmp.ne.s32.totalorder %s136, %s152
      %p154 = scmp.eq.s32.totalorder %s18, 0
      %p155 = por %p153, %p154
      %p156 = scmp.le.s32.totalorder 1, %s12
      %p157 = scmp.lt.s32.totalorder %s12, 3
      %p158 = pnand %p156, %p157
      %p159 = pneg %p158
      // Predicated region
      $region9: #{combination_module_dcn.9} parent=5 // pred_check
        _
      $region10: #{combination_module_dcn.9} parent=5 // pred_check_branch
        %161 = sbr.rel (%p158) target = $region12
      $region11: #{combination_module_dcn.9} parent=5 // pred_region
        %s162 = ssub.s32 %s12, 1
        // Predicated region
        $region13: #{combination_module_dcn.9} parent=11 // pred_check
          %p163 = pneg %p59
        $region14: #{combination_module_dcn.9} parent=11 // pred_check_branch
          %165 = sbr.rel (%p163) target = $region16
        $region15: #{combination_module_dcn.9} parent=11 // pred_region
          _
        $region16: #{combination_module_dcn.9} parent=11 // pred_fallthru
          _
        // Predicated region
        $region17: #{combination_module_dcn.9} parent=11 // pred_check
          %p166 = pneg %p80
        $region18: #{combination_module_dcn.9} parent=11 // pred_check_branch
          %168 = sbr.rel (%p166) target = $region20
        $region19: #{combination_module_dcn.9} parent=11 // pred_region
          _
        $region20: #{combination_module_dcn.9} parent=11 // pred_fallthru
          _
        // Predicated region
        $region21: #{combination_module_dcn.9} parent=11 // pred_check
          %p169 = pneg %p101
        $region22: #{combination_module_dcn.9} parent=11 // pred_check_branch
          %171 = sbr.rel (%p169) target = $region24
        $region23: #{combination_module_dcn.9} parent=11 // pred_region
          _
        $region24: #{combination_module_dcn.9} parent=11 // pred_fallthru
          _
        // Predicated region
        $region25: #{combination_module_dcn.9} parent=11 // pred_check
          %p172 = pneg %p122
        $region26: #{combination_module_dcn.9} parent=11 // pred_check_branch
          %174 = sbr.rel (%p172) target = $region28
        $region27: #{combination_module_dcn.9} parent=11 // pred_region
          %s176 = ssub.s32 16, 16
          %177 = vsyncadd [#allocation3], %s176
          %s179 = sshll.u32 %s4, 4
          %s180 = int_to_ptr.vmem [resolvable:$true] %s179
          %182 = dma.vmem_to_smem %s180, 16, [#allocation2], [#allocation3]
        $region28: #{combination_module_dcn.9} parent=11 // pred_fallthru
          _
      $region12: #{combination_module_dcn.9} parent=5 // pred_fallthru
        _
      %p183 = scmp.lt.s32.totalorder %s12, 2
      // Predicated region
      $region29: #{combination_module_dcn.9} parent=5 // pred_check
        %p184 = pneg %p183
      $region30: #{combination_module_dcn.9} parent=5 // pred_check_branch
        %186 = sbr.rel (%p184) target = $region32
      $region31: #{combination_module_dcn.9} parent=5 // pred_region
        // Predicated region
        $region33: #{combination_module_dcn.9} parent=31 // pred_check
          %p187 = pneg %p32
        $region34: #{combination_module_dcn.9} parent=31 // pred_check_branch
          %189 = sbr.rel (%p187) target = $region36
        $region35: #{combination_module_dcn.9} parent=31 // pred_region
          %p190 = scmp.lt.s32.totalorder %s12, 1
          %s191 = scalar_select %p190, %s12, 1
          %s192 = smul.addr %s191, 4
          %s193 = smul.addr %s192, 8
          %s194 = scalar_lea.vmem %s0, %s193
        $region36: #{combination_module_dcn.9} parent=31 // pred_fallthru
          _
      $region32: #{combination_module_dcn.9} parent=5 // pred_fallthru
        _
      %p195 = scmp.le.s32.totalorder 1, %s12
      %p196 = scmp.lt.s32.totalorder %s12, 3
      %p197 = pnand %p195, %p196
      %p198 = pneg %p197
      // Predicated region
      $region37: #{combination_module_dcn.9} parent=5 // pred_check
        _
      $region38: #{combination_module_dcn.9} parent=5 // pred_check_branch
        %200 = sbr.rel (%p197) target = $region40
      $region39: #{combination_module_dcn.9} parent=5 // pred_region
        %s201 = ssub.s32 %s12, 1
        // Predicated region
        $region41: #{combination_module_dcn.9} parent=39 // pred_check
          %p202 = pneg %p122
        $region42: #{combination_module_dcn.9} parent=39 // pred_check_branch
          %204 = sbr.rel (%p202) target = $region44
        $region43: #{combination_module_dcn.9} parent=39 // pred_region
          %205 = dma.done [#allocation3], 16
        $region44: #{combination_module_dcn.9} parent=39 // pred_fallthru
          _
        %206 = sfence
        %p207 = scmp.lt.s32.totalorder %s17, 1
        %s208 = scalar_select %p207, %s17, 1
        %s209 = smul.addr %s208, 4
        %s210 = smul.addr %s209, 8
        %s211 = scalar_lea.vmem %s0, %s210
        %p212 = pneg %p38
        %p213 = pneg %p35
        %p214 = pneg %p59
        %p215 = pneg %p56
        %p216 = pneg %p80
        %p217 = pneg %p77
        %p218 = pneg %p101
        %p219 = pneg %p98
        %p220 = pneg %p122
        %p221 = pneg %p119
        %p222 = pneg %p148
        %p223 = pneg %p145
        %p224 = scmp.lt.s32.totalorder %s17, 1
        %s225 = scalar_select %p224, %s17, 1
        %s226 = smul.addr %s225, 4
        %s227 = smul.addr %s226, 8
        %s228 = scalar_lea.vmem %s5, %s227
        %p229 = scmp.lt.s32.totalorder %s17, 1
        %s230 = scalar_select %p229, %s17, 1
        %s231 = smul.addr %s230, 4
        %s232 = smul.addr %s231, 8
        %s233 = scalar_lea.vmem %s0, %s232
        %p234 = scmp.lt.s32.totalorder %s17, 1
        %s235 = scalar_select %p234, %s17, 1
        %s236 = smul.addr %s235, 4
        %s237 = smul.addr %s236, 8
        %s238 = scalar_lea.vmem %s5, %s237
        %v239 = vld [vmem:[%s233] sm:$0xff]
        %v240 = vld [vmem:[%s233 + $0x8] sm:$0xff]
        %v241 = vld [vmem:[%s233 + $0x10] sm:$0xff]
        %v242 = vld [vmem:[%s233 + $0x18] sm:$0xff]
        %v243 = vadd.f32 %v239, %v240
        %244 = vadd.xlane.f32.xlu0 %v243
        %v245 = vpop.xlane.xlu0 %244
        %v246 = vadd.f32 %v241, %v242
        %247 = vadd.xlane.f32.xlu0 %v246
        %v248 = vpop.xlane.xlu0 %247
        %v249 = vrcp.pop 256.0
        %v250 = vmul.f32 %v245, %v249
        %v251 = vmul.f32 %v248, %v249
        %v252 = vmax.f32 %v239, %v240
        %253 = vmax.xlane.f32.xlu0 %v252
        %v254 = vpop.xlane.xlu0 %253
        %v255 = vmax.f32 %v241, %v242
        %256 = vmax.xlane.f32.xlu0 %v255
        %v257 = vpop.xlane.xlu0 %256
        %vm258 = vcmask 7168
        %v259 = vsel %vm258, %v250, %v254
        %v260 = vsel %vm258, %v251, %v257
        %v261 = vld [vmem:[%s1] sm:$0xf]
        %vm262 = vcmask 130048
        %v264 = vsel %vm262, %v261, 0
        %266 = vmatprep.subr.mxu0 0.0
        %267 = vmatpush1.msra.mxu0 0.0
        %268 = vmatprep.subr.mxu0 0.0
        %269 = vmatpush1.msra.mxu0 0.0
        %270 = vmatprep.subr.mxu0 0.0
        %271 = vmatpush1.msra.mxu0 0.0
        %272 = vmatprep.subr.mxu0 0.0
        %273 = vmatpush1.msra.mxu0 0.0
        %274 = vmatprep.subr.mxu0 0.0
        %275 = vmatpush1.msra.mxu0 0.0
        %276 = vmatprep.subr.mxu0 0.0
        %277 = vmatpush1.msra.mxu0 0.0
        %278 = vmatprep.subr.mxu0 0.0
        %279 = vmatpush1.msra.mxu0 0.0
        %280 = vmatprep.subr.mxu0 0.0
        %281 = vmatpush1.msra.mxu0 0.0
        %282 = vmatprep.subr.mxu0 0.0
        %283 = vmatpush1.msra.mxu0 0.0
        %284 = vmatprep.subr.mxu0 0.0
        %285 = vmatpush1.msra.mxu0 0.0
        %286 = vmatprep.subr.mxu0 0.0
        %287 = vmatpush1.msra.mxu0 0.0
        %288 = vmatprep.subr.mxu0 0.0
        %289 = vmatpush1.msra.mxu0 0.0
        %290 = vmatprep.subr.mxu0 0.0
        %291 = vmatpush1.msra.mxu0 0.0
        %292 = vmatprep.subr.mxu0 0.0
        %293 = vmatpush1.msra.mxu0 0.0
        %294 = vmatprep.subr.mxu0 0.0
        %295 = vmatpush1.msra.mxu0 %v260
        %296 = vmatprep.subr.mxu0 0.0
        %297 = vmatpush1.msra.mxu0 %v259
        %298 = vmatprep.subr.mxu0 0.0
        %299 = vmatpush2.msra.mxu0 0.0
        %300 = vmatprep.subr.mxu0 0.0
        %301 = vmatpush2.msra.mxu0 0.0
        %302 = vmatprep.subr.mxu0 0.0
        %303 = vmatpush2.msra.mxu0 0.0
        %304 = vmatprep.subr.mxu0 0.0
        %305 = vmatpush2.msra.mxu0 0.0
        %306 = vmatprep.subr.mxu0 0.0
        %307 = vmatpush2.msra.mxu0 0.0
        %308 = vmatprep.subr.mxu0 0.0
        %309 = vmatpush2.msra.mxu0 0.0
        %310 = vmatprep.subr.mxu0 0.0
        %311 = vmatpush2.msra.mxu0 0.0
        %312 = vmatprep.subr.mxu0 0.0
        %313 = vmatpush2.msra.mxu0 0.0
        %314 = vmatprep.subr.mxu0 0.0
        %315 = vmatpush2.msra.mxu0 0.0
        %316 = vmatprep.subr.mxu0 0.0
        %317 = vmatpush2.msra.mxu0 0.0
        %318 = vmatprep.subr.mxu0 0.0
        %319 = vmatpush2.msra.mxu0 0.0
        %320 = vmatprep.subr.mxu0 0.0
        %321 = vmatpush2.msra.mxu0 0.0
        %322 = vmatprep.subr.mxu0 0.0
        %323 = vmatpush2.msra.mxu0 0.0
        %324 = vmatprep.subr.mxu0 0.0
        %325 = vmatpush2.msra.mxu0 0.0
        %326 = vmatprep.subr.mxu0 0.0
        %327 = vmatpush2.msra.mxu0 0.0
        %328 = vmatprep.subr.mxu0 0.0
        %329 = vmatpush2.msra.mxu0 0.0
        %330 = vmatprep.mubr.f32.mxu0 0.0
        %331 = vmatmul.mubr.f32.gmra.mxu0 %v264
        %v332 = vpop.f32.mrf.mxu0
        %v333 = vadd.f32 0.0, %v332
        %v334 = vpop.f32.mrf.mxu0
        %335 = vdwg.mxu0
        %v336 = vmax.f32 %v333, 0.0
        %v337 = vld [vmem:[%s2] sm:$0xff]
        %v338 = vld [vmem:[%s2 + $0x8] sm:$0xff]
        %vm339 = vcmask 31744
        %v341 = vsel %vm339, %v337, 0
        %v344 = vsel %vm339, %v338, 0
        %vm346 = vcmask 1043456
        %v348 = vsel %vm346, %v336, 0
        %350 = vmatprep.subr.mxu0 0.0
        %351 = vmatpush1.msra.mxu0 0.0
        %352 = vmatprep.subr.mxu0 0.0
        %353 = vmatpush1.msra.mxu0 0.0
        %354 = vmatprep.subr.mxu0 0.0
        %355 = vmatpush1.msra.mxu0 0.0
        %356 = vmatprep.subr.mxu0 0.0
        %357 = vmatpush1.msra.mxu0 0.0
        %358 = vmatprep.subr.mxu0 0.0
        %359 = vmatpush1.msra.mxu0 0.0
        %360 = vmatprep.subr.mxu0 0.0
        %361 = vmatpush1.msra.mxu0 0.0
        %362 = vmatprep.subr.mxu0 0.0
        %363 = vmatpush1.msra.mxu0 0.0
        %364 = vmatprep.subr.mxu0 0.0
        %365 = vmatpush1.msra.mxu0 0.0
        %366 = vmatprep.subr.mxu0 0.0
        %367 = vmatpush1.msra.mxu0 0.0
        %368 = vmatprep.subr.mxu0 0.0
        %369 = vmatpush1.msra.mxu0 0.0
        %370 = vmatprep.subr.mxu0 0.0
        %371 = vmatpush1.msra.mxu0 0.0
        %372 = vmatprep.subr.mxu0 0.0
        %373 = vmatpush1.msra.mxu0 0.0
        %374 = vmatprep.subr.mxu0 0.0
        %375 = vmatpush1.msra.mxu0 0.0
        %376 = vmatprep.subr.mxu0 0.0
        %377 = vmatpush1.msra.mxu0 0.0
        %378 = vmatprep.subr.mxu0 0.0
        %379 = vmatpush1.msra.mxu0 0.0
        %380 = vmatprep.subr.mxu0 0.0
        %381 = vmatpush1.msra.mxu0 %v348
        %382 = vmatprep.subr.mxu0 0.0
        %383 = vmatpush2.msra.mxu0 0.0
        %384 = vmatprep.subr.mxu0 0.0
        %385 = vmatpush2.msra.mxu0 0.0
        %386 = vmatprep.subr.mxu0 0.0
        %387 = vmatpush2.msra.mxu0 0.0
        %388 = vmatprep.subr.mxu0 0.0
        %389 = vmatpush2.msra.mxu0 0.0
        %390 = vmatprep.subr.mxu0 0.0
        %391 = vmatpush2.msra.mxu0 0.0
        %392 = vmatprep.subr.mxu0 0.0
        %393 = vmatpush2.msra.mxu0 0.0
        %394 = vmatprep.subr.mxu0 0.0
        %395 = vmatpush2.msra.mxu0 0.0
        %396 = vmatprep.subr.mxu0 0.0
        %397 = vmatpush2.msra.mxu0 0.0
        %398 = vmatprep.subr.mxu0 0.0
        %399 = vmatpush2.msra.mxu0 0.0
        %400 = vmatprep.subr.mxu0 0.0
        %401 = vmatpush2.msra.mxu0 0.0
        %402 = vmatprep.subr.mxu0 0.0
        %403 = vmatpush2.msra.mxu0 0.0
        %404 = vmatprep.subr.mxu0 0.0
        %405 = vmatpush2.msra.mxu0 0.0
        %406 = vmatprep.subr.mxu0 0.0
        %407 = vmatpush2.msra.mxu0 0.0
        %408 = vmatprep.subr.mxu0 0.0
        %409 = vmatpush2.msra.mxu0 0.0
        %410 = vmatprep.subr.mxu0 0.0
        %411 = vmatpush2.msra.mxu0 0.0
        %412 = vmatprep.subr.mxu0 0.0
        %413 = vmatpush2.msra.mxu0 0.0
        %414 = vmatprep.mubr.f32.mxu0 0.0
        %415 = vmatmul.mubr.f32.gmra.mxu0 %v341
        %v416 = vpop.f32.mrf.mxu0
        %v417 = vadd.f32 0.0, %v416
        %v418 = vpop.f32.mrf.mxu0
        %419 = vmatprep.mubr.f32.mxu0 0.0
        %420 = vmatmul.mubr.f32.gmra.mxu0 %v344
        %v421 = vpop.f32.mrf.mxu0
        %v422 = vadd.f32 0.0, %v421
        %v423 = vpop.f32.mrf.mxu0
        %424 = vdwg.mxu0
        %427 = vrot.lane.b32.xlu0 %v417, 127
        %v428 = vpop.permute.xlu0 %427
        %429 = vrot.lane.b32.xlu0 %v422, 127
        %v430 = vpop.permute.xlu0 %429
        %v433 = vadd.f32 %v417, %v428
        %v434 = vadd.f32 %v422, %v430
        %v435 = vxor.u32 %v433, 2147483648
        %v436 = vxor.u32 %v434, 2147483648
        %v437 = vmul.f32 %v435, 1.442695
        %v438 = vpow.pop %v437
        %v439 = vmul.f32 %v436, 1.442695
        %v440 = vpow.pop %v439
        %v441 = vadd.f32 %v438, 1.0
        %v442 = vadd.f32 %v440, 1.0
        %v443 = vrcp.pop %v441
        %v444 = vmul.f32 1.0, %v443
        %v445 = vrcp.pop %v442
        %v446 = vmul.f32 1.0, %v445
        %448 = vset.pattern.permute.xlu0 0
        %449 = vperm.xlu0 %448, %v444
        %v450 = vpop.permute.xlu0 %449
        %453 = vset.pattern.permute.xlu0 0
        %454 = vperm.xlu0 %453, %v446
        %v455 = vpop.permute.xlu0 %454
        %v457 = vmul.f32 %v239, %v450
        %v458 = vmul.f32 %v240, %v450
        %v459 = vmul.f32 %v241, %v455
        %v460 = vmul.f32 %v242, %v455
        %v461 = vadd.f32 %v457, %v459
        %v462 = vrot.slane %v461, 4
        %v463 = vadd.f32 %v461, %v462
        %v464 = vrot.slane %v463, 2
        %v465 = vadd.f32 %v463, %v464
        %v466 = vrot.slane %v465, 1
        %v467 = vadd.f32 %v465, %v466
        %v468 = vadd.f32 %v458, %v460
        %v469 = vrot.slane %v468, 4
        %v470 = vadd.f32 %v468, %v469
        %v471 = vrot.slane %v470, 2
        %v472 = vadd.f32 %v470, %v471
        %v473 = vrot.slane %v472, 1
        %v474 = vadd.f32 %v472, %v473
        %v475 = vrcp.pop 16.0
        %v476 = vmul.f32 %v467, %v475
        %v477 = vmul.f32 %v474, %v475
        %v478 = vmax.f32 %v457, %v459
        %v479 = vrot.slane %v478, 4
        %v480 = vmax.f32 %v478, %v479
        %v481 = vrot.slane %v480, 2
        %v482 = vmax.f32 %v480, %v481
        %v483 = vrot.slane %v482, 1
        %v484 = vmax.f32 %v482, %v483
        %v485 = vmax.f32 %v458, %v460
        %v486 = vrot.slane %v485, 4
        %v487 = vmax.f32 %v485, %v486
        %v488 = vrot.slane %v487, 2
        %v489 = vmax.f32 %v487, %v488
        %v490 = vrot.slane %v489, 1
        %v491 = vmax.f32 %v489, %v490
        %vm492 = vcmask 1040384
        %v493 = vsel %vm492, %v476, %v484
        %v494 = vsel %vm492, %v477, %v491
        %495 = vrot.lane.b32.xlu0 %v493, 51
        %v496 = vpop.permute.xlu0 %495
        %497 = vrot.lane.b32.xlu0 %v494, 51
        %v498 = vpop.permute.xlu0 %497
        %v499 = vlaneseq
        %v500 = vand.u32 %v499, 127
        %vm501 = vcmp.lt.s32.totalorder %v500, 51
        %v502 = vsel %vm501, %v496, %v498
        %v503 = vsel %vm501, %v498, %v496
        %s504 = sld [smem:[#allocation2]]
        %v505 = vstv %s504
        %v506 = vmul.f32 %v505, %v503
        %v507 = vmul.f32 %v505, %v502
        %s508 = sld [smem:[#allocation2 + $0x31]]
        %v509 = vstv %s508
        %v510 = vmul.f32 %v509, %v503
        %v511 = vmul.f32 %v509, %v502
        %v514 = vrot.slane %v510, 1
        %v515 = vrot.slane %v511, 1
        %v518 = vadd.f32 %v506, %v514
        %v519 = vadd.f32 %v507, %v515
        %v520 = vld [vmem:[%s3] sm:$0x3]
        %v522 = vlaneseq
        %v523 = vshrl.u32 %v522, 7
        %v524 = vsub.s32 0, %v523
        %v525 = vrot.slane %v520, %v524
        %v526 = vlaneseq
        %v527 = vshrl.u32 %v526, 7
        %v528 = vsub.s32 1, %v527
        %v529 = vrot.slane %v520, %v528
        %v532 = vmul.f32 %v518, %v525
        %v533 = vmul.f32 %v519, %v529
        %v534 = vadd.f32 %v532, 0.0
        %v535 = vadd.f32 %v533, 0.0
        %536 = vrot.lane.b32.xlu0 %v493, 50
        %v537 = vpop.permute.xlu0 %536
        %538 = vrot.lane.b32.xlu0 %v494, 50
        %v539 = vpop.permute.xlu0 %538
        %vm540 = vcmp.lt.s32.totalorder %v500, 50
        %v541 = vsel %vm540, %v537, %v539
        %v542 = vsel %vm540, %v539, %v537
        %s543 = sld [smem:[#allocation2 + $0x1]]
        %v544 = vstv %s543
        %v545 = vmul.f32 %v544, %v542
        %v546 = vmul.f32 %v544, %v541
        %s547 = sld [smem:[#allocation2 + $0x32]]
        %v548 = vstv %s547
        %v549 = vmul.f32 %v548, %v542
        %v550 = vmul.f32 %v548, %v541
        %v553 = vrot.slane %v549, 1
        %v554 = vrot.slane %v550, 1
        %v557 = vadd.f32 %v545, %v553
        %v558 = vadd.f32 %v546, %v554
        %s559 = scalar_lea.vmem %s3, 2
        %v560 = vld [vmem:[%s559] sm:$0x3]
        %v562 = vlaneseq
        %v563 = vshrl.u32 %v562, 7
        %v564 = vsub.s32 0, %v563
        %v565 = vrot.slane %v560, %v564
        %v566 = vlaneseq
        %v567 = vshrl.u32 %v566, 7
        %v568 = vsub.s32 1, %v567
        %v569 = vrot.slane %v560, %v568
        %v572 = vmul.f32 %v557, %v565
        %v573 = vmul.f32 %v558, %v569
        %v574 = vadd.f32 %v572, 0.0
        %v575 = vadd.f32 %v573, 0.0
        %576 = vrot.lane.b32.xlu0 %v493, 49
        %v577 = vpop.permute.xlu0 %576
        %578 = vrot.lane.b32.xlu0 %v494, 49
        %v579 = vpop.permute.xlu0 %578
        %vm580 = vcmp.lt.s32.totalorder %v500, 49
        %v581 = vsel %vm580, %v577, %v579
        %v582 = vsel %vm580, %v579, %v577
        %s583 = sld [smem:[#allocation2 + $0x2]]
        %v584 = vstv %s583
        %v585 = vmul.f32 %v584, %v582
        %v586 = vmul.f32 %v584, %v581
        %s587 = sld [smem:[#allocation2 + $0x33]]
        %v588 = vstv %s587
        %v589 = vmul.f32 %v588, %v582
        %v590 = vmul.f32 %v588, %v581
        %v593 = vrot.slane %v589, 1
        %v594 = vrot.slane %v590, 1
        %v597 = vadd.f32 %v585, %v593
        %v598 = vadd.f32 %v586, %v594
        %s599 = scalar_lea.vmem %s3, 4
        %v600 = vld [vmem:[%s599] sm:$0x3]
        %v602 = vlaneseq
        %v603 = vshrl.u32 %v602, 7
        %v604 = vsub.s32 0, %v603
        %v605 = vrot.slane %v600, %v604
        %v606 = vlaneseq
        %v607 = vshrl.u32 %v606, 7
        %v608 = vsub.s32 1, %v607
        %v609 = vrot.slane %v600, %v608
        %v612 = vmul.f32 %v597, %v605
        %v613 = vmul.f32 %v598, %v609
        %v614 = vadd.f32 %v612, 0.0
        %v615 = vadd.f32 %v613, 0.0
        %616 = vrot.lane.b32.xlu0 %v493, 48
        %v617 = vpop.permute.xlu0 %616
        %618 = vrot.lane.b32.xlu0 %v494, 48
        %v619 = vpop.permute.xlu0 %618
        %vm620 = vcmp.lt.s32.totalorder %v500, 48
        %v621 = vsel %vm620, %v617, %v619
        %v622 = vsel %vm620, %v619, %v617
        %s623 = sld [smem:[#allocation2 + $0x3]]
        %v624 = vstv %s623
        %v625 = vmul.f32 %v624, %v622
        %v626 = vmul.f32 %v624, %v621
        %s627 = sld [smem:[#allocation2 + $0x34]]
        %v628 = vstv %s627
        %v629 = vmul.f32 %v628, %v622
        %v630 = vmul.f32 %v628, %v621
        %v633 = vrot.slane %v629, 1
        %v634 = vrot.slane %v630, 1
        %v637 = vadd.f32 %v625, %v633
        %v638 = vadd.f32 %v626, %v634
        %s639 = scalar_lea.vmem %s3, 6
        %v640 = vld [vmem:[%s639] sm:$0x3]
        %v642 = vlaneseq
        %v643 = vshrl.u32 %v642, 7
        %v644 = vsub.s32 0, %v643
        %v645 = vrot.slane %v640, %v644
        %v646 = vlaneseq
        %v647 = vshrl.u32 %v646, 7
        %v648 = vsub.s32 1, %v647
        %v649 = vrot.slane %v640, %v648
        %v652 = vmul.f32 %v637, %v645
        %v653 = vmul.f32 %v638, %v649
        %v654 = vadd.f32 %v652, 0.0
        %v655 = vadd.f32 %v653, 0.0
        %656 = vrot.lane.b32.xlu0 %v493, 47
        %v657 = vpop.permute.xlu0 %656
        %658 = vrot.lane.b32.xlu0 %v494, 47
        %v659 = vpop.permute.xlu0 %658
        %vm660 = vcmp.lt.s32.totalorder %v500, 47
        %v661 = vsel %vm660, %v657, %v659
        %v662 = vsel %vm660, %v659, %v657
        %s663 = sld [smem:[#allocation2 + $0x4]]
        %v664 = vstv %s663
        %v665 = vmul.f32 %v664, %v662
        %v666 = vmul.f32 %v664, %v661
        %s667 = sld [smem:[#allocation2 + $0x35]]
        %v668 = vstv %s667
        %v669 = vmul.f32 %v668, %v662
        %v670 = vmul.f32 %v668, %v661
        %v673 = vrot.slane %v669, 1
        %v674 = vrot.slane %v670, 1
        %v677 = vadd.f32 %v665, %v673
        %v678 = vadd.f32 %v666, %v674
        %s679 = scalar_lea.vmem %s3, 8
        %v680 = vld [vmem:[%s679] sm:$0x3]
        %v682 = vlaneseq
        %v683 = vshrl.u32 %v682, 7
        %v684 = vsub.s32 0, %v683
        %v685 = vrot.slane %v680, %v684
        %v686 = vlaneseq
        %v687 = vshrl.u32 %v686, 7
        %v688 = vsub.s32 1, %v687
        %v689 = vrot.slane %v680, %v688
        %v692 = vmul.f32 %v677, %v685
        %v693 = vmul.f32 %v678, %v689
        %v694 = vadd.f32 %v534, %v692
        %v695 = vadd.f32 %v535, %v693
        %696 = vrot.lane.b32.xlu0 %v493, 46
        %v697 = vpop.permute.xlu0 %696
        %698 = vrot.lane.b32.xlu0 %v494, 46
        %v699 = vpop.permute.xlu0 %698
        %vm700 = vcmp.lt.s32.totalorder %v500, 46
        %v701 = vsel %vm700, %v697, %v699
        %v702 = vsel %vm700, %v699, %v697
        %s703 = sld [smem:[#allocation2 + $0x5]]
        %v704 = vstv %s703
        %v705 = vmul.f32 %v704, %v702
        %v706 = vmul.f32 %v704, %v701
        %s707 = sld [smem:[#allocation2 + $0x36]]
        %v708 = vstv %s707
        %v709 = vmul.f32 %v708, %v702
        %v710 = vmul.f32 %v708, %v701
        %v713 = vrot.slane %v709, 1
        %v714 = vrot.slane %v710, 1
        %v717 = vadd.f32 %v705, %v713
        %v718 = vadd.f32 %v706, %v714
        %s719 = scalar_lea.vmem %s3, 10
        %v720 = vld [vmem:[%s719] sm:$0x3]
        %v722 = vlaneseq
        %v723 = vshrl.u32 %v722, 7
        %v724 = vsub.s32 0, %v723
        %v725 = vrot.slane %v720, %v724
        %v726 = vlaneseq
        %v727 = vshrl.u32 %v726, 7
        %v728 = vsub.s32 1, %v727
        %v729 = vrot.slane %v720, %v728
        %v732 = vmul.f32 %v717, %v725
        %v733 = vmul.f32 %v718, %v729
        %v734 = vadd.f32 %v574, %v732
        %v735 = vadd.f32 %v575, %v733
        %736 = vrot.lane.b32.xlu0 %v493, 45
        %v737 = vpop.permute.xlu0 %736
        %738 = vrot.lane.b32.xlu0 %v494, 45
        %v739 = vpop.permute.xlu0 %738
        %vm740 = vcmp.lt.s32.totalorder %v500, 45
        %v741 = vsel %vm740, %v737, %v739
        %v742 = vsel %vm740, %v739, %v737
        %s743 = sld [smem:[#allocation2 + $0x6]]
        %v744 = vstv %s743
        %v745 = vmul.f32 %v744, %v742
        %v746 = vmul.f32 %v744, %v741
        %s747 = sld [smem:[#allocation2 + $0x37]]
        %v748 = vstv %s747
        %v749 = vmul.f32 %v748, %v742
        %v750 = vmul.f32 %v748, %v741
        %v753 = vrot.slane %v749, 1
        %v754 = vrot.slane %v750, 1
        %v757 = vadd.f32 %v745, %v753
        %v758 = vadd.f32 %v746, %v754
        %s759 = scalar_lea.vmem %s3, 12
        %v760 = vld [vmem:[%s759] sm:$0x3]
        %v762 = vlaneseq
        %v763 = vshrl.u32 %v762, 7
        %v764 = vsub.s32 0, %v763
        %v765 = vrot.slane %v760, %v764
        %v766 = vlaneseq
        %v767 = vshrl.u32 %v766, 7
        %v768 = vsub.s32 1, %v767
        %v769 = vrot.slane %v760, %v768
        %v772 = vmul.f32 %v757, %v765
        %v773 = vmul.f32 %v758, %v769
        %v774 = vadd.f32 %v614, %v772
        %v775 = vadd.f32 %v615, %v773
        %776 = vrot.lane.b32.xlu0 %v493, 35
        %v777 = vpop.permute.xlu0 %776
        %778 = vrot.lane.b32.xlu0 %v494, 35
        %v779 = vpop.permute.xlu0 %778
        %vm780 = vcmp.lt.s32.totalorder %v500, 35
        %v781 = vsel %vm780, %v777, %v779
        %v782 = vsel %vm780, %v779, %v777
        %s783 = sld [smem:[#allocation2 + $0x7]]
        %v784 = vstv %s783
        %v785 = vmul.f32 %v784, %v782
        %v786 = vmul.f32 %v784, %v781
        %s787 = sld [smem:[#allocation2 + $0x38]]
        %v788 = vstv %s787
        %v789 = vmul.f32 %v788, %v782
        %v790 = vmul.f32 %v788, %v781
        %v793 = vrot.slane %v789, 1
        %v794 = vrot.slane %v790, 1
        %v797 = vadd.f32 %v785, %v793
        %v798 = vadd.f32 %v786, %v794
        %s799 = scalar_lea.vmem %s3, 14
        %v800 = vld [vmem:[%s799] sm:$0x3]
        %v802 = vlaneseq
        %v803 = vshrl.u32 %v802, 7
        %v804 = vsub.s32 0, %v803
        %v805 = vrot.slane %v800, %v804
        %v806 = vlaneseq
        %v807 = vshrl.u32 %v806, 7
        %v808 = vsub.s32 1, %v807
        %v809 = vrot.slane %v800, %v808
        %v812 = vmul.f32 %v797, %v805
        %v813 = vmul.f32 %v798, %v809
        %v814 = vadd.f32 %v654, %v812
        %v815 = vadd.f32 %v655, %v813
        %816 = vrot.lane.b32.xlu0 %v493, 34
        %v817 = vpop.permute.xlu0 %816
        %818 = vrot.lane.b32.xlu0 %v494, 34
        %v819 = vpop.permute.xlu0 %818
        %vm820 = vcmp.lt.s32.totalorder %v500, 34
        %v821 = vsel %vm820, %v817, %v819
        %v822 = vsel %vm820, %v819, %v817
        %s823 = sld [smem:[#allocation2 + $0x8]]
        %v824 = vstv %s823
        %v825 = vmul.f32 %v824, %v822
        %v826 = vmul.f32 %v824, %v821
        %s827 = sld [smem:[#allocation2 + $0x39]]
        %v828 = vstv %s827
        %v829 = vmul.f32 %v828, %v822
        %v830 = vmul.f32 %v828, %v821
        %v833 = vrot.slane %v829, 1
        %v834 = vrot.slane %v830, 1
        %v837 = vadd.f32 %v825, %v833
        %v838 = vadd.f32 %v826, %v834
        %s839 = scalar_lea.vmem %s3, 16
        %v840 = vld [vmem:[%s839] sm:$0x3]
        %v842 = vlaneseq
        %v843 = vshrl.u32 %v842, 7
        %v844 = vsub.s32 0, %v843
        %v845 = vrot.slane %v840, %v844
        %v846 = vlaneseq
        %v847 = vshrl.u32 %v846, 7
        %v848 = vsub.s32 1, %v847
        %v849 = vrot.slane %v840, %v848
        %v852 = vmul.f32 %v837, %v845
        %v853 = vmul.f32 %v838, %v849
        %v854 = vadd.f32 %v694, %v852
        %v855 = vadd.f32 %v695, %v853
        %856 = vrot.lane.b32.xlu0 %v493, 33
        %v857 = vpop.permute.xlu0 %856
        %858 = vrot.lane.b32.xlu0 %v494, 33
        %v859 = vpop.permute.xlu0 %858
        %vm860 = vcmp.lt.s32.totalorder %v500, 33
        %v861 = vsel %vm860, %v857, %v859
        %v862 = vsel %vm860, %v859, %v857
        %s863 = sld [smem:[#allocation2 + $0x9]]
        %v864 = vstv %s863
        %v865 = vmul.f32 %v864, %v862
        %v866 = vmul.f32 %v864, %v861
        %s867 = sld [smem:[#allocation2 + $0x3a]]
        %v868 = vstv %s867
        %v869 = vmul.f32 %v868, %v862
        %v870 = vmul.f32 %v868, %v861
        %v873 = vrot.slane %v869, 1
        %v874 = vrot.slane %v870, 1
        %v877 = vadd.f32 %v865, %v873
        %v878 = vadd.f32 %v866, %v874
        %s879 = scalar_lea.vmem %s3, 18
        %v880 = vld [vmem:[%s879] sm:$0x3]
        %v882 = vlaneseq
        %v883 = vshrl.u32 %v882, 7
        %v884 = vsub.s32 0, %v883
        %v885 = vrot.slane %v880, %v884
        %v886 = vlaneseq
        %v887 = vshrl.u32 %v886, 7
        %v888 = vsub.s32 1, %v887
        %v889 = vrot.slane %v880, %v888
        %v892 = vmul.f32 %v877, %v885
        %v893 = vmul.f32 %v878, %v889
        %v894 = vadd.f32 %v734, %v892
        %v895 = vadd.f32 %v735, %v893
        %896 = vrot.lane.b32.xlu0 %v493, 32
        %v897 = vpop.permute.xlu0 %896
        %898 = vrot.lane.b32.xlu0 %v494, 32
        %v899 = vpop.permute.xlu0 %898
        %vm900 = vcmp.lt.s32.totalorder %v500, 32
        %v901 = vsel %vm900, %v897, %v899
        %v902 = vsel %vm900, %v899, %v897
        %s903 = sld [smem:[#allocation2 + $0xa]]
        %v904 = vstv %s903
        %v905 = vmul.f32 %v904, %v902
        %v906 = vmul.f32 %v904, %v901
        %s907 = sld [smem:[#allocation2 + $0x3b]]
        %v908 = vstv %s907
        %v909 = vmul.f32 %v908, %v902
        %v910 = vmul.f32 %v908, %v901
        %v913 = vrot.slane %v909, 1
        %v914 = vrot.slane %v910, 1
        %v917 = vadd.f32 %v905, %v913
        %v918 = vadd.f32 %v906, %v914
        %s919 = scalar_lea.vmem %s3, 20
        %v920 = vld [vmem:[%s919] sm:$0x3]
        %v922 = vlaneseq
        %v923 = vshrl.u32 %v922, 7
        %v924 = vsub.s32 0, %v923
        %v925 = vrot.slane %v920, %v924
        %v926 = vlaneseq
        %v927 = vshrl.u32 %v926, 7
        %v928 = vsub.s32 1, %v927
        %v929 = vrot.slane %v920, %v928
        %v932 = vmul.f32 %v917, %v925
        %v933 = vmul.f32 %v918, %v929
        %v934 = vadd.f32 %v774, %v932
        %v935 = vadd.f32 %v775, %v933
        %936 = vrot.lane.b32.xlu0 %v493, 31
        %v937 = vpop.permute.xlu0 %936
        %938 = vrot.lane.b32.xlu0 %v494, 31
        %v939 = vpop.permute.xlu0 %938
        %vm940 = vcmp.lt.s32.totalorder %v500, 31
        %v941 = vsel %vm940, %v937, %v939
        %v942 = vsel %vm940, %v939, %v937
        %s943 = sld [smem:[#allocation2 + $0xb]]
        %v944 = vstv %s943
        %v945 = vmul.f32 %v944, %v942
        %v946 = vmul.f32 %v944, %v941
        %s947 = sld [smem:[#allocation2 + $0x3c]]
        %v948 = vstv %s947
        %v949 = vmul.f32 %v948, %v942
        %v950 = vmul.f32 %v948, %v941
        %v953 = vrot.slane %v949, 1
        %v954 = vrot.slane %v950, 1
        %v957 = vadd.f32 %v945, %v953
        %v958 = vadd.f32 %v946, %v954
        %s959 = scalar_lea.vmem %s3, 22
        %v960 = vld [vmem:[%s959] sm:$0x3]
        %v962 = vlaneseq
        %v963 = vshrl.u32 %v962, 7
        %v964 = vsub.s32 0, %v963
        %v965 = vrot.slane %v960, %v964
        %v966 = vlaneseq
        %v967 = vshrl.u32 %v966, 7
        %v968 = vsub.s32 1, %v967
        %v969 = vrot.slane %v960, %v968
        %v972 = vmul.f32 %v957, %v965
        %v973 = vmul.f32 %v958, %v969
        %v974 = vadd.f32 %v814, %v972
        %v975 = vadd.f32 %v815, %v973
        %976 = vrot.lane.b32.xlu0 %v493, 30
        %v977 = vpop.permute.xlu0 %976
        %978 = vrot.lane.b32.xlu0 %v494, 30
        %v979 = vpop.permute.xlu0 %978
        %vm980 = vcmp.lt.s32.totalorder %v500, 30
        %v981 = vsel %vm980, %v977, %v979
        %v982 = vsel %vm980, %v979, %v977
        %s983 = sld [smem:[#allocation2 + $0xc]]
        %v984 = vstv %s983
        %v985 = vmul.f32 %v984, %v982
        %v986 = vmul.f32 %v984, %v981
        %s987 = sld [smem:[#allocation2 + $0x3d]]
        %v988 = vstv %s987
        %v989 = vmul.f32 %v988, %v982
        %v990 = vmul.f32 %v988, %v981
        %v993 = vrot.slane %v989, 1
        %v994 = vrot.slane %v990, 1
        %v997 = vadd.f32 %v985, %v993
        %v998 = vadd.f32 %v986, %v994
        %s999 = scalar_lea.vmem %s3, 24
        %v1000 = vld [vmem:[%s999] sm:$0x3]
        %v1002 = vlaneseq
        %v1003 = vshrl.u32 %v1002, 7
        %v1004 = vsub.s32 0, %v1003
        %v1005 = vrot.slane %v1000, %v1004
        %v1006 = vlaneseq
        %v1007 = vshrl.u32 %v1006, 7
        %v1008 = vsub.s32 1, %v1007
        %v1009 = vrot.slane %v1000, %v1008
        %v1012 = vmul.f32 %v997, %v1005
        %v1013 = vmul.f32 %v998, %v1009
        %v1014 = vadd.f32 %v854, %v1012
        %v1015 = vadd.f32 %v855, %v1013
        %1016 = vrot.lane.b32.xlu0 %v493, 29
        %v1017 = vpop.permute.xlu0 %1016
        %1018 = vrot.lane.b32.xlu0 %v494, 29
        %v1019 = vpop.permute.xlu0 %1018
        %vm1020 = vcmp.lt.s32.totalorder %v500, 29
        %v1021 = vsel %vm1020, %v1017, %v1019
        %v1022 = vsel %vm1020, %v1019, %v1017
        %s1023 = sld [smem:[#allocation2 + $0xd]]
        %v1024 = vstv %s1023
        %v1025 = vmul.f32 %v1024, %v1022
        %v1026 = vmul.f32 %v1024, %v1021
        %s1027 = sld [smem:[#allocation2 + $0x3e]]
        %v1028 = vstv %s1027
        %v1029 = vmul.f32 %v1028, %v1022
        %v1030 = vmul.f32 %v1028, %v1021
        %v1033 = vrot.slane %v1029, 1
        %v1034 = vrot.slane %v1030, 1
        %v1037 = vadd.f32 %v1025, %v1033
        %v1038 = vadd.f32 %v1026, %v1034
        %s1039 = scalar_lea.vmem %s3, 26
        %v1040 = vld [vmem:[%s1039] sm:$0x3]
        %v1042 = vlaneseq
        %v1043 = vshrl.u32 %v1042, 7
        %v1044 = vsub.s32 0, %v1043
        %v1045 = vrot.slane %v1040, %v1044
        %v1046 = vlaneseq
        %v1047 = vshrl.u32 %v1046, 7
        %v1048 = vsub.s32 1, %v1047
        %v1049 = vrot.slane %v1040, %v1048
        %v1052 = vmul.f32 %v1037, %v1045
        %v1053 = vmul.f32 %v1038, %v1049
        %v1054 = vadd.f32 %v894, %v1052
        %v1055 = vadd.f32 %v895, %v1053
        %1056 = vrot.lane.b32.xlu0 %v493, 19
        %v1057 = vpop.permute.xlu0 %1056
        %1058 = vrot.lane.b32.xlu0 %v494, 19
        %v1059 = vpop.permute.xlu0 %1058
        %vm1060 = vcmp.lt.s32.totalorder %v500, 19
        %v1061 = vsel %vm1060, %v1057, %v1059
        %v1062 = vsel %vm1060, %v1059, %v1057
        %s1063 = sld [smem:[#allocation2 + $0xe]]
        %v1064 = vstv %s1063
        %v1065 = vmul.f32 %v1064, %v1062
        %v1066 = vmul.f32 %v1064, %v1061
        %s1067 = sld [smem:[#allocation2 + $0x3f]]
        %v1068 = vstv %s1067
        %v1069 = vmul.f32 %v1068, %v1062
        %v1070 = vmul.f32 %v1068, %v1061
        %v1073 = vrot.slane %v1069, 1
        %v1074 = vrot.slane %v1070, 1
        %v1077 = vadd.f32 %v1065, %v1073
        %v1078 = vadd.f32 %v1066, %v1074
        %s1079 = scalar_lea.vmem %s3, 28
        %v1080 = vld [vmem:[%s1079] sm:$0x3]
        %v1082 = vlaneseq
        %v1083 = vshrl.u32 %v1082, 7
        %v1084 = vsub.s32 0, %v1083
        %v1085 = vrot.slane %v1080, %v1084
        %v1086 = vlaneseq
        %v1087 = vshrl.u32 %v1086, 7
        %v1088 = vsub.s32 1, %v1087
        %v1089 = vrot.slane %v1080, %v1088
        %v1092 = vmul.f32 %v1077, %v1085
        %v1093 = vmul.f32 %v1078, %v1089
        %v1094 = vadd.f32 %v934, %v1092
        %v1095 = vadd.f32 %v935, %v1093
        %1096 = vrot.lane.b32.xlu0 %v493, 18
        %v1097 = vpop.permute.xlu0 %1096
        %1098 = vrot.lane.b32.xlu0 %v494, 18
        %v1099 = vpop.permute.xlu0 %1098
        %vm1100 = vcmp.lt.s32.totalorder %v500, 18
        %v1101 = vsel %vm1100, %v1097, %v1099
        %v1102 = vsel %vm1100, %v1099, %v1097
        %s1103 = sld [smem:[#allocation2 + $0xf]]
        %v1104 = vstv %s1103
        %v1105 = vmul.f32 %v1104, %v1102
        %v1106 = vmul.f32 %v1104, %v1101
        %s1107 = sld [smem:[#allocation2 + $0x40]]
        %v1108 = vstv %s1107
        %v1109 = vmul.f32 %v1108, %v1102
        %v1110 = vmul.f32 %v1108, %v1101
        %v1113 = vrot.slane %v1109, 1
        %v1114 = vrot.slane %v1110, 1
        %v1117 = vadd.f32 %v1105, %v1113
        %v1118 = vadd.f32 %v1106, %v1114
        %s1119 = scalar_lea.vmem %s3, 30
        %v1120 = vld [vmem:[%s1119] sm:$0x3]
        %v1122 = vlaneseq
        %v1123 = vshrl.u32 %v1122, 7
        %v1124 = vsub.s32 0, %v1123
        %v1125 = vrot.slane %v1120, %v1124
        %v1126 = vlaneseq
        %v1127 = vshrl.u32 %v1126, 7
        %v1128 = vsub.s32 1, %v1127
        %v1129 = vrot.slane %v1120, %v1128
        %v1132 = vmul.f32 %v1117, %v1125
        %v1133 = vmul.f32 %v1118, %v1129
        %v1134 = vadd.f32 %v974, %v1132
        %v1135 = vadd.f32 %v975, %v1133
        %1136 = vrot.lane.b32.xlu0 %v493, 17
        %v1137 = vpop.permute.xlu0 %1136
        %1138 = vrot.lane.b32.xlu0 %v494, 17
        %v1139 = vpop.permute.xlu0 %1138
        %vm1140 = vcmp.lt.s32.totalorder %v500, 17
        %v1141 = vsel %vm1140, %v1137, %v1139
        %v1142 = vsel %vm1140, %v1139, %v1137
        %s1143 = sld [smem:[#allocation2 + $0x10]]
        %v1144 = vstv %s1143
        %v1145 = vmul.f32 %v1144, %v1142
        %v1146 = vmul.f32 %v1144, %v1141
        %s1147 = sld [smem:[#allocation2 + $0x41]]
        %v1148 = vstv %s1147
        %v1149 = vmul.f32 %v1148, %v1142
        %v1150 = vmul.f32 %v1148, %v1141
        %v1153 = vrot.slane %v1149, 1
        %v1154 = vrot.slane %v1150, 1
        %v1157 = vadd.f32 %v1145, %v1153
        %v1158 = vadd.f32 %v1146, %v1154
        %s1159 = scalar_lea.vmem %s3, 32
        %v1160 = vld [vmem:[%s1159] sm:$0x3]
        %v1162 = vlaneseq
        %v1163 = vshrl.u32 %v1162, 7
        %v1164 = vsub.s32 0, %v1163
        %v1165 = vrot.slane %v1160, %v1164
        %v1166 = vlaneseq
        %v1167 = vshrl.u32 %v1166, 7
        %v1168 = vsub.s32 1, %v1167
        %v1169 = vrot.slane %v1160, %v1168
        %v1172 = vmul.f32 %v1157, %v1165
        %v1173 = vmul.f32 %v1158, %v1169
        %v1174 = vadd.f32 %v1014, %v1172
        %v1175 = vadd.f32 %v1015, %v1173
        %1176 = vrot.lane.b32.xlu0 %v493, 16
        %v1177 = vpop.permute.xlu0 %1176
        %1178 = vrot.lane.b32.xlu0 %v494, 16
        %v1179 = vpop.permute.xlu0 %1178
        %vm1180 = vcmp.lt.s32.totalorder %v500, 16
        %v1181 = vsel %vm1180, %v1177, %v1179
        %v1182 = vsel %vm1180, %v1179, %v1177
        %s1183 = sld [smem:[#allocation2 + $0x11]]
        %v1184 = vstv %s1183
        %v1185 = vmul.f32 %v1184, %v1182
        %v1186 = vmul.f32 %v1184, %v1181
        %s1187 = sld [smem:[#allocation2 + $0x42]]
        %v1188 = vstv %s1187
        %v1189 = vmul.f32 %v1188, %v1182
        %v1190 = vmul.f32 %v1188, %v1181
        %v1193 = vrot.slane %v1189, 1
        %v1194 = vrot.slane %v1190, 1
        %v1197 = vadd.f32 %v1185, %v1193
        %v1198 = vadd.f32 %v1186, %v1194
        %s1199 = scalar_lea.vmem %s3, 34
        %v1200 = vld [vmem:[%s1199] sm:$0x3]
        %v1202 = vlaneseq
        %v1203 = vshrl.u32 %v1202, 7
        %v1204 = vsub.s32 0, %v1203
        %v1205 = vrot.slane %v1200, %v1204
        %v1206 = vlaneseq
        %v1207 = vshrl.u32 %v1206, 7
        %v1208 = vsub.s32 1, %v1207
        %v1209 = vrot.slane %v1200, %v1208
        %v1212 = vmul.f32 %v1197, %v1205
        %v1213 = vmul.f32 %v1198, %v1209
        %v1214 = vadd.f32 %v1054, %v1212
        %v1215 = vadd.f32 %v1055, %v1213
        %1216 = vrot.lane.b32.xlu0 %v493, 15
        %v1217 = vpop.permute.xlu0 %1216
        %1218 = vrot.lane.b32.xlu0 %v494, 15
        %v1219 = vpop.permute.xlu0 %1218
        %vm1220 = vcmp.lt.s32.totalorder %v500, 15
        %v1221 = vsel %vm1220, %v1217, %v1219
        %v1222 = vsel %vm1220, %v1219, %v1217
        %s1223 = sld [smem:[#allocation2 + $0x12]]
        %v1224 = vstv %s1223
        %v1225 = vmul.f32 %v1224, %v1222
        %v1226 = vmul.f32 %v1224, %v1221
        %s1227 = sld [smem:[#allocation2 + $0x43]]
        %v1228 = vstv %s1227
        %v1229 = vmul.f32 %v1228, %v1222
        %v1230 = vmul.f32 %v1228, %v1221
        %v1233 = vrot.slane %v1229, 1
        %v1234 = vrot.slane %v1230, 1
        %v1237 = vadd.f32 %v1225, %v1233
        %v1238 = vadd.f32 %v1226, %v1234
        %s1239 = scalar_lea.vmem %s3, 36
        %v1240 = vld [vmem:[%s1239] sm:$0x3]
        %v1242 = vlaneseq
        %v1243 = vshrl.u32 %v1242, 7
        %v1244 = vsub.s32 0, %v1243
        %v1245 = vrot.slane %v1240, %v1244
        %v1246 = vlaneseq
        %v1247 = vshrl.u32 %v1246, 7
        %v1248 = vsub.s32 1, %v1247
        %v1249 = vrot.slane %v1240, %v1248
        %v1252 = vmul.f32 %v1237, %v1245
        %v1253 = vmul.f32 %v1238, %v1249
        %v1254 = vadd.f32 %v1094, %v1252
        %v1255 = vadd.f32 %v1095, %v1253
        %1256 = vrot.lane.b32.xlu0 %v493, 14
        %v1257 = vpop.permute.xlu0 %1256
        %1258 = vrot.lane.b32.xlu0 %v494, 14
        %v1259 = vpop.permute.xlu0 %1258
        %vm1260 = vcmp.lt.s32.totalorder %v500, 14
        %v1261 = vsel %vm1260, %v1257, %v1259
        %v1262 = vsel %vm1260, %v1259, %v1257
        %s1263 = sld [smem:[#allocation2 + $0x13]]
        %v1264 = vstv %s1263
        %v1265 = vmul.f32 %v1264, %v1262
        %v1266 = vmul.f32 %v1264, %v1261
        %s1267 = sld [smem:[#allocation2 + $0x44]]
        %v1268 = vstv %s1267
        %v1269 = vmul.f32 %v1268, %v1262
        %v1270 = vmul.f32 %v1268, %v1261
        %v1273 = vrot.slane %v1269, 1
        %v1274 = vrot.slane %v1270, 1
        %v1277 = vadd.f32 %v1265, %v1273
        %v1278 = vadd.f32 %v1266, %v1274
        %s1279 = scalar_lea.vmem %s3, 38
        %v1280 = vld [vmem:[%s1279] sm:$0x3]
        %v1282 = vlaneseq
        %v1283 = vshrl.u32 %v1282, 7
        %v1284 = vsub.s32 0, %v1283
        %v1285 = vrot.slane %v1280, %v1284
        %v1286 = vlaneseq
        %v1287 = vshrl.u32 %v1286, 7
        %v1288 = vsub.s32 1, %v1287
        %v1289 = vrot.slane %v1280, %v1288
        %v1292 = vmul.f32 %v1277, %v1285
        %v1293 = vmul.f32 %v1278, %v1289
        %v1294 = vadd.f32 %v1134, %v1292
        %v1295 = vadd.f32 %v1135, %v1293
        %1296 = vrot.lane.b32.xlu0 %v493, 13
        %v1297 = vpop.permute.xlu0 %1296
        %1298 = vrot.lane.b32.xlu0 %v494, 13
        %v1299 = vpop.permute.xlu0 %1298
        %vm1300 = vcmp.lt.s32.totalorder %v500, 13
        %v1301 = vsel %vm1300, %v1297, %v1299
        %v1302 = vsel %vm1300, %v1299, %v1297
        %s1303 = sld [smem:[#allocation2 + $0x14]]
        %v1304 = vstv %s1303
        %v1305 = vmul.f32 %v1304, %v1302
        %v1306 = vmul.f32 %v1304, %v1301
        %s1307 = sld [smem:[#allocation2 + $0x45]]
        %v1308 = vstv %s1307
        %v1309 = vmul.f32 %v1308, %v1302
        %v1310 = vmul.f32 %v1308, %v1301
        %v1313 = vrot.slane %v1309, 1
        %v1314 = vrot.slane %v1310, 1
        %v1317 = vadd.f32 %v1305, %v1313
        %v1318 = vadd.f32 %v1306, %v1314
        %s1319 = scalar_lea.vmem %s3, 40
        %v1320 = vld [vmem:[%s1319] sm:$0x3]
        %v1322 = vlaneseq
        %v1323 = vshrl.u32 %v1322, 7
        %v1324 = vsub.s32 0, %v1323
        %v1325 = vrot.slane %v1320, %v1324
        %v1326 = vlaneseq
        %v1327 = vshrl.u32 %v1326, 7
        %v1328 = vsub.s32 1, %v1327
        %v1329 = vrot.slane %v1320, %v1328
        %v1332 = vmul.f32 %v1317, %v1325
        %v1333 = vmul.f32 %v1318, %v1329
        %v1334 = vadd.f32 %v1174, %v1332
        %v1335 = vadd.f32 %v1175, %v1333
        %1336 = vrot.lane.b32.xlu0 %v493, 3
        %v1337 = vpop.permute.xlu0 %1336
        %1338 = vrot.lane.b32.xlu0 %v494, 3
        %v1339 = vpop.permute.xlu0 %1338
        %vm1340 = vcmp.lt.s32.totalorder %v500, 3
        %v1341 = vsel %vm1340, %v1337, %v1339
        %v1342 = vsel %vm1340, %v1339, %v1337
        %s1343 = sld [smem:[#allocation2 + $0x15]]
        %v1344 = vstv %s1343
        %v1345 = vmul.f32 %v1344, %v1342
        %v1346 = vmul.f32 %v1344, %v1341
        %s1347 = sld [smem:[#allocation2 + $0x46]]
        %v1348 = vstv %s1347
        %v1349 = vmul.f32 %v1348, %v1342
        %v1350 = vmul.f32 %v1348, %v1341
        %v1353 = vrot.slane %v1349, 1
        %v1354 = vrot.slane %v1350, 1
        %v1357 = vadd.f32 %v1345, %v1353
        %v1358 = vadd.f32 %v1346, %v1354
        %s1359 = scalar_lea.vmem %s3, 42
        %v1360 = vld [vmem:[%s1359] sm:$0x3]
        %v1362 = vlaneseq
        %v1363 = vshrl.u32 %v1362, 7
        %v1364 = vsub.s32 0, %v1363
        %v1365 = vrot.slane %v1360, %v1364
        %v1366 = vlaneseq
        %v1367 = vshrl.u32 %v1366, 7
        %v1368 = vsub.s32 1, %v1367
        %v1369 = vrot.slane %v1360, %v1368
        %v1372 = vmul.f32 %v1357, %v1365
        %v1373 = vmul.f32 %v1358, %v1369
        %v1374 = vadd.f32 %v1214, %v1372
        %v1375 = vadd.f32 %v1215, %v1373
        %1376 = vrot.lane.b32.xlu0 %v493, 2
        %v1377 = vpop.permute.xlu0 %1376
        %1378 = vrot.lane.b32.xlu0 %v494, 2
        %v1379 = vpop.permute.xlu0 %1378
        %vm1380 = vcmp.lt.s32.totalorder %v500, 2
        %v1381 = vsel %vm1380, %v1377, %v1379
        %v1382 = vsel %vm1380, %v1379, %v1377
        %s1383 = sld [smem:[#allocation2 + $0x16]]
        %v1384 = vstv %s1383
        %v1385 = vmul.f32 %v1384, %v1382
        %v1386 = vmul.f32 %v1384, %v1381
        %s1387 = sld [smem:[#allocation2 + $0x47]]
        %v1388 = vstv %s1387
        %v1389 = vmul.f32 %v1388, %v1382
        %v1390 = vmul.f32 %v1388, %v1381
        %v1393 = vrot.slane %v1389, 1
        %v1394 = vrot.slane %v1390, 1
        %v1397 = vadd.f32 %v1385, %v1393
        %v1398 = vadd.f32 %v1386, %v1394
        %s1399 = scalar_lea.vmem %s3, 44
        %v1400 = vld [vmem:[%s1399] sm:$0x3]
        %v1402 = vlaneseq
        %v1403 = vshrl.u32 %v1402, 7
        %v1404 = vsub.s32 0, %v1403
        %v1405 = vrot.slane %v1400, %v1404
        %v1406 = vlaneseq
        %v1407 = vshrl.u32 %v1406, 7
        %v1408 = vsub.s32 1, %v1407
        %v1409 = vrot.slane %v1400, %v1408
        %v1412 = vmul.f32 %v1397, %v1405
        %v1413 = vmul.f32 %v1398, %v1409
        %v1414 = vadd.f32 %v1254, %v1412
        %v1415 = vadd.f32 %v1255, %v1413
        %1416 = vrot.lane.b32.xlu0 %v493, 1
        %v1417 = vpop.permute.xlu0 %1416
        %1418 = vrot.lane.b32.xlu0 %v494, 1
        %v1419 = vpop.permute.xlu0 %1418
        %vm1420 = vcmp.lt.s32.totalorder %v500, 1
        %v1421 = vsel %vm1420, %v1417, %v1419
        %v1422 = vsel %vm1420, %v1419, %v1417
        %s1423 = sld [smem:[#allocation2 + $0x17]]
        %v1424 = vstv %s1423
        %v1425 = vmul.f32 %v1424, %v1422
        %v1426 = vmul.f32 %v1424, %v1421
        %s1427 = sld [smem:[#allocation2 + $0x48]]
        %v1428 = vstv %s1427
        %v1429 = vmul.f32 %v1428, %v1422
        %v1430 = vmul.f32 %v1428, %v1421
        %v1433 = vrot.slane %v1429, 1
        %v1434 = vrot.slane %v1430, 1
        %v1437 = vadd.f32 %v1425, %v1433
        %v1438 = vadd.f32 %v1426, %v1434
        %s1439 = scalar_lea.vmem %s3, 46
        %v1440 = vld [vmem:[%s1439] sm:$0x3]
        %v1442 = vlaneseq
        %v1443 = vshrl.u32 %v1442, 7
        %v1444 = vsub.s32 0, %v1443
        %v1445 = vrot.slane %v1440, %v1444
        %v1446 = vlaneseq
        %v1447 = vshrl.u32 %v1446, 7
        %v1448 = vsub.s32 1, %v1447
        %v1449 = vrot.slane %v1440, %v1448
        %v1452 = vmul.f32 %v1437, %v1445
        %v1453 = vmul.f32 %v1438, %v1449
        %v1454 = vadd.f32 %v1294, %v1452
        %v1455 = vadd.f32 %v1295, %v1453
        %s1456 = sld [smem:[#allocation2 + $0x18]]
        %v1457 = vstv %s1456
        %v1458 = vmul.f32 %v1457, %v493
        %v1459 = vmul.f32 %v1457, %v494
        %s1460 = sld [smem:[#allocation2 + $0x49]]
        %v1461 = vstv %s1460
        %v1462 = vmul.f32 %v1461, %v493
        %v1463 = vmul.f32 %v1461, %v494
        %v1466 = vrot.slane %v1462, 1
        %v1467 = vrot.slane %v1463, 1
        %v1470 = vadd.f32 %v1458, %v1466
        %v1471 = vadd.f32 %v1459, %v1467
        %s1472 = scalar_lea.vmem %s3, 48
        %v1473 = vld [vmem:[%s1472] sm:$0x3]
        %v1475 = vlaneseq
        %v1476 = vshrl.u32 %v1475, 7
        %v1477 = vsub.s32 0, %v1476
        %v1478 = vrot.slane %v1473, %v1477
        %v1479 = vlaneseq
        %v1480 = vshrl.u32 %v1479, 7
        %v1481 = vsub.s32 1, %v1480
        %v1482 = vrot.slane %v1473, %v1481
        %v1485 = vmul.f32 %v1470, %v1478
        %v1486 = vmul.f32 %v1471, %v1482
        %v1487 = vadd.f32 %v1334, %v1485
        %v1488 = vadd.f32 %v1335, %v1486
        %1489 = vrot.lane.b32.xlu0 %v493, 127
        %v1490 = vpop.permute.xlu0 %1489
        %1491 = vrot.lane.b32.xlu0 %v494, 127
        %v1492 = vpop.permute.xlu0 %1491
        %vm1493 = vcmp.lt.s32.totalorder %v500, 127
        %v1494 = vsel %vm1493, %v1490, %v1492
        %v1495 = vsel %vm1493, %v1492, %v1490
        %s1496 = sld [smem:[#allocation2 + $0x19]]
        %v1497 = vstv %s1496
        %v1498 = vmul.f32 %v1497, %v1494
        %v1499 = vmul.f32 %v1497, %v1495
        %s1500 = sld [smem:[#allocation2 + $0x4a]]
        %v1501 = vstv %s1500
        %v1502 = vmul.f32 %v1501, %v1494
        %v1503 = vmul.f32 %v1501, %v1495
        %v1506 = vrot.slane %v1502, 1
        %v1507 = vrot.slane %v1503, 1
        %v1510 = vadd.f32 %v1498, %v1506
        %v1511 = vadd.f32 %v1499, %v1507
        %s1512 = scalar_lea.vmem %s3, 50
        %v1513 = vld [vmem:[%s1512] sm:$0x3]
        %v1515 = vlaneseq
        %v1516 = vshrl.u32 %v1515, 7
        %v1517 = vsub.s32 0, %v1516
        %v1518 = vrot.slane %v1513, %v1517
        %v1519 = vlaneseq
        %v1520 = vshrl.u32 %v1519, 7
        %v1521 = vsub.s32 1, %v1520
        %v1522 = vrot.slane %v1513, %v1521
        %v1525 = vmul.f32 %v1510, %v1518
        %v1526 = vmul.f32 %v1511, %v1522
        %v1527 = vadd.f32 %v1374, %v1525
        %v1528 = vadd.f32 %v1375, %v1526
        %1529 = vrot.lane.b32.xlu0 %v493, 126
        %v1530 = vpop.permute.xlu0 %1529
        %1531 = vrot.lane.b32.xlu0 %v494, 126
        %v1532 = vpop.permute.xlu0 %1531
        %vm1533 = vcmp.lt.s32.totalorder %v500, 126
        %v1534 = vsel %vm1533, %v1530, %v1532
        %v1535 = vsel %vm1533, %v1532, %v1530
        %s1536 = sld [smem:[#allocation2 + $0x1a]]
        %v1537 = vstv %s1536
        %v1538 = vmul.f32 %v1537, %v1534
        %v1539 = vmul.f32 %v1537, %v1535
        %s1540 = sld [smem:[#allocation2 + $0x4b]]
        %v1541 = vstv %s1540
        %v1542 = vmul.f32 %v1541, %v1534
        %v1543 = vmul.f32 %v1541, %v1535
        %v1546 = vrot.slane %v1542, 1
        %v1547 = vrot.slane %v1543, 1
        %v1550 = vadd.f32 %v1538, %v1546
        %v1551 = vadd.f32 %v1539, %v1547
        %s1552 = scalar_lea.vmem %s3, 52
        %v1553 = vld [vmem:[%s1552] sm:$0x3]
        %v1555 = vlaneseq
        %v1556 = vshrl.u32 %v1555, 7
        %v1557 = vsub.s32 0, %v1556
        %v1558 = vrot.slane %v1553, %v1557
        %v1559 = vlaneseq
        %v1560 = vshrl.u32 %v1559, 7
        %v1561 = vsub.s32 1, %v1560
        %v1562 = vrot.slane %v1553, %v1561
        %v1565 = vmul.f32 %v1550, %v1558
        %v1566 = vmul.f32 %v1551, %v1562
        %v1567 = vadd.f32 %v1414, %v1565
        %v1568 = vadd.f32 %v1415, %v1566
        %1569 = vrot.lane.b32.xlu0 %v493, 125
        %v1570 = vpop.permute.xlu0 %1569
        %1571 = vrot.lane.b32.xlu0 %v494, 125
        %v1572 = vpop.permute.xlu0 %1571
        %vm1573 = vcmp.lt.s32.totalorder %v500, 125
        %v1574 = vsel %vm1573, %v1570, %v1572
        %v1575 = vsel %vm1573, %v1572, %v1570
        %s1576 = sld [smem:[#allocation2 + $0x1b]]
        %v1577 = vstv %s1576
        %v1578 = vmul.f32 %v1577, %v1574
        %v1579 = vmul.f32 %v1577, %v1575
        %s1580 = sld [smem:[#allocation2 + $0x4c]]
        %v1581 = vstv %s1580
        %v1582 = vmul.f32 %v1581, %v1574
        %v1583 = vmul.f32 %v1581, %v1575
        %v1586 = vrot.slane %v1582, 1
        %v1587 = vrot.slane %v1583, 1
        %v1590 = vadd.f32 %v1578, %v1586
        %v1591 = vadd.f32 %v1579, %v1587
        %s1592 = scalar_lea.vmem %s3, 54
        %v1593 = vld [vmem:[%s1592] sm:$0x3]
        %v1595 = vlaneseq
        %v1596 = vshrl.u32 %v1595, 7
        %v1597 = vsub.s32 0, %v1596
        %v1598 = vrot.slane %v1593, %v1597
        %v1599 = vlaneseq
        %v1600 = vshrl.u32 %v1599, 7
        %v1601 = vsub.s32 1, %v1600
        %v1602 = vrot.slane %v1593, %v1601
        %v1605 = vmul.f32 %v1590, %v1598
        %v1606 = vmul.f32 %v1591, %v1602
        %v1607 = vadd.f32 %v1454, %v1605
        %v1608 = vadd.f32 %v1455, %v1606
        %1609 = vrot.lane.b32.xlu0 %v493, 115
        %v1610 = vpop.permute.xlu0 %1609
        %1611 = vrot.lane.b32.xlu0 %v494, 115
        %v1612 = vpop.permute.xlu0 %1611
        %vm1613 = vcmp.lt.s32.totalorder %v500, 115
        %v1614 = vsel %vm1613, %v1610, %v1612
        %v1615 = vsel %vm1613, %v1612, %v1610
        %s1616 = sld [smem:[#allocation2 + $0x1c]]
        %v1617 = vstv %s1616
        %v1618 = vmul.f32 %v1617, %v1614
        %v1619 = vmul.f32 %v1617, %v1615
        %s1620 = sld [smem:[#allocation2 + $0x4d]]
        %v1621 = vstv %s1620
        %v1622 = vmul.f32 %v1621, %v1614
        %v1623 = vmul.f32 %v1621, %v1615
        %v1626 = vrot.slane %v1622, 1
        %v1627 = vrot.slane %v1623, 1
        %v1630 = vadd.f32 %v1618, %v1626
        %v1631 = vadd.f32 %v1619, %v1627
        %s1632 = scalar_lea.vmem %s3, 56
        %v1633 = vld [vmem:[%s1632] sm:$0x3]
        %v1635 = vlaneseq
        %v1636 = vshrl.u32 %v1635, 7
        %v1637 = vsub.s32 0, %v1636
        %v1638 = vrot.slane %v1633, %v1637
        %v1639 = vlaneseq
        %v1640 = vshrl.u32 %v1639, 7
        %v1641 = vsub.s32 1, %v1640
        %v1642 = vrot.slane %v1633, %v1641
        %v1645 = vmul.f32 %v1630, %v1638
        %v1646 = vmul.f32 %v1631, %v1642
        %v1647 = vadd.f32 %v1487, %v1645
        %v1648 = vadd.f32 %v1488, %v1646
        %1649 = vrot.lane.b32.xlu0 %v493, 114
        %v1650 = vpop.permute.xlu0 %1649
        %1651 = vrot.lane.b32.xlu0 %v494, 114
        %v1652 = vpop.permute.xlu0 %1651
        %vm1653 = vcmp.lt.s32.totalorder %v500, 114
        %v1654 = vsel %vm1653, %v1650, %v1652
        %v1655 = vsel %vm1653, %v1652, %v1650
        %s1656 = sld [smem:[#allocation2 + $0x1d]]
        %v1657 = vstv %s1656
        %v1658 = vmul.f32 %v1657, %v1654
        %v1659 = vmul.f32 %v1657, %v1655
        %s1660 = sld [smem:[#allocation2 + $0x4e]]
        %v1661 = vstv %s1660
        %v1662 = vmul.f32 %v1661, %v1654
        %v1663 = vmul.f32 %v1661, %v1655
        %v1666 = vrot.slane %v1662, 1
        %v1667 = vrot.slane %v1663, 1
        %v1670 = vadd.f32 %v1658, %v1666
        %v1671 = vadd.f32 %v1659, %v1667
        %s1672 = scalar_lea.vmem %s3, 58
        %v1673 = vld [vmem:[%s1672] sm:$0x3]
        %v1675 = vlaneseq
        %v1676 = vshrl.u32 %v1675, 7
        %v1677 = vsub.s32 0, %v1676
        %v1678 = vrot.slane %v1673, %v1677
        %v1679 = vlaneseq
        %v1680 = vshrl.u32 %v1679, 7
        %v1681 = vsub.s32 1, %v1680
        %v1682 = vrot.slane %v1673, %v1681
        %v1685 = vmul.f32 %v1670, %v1678
        %v1686 = vmul.f32 %v1671, %v1682
        %v1687 = vadd.f32 %v1527, %v1685
        %v1688 = vadd.f32 %v1528, %v1686
        %1689 = vrot.lane.b32.xlu0 %v493, 113
        %v1690 = vpop.permute.xlu0 %1689
        %1691 = vrot.lane.b32.xlu0 %v494, 113
        %v1692 = vpop.permute.xlu0 %1691
        %vm1693 = vcmp.lt.s32.totalorder %v500, 113
        %v1694 = vsel %vm1693, %v1690, %v1692
        %v1695 = vsel %vm1693, %v1692, %v1690
        %s1696 = sld [smem:[#allocation2 + $0x1e]]
        %v1697 = vstv %s1696
        %v1698 = vmul.f32 %v1697, %v1694
        %v1699 = vmul.f32 %v1697, %v1695
        %s1700 = sld [smem:[#allocation2 + $0x4f]]
        %v1701 = vstv %s1700
        %v1702 = vmul.f32 %v1701, %v1694
        %v1703 = vmul.f32 %v1701, %v1695
        %v1706 = vrot.slane %v1702, 1
        %v1707 = vrot.slane %v1703, 1
        %v1710 = vadd.f32 %v1698, %v1706
        %v1711 = vadd.f32 %v1699, %v1707
        %s1712 = scalar_lea.vmem %s3, 60
        %v1713 = vld [vmem:[%s1712] sm:$0x3]
        %v1715 = vlaneseq
        %v1716 = vshrl.u32 %v1715, 7
        %v1717 = vsub.s32 0, %v1716
        %v1718 = vrot.slane %v1713, %v1717
        %v1719 = vlaneseq
        %v1720 = vshrl.u32 %v1719, 7
        %v1721 = vsub.s32 1, %v1720
        %v1722 = vrot.slane %v1713, %v1721
        %v1725 = vmul.f32 %v1710, %v1718
        %v1726 = vmul.f32 %v1711, %v1722
        %v1727 = vadd.f32 %v1567, %v1725
        %v1728 = vadd.f32 %v1568, %v1726
        %1729 = vrot.lane.b32.xlu0 %v493, 112
        %v1730 = vpop.permute.xlu0 %1729
        %1731 = vrot.lane.b32.xlu0 %v494, 112
        %v1732 = vpop.permute.xlu0 %1731
        %vm1733 = vcmp.lt.s32.totalorder %v500, 112
        %v1734 = vsel %vm1733, %v1730, %v1732
        %v1735 = vsel %vm1733, %v1732, %v1730
        %s1736 = sld [smem:[#allocation2 + $0x1f]]
        %v1737 = vstv %s1736
        %v1738 = vmul.f32 %v1737, %v1734
        %v1739 = vmul.f32 %v1737, %v1735
        %s1740 = sld [smem:[#allocation2 + $0x50]]
        %v1741 = vstv %s1740
        %v1742 = vmul.f32 %v1741, %v1734
        %v1743 = vmul.f32 %v1741, %v1735
        %v1746 = vrot.slane %v1742, 1
        %v1747 = vrot.slane %v1743, 1
        %v1750 = vadd.f32 %v1738, %v1746
        %v1751 = vadd.f32 %v1739, %v1747
        %s1752 = scalar_lea.vmem %s3, 62
        %v1753 = vld [vmem:[%s1752] sm:$0x3]
        %v1755 = vlaneseq
        %v1756 = vshrl.u32 %v1755, 7
        %v1757 = vsub.s32 0, %v1756
        %v1758 = vrot.slane %v1753, %v1757
        %v1759 = vlaneseq
        %v1760 = vshrl.u32 %v1759, 7
        %v1761 = vsub.s32 1, %v1760
        %v1762 = vrot.slane %v1753, %v1761
        %v1765 = vmul.f32 %v1750, %v1758
        %v1766 = vmul.f32 %v1751, %v1762
        %v1767 = vadd.f32 %v1607, %v1765
        %v1768 = vadd.f32 %v1608, %v1766
        %1769 = vrot.lane.b32.xlu0 %v493, 111
        %v1770 = vpop.permute.xlu0 %1769
        %1771 = vrot.lane.b32.xlu0 %v494, 111
        %v1772 = vpop.permute.xlu0 %1771
        %vm1773 = vcmp.lt.s32.totalorder %v500, 111
        %v1774 = vsel %vm1773, %v1770, %v1772
        %v1775 = vsel %vm1773, %v1772, %v1770
        %s1776 = sld [smem:[#allocation2 + $0x20]]
        %v1777 = vstv %s1776
        %v1778 = vmul.f32 %v1777, %v1774
        %v1779 = vmul.f32 %v1777, %v1775
        %s1780 = sld [smem:[#allocation2 + $0x51]]
        %v1781 = vstv %s1780
        %v1782 = vmul.f32 %v1781, %v1774
        %v1783 = vmul.f32 %v1781, %v1775
        %v1786 = vrot.slane %v1782, 1
        %v1787 = vrot.slane %v1783, 1
        %v1790 = vadd.f32 %v1778, %v1786
        %v1791 = vadd.f32 %v1779, %v1787
        %s1792 = scalar_lea.vmem %s3, 64
        %v1793 = vld [vmem:[%s1792] sm:$0x3]
        %v1795 = vlaneseq
        %v1796 = vshrl.u32 %v1795, 7
        %v1797 = vsub.s32 0, %v1796
        %v1798 = vrot.slane %v1793, %v1797
        %v1799 = vlaneseq
        %v1800 = vshrl.u32 %v1799, 7
        %v1801 = vsub.s32 1, %v1800
        %v1802 = vrot.slane %v1793, %v1801
        %v1805 = vmul.f32 %v1790, %v1798
        %v1806 = vmul.f32 %v1791, %v1802
        %v1807 = vadd.f32 %v1647, %v1805
        %v1808 = vadd.f32 %v1648, %v1806
        %1809 = vrot.lane.b32.xlu0 %v493, 110
        %v1810 = vpop.permute.xlu0 %1809
        %1811 = vrot.lane.b32.xlu0 %v494, 110
        %v1812 = vpop.permute.xlu0 %1811
        %vm1813 = vcmp.lt.s32.totalorder %v500, 110
        %v1814 = vsel %vm1813, %v1810, %v1812
        %v1815 = vsel %vm1813, %v1812, %v1810
        %s1816 = sld [smem:[#allocation2 + $0x21]]
        %v1817 = vstv %s1816
        %v1818 = vmul.f32 %v1817, %v1814
        %v1819 = vmul.f32 %v1817, %v1815
        %s1820 = sld [smem:[#allocation2 + $0x52]]
        %v1821 = vstv %s1820
        %v1822 = vmul.f32 %v1821, %v1814
        %v1823 = vmul.f32 %v1821, %v1815
        %v1826 = vrot.slane %v1822, 1
        %v1827 = vrot.slane %v1823, 1
        %v1830 = vadd.f32 %v1818, %v1826
        %v1831 = vadd.f32 %v1819, %v1827
        %s1832 = scalar_lea.vmem %s3, 66
        %v1833 = vld [vmem:[%s1832] sm:$0x3]
        %v1835 = vlaneseq
        %v1836 = vshrl.u32 %v1835, 7
        %v1837 = vsub.s32 0, %v1836
        %v1838 = vrot.slane %v1833, %v1837
        %v1839 = vlaneseq
        %v1840 = vshrl.u32 %v1839, 7
        %v1841 = vsub.s32 1, %v1840
        %v1842 = vrot.slane %v1833, %v1841
        %v1845 = vmul.f32 %v1830, %v1838
        %v1846 = vmul.f32 %v1831, %v1842
        %v1847 = vadd.f32 %v1687, %v1845
        %v1848 = vadd.f32 %v1688, %v1846
        %1849 = vrot.lane.b32.xlu0 %v493, 109
        %v1850 = vpop.permute.xlu0 %1849
        %1851 = vrot.lane.b32.xlu0 %v494, 109
        %v1852 = vpop.permute.xlu0 %1851
        %vm1853 = vcmp.lt.s32.totalorder %v500, 109
        %v1854 = vsel %vm1853, %v1850, %v1852
        %v1855 = vsel %vm1853, %v1852, %v1850
        %s1856 = sld [smem:[#allocation2 + $0x22]]
        %v1857 = vstv %s1856
        %v1858 = vmul.f32 %v1857, %v1854
        %v1859 = vmul.f32 %v1857, %v1855
        %s1860 = sld [smem:[#allocation2 + $0x53]]
        %v1861 = vstv %s1860
        %v1862 = vmul.f32 %v1861, %v1854
        %v1863 = vmul.f32 %v1861, %v1855
        %v1866 = vrot.slane %v1862, 1
        %v1867 = vrot.slane %v1863, 1
        %v1870 = vadd.f32 %v1858, %v1866
        %v1871 = vadd.f32 %v1859, %v1867
        %s1872 = scalar_lea.vmem %s3, 68
        %v1873 = vld [vmem:[%s1872] sm:$0x3]
        %v1875 = vlaneseq
        %v1876 = vshrl.u32 %v1875, 7
        %v1877 = vsub.s32 0, %v1876
        %v1878 = vrot.slane %v1873, %v1877
        %v1879 = vlaneseq
        %v1880 = vshrl.u32 %v1879, 7
        %v1881 = vsub.s32 1, %v1880
        %v1882 = vrot.slane %v1873, %v1881
        %v1885 = vmul.f32 %v1870, %v1878
        %v1886 = vmul.f32 %v1871, %v1882
        %v1887 = vadd.f32 %v1727, %v1885
        %v1888 = vadd.f32 %v1728, %v1886
        %1889 = vrot.lane.b32.xlu0 %v493, 99
        %v1890 = vpop.permute.xlu0 %1889
        %1891 = vrot.lane.b32.xlu0 %v494, 99
        %v1892 = vpop.permute.xlu0 %1891
        %vm1893 = vcmp.lt.s32.totalorder %v500, 99
        %v1894 = vsel %vm1893, %v1890, %v1892
        %v1895 = vsel %vm1893, %v1892, %v1890
        %s1896 = sld [smem:[#allocation2 + $0x23]]
        %v1897 = vstv %s1896
        %v1898 = vmul.f32 %v1897, %v1894
        %v1899 = vmul.f32 %v1897, %v1895
        %s1900 = sld [smem:[#allocation2 + $0x54]]
        %v1901 = vstv %s1900
        %v1902 = vmul.f32 %v1901, %v1894
        %v1903 = vmul.f32 %v1901, %v1895
        %v1906 = vrot.slane %v1902, 1
        %v1907 = vrot.slane %v1903, 1
        %v1910 = vadd.f32 %v1898, %v1906
        %v1911 = vadd.f32 %v1899, %v1907
        %s1912 = scalar_lea.vmem %s3, 70
        %v1913 = vld [vmem:[%s1912] sm:$0x3]
        %v1915 = vlaneseq
        %v1916 = vshrl.u32 %v1915, 7
        %v1917 = vsub.s32 0, %v1916
        %v1918 = vrot.slane %v1913, %v1917
        %v1919 = vlaneseq
        %v1920 = vshrl.u32 %v1919, 7
        %v1921 = vsub.s32 1, %v1920
        %v1922 = vrot.slane %v1913, %v1921
        %v1925 = vmul.f32 %v1910, %v1918
        %v1926 = vmul.f32 %v1911, %v1922
        %v1927 = vadd.f32 %v1767, %v1925
        %v1928 = vadd.f32 %v1768, %v1926
        %1929 = vrot.lane.b32.xlu0 %v493, 98
        %v1930 = vpop.permute.xlu0 %1929
        %1931 = vrot.lane.b32.xlu0 %v494, 98
        %v1932 = vpop.permute.xlu0 %1931
        %vm1933 = vcmp.lt.s32.totalorder %v500, 98
        %v1934 = vsel %vm1933, %v1930, %v1932
        %v1935 = vsel %vm1933, %v1932, %v1930
        %s1936 = sld [smem:[#allocation2 + $0x24]]
        %v1937 = vstv %s1936
        %v1938 = vmul.f32 %v1937, %v1934
        %v1939 = vmul.f32 %v1937, %v1935
        %s1940 = sld [smem:[#allocation2 + $0x55]]
        %v1941 = vstv %s1940
        %v1942 = vmul.f32 %v1941, %v1934
        %v1943 = vmul.f32 %v1941, %v1935
        %v1946 = vrot.slane %v1942, 1
        %v1947 = vrot.slane %v1943, 1
        %v1950 = vadd.f32 %v1938, %v1946
        %v1951 = vadd.f32 %v1939, %v1947
        %s1952 = scalar_lea.vmem %s3, 72
        %v1953 = vld [vmem:[%s1952] sm:$0x3]
        %v1955 = vlaneseq
        %v1956 = vshrl.u32 %v1955, 7
        %v1957 = vsub.s32 0, %v1956
        %v1958 = vrot.slane %v1953, %v1957
        %v1959 = vlaneseq
        %v1960 = vshrl.u32 %v1959, 7
        %v1961 = vsub.s32 1, %v1960
        %v1962 = vrot.slane %v1953, %v1961
        %v1965 = vmul.f32 %v1950, %v1958
        %v1966 = vmul.f32 %v1951, %v1962
        %v1967 = vadd.f32 %v1807, %v1965
        %v1968 = vadd.f32 %v1808, %v1966
        %1969 = vrot.lane.b32.xlu0 %v493, 97
        %v1970 = vpop.permute.xlu0 %1969
        %1971 = vrot.lane.b32.xlu0 %v494, 97
        %v1972 = vpop.permute.xlu0 %1971
        %vm1973 = vcmp.lt.s32.totalorder %v500, 97
        %v1974 = vsel %vm1973, %v1970, %v1972
        %v1975 = vsel %vm1973, %v1972, %v1970
        %s1976 = sld [smem:[#allocation2 + $0x25]]
        %v1977 = vstv %s1976
        %v1978 = vmul.f32 %v1977, %v1974
        %v1979 = vmul.f32 %v1977, %v1975
        %s1980 = sld [smem:[#allocation2 + $0x56]]
        %v1981 = vstv %s1980
        %v1982 = vmul.f32 %v1981, %v1974
        %v1983 = vmul.f32 %v1981, %v1975
        %v1986 = vrot.slane %v1982, 1
        %v1987 = vrot.slane %v1983, 1
        %v1990 = vadd.f32 %v1978, %v1986
        %v1991 = vadd.f32 %v1979, %v1987
        %s1992 = scalar_lea.vmem %s3, 74
        %v1993 = vld [vmem:[%s1992] sm:$0x3]
        %v1995 = vlaneseq
        %v1996 = vshrl.u32 %v1995, 7
        %v1997 = vsub.s32 0, %v1996
        %v1998 = vrot.slane %v1993, %v1997
        %v1999 = vlaneseq
        %v2000 = vshrl.u32 %v1999, 7
        %v2001 = vsub.s32 1, %v2000
        %v2002 = vrot.slane %v1993, %v2001
        %v2005 = vmul.f32 %v1990, %v1998
        %v2006 = vmul.f32 %v1991, %v2002
        %v2007 = vadd.f32 %v1847, %v2005
        %v2008 = vadd.f32 %v1848, %v2006
        %2009 = vrot.lane.b32.xlu0 %v493, 96
        %v2010 = vpop.permute.xlu0 %2009
        %2011 = vrot.lane.b32.xlu0 %v494, 96
        %v2012 = vpop.permute.xlu0 %2011
        %vm2013 = vcmp.lt.s32.totalorder %v500, 96
        %v2014 = vsel %vm2013, %v2010, %v2012
        %v2015 = vsel %vm2013, %v2012, %v2010
        %s2016 = sld [smem:[#allocation2 + $0x26]]
        %v2017 = vstv %s2016
        %v2018 = vmul.f32 %v2017, %v2014
        %v2019 = vmul.f32 %v2017, %v2015
        %s2020 = sld [smem:[#allocation2 + $0x57]]
        %v2021 = vstv %s2020
        %v2022 = vmul.f32 %v2021, %v2014
        %v2023 = vmul.f32 %v2021, %v2015
        %v2026 = vrot.slane %v2022, 1
        %v2027 = vrot.slane %v2023, 1
        %v2030 = vadd.f32 %v2018, %v2026
        %v2031 = vadd.f32 %v2019, %v2027
        %s2032 = scalar_lea.vmem %s3, 76
        %v2033 = vld [vmem:[%s2032] sm:$0x3]
        %v2035 = vlaneseq
        %v2036 = vshrl.u32 %v2035, 7
        %v2037 = vsub.s32 0, %v2036
        %v2038 = vrot.slane %v2033, %v2037
        %v2039 = vlaneseq
        %v2040 = vshrl.u32 %v2039, 7
        %v2041 = vsub.s32 1, %v2040
        %v2042 = vrot.slane %v2033, %v2041
        %v2045 = vmul.f32 %v2030, %v2038
        %v2046 = vmul.f32 %v2031, %v2042
        %v2047 = vadd.f32 %v1887, %v2045
        %v2048 = vadd.f32 %v1888, %v2046
        %2049 = vrot.lane.b32.xlu0 %v493, 95
        %v2050 = vpop.permute.xlu0 %2049
        %2051 = vrot.lane.b32.xlu0 %v494, 95
        %v2052 = vpop.permute.xlu0 %2051
        %vm2053 = vcmp.lt.s32.totalorder %v500, 95
        %v2054 = vsel %vm2053, %v2050, %v2052
        %v2055 = vsel %vm2053, %v2052, %v2050
        %s2056 = sld [smem:[#allocation2 + $0x27]]
        %v2057 = vstv %s2056
        %v2058 = vmul.f32 %v2057, %v2054
        %v2059 = vmul.f32 %v2057, %v2055
        %s2060 = sld [smem:[#allocation2 + $0x58]]
        %v2061 = vstv %s2060
        %v2062 = vmul.f32 %v2061, %v2054
        %v2063 = vmul.f32 %v2061, %v2055
        %v2066 = vrot.slane %v2062, 1
        %v2067 = vrot.slane %v2063, 1
        %v2070 = vadd.f32 %v2058, %v2066
        %v2071 = vadd.f32 %v2059, %v2067
        %s2072 = scalar_lea.vmem %s3, 78
        %v2073 = vld [vmem:[%s2072] sm:$0x3]
        %v2075 = vlaneseq
        %v2076 = vshrl.u32 %v2075, 7
        %v2077 = vsub.s32 0, %v2076
        %v2078 = vrot.slane %v2073, %v2077
        %v2079 = vlaneseq
        %v2080 = vshrl.u32 %v2079, 7
        %v2081 = vsub.s32 1, %v2080
        %v2082 = vrot.slane %v2073, %v2081
        %v2085 = vmul.f32 %v2070, %v2078
        %v2086 = vmul.f32 %v2071, %v2082
        %v2087 = vadd.f32 %v1927, %v2085
        %v2088 = vadd.f32 %v1928, %v2086
        %2089 = vrot.lane.b32.xlu0 %v493, 94
        %v2090 = vpop.permute.xlu0 %2089
        %2091 = vrot.lane.b32.xlu0 %v494, 94
        %v2092 = vpop.permute.xlu0 %2091
        %vm2093 = vcmp.lt.s32.totalorder %v500, 94
        %v2094 = vsel %vm2093, %v2090, %v2092
        %v2095 = vsel %vm2093, %v2092, %v2090
        %s2096 = sld [smem:[#allocation2 + $0x28]]
        %v2097 = vstv %s2096
        %v2098 = vmul.f32 %v2097, %v2094
        %v2099 = vmul.f32 %v2097, %v2095
        %s2100 = sld [smem:[#allocation2 + $0x59]]
        %v2101 = vstv %s2100
        %v2102 = vmul.f32 %v2101, %v2094
        %v2103 = vmul.f32 %v2101, %v2095
        %v2106 = vrot.slane %v2102, 1
        %v2107 = vrot.slane %v2103, 1
        %v2110 = vadd.f32 %v2098, %v2106
        %v2111 = vadd.f32 %v2099, %v2107
        %s2112 = scalar_lea.vmem %s3, 80
        %v2113 = vld [vmem:[%s2112] sm:$0x3]
        %v2115 = vlaneseq
        %v2116 = vshrl.u32 %v2115, 7
        %v2117 = vsub.s32 0, %v2116
        %v2118 = vrot.slane %v2113, %v2117
        %v2119 = vlaneseq
        %v2120 = vshrl.u32 %v2119, 7
        %v2121 = vsub.s32 1, %v2120
        %v2122 = vrot.slane %v2113, %v2121
        %v2125 = vmul.f32 %v2110, %v2118
        %v2126 = vmul.f32 %v2111, %v2122
        %v2127 = vadd.f32 %v1967, %v2125
        %v2128 = vadd.f32 %v1968, %v2126
        %2129 = vrot.lane.b32.xlu0 %v493, 93
        %v2130 = vpop.permute.xlu0 %2129
        %2131 = vrot.lane.b32.xlu0 %v494, 93
        %v2132 = vpop.permute.xlu0 %2131
        %vm2133 = vcmp.lt.s32.totalorder %v500, 93
        %v2134 = vsel %vm2133, %v2130, %v2132
        %v2135 = vsel %vm2133, %v2132, %v2130
        %s2136 = sld [smem:[#allocation2 + $0x29]]
        %v2137 = vstv %s2136
        %v2138 = vmul.f32 %v2137, %v2134
        %v2139 = vmul.f32 %v2137, %v2135
        %s2140 = sld [smem:[#allocation2 + $0x5a]]
        %v2141 = vstv %s2140
        %v2142 = vmul.f32 %v2141, %v2134
        %v2143 = vmul.f32 %v2141, %v2135
        %v2146 = vrot.slane %v2142, 1
        %v2147 = vrot.slane %v2143, 1
        %v2150 = vadd.f32 %v2138, %v2146
        %v2151 = vadd.f32 %v2139, %v2147
        %s2152 = scalar_lea.vmem %s3, 82
        %v2153 = vld [vmem:[%s2152] sm:$0x3]
        %v2155 = vlaneseq
        %v2156 = vshrl.u32 %v2155, 7
        %v2157 = vsub.s32 0, %v2156
        %v2158 = vrot.slane %v2153, %v2157
        %v2159 = vlaneseq
        %v2160 = vshrl.u32 %v2159, 7
        %v2161 = vsub.s32 1, %v2160
        %v2162 = vrot.slane %v2153, %v2161
        %v2165 = vmul.f32 %v2150, %v2158
        %v2166 = vmul.f32 %v2151, %v2162
        %v2167 = vadd.f32 %v2007, %v2165
        %v2168 = vadd.f32 %v2008, %v2166
        %2169 = vrot.lane.b32.xlu0 %v493, 83
        %v2170 = vpop.permute.xlu0 %2169
        %2171 = vrot.lane.b32.xlu0 %v494, 83
        %v2172 = vpop.permute.xlu0 %2171
        %vm2173 = vcmp.lt.s32.totalorder %v500, 83
        %v2174 = vsel %vm2173, %v2170, %v2172
        %v2175 = vsel %vm2173, %v2172, %v2170
        %s2176 = sld [smem:[#allocation2 + $0x2a]]
        %v2177 = vstv %s2176
        %v2178 = vmul.f32 %v2177, %v2174
        %v2179 = vmul.f32 %v2177, %v2175
        %s2180 = sld [smem:[#allocation2 + $0x5b]]
        %v2181 = vstv %s2180
        %v2182 = vmul.f32 %v2181, %v2174
        %v2183 = vmul.f32 %v2181, %v2175
        %v2186 = vrot.slane %v2182, 1
        %v2187 = vrot.slane %v2183, 1
        %v2190 = vadd.f32 %v2178, %v2186
        %v2191 = vadd.f32 %v2179, %v2187
        %s2192 = scalar_lea.vmem %s3, 84
        %v2193 = vld [vmem:[%s2192] sm:$0x3]
        %v2195 = vlaneseq
        %v2196 = vshrl.u32 %v2195, 7
        %v2197 = vsub.s32 0, %v2196
        %v2198 = vrot.slane %v2193, %v2197
        %v2199 = vlaneseq
        %v2200 = vshrl.u32 %v2199, 7
        %v2201 = vsub.s32 1, %v2200
        %v2202 = vrot.slane %v2193, %v2201
        %v2205 = vmul.f32 %v2190, %v2198
        %v2206 = vmul.f32 %v2191, %v2202
        %v2207 = vadd.f32 %v2047, %v2205
        %v2208 = vadd.f32 %v2048, %v2206
        %2209 = vrot.lane.b32.xlu0 %v493, 82
        %v2210 = vpop.permute.xlu0 %2209
        %2211 = vrot.lane.b32.xlu0 %v494, 82
        %v2212 = vpop.permute.xlu0 %2211
        %vm2213 = vcmp.lt.s32.totalorder %v500, 82
        %v2214 = vsel %vm2213, %v2210, %v2212
        %v2215 = vsel %vm2213, %v2212, %v2210
        %s2216 = sld [smem:[#allocation2 + $0x2b]]
        %v2217 = vstv %s2216
        %v2218 = vmul.f32 %v2217, %v2214
        %v2219 = vmul.f32 %v2217, %v2215
        %s2220 = sld [smem:[#allocation2 + $0x5c]]
        %v2221 = vstv %s2220
        %v2222 = vmul.f32 %v2221, %v2214
        %v2223 = vmul.f32 %v2221, %v2215
        %v2226 = vrot.slane %v2222, 1
        %v2227 = vrot.slane %v2223, 1
        %v2230 = vadd.f32 %v2218, %v2226
        %v2231 = vadd.f32 %v2219, %v2227
        %s2232 = scalar_lea.vmem %s3, 86
        %v2233 = vld [vmem:[%s2232] sm:$0x3]
        %v2235 = vlaneseq
        %v2236 = vshrl.u32 %v2235, 7
        %v2237 = vsub.s32 0, %v2236
        %v2238 = vrot.slane %v2233, %v2237
        %v2239 = vlaneseq
        %v2240 = vshrl.u32 %v2239, 7
        %v2241 = vsub.s32 1, %v2240
        %v2242 = vrot.slane %v2233, %v2241
        %v2245 = vmul.f32 %v2230, %v2238
        %v2246 = vmul.f32 %v2231, %v2242
        %v2247 = vadd.f32 %v2087, %v2245
        %v2248 = vadd.f32 %v2088, %v2246
        %2249 = vrot.lane.b32.xlu0 %v493, 81
        %v2250 = vpop.permute.xlu0 %2249
        %2251 = vrot.lane.b32.xlu0 %v494, 81
        %v2252 = vpop.permute.xlu0 %2251
        %vm2253 = vcmp.lt.s32.totalorder %v500, 81
        %v2254 = vsel %vm2253, %v2250, %v2252
        %v2255 = vsel %vm2253, %v2252, %v2250
        %s2256 = sld [smem:[#allocation2 + $0x2c]]
        %v2257 = vstv %s2256
        %v2258 = vmul.f32 %v2257, %v2254
        %v2259 = vmul.f32 %v2257, %v2255
        %s2260 = sld [smem:[#allocation2 + $0x5d]]
        %v2261 = vstv %s2260
        %v2262 = vmul.f32 %v2261, %v2254
        %v2263 = vmul.f32 %v2261, %v2255
        %v2266 = vrot.slane %v2262, 1
        %v2267 = vrot.slane %v2263, 1
        %v2270 = vadd.f32 %v2258, %v2266
        %v2271 = vadd.f32 %v2259, %v2267
        %s2272 = scalar_lea.vmem %s3, 88
        %v2273 = vld [vmem:[%s2272] sm:$0x3]
        %v2275 = vlaneseq
        %v2276 = vshrl.u32 %v2275, 7
        %v2277 = vsub.s32 0, %v2276
        %v2278 = vrot.slane %v2273, %v2277
        %v2279 = vlaneseq
        %v2280 = vshrl.u32 %v2279, 7
        %v2281 = vsub.s32 1, %v2280
        %v2282 = vrot.slane %v2273, %v2281
        %v2285 = vmul.f32 %v2270, %v2278
        %v2286 = vmul.f32 %v2271, %v2282
        %v2287 = vadd.f32 %v2127, %v2285
        %v2288 = vadd.f32 %v2128, %v2286
        %2289 = vrot.lane.b32.xlu0 %v493, 80
        %v2290 = vpop.permute.xlu0 %2289
        %2291 = vrot.lane.b32.xlu0 %v494, 80
        %v2292 = vpop.permute.xlu0 %2291
        %vm2293 = vcmp.lt.s32.totalorder %v500, 80
        %v2294 = vsel %vm2293, %v2290, %v2292
        %v2295 = vsel %vm2293, %v2292, %v2290
        %s2296 = sld [smem:[#allocation2 + $0x2d]]
        %v2297 = vstv %s2296
        %v2298 = vmul.f32 %v2297, %v2294
        %v2299 = vmul.f32 %v2297, %v2295
        %s2300 = sld [smem:[#allocation2 + $0x5e]]
        %v2301 = vstv %s2300
        %v2302 = vmul.f32 %v2301, %v2294
        %v2303 = vmul.f32 %v2301, %v2295
        %v2306 = vrot.slane %v2302, 1
        %v2307 = vrot.slane %v2303, 1
        %v2310 = vadd.f32 %v2298, %v2306
        %v2311 = vadd.f32 %v2299, %v2307
        %s2312 = scalar_lea.vmem %s3, 90
        %v2313 = vld [vmem:[%s2312] sm:$0x3]
        %v2315 = vlaneseq
        %v2316 = vshrl.u32 %v2315, 7
        %v2317 = vsub.s32 0, %v2316
        %v2318 = vrot.slane %v2313, %v2317
        %v2319 = vlaneseq
        %v2320 = vshrl.u32 %v2319, 7
        %v2321 = vsub.s32 1, %v2320
        %v2322 = vrot.slane %v2313, %v2321
        %v2325 = vmul.f32 %v2310, %v2318
        %v2326 = vmul.f32 %v2311, %v2322
        %v2327 = vadd.f32 %v2167, %v2325
        %v2328 = vadd.f32 %v2168, %v2326
        %2329 = vrot.lane.b32.xlu0 %v493, 79
        %v2330 = vpop.permute.xlu0 %2329
        %2331 = vrot.lane.b32.xlu0 %v494, 79
        %v2332 = vpop.permute.xlu0 %2331
        %vm2333 = vcmp.lt.s32.totalorder %v500, 79
        %v2334 = vsel %vm2333, %v2330, %v2332
        %v2335 = vsel %vm2333, %v2332, %v2330
        %s2336 = sld [smem:[#allocation2 + $0x2e]]
        %v2337 = vstv %s2336
        %v2338 = vmul.f32 %v2337, %v2334
        %v2339 = vmul.f32 %v2337, %v2335
        %s2340 = sld [smem:[#allocation2 + $0x5f]]
        %v2341 = vstv %s2340
        %v2342 = vmul.f32 %v2341, %v2334
        %v2343 = vmul.f32 %v2341, %v2335
        %v2346 = vrot.slane %v2342, 1
        %v2347 = vrot.slane %v2343, 1
        %v2350 = vadd.f32 %v2338, %v2346
        %v2351 = vadd.f32 %v2339, %v2347
        %s2352 = scalar_lea.vmem %s3, 92
        %v2353 = vld [vmem:[%s2352] sm:$0x3]
        %v2355 = vlaneseq
        %v2356 = vshrl.u32 %v2355, 7
        %v2357 = vsub.s32 0, %v2356
        %v2358 = vrot.slane %v2353, %v2357
        %v2359 = vlaneseq
        %v2360 = vshrl.u32 %v2359, 7
        %v2361 = vsub.s32 1, %v2360
        %v2362 = vrot.slane %v2353, %v2361
        %v2365 = vmul.f32 %v2350, %v2358
        %v2366 = vmul.f32 %v2351, %v2362
        %v2367 = vadd.f32 %v2207, %v2365
        %v2368 = vadd.f32 %v2208, %v2366
        %2369 = vrot.lane.b32.xlu0 %v493, 78
        %v2370 = vpop.permute.xlu0 %2369
        %2371 = vrot.lane.b32.xlu0 %v494, 78
        %v2372 = vpop.permute.xlu0 %2371
        %vm2373 = vcmp.lt.s32.totalorder %v500, 78
        %v2374 = vsel %vm2373, %v2370, %v2372
        %v2375 = vsel %vm2373, %v2372, %v2370
        %s2376 = sld [smem:[#allocation2 + $0x2f]]
        %v2377 = vstv %s2376
        %v2378 = vmul.f32 %v2377, %v2374
        %v2379 = vmul.f32 %v2377, %v2375
        %s2380 = sld [smem:[#allocation2 + $0x60]]
        %v2381 = vstv %s2380
        %v2382 = vmul.f32 %v2381, %v2374
        %v2383 = vmul.f32 %v2381, %v2375
        %v2386 = vrot.slane %v2382, 1
        %v2387 = vrot.slane %v2383, 1
        %v2390 = vadd.f32 %v2378, %v2386
        %v2391 = vadd.f32 %v2379, %v2387
        %s2392 = scalar_lea.vmem %s3, 94
        %v2393 = vld [vmem:[%s2392] sm:$0x3]
        %v2395 = vlaneseq
        %v2396 = vshrl.u32 %v2395, 7
        %v2397 = vsub.s32 0, %v2396
        %v2398 = vrot.slane %v2393, %v2397
        %v2399 = vlaneseq
        %v2400 = vshrl.u32 %v2399, 7
        %v2401 = vsub.s32 1, %v2400
        %v2402 = vrot.slane %v2393, %v2401
        %v2405 = vmul.f32 %v2390, %v2398
        %v2406 = vmul.f32 %v2391, %v2402
        %v2407 = vadd.f32 %v2247, %v2405
        %v2408 = vadd.f32 %v2248, %v2406
        %2409 = vrot.lane.b32.xlu0 %v493, 77
        %v2410 = vpop.permute.xlu0 %2409
        %2411 = vrot.lane.b32.xlu0 %v494, 77
        %v2412 = vpop.permute.xlu0 %2411
        %vm2413 = vcmp.lt.s32.totalorder %v500, 77
        %v2414 = vsel %vm2413, %v2410, %v2412
        %v2415 = vsel %vm2413, %v2412, %v2410
        %s2416 = sld [smem:[#allocation2 + $0x30]]
        %v2417 = vstv %s2416
        %v2418 = vmul.f32 %v2417, %v2414
        %v2419 = vmul.f32 %v2417, %v2415
        %s2420 = sld [smem:[#allocation2 + $0x61]]
        %v2421 = vstv %s2420
        %v2422 = vmul.f32 %v2421, %v2414
        %v2423 = vmul.f32 %v2421, %v2415
        %v2426 = vrot.slane %v2422, 1
        %v2427 = vrot.slane %v2423, 1
        %v2430 = vadd.f32 %v2418, %v2426
        %v2431 = vadd.f32 %v2419, %v2427
        %s2432 = scalar_lea.vmem %s3, 96
        %v2433 = vld [vmem:[%s2432] sm:$0x3]
        %v2435 = vlaneseq
        %v2436 = vshrl.u32 %v2435, 7
        %v2437 = vsub.s32 0, %v2436
        %v2438 = vrot.slane %v2433, %v2437
        %v2439 = vlaneseq
        %v2440 = vshrl.u32 %v2439, 7
        %v2441 = vsub.s32 1, %v2440
        %v2442 = vrot.slane %v2433, %v2441
        %v2445 = vmul.f32 %v2430, %v2438
        %v2446 = vmul.f32 %v2431, %v2442
        %v2447 = vadd.f32 %v2287, %v2445
        %v2448 = vadd.f32 %v2288, %v2446
        %v2449 = vadd.f32 %v2447, %v2327
        %v2450 = vadd.f32 %v2448, %v2328
        %v2451 = vadd.f32 %v2449, %v2367
        %v2452 = vadd.f32 %v2450, %v2368
        %v2453 = vadd.f32 %v2451, %v2407
        %v2454 = vadd.f32 %v2452, %v2408
        %v2455 = vxor.u32 %v2453, 2147483648
        %v2456 = vxor.u32 %v2454, 2147483648
        %v2457 = vmul.f32 %v2455, 1.442695
        %v2458 = vpow.pop %v2457
        %v2459 = vmul.f32 %v2456, 1.442695
        %v2460 = vpow.pop %v2459
        %v2461 = vadd.f32 %v2458, 1.0
        %v2462 = vadd.f32 %v2460, 1.0
        %v2463 = vrcp.pop %v2461
        %v2464 = vmul.f32 1.0, %v2463
        %v2465 = vrcp.pop %v2462
        %v2466 = vmul.f32 1.0, %v2465
        %v2467 = vlaneseq
        %v2468 = vshrl.u32 %v2467, 7
        %v2469 = vsub.s32 0, %v2468
        %v2470 = vrot.slane %v2464, %v2469
        %v2471 = vlaneseq
        %v2472 = vshrl.u32 %v2471, 7
        %v2473 = vsub.s32 0, %v2472
        %v2474 = vrot.slane %v2466, %v2473
        %v2475 = vmul.f32 %v457, %v2470
        %v2476 = vmul.f32 %v458, %v2474
        %v2477 = vmul.f32 %v459, %v2470
        %v2478 = vmul.f32 %v460, %v2474
        %2479 = vst [vmem:[%s238] sm:$0xff] %v2475
        %2480 = vst [vmem:[%s238 + $0x8] sm:$0xff] %v2476
        %2481 = vst [vmem:[%s238 + $0x10] sm:$0xff] %v2477
        %2482 = vst [vmem:[%s238 + $0x18] sm:$0xff] %v2478
        %p2483 = scmp.lt.s32.totalorder %s17, 1
        %s2484 = scalar_select %p2483, %s17, 1
        %s2485 = smul.addr %s2484, 4
        %s2486 = smul.addr %s2485, 8
        %s2487 = scalar_lea.vmem %s5, %s2486
        // Predicated region
        $region45: #{combination_module_dcn.9} parent=39 // pred_check
          %p2488 = pneg %p145
        $region46: #{combination_module_dcn.9} parent=39 // pred_check_branch
          %2490 = sbr.rel (%p2488) target = $region48
        $region47: #{combination_module_dcn.9} parent=39 // pred_region
          _
        $region48: #{combination_module_dcn.9} parent=39 // pred_fallthru
          _
      $region40: #{combination_module_dcn.9} parent=5 // pred_fallthru
        _
      %p2491 = scmp.le.s32.totalorder 2, %s12
      // Predicated region
      $region49: #{combination_module_dcn.9} parent=5 // pred_check
        %p2492 = pneg %p2491
      $region50: #{combination_module_dcn.9} parent=5 // pred_check_branch
        %2494 = sbr.rel (%p2492) target = $region52
      $region51: #{combination_module_dcn.9} parent=5 // pred_region
        %s2495 = ssub.s32 %s12, 2
        // Predicated region
        $region53: #{combination_module_dcn.9} parent=51 // pred_check
          %p2496 = pneg %p151
        $region54: #{combination_module_dcn.9} parent=51 // pred_check_branch
          %2498 = sbr.rel (%p2496) target = $region56
        $region55: #{combination_module_dcn.9} parent=51 // pred_region
          %p2499 = scmp.lt.s32.totalorder %s18, 1
          %s2500 = scalar_select %p2499, %s18, 1
          %s2501 = smul.addr %s2500, 4
          %s2502 = smul.addr %s2501, 8
          %s2503 = scalar_lea.vmem %s5, %s2502
        $region56: #{combination_module_dcn.9} parent=51 // pred_fallthru
          _
      $region52: #{combination_module_dcn.9} parent=5 // pred_fallthru
        _
    $region6: #{combination_module_dcn.9} parent=1 // loop_footer
      %s16 = sadd.s32 1, %s12
    $region7: #{combination_module_dcn.9} parent=1 // loop_footer_branch
      %11 = sbr.rel target = $region3
    $region8: #{combination_module_dcn.9} parent=1 // loop_exit
      _
    %2504 = vsyncpa [#allocation3], 1
    %s2505 = scalar_lea.sflag [#allocation3], 1
    %2506 = vsyncpa %s2505, 1

// kernel: combination_module_dcn.11
$region0: #{combination_module_dcn.11}
  #allocation0 [shape = 'u32[]', space=smem, size = 0x4, offset = 0x4, fixed_abs, tag = 'smem constant byte address 0x4 - core index']
  #allocation1 [shape = 'u32[144,128]{1,0:T(1,128)}', space=vmem, size = 0x12000, scoped, tag = 'internal scratch']
  %s0 = inlined_call_operand.vmem [shape: bf16[16,32], index: 0, kind: input, shape index: {}]
  %s1 = inlined_call_operand.vmem [shape: bf16[2,32,256], index: 1, kind: input, shape index: {}]
  %s2 = inlined_call_operand.vmem [shape: f32[16,1], index: 2, kind: input, shape index: {}]
  %s3 = inlined_call_operand.vmem [shape: f32[2,16,256], index: 3, kind: output, shape index: {}]
  %s4 = sld [smem:[#allocation0]]
  $region120: #{combination_module_dcn.11} parent=0
    _
  %s6 = ssub.s32 1, %s4
  %s7 = scalar_select 0, %s6, %s4
  $region1: #{combination_module_dcn.11} parent=0
    #allocation2 [shape = 'u8[16384]{0}', space=vmem, size = 0x4000, scoped, tag = 'input window, operand 1']
    #allocation3 [shape = 'u8[16384]{0}', space=vmem, size = 0x4000, scoped, tag = 'output window, operand 0']
    loop: start=0, step=1, limit=6
    $region2: #{combination_module_dcn.11} parent=1 // loop_pre_header
      _
    $region3: #{combination_module_dcn.11} parent=1 // loop_header
      %s9 = sphi 0, %s13
      %p10 = scmp.ge.s32.totalorder %s9, 6
      %s16 = sphi 0, %s28
      %s17 = sphi 0, %s24
      %s18 = sphi 0, %s16
      %s19 = sphi 0, %s17
      %s20 = sphi 0, %s18
      %s21 = sphi 0, %s19
      %s29 = sphi 0, %s29
      %s31 = sphi 0, %s29
      %s32 = sphi 0, %s31
      %s46 = sphi 0, %s32
      %s54 = sphi 0, %s56
      %s57 = sphi 0, %s54
      %s58 = sphi 0, %s57
      %s74 = sphi 0, %s58
      %s78 = sphi 0, %s78
      %s80 = sphi 0, %s78
      %s81 = sphi 0, %s80
      %s95 = sphi 0, %s81
      %s103 = sphi 0, %s105
      %s106 = sphi 0, %s103
      %s107 = sphi 0, %s106
      %s123 = sphi 0, %s107
    $region4: #{combination_module_dcn.11} parent=1 // loop_header_branch
      %12 = sbr.rel (%p10) target = $region8
    $region5: #{combination_module_dcn.11} parent=1 // loop_body
      %s14 = ssub.s32 %s9, 1
      %s15 = ssub.s32 %s9, 2
      %s22 = sadd.s32 1, %s17
      %p23 = scmp.ge.s32.totalorder %s22, 2
      %s24 = scalar_select %p23, 0, %s22
      %s25 = sadd.s32 1, %s16
      %s26 = scalar_select %p23, %s25, %s16
      %p27 = scmp.ge.s32.totalorder %s26, 2
      %s28 = scalar_select %p27, 0, %s26
      %s30 = sadd.s32 %s29, 1
      %p33 = scmp.eq.s32.totalorder %s9, 3
      %p34 = scmp.ne.s32.totalorder %s29, %s31
      %p35 = scmp.eq.s32.totalorder %s9, 0
      %p36 = por %p34, %p35
      %p37 = scmp.ne.s32.totalorder %s29, %s31
      %p38 = scmp.eq.s32.totalorder %s14, 3
      %p39 = por %p37, %p38
      %p40 = scmp.ne.s32.totalorder %s31, %s32
      %p41 = scmp.eq.s32.totalorder %s14, 0
      %p42 = por %p40, %p41
      %p43 = scmp.ne.s32.totalorder %s31, %s32
      %p44 = scmp.eq.s32.totalorder %s15, 3
      %p45 = por %p43, %p44
      %p47 = scmp.ne.s32.totalorder %s32, %s46
      %p48 = scmp.eq.s32.totalorder %s15, 0
      %p49 = por %p47, %p48
      %s50 = ssub.s32 %s16, %s28
      %s51 = ssub.s32 %s17, %s24
      %s52 = sor.u32 %s50, %s51
      %p53 = scmp.eq.s32.totalorder %s52, 0
      %s55 = sadd.s32 %s54, 1
      %s56 = scalar_select %p53, %s54, %s55
      %p59 = pneg %p53
      %p60 = scmp.eq.s32.totalorder %s9, 3
      %p61 = por %p59, %p60
      %p62 = scmp.ne.s32.totalorder %s54, %s57
      %p63 = scmp.eq.s32.totalorder %s9, 0
      %p64 = por %p62, %p63
      %p65 = scmp.ne.s32.totalorder %s54, %s57
      %p66 = scmp.eq.s32.totalorder %s14, 3
      %p67 = por %p65, %p66
      %p68 = scmp.ne.s32.totalorder %s57, %s58
      %p69 = scmp.eq.s32.totalorder %s14, 0
      %p70 = por %p68, %p69
      %p71 = scmp.ne.s32.totalorder %s57, %s58
      %p72 = scmp.eq.s32.totalorder %s15, 3
      %p73 = por %p71, %p72
      %p75 = scmp.ne.s32.totalorder %s58, %s74
      %p76 = scmp.eq.s32.totalorder %s15, 0
      %p77 = por %p75, %p76
      %s79 = sadd.s32 %s78, 1
      %p82 = scmp.eq.s32.totalorder %s9, 3
      %p83 = scmp.ne.s32.totalorder %s78, %s80
      %p84 = scmp.eq.s32.totalorder %s9, 0
      %p85 = por %p83, %p84
      %p86 = scmp.ne.s32.totalorder %s78, %s80
      %p87 = scmp.eq.s32.totalorder %s14, 3
      %p88 = por %p86, %p87
      %p89 = scmp.ne.s32.totalorder %s80, %s81
      %p90 = scmp.eq.s32.totalorder %s14, 0
      %p91 = por %p89, %p90
      %p92 = scmp.ne.s32.totalorder %s80, %s81
      %p93 = scmp.eq.s32.totalorder %s15, 3
      %p94 = por %p92, %p93
      %p96 = scmp.ne.s32.totalorder %s81, %s95
      %p97 = scmp.eq.s32.totalorder %s15, 0
      %p98 = por %p96, %p97
      %s99 = ssub.s32 %s16, %s28
      %s100 = ssub.s32 %s17, %s24
      %s101 = sor.u32 %s99, %s100
      %p102 = scmp.eq.s32.totalorder %s101, 0
      %s104 = sadd.s32 %s103, 1
      %s105 = scalar_select %p102, %s103, %s104
      %p108 = pneg %p102
      %p109 = scmp.eq.s32.totalorder %s9, 3
      %p110 = por %p108, %p109
      %p111 = scmp.ne.s32.totalorder %s103, %s106
      %p112 = scmp.eq.s32.totalorder %s9, 0
      %p113 = por %p111, %p112
      %p114 = scmp.ne.s32.totalorder %s103, %s106
      %p115 = scmp.eq.s32.totalorder %s14, 3
      %p116 = por %p114, %p115
      %p117 = scmp.ne.s32.totalorder %s106, %s107
      %p118 = scmp.eq.s32.totalorder %s14, 0
      %p119 = por %p117, %p118
      %p120 = scmp.ne.s32.totalorder %s106, %s107
      %p121 = scmp.eq.s32.totalorder %s15, 3
      %p122 = por %p120, %p121
      %p124 = scmp.ne.s32.totalorder %s107, %s123
      %p125 = scmp.eq.s32.totalorder %s15, 0
      %p126 = por %p124, %p125
      %p127 = scmp.le.s32.totalorder 1, %s9
      %p128 = scmp.lt.s32.totalorder %s9, 5
      %p129 = pnand %p127, %p128
      %p130 = pneg %p129
      // Predicated region
      $region9: #{combination_module_dcn.11} parent=5 // pred_check
        _
      $region10: #{combination_module_dcn.11} parent=5 // pred_check_branch
        %132 = sbr.rel (%p129) target = $region12
      $region11: #{combination_module_dcn.11} parent=5 // pred_region
        %s133 = ssub.s32 %s9, 1
        // Predicated region
        $region13: #{combination_module_dcn.11} parent=11 // pred_check
          %p134 = pneg %p42
        $region14: #{combination_module_dcn.11} parent=11 // pred_check_branch
          %136 = sbr.rel (%p134) target = $region16
        $region15: #{combination_module_dcn.11} parent=11 // pred_region
          _
        $region16: #{combination_module_dcn.11} parent=11 // pred_fallthru
          _
        // Predicated region
        $region17: #{combination_module_dcn.11} parent=11 // pred_check
          %p137 = pneg %p91
        $region18: #{combination_module_dcn.11} parent=11 // pred_check_branch
          %139 = sbr.rel (%p137) target = $region20
        $region19: #{combination_module_dcn.11} parent=11 // pred_region
          _
        $region20: #{combination_module_dcn.11} parent=11 // pred_fallthru
          _
      $region12: #{combination_module_dcn.11} parent=5 // pred_fallthru
        _
      %p140 = scmp.lt.s32.totalorder %s9, 4
      // Predicated region
      $region21: #{combination_module_dcn.11} parent=5 // pred_check
        %p141 = pneg %p140
      $region22: #{combination_module_dcn.11} parent=5 // pred_check_branch
        %143 = sbr.rel (%p141) target = $region24
      $region23: #{combination_module_dcn.11} parent=5 // pred_region
        // Predicated region
        $region25: #{combination_module_dcn.11} parent=23 // pred_check
          %p144 = pneg %p64
        $region26: #{combination_module_dcn.11} parent=23 // pred_check_branch
          %146 = sbr.rel (%p144) target = $region28
        $region27: #{combination_module_dcn.11} parent=23 // pred_region
          %s147 = sand.u32 %s54, 1
          %s148 = sand.u32 %s54, 1
          %s149 = smul.addr %s148, 16
          %s150 = scalar_lea.vmem [#allocation2], %s149
          %s151 = smul.addr %s16, 8
          %s152 = sadd.s32 %s17, %s151
          %s153 = smul.addr %s152, 4
          %s154 = scalar_lea.vmem %s1, %s153
          // Predicated region
          $region29: #{combination_module_dcn.11} parent=27 // pred_check
            _
          $region30: #{combination_module_dcn.11} parent=27 // pred_check_branch
            %156 = sbr.rel (0) target = $region32
          $region31: #{combination_module_dcn.11} parent=27 // pred_region
            // Predicated region
            $region33: #{combination_module_dcn.11} parent=31 // pred_check
              _
            $region34: #{combination_module_dcn.11} parent=31 // pred_check_branch
              %158 = sbr.rel target = $region36
            $region35: #{combination_module_dcn.11} parent=31 // pred_region
              // Predicated region
              $region48: #{combination_module_dcn.11} parent=35 // pred_check
                _
              $region49: #{combination_module_dcn.11} parent=35 // pred_check_branch
                %180 = sbr.rel (0) target = $region51
              $region50: #{combination_module_dcn.11} parent=35 // pred_region
                loop: start=0, step=1, limit=1
                $region52: #{combination_module_dcn.11} parent=50 // loop_pre_header
                  _
                $region53: #{combination_module_dcn.11} parent=50 // loop_header
                  %s182 = sphi 0, %s186
                  %p183 = scmp.ge.s32.totalorder %s182, 1
                  %s187 = sphi %s154, %s154
                  %s188 = sphi %s150, %s150
                $region54: #{combination_module_dcn.11} parent=50 // loop_header_branch
                  %185 = sbr.rel (%p183) target = $region58
                $region55: #{combination_module_dcn.11} parent=50 // loop_body
                  _
                $region56: #{combination_module_dcn.11} parent=50 // loop_footer
                  %s186 = sadd.s32 1, %s182
                $region57: #{combination_module_dcn.11} parent=50 // loop_footer_branch
                  %181 = sbr.rel target = $region53
                $region58: #{combination_module_dcn.11} parent=50 // loop_exit
                  _
                %s190 = ssub.s32 16, 1
                loop: start=0, step=1, limit=1
                $region59: #{combination_module_dcn.11} parent=50 // loop_pre_header
                  _
                $region60: #{combination_module_dcn.11} parent=50 // loop_header
                  %s192 = sphi 0, %s196
                  %p193 = scmp.ge.s32.totalorder %s192, 1
                  %s197 = sphi %s154, %s154
                  %s198 = sphi %s150, %s150
                $region61: #{combination_module_dcn.11} parent=50 // loop_header_branch
                  %195 = sbr.rel (%p193) target = $region65
                $region62: #{combination_module_dcn.11} parent=50 // loop_body
                  %v199 = vld [vmem:[%s197] sm:%s190]
                  %200 = vst [vmem:[%s198] sm:%s190] %v199
                  %v201 = vld [vmem:[%s197 + $0x8] sm:%s190]
                  %202 = vst [vmem:[%s198 + $0x4] sm:%s190] %v201
                  %v203 = vld [vmem:[%s197 + $0x10] sm:%s190]
                  %204 = vst [vmem:[%s198 + $0x8] sm:%s190] %v203
                  %v205 = vld [vmem:[%s197 + $0x18] sm:%s190]
                  %206 = vst [vmem:[%s198 + $0xc] sm:%s190] %v205
                $region63: #{combination_module_dcn.11} parent=50 // loop_footer
                  %s196 = sadd.s32 1, %s192
                $region64: #{combination_module_dcn.11} parent=50 // loop_footer_branch
                  %191 = sbr.rel target = $region60
                $region65: #{combination_module_dcn.11} parent=50 // loop_exit
                  _
              $region51: #{combination_module_dcn.11} parent=35 // pred_fallthru
                _
            $region36: #{combination_module_dcn.11} parent=31 // pred_fallthru
              _
            // Predicated region
            $region37: #{combination_module_dcn.11} parent=31 // pred_check
              _
            $region38: #{combination_module_dcn.11} parent=31 // pred_check_branch
              %160 = sbr.rel (0) target = $region40
            $region39: #{combination_module_dcn.11} parent=31 // pred_region
              %s162 = ssub.s32 16, 1
              loop: start=0, step=1, limit=1
              $region41: #{combination_module_dcn.11} parent=39 // loop_pre_header
                _
              $region42: #{combination_module_dcn.11} parent=39 // loop_header
                %s164 = sphi 0, %s168
                %p165 = scmp.ge.s32.totalorder %s164, 1
                %s169 = sphi %s154, %s154
                %s170 = sphi %s150, %s150
              $region43: #{combination_module_dcn.11} parent=39 // loop_header_branch
                %167 = sbr.rel (%p165) target = $region47
              $region44: #{combination_module_dcn.11} parent=39 // loop_body
                %v171 = vld [vmem:[%s169] sm:%s162]
                %172 = vst [vmem:[%s170] sm:%s162] %v171
                %v173 = vld [vmem:[%s169 + $0x8] sm:%s162]
                %174 = vst [vmem:[%s170 + $0x4] sm:%s162] %v173
                %v175 = vld [vmem:[%s169 + $0x10] sm:%s162]
                %176 = vst [vmem:[%s170 + $0x8] sm:%s162] %v175
                %v177 = vld [vmem:[%s169 + $0x18] sm:%s162]
                %178 = vst [vmem:[%s170 + $0xc] sm:%s162] %v177
              $region45: #{combination_module_dcn.11} parent=39 // loop_footer
                %s168 = sadd.s32 1, %s164
              $region46: #{combination_module_dcn.11} parent=39 // loop_footer_branch
                %163 = sbr.rel target = $region42
              $region47: #{combination_module_dcn.11} parent=39 // loop_exit
                _
            $region40: #{combination_module_dcn.11} parent=31 // pred_fallthru
              _
          $region32: #{combination_module_dcn.11} parent=27 // pred_fallthru
            _
          %207 = vnop
        $region28: #{combination_module_dcn.11} parent=23 // pred_fallthru
          _
      $region24: #{combination_module_dcn.11} parent=5 // pred_fallthru
        _
      %p208 = scmp.le.s32.totalorder 1, %s9
      %p209 = scmp.lt.s32.totalorder %s9, 5
      %p210 = pnand %p208, %p209
      %p211 = pneg %p210
      // Predicated region
      $region66: #{combination_module_dcn.11} parent=5 // pred_check
        _
      $region67: #{combination_module_dcn.11} parent=5 // pred_check_branch
        %213 = sbr.rel (%p210) target = $region69
      $region68: #{combination_module_dcn.11} parent=5 // pred_region
        %s214 = ssub.s32 %s9, 1
        %s215 = sand.u32 %s57, 1
        %s216 = sand.u32 %s57, 1
        %s217 = smul.addr %s216, 16
        %s218 = scalar_lea.vmem [#allocation2], %s217
        // Predicated region
        $region70: #{combination_module_dcn.11} parent=68 // pred_check
          %p219 = pneg %p70
        $region71: #{combination_module_dcn.11} parent=68 // pred_check_branch
          %221 = sbr.rel (%p219) target = $region73
        $region72: #{combination_module_dcn.11} parent=68 // pred_region
          _
        $region73: #{combination_module_dcn.11} parent=68 // pred_fallthru
          _
        %p222 = pneg %p42
        %p223 = pneg %p39
        %s224 = sand.u32 %s57, 1
        %s225 = sand.u32 %s57, 1
        %s226 = smul.addr %s225, 16
        %s227 = scalar_lea.vmem [#allocation2], %s226
        %p228 = pneg %p70
        %p229 = pneg %p67
        %p230 = pneg %p91
        %p231 = pneg %p88
        %p232 = pneg %p119
        %p233 = pneg %p116
        %s234 = sand.u32 %s106, 1
        %s235 = sand.u32 %s106, 1
        %s236 = smul.addr %s235, 16
        %s237 = scalar_lea.vmem [#allocation3], %s236
        %v239 = vld [vmem:[%s0] sm:$0xf]
        %v240 = vld [vmem:[%s0 + $0x4] sm:$0xf]
        %v241 = vld [vmem:[%s218] sm:$0xf]
        %v242 = vld [vmem:[%s218 + $0x4] sm:$0xf]
        %v243 = vld [vmem:[%s218 + $0x8] sm:$0xf]
        %v244 = vld [vmem:[%s218 + $0xc] sm:$0xf]
        %v245 = vld [vmem:[%s2] sm:$0xff]
        %v246 = vld [vmem:[%s2 + $0x8] sm:$0xff]
        %248 = vset.pattern.permute.xlu0 0
        %249 = vperm.xlu0 %248, %v245
        %v250 = vpop.permute.xlu0 %249
        %253 = vset.pattern.permute.xlu0 0
        %254 = vperm.xlu0 %253, %v246
        %v255 = vpop.permute.xlu0 %254
        %v259 = vunpack.c.l.b16 %v239
        %v260 = vunpack.c.l.b16 %v240
        %v261 = vpack.c.b16 %v260, %v259
        %v266 = vunpack.c.l.b16 %v241
        %v267 = vunpack.c.l.b16 %v242
        %v268 = vunpack.c.l.b16 %v243
        %v269 = vunpack.c.l.b16 %v244
        %v270 = vpack.c.b16 %v267, %v266
        %v271 = vpack.c.b16 %v269, %v268
        %vm274 = vcmask 261120
        %v276 = vsel %vm274, %v261, 0
        %278 = vmatprep.subr.bf16.mxu0 0
        %279 = vmatpush1.bf16.msra.mxu0 0
        %280 = vmatprep.subr.bf16.mxu0 0
        %281 = vmatpush1.bf16.msra.mxu0 0
        %282 = vmatprep.subr.bf16.mxu0 0
        %283 = vmatpush1.bf16.msra.mxu0 0
        %284 = vmatprep.subr.bf16.mxu0 0
        %285 = vmatpush1.bf16.msra.mxu0 0
        %286 = vmatprep.subr.bf16.mxu0 0
        %287 = vmatpush1.bf16.msra.mxu0 0
        %288 = vmatprep.subr.bf16.mxu0 0
        %289 = vmatpush1.bf16.msra.mxu0 0
        %290 = vmatprep.subr.bf16.mxu0 0
        %291 = vmatpush1.bf16.msra.mxu0 %v271
        %292 = vmatprep.subr.bf16.mxu0 0
        %293 = vmatpush1.bf16.msra.mxu0 %v270
        %294 = vmatprep.subr.bf16.mxu0 0
        %295 = vmatpush2.bf16.msra.mxu0 0
        %296 = vmatprep.subr.bf16.mxu0 0
        %297 = vmatpush2.bf16.msra.mxu0 0
        %298 = vmatprep.subr.bf16.mxu0 0
        %299 = vmatpush2.bf16.msra.mxu0 0
        %300 = vmatprep.subr.bf16.mxu0 0
        %301 = vmatpush2.bf16.msra.mxu0 0
        %302 = vmatprep.subr.bf16.mxu0 0
        %303 = vmatpush2.bf16.msra.mxu0 0
        %304 = vmatprep.subr.bf16.mxu0 0
        %305 = vmatpush2.bf16.msra.mxu0 0
        %306 = vmatprep.subr.bf16.mxu0 0
        %307 = vmatpush2.bf16.msra.mxu0 0
        %308 = vmatprep.subr.bf16.mxu0 0
        %309 = vmatpush2.bf16.msra.mxu0 0
        %310 = vmatprep.mubr.bf16.mxu0 0
        %311 = vmatmul.mubr.bf16.gmra.mxu0 %v276
        %v312 = vpop.f32.mrf.mxu0
        %v313 = vadd.f32 %v250, %v312
        %v314 = vpop.f32.mrf.mxu0
        %v315 = vpop.f32.mrf.mxu0
        %v316 = vadd.f32 %v255, %v315
        %v317 = vpop.f32.mrf.mxu0
        %318 = vdwg.mxu0
        %v319 = vmax.f32 %v313, 0.0
        %v320 = vmax.f32 %v316, 0.0
        %321 = vst [vmem:[%s237] sm:$0xff] %v319
        %322 = vst [vmem:[%s237 + $0x8] sm:$0xff] %v320
        %s323 = sand.u32 %s106, 1
        %s324 = sand.u32 %s106, 1
        %s325 = smul.addr %s324, 16
        %s326 = scalar_lea.vmem [#allocation3], %s325
        // Predicated region
        $region74: #{combination_module_dcn.11} parent=68 // pred_check
          %p327 = pneg %p116
        $region75: #{combination_module_dcn.11} parent=68 // pred_check_branch
          %329 = sbr.rel (%p327) target = $region77
        $region76: #{combination_module_dcn.11} parent=68 // pred_region
          %s330 = smul.addr %s18, 4
          %s331 = sadd.s32 %s19, %s330
          %s332 = smul.addr %s331, 8
          %s333 = scalar_lea.vmem %s3, %s332
          // Predicated region
          $region78: #{combination_module_dcn.11} parent=76 // pred_check
            _
          $region79: #{combination_module_dcn.11} parent=76 // pred_check_branch
            %335 = sbr.rel (0) target = $region81
          $region80: #{combination_module_dcn.11} parent=76 // pred_region
            // Predicated region
            $region82: #{combination_module_dcn.11} parent=80 // pred_check
              _
            $region83: #{combination_module_dcn.11} parent=80 // pred_check_branch
              %337 = sbr.rel (0) target = $region85
            $region84: #{combination_module_dcn.11} parent=80 // pred_region
              // Predicated region
              $region97: #{combination_module_dcn.11} parent=84 // pred_check
                _
              $region98: #{combination_module_dcn.11} parent=84 // pred_check_branch
                %355 = sbr.rel (0) target = $region100
              $region99: #{combination_module_dcn.11} parent=84 // pred_region
                loop: start=0, step=1, limit=1
                $region101: #{combination_module_dcn.11} parent=99 // loop_pre_header
                  _
                $region102: #{combination_module_dcn.11} parent=99 // loop_header
                  %s357 = sphi 0, %s361
                  %p358 = scmp.ge.s32.totalorder %s357, 1
                  %s362 = sphi %s326, %s326
                  %s363 = sphi %s333, %s333
                $region103: #{combination_module_dcn.11} parent=99 // loop_header_branch
                  %360 = sbr.rel (%p358) target = $region107
                $region104: #{combination_module_dcn.11} parent=99 // loop_body
                  %v364 = vld [vmem:[%s362] sm:$0xff]
                  %365 = vst [vmem:[%s363] sm:$0xff] %v364
                  %v366 = vld [vmem:[%s362 + $0x8] sm:$0xff]
                  %367 = vst [vmem:[%s363 + $0x10] sm:$0xff] %v366
                $region105: #{combination_module_dcn.11} parent=99 // loop_footer
                  %s361 = sadd.s32 1, %s357
                $region106: #{combination_module_dcn.11} parent=99 // loop_footer_branch
                  %356 = sbr.rel target = $region102
                $region107: #{combination_module_dcn.11} parent=99 // loop_exit
                  _
              $region100: #{combination_module_dcn.11} parent=84 // pred_fallthru
                _
              // Predicated region
              $region108: #{combination_module_dcn.11} parent=84 // pred_check
                _
              $region109: #{combination_module_dcn.11} parent=84 // pred_check_branch
                %369 = sbr.rel target = $region111
              $region110: #{combination_module_dcn.11} parent=84 // pred_region
                _
              $region111: #{combination_module_dcn.11} parent=84 // pred_fallthru
                _
            $region85: #{combination_module_dcn.11} parent=80 // pred_fallthru
              _
            // Predicated region
            $region86: #{combination_module_dcn.11} parent=80 // pred_check
              _
            $region87: #{combination_module_dcn.11} parent=80 // pred_check_branch
              %339 = sbr.rel target = $region89
            $region88: #{combination_module_dcn.11} parent=80 // pred_region
              %s341 = ssub.s32 256, 1
              loop: start=0, step=1, limit=1
              $region90: #{combination_module_dcn.11} parent=88 // loop_pre_header
                _
              $region91: #{combination_module_dcn.11} parent=88 // loop_header
                %s343 = sphi 0, %s347
                %p344 = scmp.ge.s32.totalorder %s343, 1
                %s348 = sphi %s326, %s326
                %s349 = sphi %s333, %s333
              $region92: #{combination_module_dcn.11} parent=88 // loop_header_branch
                %346 = sbr.rel (%p344) target = $region96
              $region93: #{combination_module_dcn.11} parent=88 // loop_body
                %v350 = vld [vmem:[%s348] sm:%s341]
                %351 = vst [vmem:[%s349] sm:%s341] %v350
                %v352 = vld [vmem:[%s348 + $0x8] sm:%s341]
                %353 = vst [vmem:[%s349 + $0x10] sm:%s341] %v352
              $region94: #{combination_module_dcn.11} parent=88 // loop_footer
                %s347 = sadd.s32 1, %s343
              $region95: #{combination_module_dcn.11} parent=88 // loop_footer_branch
                %342 = sbr.rel target = $region91
              $region96: #{combination_module_dcn.11} parent=88 // loop_exit
                _
            $region89: #{combination_module_dcn.11} parent=80 // pred_fallthru
              _
          $region81: #{combination_module_dcn.11} parent=76 // pred_fallthru
            _
          %370 = vnop
        $region77: #{combination_module_dcn.11} parent=68 // pred_fallthru
          _
      $region69: #{combination_module_dcn.11} parent=5 // pred_fallthru
        _
      %p371 = scmp.le.s32.totalorder 2, %s9
      // Predicated region
      $region112: #{combination_module_dcn.11} parent=5 // pred_check
        %p372 = pneg %p371
      $region113: #{combination_module_dcn.11} parent=5 // pred_check_branch
        %374 = sbr.rel (%p372) target = $region115
      $region114: #{combination_module_dcn.11} parent=5 // pred_region
        %s375 = ssub.s32 %s9, 2
        // Predicated region
        $region116: #{combination_module_dcn.11} parent=114 // pred_check
          %p376 = pneg %p122
        $region117: #{combination_module_dcn.11} parent=114 // pred_check_branch
          %378 = sbr.rel (%p376) target = $region119
        $region118: #{combination_module_dcn.11} parent=114 // pred_region
          %s379 = sand.u32 %s107, 1
          %s380 = sand.u32 %s107, 1
          %s381 = smul.addr %s380, 16
          %s382 = scalar_lea.vmem [#allocation3], %s381
        $region119: #{combination_module_dcn.11} parent=114 // pred_fallthru
          _
      $region115: #{combination_module_dcn.11} parent=5 // pred_fallthru
        _
    $region6: #{combination_module_dcn.11} parent=1 // loop_footer
      %s13 = sadd.s32 1, %s9
    $region7: #{combination_module_dcn.11} parent=1 // loop_footer_branch
      %8 = sbr.rel target = $region3
    $region8: #{combination_module_dcn.11} parent=1 // loop_exit
      _

</llo_original>
